<compile_context>
chip_gen: v6e
topology: v6e:2x2x1
jax: 0.10.0
libtpu: 0.0.40
codegen_flags: <defaults>
</compile_context>

<pallas_src>
import jax
import jax.numpy as jnp
from jax.experimental import pallas as pl
from jax.experimental.pallas import tpu as pltpu

# ---- Module hyper-parameters (NeRF_old defaults) ----
D = 8
W = 256
IN_XYZ = 63
IN_DIR = 27
IN_TOT = IN_XYZ + IN_DIR      # 90
OUT_CH = 3
FS_PAD = 384                  # fused [xyz_encoding_final(256) | sigma(1) | pad] head
TB = 512                      # batch tile (rows per grid step)


def nerf_kernel(x_ref,
                w0, b0, w1, b1, w2, b2, w3, b3,
                w4a, w4b, b4, w5, b5, w6, b6, w7, b7,
                wfs, bfs, wd1, wd2, bd, wr, br,
                out_ref):
    f32 = jnp.float32
    bf16 = jnp.bfloat16

    x = x_ref[...]                                    # (TB, 90) f32
    xyz16 = x[:, :IN_XYZ].astype(bf16)                # (TB, 63)
    dir16 = x[:, IN_XYZ:IN_TOT].astype(bf16)          # (TB, 27)

    def lin(h16, w_ref, b_ref):
        # bf16 operands on the MXU, f32 accumulation, f32 bias add.
        return jnp.dot(h16, w_ref[...], preferred_element_type=f32) + b_ref[...]

    def relu16(v):
        return jnp.maximum(v, 0.0).astype(bf16)

    # xyz encoder (D=8 layers, ReLU, skip connection at layer index 4).
    h = relu16(lin(xyz16, w0, b0))
    h = relu16(lin(h, w1, b1))
    h = relu16(lin(h, w2, b2))
    h = relu16(lin(h, w3, b3))
    # skip: cat([input_xyz, h]) @ W4  ==  xyz @ W4[:63] + h @ W4[63:]
    h = relu16(jnp.dot(xyz16, w4a[...], preferred_element_type=f32)
               + jnp.dot(h, w4b[...], preferred_element_type=f32) + b4[...])
    h = relu16(lin(h, w5, b5))
    h = relu16(lin(h, w6, b6))
    h = relu16(lin(h, w7, b7))

    # Fused head: [xyz_encoding_final | sigma | zero-pad] in one matmul.
    fs = lin(h, wfs, bfs)                             # (TB, 384) f32
    final16 = fs[:, :W].astype(bf16)                  # (TB, 256)
    sigma = fs[:, W:W + 1]                            # (TB, 1)

    # direction branch: cat([final, dir]) @ Wd == final @ Wd[:256] + dir @ Wd[256:]
    de16 = relu16(jnp.dot(final16, wd1[...], preferred_element_type=f32)
                  + jnp.dot(dir16, wd2[...], preferred_element_type=f32) + bd[...])
    rgb = jax.nn.sigmoid(lin(de16, wr, br))           # (TB, 3), color_act

    # single fused store: out = cat([rgb, sigma], -1)
    out_ref[...] = jnp.concatenate([rgb, sigma], axis=-1).astype(out_ref.dtype)


def init_params(key):
    """PyTorch-Linear-style init; weights stored (in, out), pre-cast to bf16."""
    def linear(k, fan_in, fan_out):
        kw, kb = jax.random.split(k)
        bound = 1.0 / (fan_in ** 0.5)
        w = jax.random.uniform(kw, (fan_in, fan_out), jnp.float32, -bound, bound)
        b = jax.random.uniform(kb, (1, fan_out), jnp.float32, -bound, bound)
        return w, b

    keys = jax.random.split(key, 12)
    w0, b0 = linear(keys[0], IN_XYZ, W)
    w1, b1 = linear(keys[1], W, W)
    w2, b2 = linear(keys[2], W, W)
    w3, b3 = linear(keys[3], W, W)
    w4, b4 = linear(keys[4], IN_XYZ + W, W)          # input order [xyz, h]
    w4a, w4b = w4[:IN_XYZ], w4[IN_XYZ:]
    w5, b5 = linear(keys[5], W, W)
    w6, b6 = linear(keys[6], W, W)
    w7, b7 = linear(keys[7], W, W)
    wf, bf = linear(keys[8], W, W)                   # xyz_encoding_final
    ws, bs = linear(keys[9], W, 1)                   # sigma
    wd, bd = linear(keys[10], W + IN_DIR, W // 2)    # dir_encoding, order [final, dir]
    wd1, wd2 = wd[:W], wd[W:]
    wr, br = linear(keys[11], W // 2, OUT_CH)        # rgb

    # Fuse sigma head into xyz_encoding_final; pad N to 384 (lane multiple).
    wfs = (jnp.zeros((W, FS_PAD), jnp.float32)
           .at[:, :W].set(wf).at[:, W:W + 1].set(ws))
    bfs = (jnp.zeros((1, FS_PAD), jnp.float32)
           .at[:, :W].set(bf).at[:, W:W + 1].set(bs))

    bf16 = jnp.bfloat16
    return [w0.astype(bf16), b0, w1.astype(bf16), b1,
            w2.astype(bf16), b2, w3.astype(bf16), b3,
            w4a.astype(bf16), w4b.astype(bf16), b4,
            w5.astype(bf16), b5, w6.astype(bf16), b6, w7.astype(bf16), b7,
            wfs.astype(bf16), bfs,
            wd1.astype(bf16), wd2.astype(bf16), bd,
            wr.astype(bf16), br]


def nerf_forward(x, params, *, tb=TB):
    """x: (B, 90) -> (B, 4) = [sigmoid(rgb), sigma]."""
    B = x.shape[0]
    B_pad = ((B + tb - 1) // tb) * tb
    x_pad = jnp.pad(x.astype(jnp.float32), ((0, B_pad - B), (0, 0)))

    in_specs = [pl.BlockSpec((tb, IN_TOT), lambda i: (i, 0))]
    for p in params:
        r, c = p.shape
        # Full-array block, constant index_map -> weights stay resident in VMEM.
        in_specs.append(pl.BlockSpec((r, c), lambda i: (0, 0)))
    out_specs = pl.BlockSpec((tb, OUT_CH + 1), lambda i: (i, 0))

    # Scheduler hint: ~1.25 MFLOP per row, tiny HBM traffic per row.
    flops_per_row = 2 * (IN_XYZ * W + 3 * W * W + (IN_XYZ + W) * W + 3 * W * W
                         + W * FS_PAD + (W + IN_DIR) * (W // 2) + (W // 2) * OUT_CH)
    param_bytes = int(sum(p.size * p.dtype.itemsize for p in params))
    cost = pl.CostEstimate(
        flops=flops_per_row * B_pad,
        transcendentals=3 * B_pad,
        bytes_accessed=B_pad * (IN_TOT + OUT_CH + 1) * 4 + param_bytes,
    )

    out = pl.pallas_call(
        nerf_kernel,
        out_shape=jax.ShapeDtypeStruct((B_pad, OUT_CH + 1), jnp.float32),
        grid_spec=pltpu.PrefetchScalarGridSpec(
            num_scalar_prefetch=0,
            grid=(B_pad // tb,),
            in_specs=in_specs,
            out_specs=out_specs,
        ),
        compiler_params=pltpu.CompilerParams(
            dimension_semantics=("parallel",),
            vmem_limit_bytes=32 * 1024 * 1024,   # safe on v5e/v6e/v7x; plenty of headroom
        ),
        cost_estimate=cost,
    )(x_pad, *params)
    return out[:B]


def nerf_ref(x, params):
    """Pure-JAX reference mirroring the kernel math (bf16 operands, f32 acc)."""
    (w0, b0, w1, b1, w2, b2, w3, b3,
     w4a, w4b, b4, w5, b5, w6, b6, w7, b7,
     wfs, bfs, wd1, wd2, bd, wr, br) = params
    f32, bf16 = jnp.float32, jnp.bfloat16
    x = x.astype(f32)
    xyz16 = x[:, :IN_XYZ].astype(bf16)
    dir16 = x[:, IN_XYZ:IN_TOT].astype(bf16)

    def lin(h16, w, b):
        return jnp.dot(h16, w, preferred_element_type=f32) + b

    relu16 = lambda v: jnp.maximum(v, 0.0).astype(bf16)

    h = relu16(lin(xyz16, w0, b0))
    h = relu16(lin(h, w1, b1))
    h = relu16(lin(h, w2, b2))
    h = relu16(lin(h, w3, b3))
    h = relu16(jnp.dot(xyz16, w4a, preferred_element_type=f32)
               + jnp.dot(h, w4b, preferred_element_type=f32) + b4)
    h = relu16(lin(h, w5, b5))
    h = relu16(lin(h, w6, b6))
    h = relu16(lin(h, w7, b7))
    fs = lin(h, wfs, bfs)
    final16 = fs[:, :W].astype(bf16)
    sigma = fs[:, W:W + 1]
    de16 = relu16(jnp.dot(final16, wd1, preferred_element_type=f32)
                  + jnp.dot(dir16, wd2, preferred_element_type=f32) + bd)
    rgb = jax.nn.sigmoid(lin(de16, wr, br))
    return jnp.concatenate([rgb, sigma], axis=-1)


if __name__ == "__main__":
    key = jax.random.PRNGKey(0)
    kx, kp = jax.random.split(key)

    B = 1000  # pads to 1024 -> 2 grid steps of TB=512 (both v7x TCs get work)
    x = jax.random.normal(kx, (B, IN_TOT), jnp.float32)
    params = init_params(kp)

    out = jax.block_until_ready(nerf_forward(x, params))
    ref = nerf_ref(x, params)

    assert out.shape == (B, OUT_CH + 1)
    err = float(jnp.max(jnp.abs(out - ref)))
    assert err < 1e-2, f"max abs err {err}"
    print("KERNEL_OK")
</pallas_src>

<mosaic_0001>
module attributes {stable_mosaic.version = 11 : i64} {
  func.func @nerf_kernel(%arg0: i32, %arg1: memref<512x90xf32, #tpu.memory_space<vmem>>, %arg2: memref<63x256xbf16, #tpu.memory_space<vmem>>, %arg3: memref<1x256xf32, #tpu.memory_space<vmem>>, %arg4: memref<256x256xbf16, #tpu.memory_space<vmem>>, %arg5: memref<1x256xf32, #tpu.memory_space<vmem>>, %arg6: memref<256x256xbf16, #tpu.memory_space<vmem>>, %arg7: memref<1x256xf32, #tpu.memory_space<vmem>>, %arg8: memref<256x256xbf16, #tpu.memory_space<vmem>>, %arg9: memref<1x256xf32, #tpu.memory_space<vmem>>, %arg10: memref<63x256xbf16, #tpu.memory_space<vmem>>, %arg11: memref<256x256xbf16, #tpu.memory_space<vmem>>, %arg12: memref<1x256xf32, #tpu.memory_space<vmem>>, %arg13: memref<256x256xbf16, #tpu.memory_space<vmem>>, %arg14: memref<1x256xf32, #tpu.memory_space<vmem>>, %arg15: memref<256x256xbf16, #tpu.memory_space<vmem>>, %arg16: memref<1x256xf32, #tpu.memory_space<vmem>>, %arg17: memref<256x256xbf16, #tpu.memory_space<vmem>>, %arg18: memref<1x256xf32, #tpu.memory_space<vmem>>, %arg19: memref<256x384xbf16, #tpu.memory_space<vmem>>, %arg20: memref<1x384xf32, #tpu.memory_space<vmem>>, %arg21: memref<256x128xbf16, #tpu.memory_space<vmem>>, %arg22: memref<27x128xbf16, #tpu.memory_space<vmem>>, %arg23: memref<1x128xf32, #tpu.memory_space<vmem>>, %arg24: memref<128x3xbf16, #tpu.memory_space<vmem>>, %arg25: memref<1x3xf32, #tpu.memory_space<vmem>>, %arg26: memref<512x4xf32, #tpu.memory_space<vmem>>) attributes {dimension_semantics = [#tpu.dimension_semantics<parallel>], iteration_bounds = array<i64: 2>, scalar_prefetch = 0 : i64, scratch_operands = 0 : i64, tpu.core_type = #tpu.core_type<tc>, window_params = [{transform_indices = @transform_0, window_bounds = array<i64: 512, 90>}, {pipeline_mode = #tpu.pipeline_mode<synchronous>, transform_indices = @transform_1, window_bounds = array<i64: 63, 256>}, {pipeline_mode = #tpu.pipeline_mode<synchronous>, transform_indices = @transform_2, window_bounds = array<i64: 1, 256>}, {pipeline_mode = #tpu.pipeline_mode<synchronous>, transform_indices = @transform_3, window_bounds = array<i64: 256, 256>}, {pipeline_mode = #tpu.pipeline_mode<synchronous>, transform_indices = @transform_4, window_bounds = array<i64: 1, 256>}, {pipeline_mode = #tpu.pipeline_mode<synchronous>, transform_indices = @transform_5, window_bounds = array<i64: 256, 256>}, {pipeline_mode = #tpu.pipeline_mode<synchronous>, transform_indices = @transform_6, window_bounds = array<i64: 1, 256>}, {pipeline_mode = #tpu.pipeline_mode<synchronous>, transform_indices = @transform_7, window_bounds = array<i64: 256, 256>}, {pipeline_mode = #tpu.pipeline_mode<synchronous>, transform_indices = @transform_8, window_bounds = array<i64: 1, 256>}, {pipeline_mode = #tpu.pipeline_mode<synchronous>, transform_indices = @transform_9, window_bounds = array<i64: 63, 256>}, {pipeline_mode = #tpu.pipeline_mode<synchronous>, transform_indices = @transform_10, window_bounds = array<i64: 256, 256>}, {pipeline_mode = #tpu.pipeline_mode<synchronous>, transform_indices = @transform_11, window_bounds = array<i64: 1, 256>}, {pipeline_mode = #tpu.pipeline_mode<synchronous>, transform_indices = @transform_12, window_bounds = array<i64: 256, 256>}, {pipeline_mode = #tpu.pipeline_mode<synchronous>, transform_indices = @transform_13, window_bounds = array<i64: 1, 256>}, {pipeline_mode = #tpu.pipeline_mode<synchronous>, transform_indices = @transform_14, window_bounds = array<i64: 256, 256>}, {pipeline_mode = #tpu.pipeline_mode<synchronous>, transform_indices = @transform_15, window_bounds = array<i64: 1, 256>}, {pipeline_mode = #tpu.pipeline_mode<synchronous>, transform_indices = @transform_16, window_bounds = array<i64: 256, 256>}, {pipeline_mode = #tpu.pipeline_mode<synchronous>, transform_indices = @transform_17, window_bounds = array<i64: 1, 256>}, {pipeline_mode = #tpu.pipeline_mode<synchronous>, transform_indices = @transform_18, window_bounds = array<i64: 256, 384>}, {pipeline_mode = #tpu.pipeline_mode<synchronous>, transform_indices = @transform_19, window_bounds = array<i64: 1, 384>}, {pipeline_mode = #tpu.pipeline_mode<synchronous>, transform_indices = @transform_20, window_bounds = array<i64: 256, 128>}, {pipeline_mode = #tpu.pipeline_mode<synchronous>, transform_indices = @transform_21, window_bounds = array<i64: 27, 128>}, {pipeline_mode = #tpu.pipeline_mode<synchronous>, transform_indices = @transform_22, window_bounds = array<i64: 1, 128>}, {pipeline_mode = #tpu.pipeline_mode<synchronous>, transform_indices = @transform_23, window_bounds = array<i64: 128, 3>}, {pipeline_mode = #tpu.pipeline_mode<synchronous>, transform_indices = @transform_24, window_bounds = array<i64: 1, 3>}, {transform_indices = @transform_25, window_bounds = array<i64: 512, 4>}]} {
    %c0 = arith.constant 0 : index
    %c0_0 = arith.constant 0 : index
    %0 = vector.load %arg1[%c0, %c0_0] : memref<512x90xf32, #tpu.memory_space<vmem>>, vector<512x90xf32>
    %1 = vector.extract_strided_slice %0 {offsets = [0, 0], sizes = [512, 63], strides = [1, 1]} : vector<512x90xf32> to vector<512x63xf32>
    %2 = arith.truncf %1 : vector<512x63xf32> to vector<512x63xbf16>
    %3 = vector.extract_strided_slice %0 {offsets = [0, 63], sizes = [512, 27], strides = [1, 1]} : vector<512x90xf32> to vector<512x27xf32>
    %4 = arith.truncf %3 : vector<512x27xf32> to vector<512x27xbf16>
    %c0_1 = arith.constant 0 : index
    %c0_2 = arith.constant 0 : index
    %5 = vector.load %arg2[%c0_1, %c0_2] : memref<63x256xbf16, #tpu.memory_space<vmem>>, vector<63x256xbf16>
    %cst = arith.constant dense<0.000000e+00> : vector<512x256xf32>
    %6 = tpu.matmul %2, %5, %cst {dimension_numbers = #tpu.dot_dimension_numbers<[1], [0], [0], [1], [0, 0, 1, 1], [], []>} : vector<512x63xbf16>, vector<63x256xbf16>, vector<512x256xf32> -> vector<512x256xf32>
    %c0_3 = arith.constant 0 : index
    %c0_4 = arith.constant 0 : index
    %7 = vector.load %arg3[%c0_3, %c0_4] : memref<1x256xf32, #tpu.memory_space<vmem>>, vector<1x256xf32>
    %8 = vector.broadcast %7 : vector<1x256xf32> to vector<512x256xf32>
    %9 = arith.addf %6, %8 : vector<512x256xf32>
    %cst_5 = arith.constant 0.000000e+00 : f32
    %10 = vector.broadcast %cst_5 : f32 to vector<512x256xf32>
    %11 = arith.maximumf %9, %10 : vector<512x256xf32>
    %12 = arith.truncf %11 : vector<512x256xf32> to vector<512x256xbf16>
    %c0_6 = arith.constant 0 : index
    %c0_7 = arith.constant 0 : index
    %13 = vector.load %arg4[%c0_6, %c0_7] : memref<256x256xbf16, #tpu.memory_space<vmem>>, vector<256x256xbf16>
    %cst_8 = arith.constant dense<0.000000e+00> : vector<512x256xf32>
    %14 = tpu.matmul %12, %13, %cst_8 {dimension_numbers = #tpu.dot_dimension_numbers<[1], [0], [0], [1], [0, 0, 1, 1], [], []>} : vector<512x256xbf16>, vector<256x256xbf16>, vector<512x256xf32> -> vector<512x256xf32>
    %c0_9 = arith.constant 0 : index
    %c0_10 = arith.constant 0 : index
    %15 = vector.load %arg5[%c0_9, %c0_10] : memref<1x256xf32, #tpu.memory_space<vmem>>, vector<1x256xf32>
    %16 = vector.broadcast %15 : vector<1x256xf32> to vector<512x256xf32>
    %17 = arith.addf %14, %16 : vector<512x256xf32>
    %cst_11 = arith.constant 0.000000e+00 : f32
    %18 = vector.broadcast %cst_11 : f32 to vector<512x256xf32>
    %19 = arith.maximumf %17, %18 : vector<512x256xf32>
    %20 = arith.truncf %19 : vector<512x256xf32> to vector<512x256xbf16>
    %c0_12 = arith.constant 0 : index
    %c0_13 = arith.constant 0 : index
    %21 = vector.load %arg6[%c0_12, %c0_13] : memref<256x256xbf16, #tpu.memory_space<vmem>>, vector<256x256xbf16>
    %cst_14 = arith.constant dense<0.000000e+00> : vector<512x256xf32>
    %22 = tpu.matmul %20, %21, %cst_14 {dimension_numbers = #tpu.dot_dimension_numbers<[1], [0], [0], [1], [0, 0, 1, 1], [], []>} : vector<512x256xbf16>, vector<256x256xbf16>, vector<512x256xf32> -> vector<512x256xf32>
    %c0_15 = arith.constant 0 : index
    %c0_16 = arith.constant 0 : index
    %23 = vector.load %arg7[%c0_15, %c0_16] : memref<1x256xf32, #tpu.memory_space<vmem>>, vector<1x256xf32>
    %24 = vector.broadcast %23 : vector<1x256xf32> to vector<512x256xf32>
    %25 = arith.addf %22, %24 : vector<512x256xf32>
    %cst_17 = arith.constant 0.000000e+00 : f32
    %26 = vector.broadcast %cst_17 : f32 to vector<512x256xf32>
    %27 = arith.maximumf %25, %26 : vector<512x256xf32>
    %28 = arith.truncf %27 : vector<512x256xf32> to vector<512x256xbf16>
    %c0_18 = arith.constant 0 : index
    %c0_19 = arith.constant 0 : index
    %29 = vector.load %arg8[%c0_18, %c0_19] : memref<256x256xbf16, #tpu.memory_space<vmem>>, vector<256x256xbf16>
    %cst_20 = arith.constant dense<0.000000e+00> : vector<512x256xf32>
    %30 = tpu.matmul %28, %29, %cst_20 {dimension_numbers = #tpu.dot_dimension_numbers<[1], [0], [0], [1], [0, 0, 1, 1], [], []>} : vector<512x256xbf16>, vector<256x256xbf16>, vector<512x256xf32> -> vector<512x256xf32>
    %c0_21 = arith.constant 0 : index
    %c0_22 = arith.constant 0 : index
    %31 = vector.load %arg9[%c0_21, %c0_22] : memref<1x256xf32, #tpu.memory_space<vmem>>, vector<1x256xf32>
    %32 = vector.broadcast %31 : vector<1x256xf32> to vector<512x256xf32>
    %33 = arith.addf %30, %32 : vector<512x256xf32>
    %cst_23 = arith.constant 0.000000e+00 : f32
    %34 = vector.broadcast %cst_23 : f32 to vector<512x256xf32>
    %35 = arith.maximumf %33, %34 : vector<512x256xf32>
    %36 = arith.truncf %35 : vector<512x256xf32> to vector<512x256xbf16>
    %c0_24 = arith.constant 0 : index
    %c0_25 = arith.constant 0 : index
    %37 = vector.load %arg10[%c0_24, %c0_25] : memref<63x256xbf16, #tpu.memory_space<vmem>>, vector<63x256xbf16>
    %cst_26 = arith.constant dense<0.000000e+00> : vector<512x256xf32>
    %38 = tpu.matmul %2, %37, %cst_26 {dimension_numbers = #tpu.dot_dimension_numbers<[1], [0], [0], [1], [0, 0, 1, 1], [], []>} : vector<512x63xbf16>, vector<63x256xbf16>, vector<512x256xf32> -> vector<512x256xf32>
    %c0_27 = arith.constant 0 : index
    %c0_28 = arith.constant 0 : index
    %39 = vector.load %arg11[%c0_27, %c0_28] : memref<256x256xbf16, #tpu.memory_space<vmem>>, vector<256x256xbf16>
    %cst_29 = arith.constant dense<0.000000e+00> : vector<512x256xf32>
    %40 = tpu.matmul %36, %39, %cst_29 {dimension_numbers = #tpu.dot_dimension_numbers<[1], [0], [0], [1], [0, 0, 1, 1], [], []>} : vector<512x256xbf16>, vector<256x256xbf16>, vector<512x256xf32> -> vector<512x256xf32>
    %41 = arith.addf %38, %40 : vector<512x256xf32>
    %c0_30 = arith.constant 0 : index
    %c0_31 = arith.constant 0 : index
    %42 = vector.load %arg12[%c0_30, %c0_31] : memref<1x256xf32, #tpu.memory_space<vmem>>, vector<1x256xf32>
    %43 = vector.broadcast %42 : vector<1x256xf32> to vector<512x256xf32>
    %44 = arith.addf %41, %43 : vector<512x256xf32>
    %cst_32 = arith.constant 0.000000e+00 : f32
    %45 = vector.broadcast %cst_32 : f32 to vector<512x256xf32>
    %46 = arith.maximumf %44, %45 : vector<512x256xf32>
    %47 = arith.truncf %46 : vector<512x256xf32> to vector<512x256xbf16>
    %c0_33 = arith.constant 0 : index
    %c0_34 = arith.constant 0 : index
    %48 = vector.load %arg13[%c0_33, %c0_34] : memref<256x256xbf16, #tpu.memory_space<vmem>>, vector<256x256xbf16>
    %cst_35 = arith.constant dense<0.000000e+00> : vector<512x256xf32>
    %49 = tpu.matmul %47, %48, %cst_35 {dimension_numbers = #tpu.dot_dimension_numbers<[1], [0], [0], [1], [0, 0, 1, 1], [], []>} : vector<512x256xbf16>, vector<256x256xbf16>, vector<512x256xf32> -> vector<512x256xf32>
    %c0_36 = arith.constant 0 : index
    %c0_37 = arith.constant 0 : index
    %50 = vector.load %arg14[%c0_36, %c0_37] : memref<1x256xf32, #tpu.memory_space<vmem>>, vector<1x256xf32>
    %51 = vector.broadcast %50 : vector<1x256xf32> to vector<512x256xf32>
    %52 = arith.addf %49, %51 : vector<512x256xf32>
    %cst_38 = arith.constant 0.000000e+00 : f32
    %53 = vector.broadcast %cst_38 : f32 to vector<512x256xf32>
    %54 = arith.maximumf %52, %53 : vector<512x256xf32>
    %55 = arith.truncf %54 : vector<512x256xf32> to vector<512x256xbf16>
    %c0_39 = arith.constant 0 : index
    %c0_40 = arith.constant 0 : index
    %56 = vector.load %arg15[%c0_39, %c0_40] : memref<256x256xbf16, #tpu.memory_space<vmem>>, vector<256x256xbf16>
    %cst_41 = arith.constant dense<0.000000e+00> : vector<512x256xf32>
    %57 = tpu.matmul %55, %56, %cst_41 {dimension_numbers = #tpu.dot_dimension_numbers<[1], [0], [0], [1], [0, 0, 1, 1], [], []>} : vector<512x256xbf16>, vector<256x256xbf16>, vector<512x256xf32> -> vector<512x256xf32>
    %c0_42 = arith.constant 0 : index
    %c0_43 = arith.constant 0 : index
    %58 = vector.load %arg16[%c0_42, %c0_43] : memref<1x256xf32, #tpu.memory_space<vmem>>, vector<1x256xf32>
    %59 = vector.broadcast %58 : vector<1x256xf32> to vector<512x256xf32>
    %60 = arith.addf %57, %59 : vector<512x256xf32>
    %cst_44 = arith.constant 0.000000e+00 : f32
    %61 = vector.broadcast %cst_44 : f32 to vector<512x256xf32>
    %62 = arith.maximumf %60, %61 : vector<512x256xf32>
    %63 = arith.truncf %62 : vector<512x256xf32> to vector<512x256xbf16>
    %c0_45 = arith.constant 0 : index
    %c0_46 = arith.constant 0 : index
    %64 = vector.load %arg17[%c0_45, %c0_46] : memref<256x256xbf16, #tpu.memory_space<vmem>>, vector<256x256xbf16>
    %cst_47 = arith.constant dense<0.000000e+00> : vector<512x256xf32>
    %65 = tpu.matmul %63, %64, %cst_47 {dimension_numbers = #tpu.dot_dimension_numbers<[1], [0], [0], [1], [0, 0, 1, 1], [], []>} : vector<512x256xbf16>, vector<256x256xbf16>, vector<512x256xf32> -> vector<512x256xf32>
    %c0_48 = arith.constant 0 : index
    %c0_49 = arith.constant 0 : index
    %66 = vector.load %arg18[%c0_48, %c0_49] : memref<1x256xf32, #tpu.memory_space<vmem>>, vector<1x256xf32>
    %67 = vector.broadcast %66 : vector<1x256xf32> to vector<512x256xf32>
    %68 = arith.addf %65, %67 : vector<512x256xf32>
    %cst_50 = arith.constant 0.000000e+00 : f32
    %69 = vector.broadcast %cst_50 : f32 to vector<512x256xf32>
    %70 = arith.maximumf %68, %69 : vector<512x256xf32>
    %71 = arith.truncf %70 : vector<512x256xf32> to vector<512x256xbf16>
    %c0_51 = arith.constant 0 : index
    %c0_52 = arith.constant 0 : index
    %72 = vector.load %arg19[%c0_51, %c0_52] : memref<256x384xbf16, #tpu.memory_space<vmem>>, vector<256x384xbf16>
    %cst_53 = arith.constant dense<0.000000e+00> : vector<512x384xf32>
    %73 = tpu.matmul %71, %72, %cst_53 {dimension_numbers = #tpu.dot_dimension_numbers<[1], [0], [0], [1], [0, 0, 1, 1], [], []>} : vector<512x256xbf16>, vector<256x384xbf16>, vector<512x384xf32> -> vector<512x384xf32>
    %c0_54 = arith.constant 0 : index
    %c0_55 = arith.constant 0 : index
    %74 = vector.load %arg20[%c0_54, %c0_55] : memref<1x384xf32, #tpu.memory_space<vmem>>, vector<1x384xf32>
    %75 = vector.broadcast %74 : vector<1x384xf32> to vector<512x384xf32>
    %76 = arith.addf %73, %75 : vector<512x384xf32>
    %77 = vector.extract_strided_slice %76 {offsets = [0, 0], sizes = [512, 256], strides = [1, 1]} : vector<512x384xf32> to vector<512x256xf32>
    %78 = arith.truncf %77 : vector<512x256xf32> to vector<512x256xbf16>
    %79 = vector.extract_strided_slice %76 {offsets = [0, 256], sizes = [512, 1], strides = [1, 1]} : vector<512x384xf32> to vector<512x1xf32>
    %c0_56 = arith.constant 0 : index
    %c0_57 = arith.constant 0 : index
    %80 = vector.load %arg21[%c0_56, %c0_57] : memref<256x128xbf16, #tpu.memory_space<vmem>>, vector<256x128xbf16>
    %cst_58 = arith.constant dense<0.000000e+00> : vector<512x128xf32>
    %81 = tpu.matmul %78, %80, %cst_58 {dimension_numbers = #tpu.dot_dimension_numbers<[1], [0], [0], [1], [0, 0, 1, 1], [], []>} : vector<512x256xbf16>, vector<256x128xbf16>, vector<512x128xf32> -> vector<512x128xf32>
    %c0_59 = arith.constant 0 : index
    %c0_60 = arith.constant 0 : index
    %82 = vector.load %arg22[%c0_59, %c0_60] : memref<27x128xbf16, #tpu.memory_space<vmem>>, vector<27x128xbf16>
    %cst_61 = arith.constant dense<0.000000e+00> : vector<512x128xf32>
    %83 = tpu.matmul %4, %82, %cst_61 {dimension_numbers = #tpu.dot_dimension_numbers<[1], [0], [0], [1], [0, 0, 1, 1], [], []>} : vector<512x27xbf16>, vector<27x128xbf16>, vector<512x128xf32> -> vector<512x128xf32>
    %84 = arith.addf %81, %83 : vector<512x128xf32>
    %c0_62 = arith.constant 0 : index
    %c0_63 = arith.constant 0 : index
    %85 = vector.load %arg23[%c0_62, %c0_63] : memref<1x128xf32, #tpu.memory_space<vmem>>, vector<1x128xf32>
    %86 = vector.broadcast %85 : vector<1x128xf32> to vector<512x128xf32>
    %87 = arith.addf %84, %86 : vector<512x128xf32>
    %cst_64 = arith.constant 0.000000e+00 : f32
    %88 = vector.broadcast %cst_64 : f32 to vector<512x128xf32>
    %89 = arith.maximumf %87, %88 : vector<512x128xf32>
    %90 = arith.truncf %89 : vector<512x128xf32> to vector<512x128xbf16>
    %c0_65 = arith.constant 0 : index
    %c0_66 = arith.constant 0 : index
    %91 = vector.load %arg24[%c0_65, %c0_66] : memref<128x3xbf16, #tpu.memory_space<vmem>>, vector<128x3xbf16>
    %cst_67 = arith.constant dense<0.000000e+00> : vector<512x3xf32>
    %92 = tpu.matmul %90, %91, %cst_67 {dimension_numbers = #tpu.dot_dimension_numbers<[1], [0], [0], [1], [0, 0, 1, 1], [], []>} : vector<512x128xbf16>, vector<128x3xbf16>, vector<512x3xf32> -> vector<512x3xf32>
    %c0_68 = arith.constant 0 : index
    %c0_69 = arith.constant 0 : index
    %93 = vector.load %arg25[%c0_68, %c0_69] : memref<1x3xf32, #tpu.memory_space<vmem>>, vector<1x3xf32>
    %94 = vector.broadcast %93 : vector<1x3xf32> to vector<512x3xf32>
    %95 = arith.addf %92, %94 : vector<512x3xf32>
    %96 = arith.negf %95 : vector<512x3xf32>
    %97 = math.exp %96 : vector<512x3xf32>
    %cst_70 = arith.constant 1.000000e+00 : f32
    %98 = vector.broadcast %cst_70 : f32 to vector<512x3xf32>
    %99 = arith.addf %98, %97 : vector<512x3xf32>
    %100 = arith.divf %98, %99 : vector<512x3xf32>
    %101 = tpu.concatenate %100, %79 in 1 : vector<512x3xf32>, vector<512x1xf32> -> vector<512x4xf32>
    %c0_71 = arith.constant 0 : index
    %c0_72 = arith.constant 0 : index
    %102 = vector.load %arg26[%c0_71, %c0_72] : memref<512x4xf32, #tpu.memory_space<vmem>>, vector<512x4xf32>
    tpu.vector_store %arg26[%c0_71, %c0_72], %101 {strides = array<i32>} : memref<512x4xf32, #tpu.memory_space<vmem>>, vector<512x4xf32>,
    return
  }
  func.func @transform_0(%arg0: i32) -> (i32, i32) {
    %c0_i32 = arith.constant 0 : i32
    %c0_i32_0 = arith.constant 0 : i32
    return %arg0, %c0_i32 : i32, i32
  }
  func.func @transform_1(%arg0: i32) -> (i32, i32) {
    %c0_i32 = arith.constant 0 : i32
    %c0_i32_0 = arith.constant 0 : i32
    %c0_i32_1 = arith.constant 0 : i32
    return %c0_i32, %c0_i32_0 : i32, i32
  }
  func.func @transform_2(%arg0: i32) -> (i32, i32) {
    %c0_i32 = arith.constant 0 : i32
    %c0_i32_0 = arith.constant 0 : i32
    %c0_i32_1 = arith.constant 0 : i32
    return %c0_i32, %c0_i32_0 : i32, i32
  }
  func.func @transform_3(%arg0: i32) -> (i32, i32) {
    %c0_i32 = arith.constant 0 : i32
    %c0_i32_0 = arith.constant 0 : i32
    %c0_i32_1 = arith.constant 0 : i32
    return %c0_i32, %c0_i32_0 : i32, i32
  }
  func.func @transform_4(%arg0: i32) -> (i32, i32) {
    %c0_i32 = arith.constant 0 : i32
    %c0_i32_0 = arith.constant 0 : i32
    %c0_i32_1 = arith.constant 0 : i32
    return %c0_i32, %c0_i32_0 : i32, i32
  }
  func.func @transform_5(%arg0: i32) -> (i32, i32) {
    %c0_i32 = arith.constant 0 : i32
    %c0_i32_0 = arith.constant 0 : i32
    %c0_i32_1 = arith.constant 0 : i32
    return %c0_i32, %c0_i32_0 : i32, i32
  }
  func.func @transform_6(%arg0: i32) -> (i32, i32) {
    %c0_i32 = arith.constant 0 : i32
    %c0_i32_0 = arith.constant 0 : i32
    %c0_i32_1 = arith.constant 0 : i32
    return %c0_i32, %c0_i32_0 : i32, i32
  }
  func.func @transform_7(%arg0: i32) -> (i32, i32) {
    %c0_i32 = arith.constant 0 : i32
    %c0_i32_0 = arith.constant 0 : i32
    %c0_i32_1 = arith.constant 0 : i32
    return %c0_i32, %c0_i32_0 : i32, i32
  }
  func.func @transform_8(%arg0: i32) -> (i32, i32) {
    %c0_i32 = arith.constant 0 : i32
    %c0_i32_0 = arith.constant 0 : i32
    %c0_i32_1 = arith.constant 0 : i32
    return %c0_i32, %c0_i32_0 : i32, i32
  }
  func.func @transform_9(%arg0: i32) -> (i32, i32) {
    %c0_i32 = arith.constant 0 : i32
    %c0_i32_0 = arith.constant 0 : i32
    %c0_i32_1 = arith.constant 0 : i32
    return %c0_i32, %c0_i32_0 : i32, i32
  }
  func.func @transform_10(%arg0: i32) -> (i32, i32) {
    %c0_i32 = arith.constant 0 : i32
    %c0_i32_0 = arith.constant 0 : i32
    %c0_i32_1 = arith.constant 0 : i32
    return %c0_i32, %c0_i32_0 : i32, i32
  }
  func.func @transform_11(%arg0: i32) -> (i32, i32) {
    %c0_i32 = arith.constant 0 : i32
    %c0_i32_0 = arith.constant 0 : i32
    %c0_i32_1 = arith.constant 0 : i32
    return %c0_i32, %c0_i32_0 : i32, i32
  }
  func.func @transform_12(%arg0: i32) -> (i32, i32) {
    %c0_i32 = arith.constant 0 : i32
    %c0_i32_0 = arith.constant 0 : i32
    %c0_i32_1 = arith.constant 0 : i32
    return %c0_i32, %c0_i32_0 : i32, i32
  }
  func.func @transform_13(%arg0: i32) -> (i32, i32) {
    %c0_i32 = arith.constant 0 : i32
    %c0_i32_0 = arith.constant 0 : i32
    %c0_i32_1 = arith.constant 0 : i32
    return %c0_i32, %c0_i32_0 : i32, i32
  }
  func.func @transform_14(%arg0: i32) -> (i32, i32) {
    %c0_i32 = arith.constant 0 : i32
    %c0_i32_0 = arith.constant 0 : i32
    %c0_i32_1 = arith.constant 0 : i32
    return %c0_i32, %c0_i32_0 : i32, i32
  }
  func.func @transform_15(%arg0: i32) -> (i32, i32) {
    %c0_i32 = arith.constant 0 : i32
    %c0_i32_0 = arith.constant 0 : i32
    %c0_i32_1 = arith.constant 0 : i32
    return %c0_i32, %c0_i32_0 : i32, i32
  }
  func.func @transform_16(%arg0: i32) -> (i32, i32) {
    %c0_i32 = arith.constant 0 : i32
    %c0_i32_0 = arith.constant 0 : i32
    %c0_i32_1 = arith.constant 0 : i32
    return %c0_i32, %c0_i32_0 : i32, i32
  }
  func.func @transform_17(%arg0: i32) -> (i32, i32) {
    %c0_i32 = arith.constant 0 : i32
    %c0_i32_0 = arith.constant 0 : i32
    %c0_i32_1 = arith.constant 0 : i32
    return %c0_i32, %c0_i32_0 : i32, i32
  }
  func.func @transform_18(%arg0: i32) -> (i32, i32) {
    %c0_i32 = arith.constant 0 : i32
    %c0_i32_0 = arith.constant 0 : i32
    %c0_i32_1 = arith.constant 0 : i32
    return %c0_i32, %c0_i32_0 : i32, i32
  }
  func.func @transform_19(%arg0: i32) -> (i32, i32) {
    %c0_i32 = arith.constant 0 : i32
    %c0_i32_0 = arith.constant 0 : i32
    %c0_i32_1 = arith.constant 0 : i32
    return %c0_i32, %c0_i32_0 : i32, i32
  }
  func.func @transform_20(%arg0: i32) -> (i32, i32) {
    %c0_i32 = arith.constant 0 : i32
    %c0_i32_0 = arith.constant 0 : i32
    %c0_i32_1 = arith.constant 0 : i32
    return %c0_i32, %c0_i32_0 : i32, i32
  }
  func.func @transform_21(%arg0: i32) -> (i32, i32) {
    %c0_i32 = arith.constant 0 : i32
    %c0_i32_0 = arith.constant 0 : i32
    %c0_i32_1 = arith.constant 0 : i32
    return %c0_i32, %c0_i32_0 : i32, i32
  }
  func.func @transform_22(%arg0: i32) -> (i32, i32) {
    %c0_i32 = arith.constant 0 : i32
    %c0_i32_0 = arith.constant 0 : i32
    %c0_i32_1 = arith.constant 0 : i32
    return %c0_i32, %c0_i32_0 : i32, i32
  }
  func.func @transform_23(%arg0: i32) -> (i32, i32) {
    %c0_i32 = arith.constant 0 : i32
    %c0_i32_0 = arith.constant 0 : i32
    %c0_i32_1 = arith.constant 0 : i32
    return %c0_i32, %c0_i32_0 : i32, i32
  }
  func.func @transform_24(%arg0: i32) -> (i32, i32) {
    %c0_i32 = arith.constant 0 : i32
    %c0_i32_0 = arith.constant 0 : i32
    %c0_i32_1 = arith.constant 0 : i32
    return %c0_i32, %c0_i32_0 : i32, i32
  }
  func.func @transform_25(%arg0: i32) -> (i32, i32) {
    %c0_i32 = arith.constant 0 : i32
    %c0_i32_0 = arith.constant 0 : i32
    return %arg0, %c0_i32 : i32, i32
  }
}

</mosaic_0001>

<llo_original>
// kernel: tpu_custom_call.1
$region0: #{tpu_custom_call.1}
  #allocation0 [shape = 'u32[]', space=smem, size = 0x4, offset = 0x4, fixed_abs, tag = 'smem constant byte address 0x4 - core index']
  #allocation1 [shape = 'u32[144,128]{1,0:T(1,128)}', space=vmem, size = 0x12000, scoped, tag = 'internal scratch']
  %s0 = inlined_call_operand.vmem [shape: f32[1024,90], index: 0, kind: input, shape index: {}]
  %s1 = inlined_call_operand.vmem [shape: bf16[63,256], index: 1, kind: input, shape index: {}]
  %s2 = inlined_call_operand.vmem [shape: f32[1,256], index: 2, kind: input, shape index: {}]
  %s3 = inlined_call_operand.vmem [shape: bf16[256,256], index: 3, kind: input, shape index: {}]
  %s4 = inlined_call_operand.hbm [shape: f32[1,256], index: 4, kind: input, shape index: {}]
  %s5 = inlined_call_operand.vmem [shape: bf16[256,256], index: 5, kind: input, shape index: {}]
  %s6 = inlined_call_operand.hbm [shape: f32[1,256], index: 6, kind: input, shape index: {}]
  %s7 = inlined_call_operand.vmem [shape: bf16[256,256], index: 7, kind: input, shape index: {}]
  %s8 = inlined_call_operand.hbm [shape: f32[1,256], index: 8, kind: input, shape index: {}]
  %s9 = inlined_call_operand.hbm [shape: bf16[63,256], index: 9, kind: input, shape index: {}]
  %s10 = inlined_call_operand.vmem [shape: bf16[256,256], index: 10, kind: input, shape index: {}]
  %s11 = inlined_call_operand.hbm [shape: f32[1,256], index: 11, kind: input, shape index: {}]
  %s12 = inlined_call_operand.vmem [shape: bf16[256,256], index: 12, kind: input, shape index: {}]
  %s13 = inlined_call_operand.hbm [shape: f32[1,256], index: 13, kind: input, shape index: {}]
  %s14 = inlined_call_operand.hbm [shape: bf16[256,256], index: 14, kind: input, shape index: {}]
  %s15 = inlined_call_operand.hbm [shape: f32[1,256], index: 15, kind: input, shape index: {}]
  %s16 = inlined_call_operand.hbm [shape: bf16[256,256], index: 16, kind: input, shape index: {}]
  %s17 = inlined_call_operand.hbm [shape: f32[1,256], index: 17, kind: input, shape index: {}]
  %s18 = inlined_call_operand.vmem [shape: bf16[256,384], index: 18, kind: input, shape index: {}]
  %s19 = inlined_call_operand.vmem [shape: f32[1,384], index: 19, kind: input, shape index: {}]
  %s20 = inlined_call_operand.vmem [shape: bf16[256,128], index: 20, kind: input, shape index: {}]
  %s21 = inlined_call_operand.vmem [shape: bf16[27,128], index: 21, kind: input, shape index: {}]
  %s22 = inlined_call_operand.vmem [shape: f32[1,128], index: 22, kind: input, shape index: {}]
  %s23 = inlined_call_operand.vmem [shape: bf16[128,3], index: 23, kind: input, shape index: {}]
  %s24 = inlined_call_operand.vmem [shape: f32[1,3], index: 24, kind: input, shape index: {}]
  %s25 = inlined_call_operand.vmem [shape: f32[1024,4], index: 25, kind: output, shape index: {}]
  %s26 = sld [smem:[#allocation0]]
  $region173: #{tpu_custom_call.1} parent=0
    _
  %s28 = ssub.s32 1, %s26
  %s29 = scalar_select 0, %s28, %s26
  $region1: #{tpu_custom_call.1} parent=0
    #allocation2 [shape = 'u8[1024]{0}', space=vmem, size = 0x400, scoped, tag = 'input window, operand 4, single buffered']
    #allocation3 [shape = 's32[2]{0}', space=sflag, size = 0x8, scoped, tag = 'scoped memory for tpu_custom_call.1']
    #allocation4 [shape = 'u8[1024]{0}', space=vmem, size = 0x400, scoped, tag = 'input window, operand 6, single buffered']
    #allocation5 [shape = 's32[1]{0}', space=sflag, size = 0x4, scoped, tag = 'scoped memory for tpu_custom_call.1']
    #allocation6 [shape = 'u8[1024]{0}', space=vmem, size = 0x400, scoped, tag = 'input window, operand 8, single buffered']
    #allocation7 [shape = 'u8[32768]{0}', space=vmem, size = 0x8000, scoped, tag = 'input window, operand 9, single buffered']
    #allocation8 [shape = 's32[1]{0}', space=sflag, size = 0x4, scoped, tag = 'scoped memory for tpu_custom_call.1']
    #allocation9 [shape = 'u8[1024]{0}', space=vmem, size = 0x400, scoped, tag = 'input window, operand 11, single buffered']
    #allocation10 [shape = 'u8[1024]{0}', space=vmem, size = 0x400, scoped, tag = 'input window, operand 13, single buffered']
    #allocation11 [shape = 's32[1]{0}', space=sflag, size = 0x4, scoped, tag = 'scoped memory for tpu_custom_call.1']
    #allocation12 [shape = 'u8[131072]{0}', space=vmem, size = 0x20000, scoped, tag = 'input window, operand 14, single buffered']
    #allocation13 [shape = 'u8[1024]{0}', space=vmem, size = 0x400, scoped, tag = 'input window, operand 15, single buffered']
    #allocation14 [shape = 's32[1]{0}', space=sflag, size = 0x4, scoped, tag = 'scoped memory for tpu_custom_call.1']
    #allocation15 [shape = 'u8[131072]{0}', space=vmem, size = 0x20000, scoped, tag = 'input window, operand 16, single buffered']
    #allocation16 [shape = 'u8[1024]{0}', space=vmem, size = 0x400, scoped, tag = 'input window, operand 17, single buffered']
    #allocation17 [shape = 's32[1]{0}', space=sflag, size = 0x4, scoped, tag = 'scoped memory for tpu_custom_call.1']
    %30 = vsyncpa [#allocation3], 0
    %31 = vsyncpa [#allocation5], 0
    %32 = vsyncpa [#allocation8], 0
    %33 = vsyncpa [#allocation11], 0
    %34 = vsyncpa [#allocation14], 0
    %35 = vsyncpa [#allocation17], 0
    loop: start=0, step=1, limit=4
    $region2: #{tpu_custom_call.1} parent=1 // loop_pre_header
      _
    $region3: #{tpu_custom_call.1} parent=1 // loop_header
      %s37 = sphi 0, %s41
      %p38 = scmp.ge.s32.totalorder %s37, 4
      %s47 = sphi 0, %s49
      %s50 = sphi 0, %s47
      %s51 = sphi 0, %s50
      %s67 = sphi 0, %s51
      %s71 = sphi 0, %s71
      %s73 = sphi 0, %s71
      %s74 = sphi 0, %s73
      %s88 = sphi 0, %s74
      %s92 = sphi 0, %s92
      %s94 = sphi 0, %s92
      %s95 = sphi 0, %s94
      %s109 = sphi 0, %s95
      %s113 = sphi 0, %s113
      %s115 = sphi 0, %s113
      %s116 = sphi 0, %s115
      %s130 = sphi 0, %s116
      %s134 = sphi 0, %s134
      %s136 = sphi 0, %s134
      %s137 = sphi 0, %s136
      %s151 = sphi 0, %s137
      %s155 = sphi 0, %s155
      %s157 = sphi 0, %s155
      %s158 = sphi 0, %s157
      %s172 = sphi 0, %s158
      %s176 = sphi 0, %s176
      %s178 = sphi 0, %s176
      %s179 = sphi 0, %s178
      %s193 = sphi 0, %s179
      %s197 = sphi 0, %s197
      %s199 = sphi 0, %s197
      %s200 = sphi 0, %s199
      %s214 = sphi 0, %s200
      %s218 = sphi 0, %s218
      %s220 = sphi 0, %s218
      %s221 = sphi 0, %s220
      %s235 = sphi 0, %s221
      %s239 = sphi 0, %s239
      %s241 = sphi 0, %s239
      %s242 = sphi 0, %s241
      %s256 = sphi 0, %s242
      %s260 = sphi 0, %s260
      %s262 = sphi 0, %s260
      %s263 = sphi 0, %s262
      %s277 = sphi 0, %s263
      %s281 = sphi 0, %s281
      %s283 = sphi 0, %s281
      %s284 = sphi 0, %s283
      %s298 = sphi 0, %s284
      %s302 = sphi 0, %s302
      %s304 = sphi 0, %s302
      %s305 = sphi 0, %s304
      %s319 = sphi 0, %s305
      %s323 = sphi 0, %s323
      %s325 = sphi 0, %s323
      %s326 = sphi 0, %s325
      %s340 = sphi 0, %s326
      %s344 = sphi 0, %s344
      %s346 = sphi 0, %s344
      %s347 = sphi 0, %s346
      %s361 = sphi 0, %s347
      %s365 = sphi 0, %s365
      %s367 = sphi 0, %s365
      %s368 = sphi 0, %s367
      %s382 = sphi 0, %s368
      %s386 = sphi 0, %s386
      %s388 = sphi 0, %s386
      %s389 = sphi 0, %s388
      %s403 = sphi 0, %s389
      %s407 = sphi 0, %s407
      %s409 = sphi 0, %s407
      %s410 = sphi 0, %s409
      %s424 = sphi 0, %s410
      %s428 = sphi 0, %s428
      %s430 = sphi 0, %s428
      %s431 = sphi 0, %s430
      %s445 = sphi 0, %s431
      %s449 = sphi 0, %s449
      %s451 = sphi 0, %s449
      %s452 = sphi 0, %s451
      %s466 = sphi 0, %s452
      %s470 = sphi 0, %s470
      %s472 = sphi 0, %s470
      %s473 = sphi 0, %s472
      %s487 = sphi 0, %s473
      %s491 = sphi 0, %s491
      %s493 = sphi 0, %s491
      %s494 = sphi 0, %s493
      %s508 = sphi 0, %s494
      %s512 = sphi 0, %s512
      %s514 = sphi 0, %s512
      %s515 = sphi 0, %s514
      %s529 = sphi 0, %s515
      %s533 = sphi 0, %s533
      %s535 = sphi 0, %s533
      %s536 = sphi 0, %s535
      %s550 = sphi 0, %s536
      %s554 = sphi 0, %s554
      %s556 = sphi 0, %s554
      %s557 = sphi 0, %s556
      %s571 = sphi 0, %s557
      %s577 = sphi 0, %s579
      %s580 = sphi 0, %s577
      %s581 = sphi 0, %s580
      %s597 = sphi 0, %s581
    $region4: #{tpu_custom_call.1} parent=1 // loop_header_branch
      %40 = sbr.rel (%p38) target = $region8
    $region5: #{tpu_custom_call.1} parent=1 // loop_body
      %s42 = ssub.s32 %s37, 1
      %s43 = ssub.s32 %s37, 2
      %s44 = sadd.s32 %s37, 1
      %s45 = ssub.s32 %s37, %s44
      %p46 = scmp.eq.s32.totalorder %s45, 0
      %s48 = sadd.s32 %s47, 1
      %s49 = scalar_select %p46, %s47, %s48
      %p52 = pneg %p46
      %p53 = scmp.eq.s32.totalorder %s37, 1
      %p54 = por %p52, %p53
      %p55 = scmp.ne.s32.totalorder %s47, %s50
      %p56 = scmp.eq.s32.totalorder %s37, 0
      %p57 = por %p55, %p56
      %p58 = scmp.ne.s32.totalorder %s47, %s50
      %p59 = scmp.eq.s32.totalorder %s42, 1
      %p60 = por %p58, %p59
      %p61 = scmp.ne.s32.totalorder %s50, %s51
      %p62 = scmp.eq.s32.totalorder %s42, 0
      %p63 = por %p61, %p62
      %p64 = scmp.ne.s32.totalorder %s50, %s51
      %p65 = scmp.eq.s32.totalorder %s43, 1
      %p66 = por %p64, %p65
      %p68 = scmp.ne.s32.totalorder %s51, %s67
      %p69 = scmp.eq.s32.totalorder %s43, 0
      %p70 = por %p68, %p69
      %s72 = sadd.s32 %s71, 1
      %p75 = scmp.eq.s32.totalorder %s37, 1
      %p76 = scmp.ne.s32.totalorder %s71, %s73
      %p77 = scmp.eq.s32.totalorder %s37, 0
      %p78 = por %p76, %p77
      %p79 = scmp.ne.s32.totalorder %s71, %s73
      %p80 = scmp.eq.s32.totalorder %s42, 1
      %p81 = por %p79, %p80
      %p82 = scmp.ne.s32.totalorder %s73, %s74
      %p83 = scmp.eq.s32.totalorder %s42, 0
      %p84 = por %p82, %p83
      %p85 = scmp.ne.s32.totalorder %s73, %s74
      %p86 = scmp.eq.s32.totalorder %s43, 1
      %p87 = por %p85, %p86
      %p89 = scmp.ne.s32.totalorder %s74, %s88
      %p90 = scmp.eq.s32.totalorder %s43, 0
      %p91 = por %p89, %p90
      %s93 = sadd.s32 %s92, 1
      %p96 = scmp.eq.s32.totalorder %s37, 1
      %p97 = scmp.ne.s32.totalorder %s92, %s94
      %p98 = scmp.eq.s32.totalorder %s37, 0
      %p99 = por %p97, %p98
      %p100 = scmp.ne.s32.totalorder %s92, %s94
      %p101 = scmp.eq.s32.totalorder %s42, 1
      %p102 = por %p100, %p101
      %p103 = scmp.ne.s32.totalorder %s94, %s95
      %p104 = scmp.eq.s32.totalorder %s42, 0
      %p105 = por %p103, %p104
      %p106 = scmp.ne.s32.totalorder %s94, %s95
      %p107 = scmp.eq.s32.totalorder %s43, 1
      %p108 = por %p106, %p107
      %p110 = scmp.ne.s32.totalorder %s95, %s109
      %p111 = scmp.eq.s32.totalorder %s43, 0
      %p112 = por %p110, %p111
      %s114 = sadd.s32 %s113, 1
      %p117 = scmp.eq.s32.totalorder %s37, 1
      %p118 = scmp.ne.s32.totalorder %s113, %s115
      %p119 = scmp.eq.s32.totalorder %s37, 0
      %p120 = por %p118, %p119
      %p121 = scmp.ne.s32.totalorder %s113, %s115
      %p122 = scmp.eq.s32.totalorder %s42, 1
      %p123 = por %p121, %p122
      %p124 = scmp.ne.s32.totalorder %s115, %s116
      %p125 = scmp.eq.s32.totalorder %s42, 0
      %p126 = por %p124, %p125
      %p127 = scmp.ne.s32.totalorder %s115, %s116
      %p128 = scmp.eq.s32.totalorder %s43, 1
      %p129 = por %p127, %p128
      %p131 = scmp.ne.s32.totalorder %s116, %s130
      %p132 = scmp.eq.s32.totalorder %s43, 0
      %p133 = por %p131, %p132
      %s135 = sadd.s32 %s134, 1
      %p138 = scmp.eq.s32.totalorder %s37, 1
      %p139 = scmp.ne.s32.totalorder %s134, %s136
      %p140 = scmp.eq.s32.totalorder %s37, 0
      %p141 = por %p139, %p140
      %p142 = scmp.ne.s32.totalorder %s134, %s136
      %p143 = scmp.eq.s32.totalorder %s42, 1
      %p144 = por %p142, %p143
      %p145 = scmp.ne.s32.totalorder %s136, %s137
      %p146 = scmp.eq.s32.totalorder %s42, 0
      %p147 = por %p145, %p146
      %p148 = scmp.ne.s32.totalorder %s136, %s137
      %p149 = scmp.eq.s32.totalorder %s43, 1
      %p150 = por %p148, %p149
      %p152 = scmp.ne.s32.totalorder %s137, %s151
      %p153 = scmp.eq.s32.totalorder %s43, 0
      %p154 = por %p152, %p153
      %s156 = sadd.s32 %s155, 1
      %p159 = scmp.eq.s32.totalorder %s37, 1
      %p160 = scmp.ne.s32.totalorder %s155, %s157
      %p161 = scmp.eq.s32.totalorder %s37, 0
      %p162 = por %p160, %p161
      %p163 = scmp.ne.s32.totalorder %s155, %s157
      %p164 = scmp.eq.s32.totalorder %s42, 1
      %p165 = por %p163, %p164
      %p166 = scmp.ne.s32.totalorder %s157, %s158
      %p167 = scmp.eq.s32.totalorder %s42, 0
      %p168 = por %p166, %p167
      %p169 = scmp.ne.s32.totalorder %s157, %s158
      %p170 = scmp.eq.s32.totalorder %s43, 1
      %p171 = por %p169, %p170
      %p173 = scmp.ne.s32.totalorder %s158, %s172
      %p174 = scmp.eq.s32.totalorder %s43, 0
      %p175 = por %p173, %p174
      %s177 = sadd.s32 %s176, 1
      %p180 = scmp.eq.s32.totalorder %s37, 1
      %p181 = scmp.ne.s32.totalorder %s176, %s178
      %p182 = scmp.eq.s32.totalorder %s37, 0
      %p183 = por %p181, %p182
      %p184 = scmp.ne.s32.totalorder %s176, %s178
      %p185 = scmp.eq.s32.totalorder %s42, 1
      %p186 = por %p184, %p185
      %p187 = scmp.ne.s32.totalorder %s178, %s179
      %p188 = scmp.eq.s32.totalorder %s42, 0
      %p189 = por %p187, %p188
      %p190 = scmp.ne.s32.totalorder %s178, %s179
      %p191 = scmp.eq.s32.totalorder %s43, 1
      %p192 = por %p190, %p191
      %p194 = scmp.ne.s32.totalorder %s179, %s193
      %p195 = scmp.eq.s32.totalorder %s43, 0
      %p196 = por %p194, %p195
      %s198 = sadd.s32 %s197, 1
      %p201 = scmp.eq.s32.totalorder %s37, 1
      %p202 = scmp.ne.s32.totalorder %s197, %s199
      %p203 = scmp.eq.s32.totalorder %s37, 0
      %p204 = por %p202, %p203
      %p205 = scmp.ne.s32.totalorder %s197, %s199
      %p206 = scmp.eq.s32.totalorder %s42, 1
      %p207 = por %p205, %p206
      %p208 = scmp.ne.s32.totalorder %s199, %s200
      %p209 = scmp.eq.s32.totalorder %s42, 0
      %p210 = por %p208, %p209
      %p211 = scmp.ne.s32.totalorder %s199, %s200
      %p212 = scmp.eq.s32.totalorder %s43, 1
      %p213 = por %p211, %p212
      %p215 = scmp.ne.s32.totalorder %s200, %s214
      %p216 = scmp.eq.s32.totalorder %s43, 0
      %p217 = por %p215, %p216
      %s219 = sadd.s32 %s218, 1
      %p222 = scmp.eq.s32.totalorder %s37, 1
      %p223 = scmp.ne.s32.totalorder %s218, %s220
      %p224 = scmp.eq.s32.totalorder %s37, 0
      %p225 = por %p223, %p224
      %p226 = scmp.ne.s32.totalorder %s218, %s220
      %p227 = scmp.eq.s32.totalorder %s42, 1
      %p228 = por %p226, %p227
      %p229 = scmp.ne.s32.totalorder %s220, %s221
      %p230 = scmp.eq.s32.totalorder %s42, 0
      %p231 = por %p229, %p230
      %p232 = scmp.ne.s32.totalorder %s220, %s221
      %p233 = scmp.eq.s32.totalorder %s43, 1
      %p234 = por %p232, %p233
      %p236 = scmp.ne.s32.totalorder %s221, %s235
      %p237 = scmp.eq.s32.totalorder %s43, 0
      %p238 = por %p236, %p237
      %s240 = sadd.s32 %s239, 1
      %p243 = scmp.eq.s32.totalorder %s37, 1
      %p244 = scmp.ne.s32.totalorder %s239, %s241
      %p245 = scmp.eq.s32.totalorder %s37, 0
      %p246 = por %p244, %p245
      %p247 = scmp.ne.s32.totalorder %s239, %s241
      %p248 = scmp.eq.s32.totalorder %s42, 1
      %p249 = por %p247, %p248
      %p250 = scmp.ne.s32.totalorder %s241, %s242
      %p251 = scmp.eq.s32.totalorder %s42, 0
      %p252 = por %p250, %p251
      %p253 = scmp.ne.s32.totalorder %s241, %s242
      %p254 = scmp.eq.s32.totalorder %s43, 1
      %p255 = por %p253, %p254
      %p257 = scmp.ne.s32.totalorder %s242, %s256
      %p258 = scmp.eq.s32.totalorder %s43, 0
      %p259 = por %p257, %p258
      %s261 = sadd.s32 %s260, 1
      %p264 = scmp.eq.s32.totalorder %s37, 1
      %p265 = scmp.ne.s32.totalorder %s260, %s262
      %p266 = scmp.eq.s32.totalorder %s37, 0
      %p267 = por %p265, %p266
      %p268 = scmp.ne.s32.totalorder %s260, %s262
      %p269 = scmp.eq.s32.totalorder %s42, 1
      %p270 = por %p268, %p269
      %p271 = scmp.ne.s32.totalorder %s262, %s263
      %p272 = scmp.eq.s32.totalorder %s42, 0
      %p273 = por %p271, %p272
      %p274 = scmp.ne.s32.totalorder %s262, %s263
      %p275 = scmp.eq.s32.totalorder %s43, 1
      %p276 = por %p274, %p275
      %p278 = scmp.ne.s32.totalorder %s263, %s277
      %p279 = scmp.eq.s32.totalorder %s43, 0
      %p280 = por %p278, %p279
      %s282 = sadd.s32 %s281, 1
      %p285 = scmp.eq.s32.totalorder %s37, 1
      %p286 = scmp.ne.s32.totalorder %s281, %s283
      %p287 = scmp.eq.s32.totalorder %s37, 0
      %p288 = por %p286, %p287
      %p289 = scmp.ne.s32.totalorder %s281, %s283
      %p290 = scmp.eq.s32.totalorder %s42, 1
      %p291 = por %p289, %p290
      %p292 = scmp.ne.s32.totalorder %s283, %s284
      %p293 = scmp.eq.s32.totalorder %s42, 0
      %p294 = por %p292, %p293
      %p295 = scmp.ne.s32.totalorder %s283, %s284
      %p296 = scmp.eq.s32.totalorder %s43, 1
      %p297 = por %p295, %p296
      %p299 = scmp.ne.s32.totalorder %s284, %s298
      %p300 = scmp.eq.s32.totalorder %s43, 0
      %p301 = por %p299, %p300
      %s303 = sadd.s32 %s302, 1
      %p306 = scmp.eq.s32.totalorder %s37, 1
      %p307 = scmp.ne.s32.totalorder %s302, %s304
      %p308 = scmp.eq.s32.totalorder %s37, 0
      %p309 = por %p307, %p308
      %p310 = scmp.ne.s32.totalorder %s302, %s304
      %p311 = scmp.eq.s32.totalorder %s42, 1
      %p312 = por %p310, %p311
      %p313 = scmp.ne.s32.totalorder %s304, %s305
      %p314 = scmp.eq.s32.totalorder %s42, 0
      %p315 = por %p313, %p314
      %p316 = scmp.ne.s32.totalorder %s304, %s305
      %p317 = scmp.eq.s32.totalorder %s43, 1
      %p318 = por %p316, %p317
      %p320 = scmp.ne.s32.totalorder %s305, %s319
      %p321 = scmp.eq.s32.totalorder %s43, 0
      %p322 = por %p320, %p321
      %s324 = sadd.s32 %s323, 1
      %p327 = scmp.eq.s32.totalorder %s37, 1
      %p328 = scmp.ne.s32.totalorder %s323, %s325
      %p329 = scmp.eq.s32.totalorder %s37, 0
      %p330 = por %p328, %p329
      %p331 = scmp.ne.s32.totalorder %s323, %s325
      %p332 = scmp.eq.s32.totalorder %s42, 1
      %p333 = por %p331, %p332
      %p334 = scmp.ne.s32.totalorder %s325, %s326
      %p335 = scmp.eq.s32.totalorder %s42, 0
      %p336 = por %p334, %p335
      %p337 = scmp.ne.s32.totalorder %s325, %s326
      %p338 = scmp.eq.s32.totalorder %s43, 1
      %p339 = por %p337, %p338
      %p341 = scmp.ne.s32.totalorder %s326, %s340
      %p342 = scmp.eq.s32.totalorder %s43, 0
      %p343 = por %p341, %p342
      %s345 = sadd.s32 %s344, 1
      %p348 = scmp.eq.s32.totalorder %s37, 1
      %p349 = scmp.ne.s32.totalorder %s344, %s346
      %p350 = scmp.eq.s32.totalorder %s37, 0
      %p351 = por %p349, %p350
      %p352 = scmp.ne.s32.totalorder %s344, %s346
      %p353 = scmp.eq.s32.totalorder %s42, 1
      %p354 = por %p352, %p353
      %p355 = scmp.ne.s32.totalorder %s346, %s347
      %p356 = scmp.eq.s32.totalorder %s42, 0
      %p357 = por %p355, %p356
      %p358 = scmp.ne.s32.totalorder %s346, %s347
      %p359 = scmp.eq.s32.totalorder %s43, 1
      %p360 = por %p358, %p359
      %p362 = scmp.ne.s32.totalorder %s347, %s361
      %p363 = scmp.eq.s32.totalorder %s43, 0
      %p364 = por %p362, %p363
      %s366 = sadd.s32 %s365, 1
      %p369 = scmp.eq.s32.totalorder %s37, 1
      %p370 = scmp.ne.s32.totalorder %s365, %s367
      %p371 = scmp.eq.s32.totalorder %s37, 0
      %p372 = por %p370, %p371
      %p373 = scmp.ne.s32.totalorder %s365, %s367
      %p374 = scmp.eq.s32.totalorder %s42, 1
      %p375 = por %p373, %p374
      %p376 = scmp.ne.s32.totalorder %s367, %s368
      %p377 = scmp.eq.s32.totalorder %s42, 0
      %p378 = por %p376, %p377
      %p379 = scmp.ne.s32.totalorder %s367, %s368
      %p380 = scmp.eq.s32.totalorder %s43, 1
      %p381 = por %p379, %p380
      %p383 = scmp.ne.s32.totalorder %s368, %s382
      %p384 = scmp.eq.s32.totalorder %s43, 0
      %p385 = por %p383, %p384
      %s387 = sadd.s32 %s386, 1
      %p390 = scmp.eq.s32.totalorder %s37, 1
      %p391 = scmp.ne.s32.totalorder %s386, %s388
      %p392 = scmp.eq.s32.totalorder %s37, 0
      %p393 = por %p391, %p392
      %p394 = scmp.ne.s32.totalorder %s386, %s388
      %p395 = scmp.eq.s32.totalorder %s42, 1
      %p396 = por %p394, %p395
      %p397 = scmp.ne.s32.totalorder %s388, %s389
      %p398 = scmp.eq.s32.totalorder %s42, 0
      %p399 = por %p397, %p398
      %p400 = scmp.ne.s32.totalorder %s388, %s389
      %p401 = scmp.eq.s32.totalorder %s43, 1
      %p402 = por %p400, %p401
      %p404 = scmp.ne.s32.totalorder %s389, %s403
      %p405 = scmp.eq.s32.totalorder %s43, 0
      %p406 = por %p404, %p405
      %s408 = sadd.s32 %s407, 1
      %p411 = scmp.eq.s32.totalorder %s37, 1
      %p412 = scmp.ne.s32.totalorder %s407, %s409
      %p413 = scmp.eq.s32.totalorder %s37, 0
      %p414 = por %p412, %p413
      %p415 = scmp.ne.s32.totalorder %s407, %s409
      %p416 = scmp.eq.s32.totalorder %s42, 1
      %p417 = por %p415, %p416
      %p418 = scmp.ne.s32.totalorder %s409, %s410
      %p419 = scmp.eq.s32.totalorder %s42, 0
      %p420 = por %p418, %p419
      %p421 = scmp.ne.s32.totalorder %s409, %s410
      %p422 = scmp.eq.s32.totalorder %s43, 1
      %p423 = por %p421, %p422
      %p425 = scmp.ne.s32.totalorder %s410, %s424
      %p426 = scmp.eq.s32.totalorder %s43, 0
      %p427 = por %p425, %p426
      %s429 = sadd.s32 %s428, 1
      %p432 = scmp.eq.s32.totalorder %s37, 1
      %p433 = scmp.ne.s32.totalorder %s428, %s430
      %p434 = scmp.eq.s32.totalorder %s37, 0
      %p435 = por %p433, %p434
      %p436 = scmp.ne.s32.totalorder %s428, %s430
      %p437 = scmp.eq.s32.totalorder %s42, 1
      %p438 = por %p436, %p437
      %p439 = scmp.ne.s32.totalorder %s430, %s431
      %p440 = scmp.eq.s32.totalorder %s42, 0
      %p441 = por %p439, %p440
      %p442 = scmp.ne.s32.totalorder %s430, %s431
      %p443 = scmp.eq.s32.totalorder %s43, 1
      %p444 = por %p442, %p443
      %p446 = scmp.ne.s32.totalorder %s431, %s445
      %p447 = scmp.eq.s32.totalorder %s43, 0
      %p448 = por %p446, %p447
      %s450 = sadd.s32 %s449, 1
      %p453 = scmp.eq.s32.totalorder %s37, 1
      %p454 = scmp.ne.s32.totalorder %s449, %s451
      %p455 = scmp.eq.s32.totalorder %s37, 0
      %p456 = por %p454, %p455
      %p457 = scmp.ne.s32.totalorder %s449, %s451
      %p458 = scmp.eq.s32.totalorder %s42, 1
      %p459 = por %p457, %p458
      %p460 = scmp.ne.s32.totalorder %s451, %s452
      %p461 = scmp.eq.s32.totalorder %s42, 0
      %p462 = por %p460, %p461
      %p463 = scmp.ne.s32.totalorder %s451, %s452
      %p464 = scmp.eq.s32.totalorder %s43, 1
      %p465 = por %p463, %p464
      %p467 = scmp.ne.s32.totalorder %s452, %s466
      %p468 = scmp.eq.s32.totalorder %s43, 0
      %p469 = por %p467, %p468
      %s471 = sadd.s32 %s470, 1
      %p474 = scmp.eq.s32.totalorder %s37, 1
      %p475 = scmp.ne.s32.totalorder %s470, %s472
      %p476 = scmp.eq.s32.totalorder %s37, 0
      %p477 = por %p475, %p476
      %p478 = scmp.ne.s32.totalorder %s470, %s472
      %p479 = scmp.eq.s32.totalorder %s42, 1
      %p480 = por %p478, %p479
      %p481 = scmp.ne.s32.totalorder %s472, %s473
      %p482 = scmp.eq.s32.totalorder %s42, 0
      %p483 = por %p481, %p482
      %p484 = scmp.ne.s32.totalorder %s472, %s473
      %p485 = scmp.eq.s32.totalorder %s43, 1
      %p486 = por %p484, %p485
      %p488 = scmp.ne.s32.totalorder %s473, %s487
      %p489 = scmp.eq.s32.totalorder %s43, 0
      %p490 = por %p488, %p489
      %s492 = sadd.s32 %s491, 1
      %p495 = scmp.eq.s32.totalorder %s37, 1
      %p496 = scmp.ne.s32.totalorder %s491, %s493
      %p497 = scmp.eq.s32.totalorder %s37, 0
      %p498 = por %p496, %p497
      %p499 = scmp.ne.s32.totalorder %s491, %s493
      %p500 = scmp.eq.s32.totalorder %s42, 1
      %p501 = por %p499, %p500
      %p502 = scmp.ne.s32.totalorder %s493, %s494
      %p503 = scmp.eq.s32.totalorder %s42, 0
      %p504 = por %p502, %p503
      %p505 = scmp.ne.s32.totalorder %s493, %s494
      %p506 = scmp.eq.s32.totalorder %s43, 1
      %p507 = por %p505, %p506
      %p509 = scmp.ne.s32.totalorder %s494, %s508
      %p510 = scmp.eq.s32.totalorder %s43, 0
      %p511 = por %p509, %p510
      %s513 = sadd.s32 %s512, 1
      %p516 = scmp.eq.s32.totalorder %s37, 1
      %p517 = scmp.ne.s32.totalorder %s512, %s514
      %p518 = scmp.eq.s32.totalorder %s37, 0
      %p519 = por %p517, %p518
      %p520 = scmp.ne.s32.totalorder %s512, %s514
      %p521 = scmp.eq.s32.totalorder %s42, 1
      %p522 = por %p520, %p521
      %p523 = scmp.ne.s32.totalorder %s514, %s515
      %p524 = scmp.eq.s32.totalorder %s42, 0
      %p525 = por %p523, %p524
      %p526 = scmp.ne.s32.totalorder %s514, %s515
      %p527 = scmp.eq.s32.totalorder %s43, 1
      %p528 = por %p526, %p527
      %p530 = scmp.ne.s32.totalorder %s515, %s529
      %p531 = scmp.eq.s32.totalorder %s43, 0
      %p532 = por %p530, %p531
      %s534 = sadd.s32 %s533, 1
      %p537 = scmp.eq.s32.totalorder %s37, 1
      %p538 = scmp.ne.s32.totalorder %s533, %s535
      %p539 = scmp.eq.s32.totalorder %s37, 0
      %p540 = por %p538, %p539
      %p541 = scmp.ne.s32.totalorder %s533, %s535
      %p542 = scmp.eq.s32.totalorder %s42, 1
      %p543 = por %p541, %p542
      %p544 = scmp.ne.s32.totalorder %s535, %s536
      %p545 = scmp.eq.s32.totalorder %s42, 0
      %p546 = por %p544, %p545
      %p547 = scmp.ne.s32.totalorder %s535, %s536
      %p548 = scmp.eq.s32.totalorder %s43, 1
      %p549 = por %p547, %p548
      %p551 = scmp.ne.s32.totalorder %s536, %s550
      %p552 = scmp.eq.s32.totalorder %s43, 0
      %p553 = por %p551, %p552
      %s555 = sadd.s32 %s554, 1
      %p558 = scmp.eq.s32.totalorder %s37, 1
      %p559 = scmp.ne.s32.totalorder %s554, %s556
      %p560 = scmp.eq.s32.totalorder %s37, 0
      %p561 = por %p559, %p560
      %p562 = scmp.ne.s32.totalorder %s554, %s556
      %p563 = scmp.eq.s32.totalorder %s42, 1
      %p564 = por %p562, %p563
      %p565 = scmp.ne.s32.totalorder %s556, %s557
      %p566 = scmp.eq.s32.totalorder %s42, 0
      %p567 = por %p565, %p566
      %p568 = scmp.ne.s32.totalorder %s556, %s557
      %p569 = scmp.eq.s32.totalorder %s43, 1
      %p570 = por %p568, %p569
      %p572 = scmp.ne.s32.totalorder %s557, %s571
      %p573 = scmp.eq.s32.totalorder %s43, 0
      %p574 = por %p572, %p573
      %s575 = ssub.s32 %s37, %s44
      %p576 = scmp.eq.s32.totalorder %s575, 0
      %s578 = sadd.s32 %s577, 1
      %s579 = scalar_select %p576, %s577, %s578
      %p582 = pneg %p576
      %p583 = scmp.eq.s32.totalorder %s37, 1
      %p584 = por %p582, %p583
      %p585 = scmp.ne.s32.totalorder %s577, %s580
      %p586 = scmp.eq.s32.totalorder %s37, 0
      %p587 = por %p585, %p586
      %p588 = scmp.ne.s32.totalorder %s577, %s580
      %p589 = scmp.eq.s32.totalorder %s42, 1
      %p590 = por %p588, %p589
      %p591 = scmp.ne.s32.totalorder %s580, %s581
      %p592 = scmp.eq.s32.totalorder %s42, 0
      %p593 = por %p591, %p592
      %p594 = scmp.ne.s32.totalorder %s580, %s581
      %p595 = scmp.eq.s32.totalorder %s43, 1
      %p596 = por %p594, %p595
      %p598 = scmp.ne.s32.totalorder %s581, %s597
      %p599 = scmp.eq.s32.totalorder %s43, 0
      %p600 = por %p598, %p599
      %p601 = scmp.le.s32.totalorder 1, %s37
      %p602 = scmp.lt.s32.totalorder %s37, 3
      %p603 = pnand %p601, %p602
      %p604 = pneg %p603
      // Predicated region
      $region9: #{tpu_custom_call.1} parent=5 // pred_check
        _
      $region10: #{tpu_custom_call.1} parent=5 // pred_check_branch
        %606 = sbr.rel (%p603) target = $region12
      $region11: #{tpu_custom_call.1} parent=5 // pred_region
        %s607 = ssub.s32 %s37, 1
        // Predicated region
        $region13: #{tpu_custom_call.1} parent=11 // pred_check
          %p608 = pneg %p84
        $region14: #{tpu_custom_call.1} parent=11 // pred_check_branch
          %610 = sbr.rel (%p608) target = $region16
        $region15: #{tpu_custom_call.1} parent=11 // pred_region
          _
        $region16: #{tpu_custom_call.1} parent=11 // pred_fallthru
          _
        // Predicated region
        $region17: #{tpu_custom_call.1} parent=11 // pred_check
          %p611 = pneg %p105
        $region18: #{tpu_custom_call.1} parent=11 // pred_check_branch
          %613 = sbr.rel (%p611) target = $region20
        $region19: #{tpu_custom_call.1} parent=11 // pred_region
          _
        $region20: #{tpu_custom_call.1} parent=11 // pred_fallthru
          _
        // Predicated region
        $region21: #{tpu_custom_call.1} parent=11 // pred_check
          %p614 = pneg %p126
        $region22: #{tpu_custom_call.1} parent=11 // pred_check_branch
          %616 = sbr.rel (%p614) target = $region24
        $region23: #{tpu_custom_call.1} parent=11 // pred_region
          _
        $region24: #{tpu_custom_call.1} parent=11 // pred_fallthru
          _
        // Predicated region
        $region25: #{tpu_custom_call.1} parent=11 // pred_check
          %p617 = pneg %p147
        $region26: #{tpu_custom_call.1} parent=11 // pred_check_branch
          %619 = sbr.rel (%p617) target = $region28
        $region27: #{tpu_custom_call.1} parent=11 // pred_region
          %s621 = ssub.s32 32, 32
          %622 = vsyncadd [#allocation3], %s621
          %s624 = sshll.u32 [#allocation2], 4
          %s625 = int_to_ptr.vmem [resolvable:$true] %s624
          %627 = dma.hbm_to_vmem [thread:$0]  %s4, 32, %s625, [#allocation3]
        $region28: #{tpu_custom_call.1} parent=11 // pred_fallthru
          _
        // Predicated region
        $region29: #{tpu_custom_call.1} parent=11 // pred_check
          %p628 = pneg %p168
        $region30: #{tpu_custom_call.1} parent=11 // pred_check_branch
          %630 = sbr.rel (%p628) target = $region32
        $region31: #{tpu_custom_call.1} parent=11 // pred_region
          _
        $region32: #{tpu_custom_call.1} parent=11 // pred_fallthru
          _
        // Predicated region
        $region33: #{tpu_custom_call.1} parent=11 // pred_check
          %p631 = pneg %p189
        $region34: #{tpu_custom_call.1} parent=11 // pred_check_branch
          %633 = sbr.rel (%p631) target = $region36
        $region35: #{tpu_custom_call.1} parent=11 // pred_region
          %s635 = ssub.s32 32, 32
          %636 = vsyncadd [#allocation5], %s635
          %s638 = sshll.u32 [#allocation4], 4
          %s639 = int_to_ptr.vmem [resolvable:$true] %s638
          %641 = dma.hbm_to_vmem [thread:$0]  %s6, 32, %s639, [#allocation5]
        $region36: #{tpu_custom_call.1} parent=11 // pred_fallthru
          _
        // Predicated region
        $region37: #{tpu_custom_call.1} parent=11 // pred_check
          %p642 = pneg %p210
        $region38: #{tpu_custom_call.1} parent=11 // pred_check_branch
          %644 = sbr.rel (%p642) target = $region40
        $region39: #{tpu_custom_call.1} parent=11 // pred_region
          _
        $region40: #{tpu_custom_call.1} parent=11 // pred_fallthru
          _
        // Predicated region
        $region41: #{tpu_custom_call.1} parent=11 // pred_check
          %p645 = pneg %p231
        $region42: #{tpu_custom_call.1} parent=11 // pred_check_branch
          %647 = sbr.rel (%p645) target = $region44
        $region43: #{tpu_custom_call.1} parent=11 // pred_region
          %s649 = ssub.s32 32, 32
          %650 = vsyncadd [#allocation5], %s649
          %s652 = sshll.u32 [#allocation6], 4
          %s653 = int_to_ptr.vmem [resolvable:$true] %s652
          %655 = dma.hbm_to_vmem [thread:$0]  %s8, 32, %s653, [#allocation5]
        $region44: #{tpu_custom_call.1} parent=11 // pred_fallthru
          _
        // Predicated region
        $region45: #{tpu_custom_call.1} parent=11 // pred_check
          %p656 = pneg %p252
        $region46: #{tpu_custom_call.1} parent=11 // pred_check_branch
          %658 = sbr.rel (%p656) target = $region48
        $region47: #{tpu_custom_call.1} parent=11 // pred_region
          %s660 = ssub.s32 1024, 1024
          %661 = vsyncadd [#allocation8], %s660
          %s662 = sshll.u32 [#allocation7], 4
          %s663 = int_to_ptr.vmem [resolvable:$true] %s662
          %668 = dma.hbm_to_vmem [thread:$0]  %s9, 1024, %s663, [#allocation8], 128, 128, 8
        $region48: #{tpu_custom_call.1} parent=11 // pred_fallthru
          _
        // Predicated region
        $region49: #{tpu_custom_call.1} parent=11 // pred_check
          %p669 = pneg %p273
        $region50: #{tpu_custom_call.1} parent=11 // pred_check_branch
          %671 = sbr.rel (%p669) target = $region52
        $region51: #{tpu_custom_call.1} parent=11 // pred_region
          _
        $region52: #{tpu_custom_call.1} parent=11 // pred_fallthru
          _
        // Predicated region
        $region53: #{tpu_custom_call.1} parent=11 // pred_check
          %p672 = pneg %p294
        $region54: #{tpu_custom_call.1} parent=11 // pred_check_branch
          %674 = sbr.rel (%p672) target = $region56
        $region55: #{tpu_custom_call.1} parent=11 // pred_region
          %s676 = ssub.s32 32, 32
          %677 = vsyncadd [#allocation8], %s676
          %s679 = sshll.u32 [#allocation9], 4
          %s680 = int_to_ptr.vmem [resolvable:$true] %s679
          %682 = dma.hbm_to_vmem [thread:$0]  %s11, 32, %s680, [#allocation8]
        $region56: #{tpu_custom_call.1} parent=11 // pred_fallthru
          _
        // Predicated region
        $region57: #{tpu_custom_call.1} parent=11 // pred_check
          %p683 = pneg %p315
        $region58: #{tpu_custom_call.1} parent=11 // pred_check_branch
          %685 = sbr.rel (%p683) target = $region60
        $region59: #{tpu_custom_call.1} parent=11 // pred_region
          _
        $region60: #{tpu_custom_call.1} parent=11 // pred_fallthru
          _
        // Predicated region
        $region61: #{tpu_custom_call.1} parent=11 // pred_check
          %p686 = pneg %p336
        $region62: #{tpu_custom_call.1} parent=11 // pred_check_branch
          %688 = sbr.rel (%p686) target = $region64
        $region63: #{tpu_custom_call.1} parent=11 // pred_region
          %s690 = ssub.s32 32, 32
          %691 = vsyncadd [#allocation11], %s690
          %s693 = sshll.u32 [#allocation10], 4
          %s694 = int_to_ptr.vmem [resolvable:$true] %s693
          %696 = dma.hbm_to_vmem [thread:$0]  %s13, 32, %s694, [#allocation11]
        $region64: #{tpu_custom_call.1} parent=11 // pred_fallthru
          _
        // Predicated region
        $region65: #{tpu_custom_call.1} parent=11 // pred_check
          %p697 = pneg %p357
        $region66: #{tpu_custom_call.1} parent=11 // pred_check_branch
          %699 = sbr.rel (%p697) target = $region68
        $region67: #{tpu_custom_call.1} parent=11 // pred_region
          %s701 = ssub.s32 4096, 4096
          %702 = vsyncadd [#allocation11], %s701
          %s703 = sshll.u32 [#allocation12], 4
          %s704 = int_to_ptr.vmem [resolvable:$true] %s703
          %709 = dma.hbm_to_vmem [thread:$0]  %s14, 4096, %s704, [#allocation11], 128, 128, 8
        $region68: #{tpu_custom_call.1} parent=11 // pred_fallthru
          _
        // Predicated region
        $region69: #{tpu_custom_call.1} parent=11 // pred_check
          %p710 = pneg %p378
        $region70: #{tpu_custom_call.1} parent=11 // pred_check_branch
          %712 = sbr.rel (%p710) target = $region72
        $region71: #{tpu_custom_call.1} parent=11 // pred_region
          %s714 = ssub.s32 32, 32
          %715 = vsyncadd [#allocation14], %s714
          %s717 = sshll.u32 [#allocation13], 4
          %s718 = int_to_ptr.vmem [resolvable:$true] %s717
          %720 = dma.hbm_to_vmem [thread:$0]  %s15, 32, %s718, [#allocation14]
        $region72: #{tpu_custom_call.1} parent=11 // pred_fallthru
          _
        // Predicated region
        $region73: #{tpu_custom_call.1} parent=11 // pred_check
          %p721 = pneg %p399
        $region74: #{tpu_custom_call.1} parent=11 // pred_check_branch
          %723 = sbr.rel (%p721) target = $region76
        $region75: #{tpu_custom_call.1} parent=11 // pred_region
          %s725 = ssub.s32 4096, 4096
          %726 = vsyncadd [#allocation14], %s725
          %s727 = sshll.u32 [#allocation15], 4
          %s728 = int_to_ptr.vmem [resolvable:$true] %s727
          %733 = dma.hbm_to_vmem [thread:$0]  %s16, 4096, %s728, [#allocation14], 128, 128, 8
        $region76: #{tpu_custom_call.1} parent=11 // pred_fallthru
          _
        // Predicated region
        $region77: #{tpu_custom_call.1} parent=11 // pred_check
          %p734 = pneg %p420
        $region78: #{tpu_custom_call.1} parent=11 // pred_check_branch
          %736 = sbr.rel (%p734) target = $region80
        $region79: #{tpu_custom_call.1} parent=11 // pred_region
          %s738 = ssub.s32 32, 32
          %739 = vsyncadd [#allocation17], %s738
          %s741 = sshll.u32 [#allocation16], 4
          %s742 = int_to_ptr.vmem [resolvable:$true] %s741
          %744 = dma.hbm_to_vmem [thread:$0]  %s17, 32, %s742, [#allocation17]
        $region80: #{tpu_custom_call.1} parent=11 // pred_fallthru
          _
        // Predicated region
        $region81: #{tpu_custom_call.1} parent=11 // pred_check
          %p745 = pneg %p441
        $region82: #{tpu_custom_call.1} parent=11 // pred_check_branch
          %747 = sbr.rel (%p745) target = $region84
        $region83: #{tpu_custom_call.1} parent=11 // pred_region
          _
        $region84: #{tpu_custom_call.1} parent=11 // pred_fallthru
          _
        // Predicated region
        $region85: #{tpu_custom_call.1} parent=11 // pred_check
          %p748 = pneg %p462
        $region86: #{tpu_custom_call.1} parent=11 // pred_check_branch
          %750 = sbr.rel (%p748) target = $region88
        $region87: #{tpu_custom_call.1} parent=11 // pred_region
          _
        $region88: #{tpu_custom_call.1} parent=11 // pred_fallthru
          _
        // Predicated region
        $region89: #{tpu_custom_call.1} parent=11 // pred_check
          %p751 = pneg %p483
        $region90: #{tpu_custom_call.1} parent=11 // pred_check_branch
          %753 = sbr.rel (%p751) target = $region92
        $region91: #{tpu_custom_call.1} parent=11 // pred_region
          _
        $region92: #{tpu_custom_call.1} parent=11 // pred_fallthru
          _
        // Predicated region
        $region93: #{tpu_custom_call.1} parent=11 // pred_check
          %p754 = pneg %p504
        $region94: #{tpu_custom_call.1} parent=11 // pred_check_branch
          %756 = sbr.rel (%p754) target = $region96
        $region95: #{tpu_custom_call.1} parent=11 // pred_region
          _
        $region96: #{tpu_custom_call.1} parent=11 // pred_fallthru
          _
        // Predicated region
        $region97: #{tpu_custom_call.1} parent=11 // pred_check
          %p757 = pneg %p525
        $region98: #{tpu_custom_call.1} parent=11 // pred_check_branch
          %759 = sbr.rel (%p757) target = $region100
        $region99: #{tpu_custom_call.1} parent=11 // pred_region
          _
        $region100: #{tpu_custom_call.1} parent=11 // pred_fallthru
          _
        // Predicated region
        $region101: #{tpu_custom_call.1} parent=11 // pred_check
          %p760 = pneg %p546
        $region102: #{tpu_custom_call.1} parent=11 // pred_check_branch
          %762 = sbr.rel (%p760) target = $region104
        $region103: #{tpu_custom_call.1} parent=11 // pred_region
          _
        $region104: #{tpu_custom_call.1} parent=11 // pred_fallthru
          _
        // Predicated region
        $region105: #{tpu_custom_call.1} parent=11 // pred_check
          %p763 = pneg %p567
        $region106: #{tpu_custom_call.1} parent=11 // pred_check_branch
          %765 = sbr.rel (%p763) target = $region108
        $region107: #{tpu_custom_call.1} parent=11 // pred_region
          _
        $region108: #{tpu_custom_call.1} parent=11 // pred_fallthru
          _
      $region12: #{tpu_custom_call.1} parent=5 // pred_fallthru
        _
      %p766 = scmp.lt.s32.totalorder %s37, 2
      // Predicated region
      $region109: #{tpu_custom_call.1} parent=5 // pred_check
        %p767 = pneg %p766
      $region110: #{tpu_custom_call.1} parent=5 // pred_check_branch
        %769 = sbr.rel (%p767) target = $region112
      $region111: #{tpu_custom_call.1} parent=5 // pred_region
        // Predicated region
        $region113: #{tpu_custom_call.1} parent=111 // pred_check
          %p770 = pneg %p57
        $region114: #{tpu_custom_call.1} parent=111 // pred_check_branch
          %772 = sbr.rel (%p770) target = $region116
        $region115: #{tpu_custom_call.1} parent=111 // pred_region
          %s773 = smul.u32 64, %s37
          %p774 = scmp.lt.s32.totalorder %s773, 127
          %s775 = scalar_select %p774, %s773, 127
          %s776 = smul.addr %s775, 8
          %s777 = scalar_lea.vmem %s0, %s776
          %s778 = smul.u32 64, %s37
        $region116: #{tpu_custom_call.1} parent=111 // pred_fallthru
          _
      $region112: #{tpu_custom_call.1} parent=5 // pred_fallthru
        _
      %p779 = scmp.le.s32.totalorder 1, %s37
      %p780 = scmp.lt.s32.totalorder %s37, 3
      %p781 = pnand %p779, %p780
      %p782 = pneg %p781
      // Predicated region
      $region117: #{tpu_custom_call.1} parent=5 // pred_check
        _
      $region118: #{tpu_custom_call.1} parent=5 // pred_check_branch
        %784 = sbr.rel (%p781) target = $region120
      $region119: #{tpu_custom_call.1} parent=5 // pred_region
        %s785 = ssub.s32 %s37, 1
        // Predicated region
        $region121: #{tpu_custom_call.1} parent=119 // pred_check
          %p786 = pneg %p147
        $region122: #{tpu_custom_call.1} parent=119 // pred_check_branch
          %788 = sbr.rel (%p786) target = $region124
        $region123: #{tpu_custom_call.1} parent=119 // pred_region
          %789 = dma.done [#allocation3], 32
        $region124: #{tpu_custom_call.1} parent=119 // pred_fallthru
          _
        // Predicated region
        $region125: #{tpu_custom_call.1} parent=119 // pred_check
          %p790 = pneg %p189
        $region126: #{tpu_custom_call.1} parent=119 // pred_check_branch
          %792 = sbr.rel (%p790) target = $region128
        $region127: #{tpu_custom_call.1} parent=119 // pred_region
          %793 = dma.done [#allocation5], 32
        $region128: #{tpu_custom_call.1} parent=119 // pred_fallthru
          _
        // Predicated region
        $region129: #{tpu_custom_call.1} parent=119 // pred_check
          %p794 = pneg %p231
        $region130: #{tpu_custom_call.1} parent=119 // pred_check_branch
          %796 = sbr.rel (%p794) target = $region132
        $region131: #{tpu_custom_call.1} parent=119 // pred_region
          %797 = dma.done [#allocation5], 32
        $region132: #{tpu_custom_call.1} parent=119 // pred_fallthru
          _
        // Predicated region
        $region133: #{tpu_custom_call.1} parent=119 // pred_check
          %p798 = pneg %p252
        $region134: #{tpu_custom_call.1} parent=119 // pred_check_branch
          %800 = sbr.rel (%p798) target = $region136
        $region135: #{tpu_custom_call.1} parent=119 // pred_region
          %801 = dma.done [#allocation8], 1024
        $region136: #{tpu_custom_call.1} parent=119 // pred_fallthru
          _
        // Predicated region
        $region137: #{tpu_custom_call.1} parent=119 // pred_check
          %p802 = pneg %p294
        $region138: #{tpu_custom_call.1} parent=119 // pred_check_branch
          %804 = sbr.rel (%p802) target = $region140
        $region139: #{tpu_custom_call.1} parent=119 // pred_region
          %805 = dma.done [#allocation8], 32
        $region140: #{tpu_custom_call.1} parent=119 // pred_fallthru
          _
        // Predicated region
        $region141: #{tpu_custom_call.1} parent=119 // pred_check
          %p806 = pneg %p336
        $region142: #{tpu_custom_call.1} parent=119 // pred_check_branch
          %808 = sbr.rel (%p806) target = $region144
        $region143: #{tpu_custom_call.1} parent=119 // pred_region
          %809 = dma.done [#allocation11], 32
        $region144: #{tpu_custom_call.1} parent=119 // pred_fallthru
          _
        // Predicated region
        $region145: #{tpu_custom_call.1} parent=119 // pred_check
          %p810 = pneg %p357
        $region146: #{tpu_custom_call.1} parent=119 // pred_check_branch
          %812 = sbr.rel (%p810) target = $region148
        $region147: #{tpu_custom_call.1} parent=119 // pred_region
          %813 = dma.done [#allocation11], 4096
        $region148: #{tpu_custom_call.1} parent=119 // pred_fallthru
          _
        // Predicated region
        $region149: #{tpu_custom_call.1} parent=119 // pred_check
          %p814 = pneg %p378
        $region150: #{tpu_custom_call.1} parent=119 // pred_check_branch
          %816 = sbr.rel (%p814) target = $region152
        $region151: #{tpu_custom_call.1} parent=119 // pred_region
          %817 = dma.done [#allocation14], 32
        $region152: #{tpu_custom_call.1} parent=119 // pred_fallthru
          _
        // Predicated region
        $region153: #{tpu_custom_call.1} parent=119 // pred_check
          %p818 = pneg %p399
        $region154: #{tpu_custom_call.1} parent=119 // pred_check_branch
          %820 = sbr.rel (%p818) target = $region156
        $region155: #{tpu_custom_call.1} parent=119 // pred_region
          %821 = dma.done [#allocation14], 4096
        $region156: #{tpu_custom_call.1} parent=119 // pred_fallthru
          _
        // Predicated region
        $region157: #{tpu_custom_call.1} parent=119 // pred_check
          %p822 = pneg %p420
        $region158: #{tpu_custom_call.1} parent=119 // pred_check_branch
          %824 = sbr.rel (%p822) target = $region160
        $region159: #{tpu_custom_call.1} parent=119 // pred_region
          %825 = dma.done [#allocation17], 32
        $region160: #{tpu_custom_call.1} parent=119 // pred_fallthru
          _
        %s826 = smul.u32 64, %s42
        %p827 = scmp.lt.s32.totalorder %s826, 127
        %s828 = scalar_select %p827, %s826, 127
        %s829 = smul.addr %s828, 8
        %s830 = scalar_lea.vmem %s0, %s829
        %p831 = pneg %p63
        %p832 = pneg %p60
        %p833 = pneg %p84
        %p834 = pneg %p81
        %p835 = pneg %p105
        %p836 = pneg %p102
        %p837 = pneg %p126
        %p838 = pneg %p123
        %p839 = pneg %p147
        %p840 = pneg %p144
        %p841 = pneg %p168
        %p842 = pneg %p165
        %p843 = pneg %p189
        %p844 = pneg %p186
        %p845 = pneg %p210
        %p846 = pneg %p207
        %p847 = pneg %p231
        %p848 = pneg %p228
        %p849 = pneg %p252
        %p850 = pneg %p249
        %p851 = pneg %p273
        %p852 = pneg %p270
        %p853 = pneg %p294
        %p854 = pneg %p291
        %p855 = pneg %p315
        %p856 = pneg %p312
        %p857 = pneg %p336
        %p858 = pneg %p333
        %p859 = pneg %p357
        %p860 = pneg %p354
        %p861 = pneg %p378
        %p862 = pneg %p375
        %p863 = pneg %p399
        %p864 = pneg %p396
        %p865 = pneg %p420
        %p866 = pneg %p417
        %p867 = pneg %p441
        %p868 = pneg %p438
        %p869 = pneg %p462
        %p870 = pneg %p459
        %p871 = pneg %p483
        %p872 = pneg %p480
        %p873 = pneg %p504
        %p874 = pneg %p501
        %p875 = pneg %p525
        %p876 = pneg %p522
        %p877 = pneg %p546
        %p878 = pneg %p543
        %p879 = pneg %p567
        %p880 = pneg %p564
        %p881 = pneg %p593
        %p882 = pneg %p590
        %s883 = smul.u32 64, %s42
        %p884 = scmp.lt.s32.totalorder %s883, 127
        %s885 = scalar_select %p884, %s883, 127
        %s886 = smul.addr %s885, 8
        %s887 = scalar_lea.vmem %s25, %s886
        %s888 = smul.u32 64, %s42
        %p889 = scmp.lt.s32.totalorder %s888, 127
        %s890 = scalar_select %p889, %s888, 127
        %s891 = smul.addr %s890, 8
        %s892 = scalar_lea.vmem %s0, %s891
        %s893 = smul.u32 64, %s42
        %s894 = smul.u32 64, %s42
        %p895 = scmp.lt.s32.totalorder %s894, 127
        %s896 = scalar_select %p895, %s894, 127
        %s897 = smul.addr %s896, 8
        %s898 = scalar_lea.vmem %s25, %s897
        %s899 = smul.u32 64, %s42
        %v901 = vld [vmem:[%s892] sm:$0xff]
        %v902 = vld [vmem:[%s892 + $0x8] sm:$0xff]
        %v903 = vld [vmem:[%s892 + $0x10] sm:$0xff]
        %v904 = vld [vmem:[%s892 + $0x18] sm:$0xff]
        %v905 = vld [vmem:[%s892 + $0x20] sm:$0xff]
        %v906 = vld [vmem:[%s892 + $0x28] sm:$0xff]
        %v907 = vld [vmem:[%s892 + $0x30] sm:$0xff]
        %v908 = vld [vmem:[%s892 + $0x38] sm:$0xff]
        %v909 = vld [vmem:[%s892 + $0x40] sm:$0xff]
        %v910 = vld [vmem:[%s892 + $0x48] sm:$0xff]
        %v911 = vld [vmem:[%s892 + $0x50] sm:$0xff]
        %v912 = vld [vmem:[%s892 + $0x58] sm:$0xff]
        %v913 = vld [vmem:[%s892 + $0x60] sm:$0xff]
        %v914 = vld [vmem:[%s892 + $0x68] sm:$0xff]
        %v915 = vld [vmem:[%s892 + $0x70] sm:$0xff]
        %v916 = vld [vmem:[%s892 + $0x78] sm:$0xff]
        %v917 = vld [vmem:[%s892 + $0x80] sm:$0xff]
        %v918 = vld [vmem:[%s892 + $0x88] sm:$0xff]
        %v919 = vld [vmem:[%s892 + $0x90] sm:$0xff]
        %v920 = vld [vmem:[%s892 + $0x98] sm:$0xff]
        %v921 = vld [vmem:[%s892 + $0xa0] sm:$0xff]
        %v922 = vld [vmem:[%s892 + $0xa8] sm:$0xff]
        %v923 = vld [vmem:[%s892 + $0xb0] sm:$0xff]
        %v924 = vld [vmem:[%s892 + $0xb8] sm:$0xff]
        %v925 = vld [vmem:[%s892 + $0xc0] sm:$0xff]
        %v926 = vld [vmem:[%s892 + $0xc8] sm:$0xff]
        %v927 = vld [vmem:[%s892 + $0xd0] sm:$0xff]
        %v928 = vld [vmem:[%s892 + $0xd8] sm:$0xff]
        %v929 = vld [vmem:[%s892 + $0xe0] sm:$0xff]
        %v930 = vld [vmem:[%s892 + $0xe8] sm:$0xff]
        %v931 = vld [vmem:[%s892 + $0xf0] sm:$0xff]
        %v932 = vld [vmem:[%s892 + $0xf8] sm:$0xff]
        %v933 = vld [vmem:[%s892 + $0x100] sm:$0xff]
        %v934 = vld [vmem:[%s892 + $0x108] sm:$0xff]
        %v935 = vld [vmem:[%s892 + $0x110] sm:$0xff]
        %v936 = vld [vmem:[%s892 + $0x118] sm:$0xff]
        %v937 = vld [vmem:[%s892 + $0x120] sm:$0xff]
        %v938 = vld [vmem:[%s892 + $0x128] sm:$0xff]
        %v939 = vld [vmem:[%s892 + $0x130] sm:$0xff]
        %v940 = vld [vmem:[%s892 + $0x138] sm:$0xff]
        %v941 = vld [vmem:[%s892 + $0x140] sm:$0xff]
        %v942 = vld [vmem:[%s892 + $0x148] sm:$0xff]
        %v943 = vld [vmem:[%s892 + $0x150] sm:$0xff]
        %v944 = vld [vmem:[%s892 + $0x158] sm:$0xff]
        %v945 = vld [vmem:[%s892 + $0x160] sm:$0xff]
        %v946 = vld [vmem:[%s892 + $0x168] sm:$0xff]
        %v947 = vld [vmem:[%s892 + $0x170] sm:$0xff]
        %v948 = vld [vmem:[%s892 + $0x178] sm:$0xff]
        %v949 = vld [vmem:[%s892 + $0x180] sm:$0xff]
        %v950 = vld [vmem:[%s892 + $0x188] sm:$0xff]
        %v951 = vld [vmem:[%s892 + $0x190] sm:$0xff]
        %v952 = vld [vmem:[%s892 + $0x198] sm:$0xff]
        %v953 = vld [vmem:[%s892 + $0x1a0] sm:$0xff]
        %v954 = vld [vmem:[%s892 + $0x1a8] sm:$0xff]
        %v955 = vld [vmem:[%s892 + $0x1b0] sm:$0xff]
        %v956 = vld [vmem:[%s892 + $0x1b8] sm:$0xff]
        %v957 = vld [vmem:[%s892 + $0x1c0] sm:$0xff]
        %v958 = vld [vmem:[%s892 + $0x1c8] sm:$0xff]
        %v959 = vld [vmem:[%s892 + $0x1d0] sm:$0xff]
        %v960 = vld [vmem:[%s892 + $0x1d8] sm:$0xff]
        %v961 = vld [vmem:[%s892 + $0x1e0] sm:$0xff]
        %v962 = vld [vmem:[%s892 + $0x1e8] sm:$0xff]
        %v963 = vld [vmem:[%s892 + $0x1f0] sm:$0xff]
        %v964 = vld [vmem:[%s892 + $0x1f8] sm:$0xff]
        %v965 = vpack.c.bf16 %v902, %v901
        %v966 = vpack.c.bf16 %v904, %v903
        %v967 = vpack.c.bf16 %v906, %v905
        %v968 = vpack.c.bf16 %v908, %v907
        %v969 = vpack.c.bf16 %v910, %v909
        %v970 = vpack.c.bf16 %v912, %v911
        %v971 = vpack.c.bf16 %v914, %v913
        %v972 = vpack.c.bf16 %v916, %v915
        %v973 = vpack.c.bf16 %v918, %v917
        %v974 = vpack.c.bf16 %v920, %v919
        %v975 = vpack.c.bf16 %v922, %v921
        %v976 = vpack.c.bf16 %v924, %v923
        %v977 = vpack.c.bf16 %v926, %v925
        %v978 = vpack.c.bf16 %v928, %v927
        %v979 = vpack.c.bf16 %v930, %v929
        %v980 = vpack.c.bf16 %v932, %v931
        %v981 = vpack.c.bf16 %v934, %v933
        %v982 = vpack.c.bf16 %v936, %v935
        %v983 = vpack.c.bf16 %v938, %v937
        %v984 = vpack.c.bf16 %v940, %v939
        %v985 = vpack.c.bf16 %v942, %v941
        %v986 = vpack.c.bf16 %v944, %v943
        %v987 = vpack.c.bf16 %v946, %v945
        %v988 = vpack.c.bf16 %v948, %v947
        %v989 = vpack.c.bf16 %v950, %v949
        %v990 = vpack.c.bf16 %v952, %v951
        %v991 = vpack.c.bf16 %v954, %v953
        %v992 = vpack.c.bf16 %v956, %v955
        %v993 = vpack.c.bf16 %v958, %v957
        %v994 = vpack.c.bf16 %v960, %v959
        %v995 = vpack.c.bf16 %v962, %v961
        %v996 = vpack.c.bf16 %v964, %v963
        %v997 = vld [vmem:[%s1] sm:$0xff]
        %v998 = vld [vmem:[%s1 + $0x8] sm:$0xff]
        %v999 = vld [vmem:[%s1 + $0x10] sm:$0xff]
        %v1000 = vld [vmem:[%s1 + $0x18] sm:$0xff]
        %v1001 = vld [vmem:[%s1 + $0x20] sm:$0xff]
        %v1002 = vld [vmem:[%s1 + $0x28] sm:$0xff]
        %v1003 = vld [vmem:[%s1 + $0x30] sm:$0xff]
        %v1004 = vld [vmem:[%s1 + $0x38] sm:$0xff]
        %v1005 = vld [vmem:[%s2] sm:$0x3]
        %v1007 = vlaneseq
        %v1008 = vshrl.u32 %v1007, 7
        %v1009 = vsub.s32 0, %v1008
        %v1010 = vrot.slane %v1005, %v1009
        %v1011 = vlaneseq
        %v1012 = vshrl.u32 %v1011, 7
        %v1013 = vsub.s32 1, %v1012
        %v1014 = vrot.slane %v1005, %v1013
        %v1025 = vunpack.c.l.b16 %v997
        %v1026 = vunpack.c.h.b16 %v997
        %v1027 = vunpack.c.l.b16 %v998
        %v1028 = vunpack.c.h.b16 %v998
        %v1029 = vunpack.c.l.b16 %v999
        %v1030 = vunpack.c.h.b16 %v999
        %v1031 = vunpack.c.l.b16 %v1000
        %v1032 = vunpack.c.h.b16 %v1000
        %v1033 = vunpack.c.l.b16 %v1001
        %v1034 = vunpack.c.h.b16 %v1001
        %v1035 = vunpack.c.l.b16 %v1002
        %v1036 = vunpack.c.h.b16 %v1002
        %v1037 = vunpack.c.l.b16 %v1003
        %v1038 = vunpack.c.h.b16 %v1003
        %v1039 = vunpack.c.l.b16 %v1004
        %v1040 = vunpack.c.h.b16 %v1004
        %v1041 = vpack.c.b16 %v1027, %v1025
        %v1042 = vpack.c.b16 %v1028, %v1026
        %v1043 = vpack.c.b16 %v1031, %v1029
        %v1044 = vpack.c.b16 %v1032, %v1030
        %v1045 = vpack.c.b16 %v1035, %v1033
        %v1046 = vpack.c.b16 %v1036, %v1034
        %v1047 = vpack.c.b16 %v1039, %v1037
        %v1048 = vpack.c.b16 %v1040, %v1038
        %vm1055 = vcmask 515072
        %v1057 = vsel %vm1055, %v965, 0
        %v1060 = vsel %vm1055, %v966, 0
        %v1063 = vsel %vm1055, %v967, 0
        %v1066 = vsel %vm1055, %v968, 0
        %v1069 = vsel %vm1055, %v969, 0
        %v1072 = vsel %vm1055, %v970, 0
        %v1075 = vsel %vm1055, %v971, 0
        %v1078 = vsel %vm1055, %v972, 0
        %v1081 = vsel %vm1055, %v973, 0
        %v1084 = vsel %vm1055, %v974, 0
        %v1087 = vsel %vm1055, %v975, 0
        %v1090 = vsel %vm1055, %v976, 0
        %v1093 = vsel %vm1055, %v977, 0
        %v1096 = vsel %vm1055, %v978, 0
        %v1099 = vsel %vm1055, %v979, 0
        %v1102 = vsel %vm1055, %v980, 0
        %v1105 = vsel %vm1055, %v981, 0
        %v1108 = vsel %vm1055, %v982, 0
        %v1111 = vsel %vm1055, %v983, 0
        %v1114 = vsel %vm1055, %v984, 0
        %v1117 = vsel %vm1055, %v985, 0
        %v1120 = vsel %vm1055, %v986, 0
        %v1123 = vsel %vm1055, %v987, 0
        %v1126 = vsel %vm1055, %v988, 0
        %v1129 = vsel %vm1055, %v989, 0
        %v1132 = vsel %vm1055, %v990, 0
        %v1135 = vsel %vm1055, %v991, 0
        %v1138 = vsel %vm1055, %v992, 0
        %v1141 = vsel %vm1055, %v993, 0
        %v1144 = vsel %vm1055, %v994, 0
        %v1147 = vsel %vm1055, %v995, 0
        %v1150 = vsel %vm1055, %v996, 0
        %vm1152 = vcmask 1046528
        %vm1153 = vcmask 1047552
        %v1154 = vsel %vm1152, 4294967295, 65535
        %v1155 = vsel %vm1153, %v1154, 0
        %v1157 = vand.u32 %v1047, %v1155
        %v1160 = vand.u32 %v1048, %v1155
        %1162 = vmatprep.subr.bf16.mxu0 0
        %1163 = vmatpush1.bf16.msra.mxu0 0
        %1164 = vmatprep.subr.bf16.mxu0 0
        %1165 = vmatpush1.bf16.msra.mxu0 0
        %1166 = vmatprep.subr.bf16.mxu0 0
        %1167 = vmatpush1.bf16.msra.mxu0 0
        %1168 = vmatprep.subr.bf16.mxu0 0
        %1169 = vmatpush1.bf16.msra.mxu0 0
        %1170 = vmatprep.subr.bf16.mxu0 %v1160
        %1171 = vmatpush1.bf16.msra.mxu0 %v1157
        %1172 = vmatprep.subr.bf16.mxu0 %v1046
        %1173 = vmatpush1.bf16.msra.mxu0 %v1045
        %1174 = vmatprep.subr.bf16.mxu0 %v1044
        %1175 = vmatpush1.bf16.msra.mxu0 %v1043
        %1176 = vmatprep.subr.bf16.mxu0 %v1042
        %1177 = vmatpush1.bf16.msra.mxu0 %v1041
        %1178 = vmatprep.subr.bf16.mxu0 0
        %1179 = vmatpush2.bf16.msra.mxu0 0
        %1180 = vmatprep.subr.bf16.mxu0 0
        %1181 = vmatpush2.bf16.msra.mxu0 0
        %1182 = vmatprep.subr.bf16.mxu0 0
        %1183 = vmatpush2.bf16.msra.mxu0 0
        %1184 = vmatprep.subr.bf16.mxu0 0
        %1185 = vmatpush2.bf16.msra.mxu0 0
        %1186 = vmatprep.subr.bf16.mxu0 0
        %1187 = vmatpush2.bf16.msra.mxu0 0
        %1188 = vmatprep.subr.bf16.mxu0 0
        %1189 = vmatpush2.bf16.msra.mxu0 0
        %1190 = vmatprep.subr.bf16.mxu0 0
        %1191 = vmatpush2.bf16.msra.mxu0 0
        %1192 = vmatprep.subr.bf16.mxu0 0
        %1193 = vmatpush2.bf16.msra.mxu0 0
        %1194 = vmatprep.mubr.bf16.mxu0 0
        %1195 = vmatmul.mubr.bf16.gmra.mxu0 %v1057
        %v1196 = vpop.f32.mrf.mxu0
        %v1197 = vadd.f32 %v1010, %v1196
        %v1198 = vpop.f32.mrf.mxu0
        %v1199 = vadd.f32 %v1014, %v1198
        %v1200 = vpop.f32.mrf.mxu0
        %v1201 = vadd.f32 %v1010, %v1200
        %v1202 = vpop.f32.mrf.mxu0
        %v1203 = vadd.f32 %v1014, %v1202
        %1204 = vmatprep.mubr.bf16.mxu0 0
        %1205 = vmatmul.mubr.bf16.gmra.mxu0 %v1060
        %v1206 = vpop.f32.mrf.mxu0
        %v1207 = vadd.f32 %v1010, %v1206
        %v1208 = vpop.f32.mrf.mxu0
        %v1209 = vadd.f32 %v1014, %v1208
        %v1210 = vpop.f32.mrf.mxu0
        %v1211 = vadd.f32 %v1010, %v1210
        %v1212 = vpop.f32.mrf.mxu0
        %v1213 = vadd.f32 %v1014, %v1212
        %1214 = vmatprep.mubr.bf16.mxu0 0
        %1215 = vmatmul.mubr.bf16.gmra.mxu0 %v1063
        %v1216 = vpop.f32.mrf.mxu0
        %v1217 = vadd.f32 %v1010, %v1216
        %v1218 = vpop.f32.mrf.mxu0
        %v1219 = vadd.f32 %v1014, %v1218
        %v1220 = vpop.f32.mrf.mxu0
        %v1221 = vadd.f32 %v1010, %v1220
        %v1222 = vpop.f32.mrf.mxu0
        %v1223 = vadd.f32 %v1014, %v1222
        %1224 = vmatprep.mubr.bf16.mxu0 0
        %1225 = vmatmul.mubr.bf16.gmra.mxu0 %v1066
        %v1226 = vpop.f32.mrf.mxu0
        %v1227 = vadd.f32 %v1010, %v1226
        %v1228 = vpop.f32.mrf.mxu0
        %v1229 = vadd.f32 %v1014, %v1228
        %v1230 = vpop.f32.mrf.mxu0
        %v1231 = vadd.f32 %v1010, %v1230
        %v1232 = vpop.f32.mrf.mxu0
        %v1233 = vadd.f32 %v1014, %v1232
        %1234 = vmatprep.mubr.bf16.mxu0 0
        %1235 = vmatmul.mubr.bf16.gmra.mxu0 %v1069
        %v1236 = vpop.f32.mrf.mxu0
        %v1237 = vadd.f32 %v1010, %v1236
        %v1238 = vpop.f32.mrf.mxu0
        %v1239 = vadd.f32 %v1014, %v1238
        %v1240 = vpop.f32.mrf.mxu0
        %v1241 = vadd.f32 %v1010, %v1240
        %v1242 = vpop.f32.mrf.mxu0
        %v1243 = vadd.f32 %v1014, %v1242
        %1244 = vmatprep.mubr.bf16.mxu0 0
        %1245 = vmatmul.mubr.bf16.gmra.mxu0 %v1072
        %v1246 = vpop.f32.mrf.mxu0
        %v1247 = vadd.f32 %v1010, %v1246
        %v1248 = vpop.f32.mrf.mxu0
        %v1249 = vadd.f32 %v1014, %v1248
        %v1250 = vpop.f32.mrf.mxu0
        %v1251 = vadd.f32 %v1010, %v1250
        %v1252 = vpop.f32.mrf.mxu0
        %v1253 = vadd.f32 %v1014, %v1252
        %1254 = vmatprep.mubr.bf16.mxu0 0
        %1255 = vmatmul.mubr.bf16.gmra.mxu0 %v1075
        %v1256 = vpop.f32.mrf.mxu0
        %v1257 = vadd.f32 %v1010, %v1256
        %v1258 = vpop.f32.mrf.mxu0
        %v1259 = vadd.f32 %v1014, %v1258
        %v1260 = vpop.f32.mrf.mxu0
        %v1261 = vadd.f32 %v1010, %v1260
        %v1262 = vpop.f32.mrf.mxu0
        %v1263 = vadd.f32 %v1014, %v1262
        %1264 = vmatprep.mubr.bf16.mxu0 0
        %1265 = vmatmul.mubr.bf16.gmra.mxu0 %v1078
        %v1266 = vpop.f32.mrf.mxu0
        %v1267 = vadd.f32 %v1010, %v1266
        %v1268 = vpop.f32.mrf.mxu0
        %v1269 = vadd.f32 %v1014, %v1268
        %v1270 = vpop.f32.mrf.mxu0
        %v1271 = vadd.f32 %v1010, %v1270
        %v1272 = vpop.f32.mrf.mxu0
        %v1273 = vadd.f32 %v1014, %v1272
        %1274 = vmatprep.mubr.bf16.mxu0 0
        %1275 = vmatmul.mubr.bf16.gmra.mxu0 %v1081
        %v1276 = vpop.f32.mrf.mxu0
        %v1277 = vadd.f32 %v1010, %v1276
        %v1278 = vpop.f32.mrf.mxu0
        %v1279 = vadd.f32 %v1014, %v1278
        %v1280 = vpop.f32.mrf.mxu0
        %v1281 = vadd.f32 %v1010, %v1280
        %v1282 = vpop.f32.mrf.mxu0
        %v1283 = vadd.f32 %v1014, %v1282
        %1284 = vmatprep.mubr.bf16.mxu0 0
        %1285 = vmatmul.mubr.bf16.gmra.mxu0 %v1084
        %v1286 = vpop.f32.mrf.mxu0
        %v1287 = vadd.f32 %v1010, %v1286
        %v1288 = vpop.f32.mrf.mxu0
        %v1289 = vadd.f32 %v1014, %v1288
        %v1290 = vpop.f32.mrf.mxu0
        %v1291 = vadd.f32 %v1010, %v1290
        %v1292 = vpop.f32.mrf.mxu0
        %v1293 = vadd.f32 %v1014, %v1292
        %1294 = vmatprep.mubr.bf16.mxu0 0
        %1295 = vmatmul.mubr.bf16.gmra.mxu0 %v1087
        %v1296 = vpop.f32.mrf.mxu0
        %v1297 = vadd.f32 %v1010, %v1296
        %v1298 = vpop.f32.mrf.mxu0
        %v1299 = vadd.f32 %v1014, %v1298
        %v1300 = vpop.f32.mrf.mxu0
        %v1301 = vadd.f32 %v1010, %v1300
        %v1302 = vpop.f32.mrf.mxu0
        %v1303 = vadd.f32 %v1014, %v1302
        %1304 = vmatprep.mubr.bf16.mxu0 0
        %1305 = vmatmul.mubr.bf16.gmra.mxu0 %v1090
        %v1306 = vpop.f32.mrf.mxu0
        %v1307 = vadd.f32 %v1010, %v1306
        %v1308 = vpop.f32.mrf.mxu0
        %v1309 = vadd.f32 %v1014, %v1308
        %v1310 = vpop.f32.mrf.mxu0
        %v1311 = vadd.f32 %v1010, %v1310
        %v1312 = vpop.f32.mrf.mxu0
        %v1313 = vadd.f32 %v1014, %v1312
        %1314 = vmatprep.mubr.bf16.mxu0 0
        %1315 = vmatmul.mubr.bf16.gmra.mxu0 %v1093
        %v1316 = vpop.f32.mrf.mxu0
        %v1317 = vadd.f32 %v1010, %v1316
        %v1318 = vpop.f32.mrf.mxu0
        %v1319 = vadd.f32 %v1014, %v1318
        %v1320 = vpop.f32.mrf.mxu0
        %v1321 = vadd.f32 %v1010, %v1320
        %v1322 = vpop.f32.mrf.mxu0
        %v1323 = vadd.f32 %v1014, %v1322
        %1324 = vmatprep.mubr.bf16.mxu0 0
        %1325 = vmatmul.mubr.bf16.gmra.mxu0 %v1096
        %v1326 = vpop.f32.mrf.mxu0
        %v1327 = vadd.f32 %v1010, %v1326
        %v1328 = vpop.f32.mrf.mxu0
        %v1329 = vadd.f32 %v1014, %v1328
        %v1330 = vpop.f32.mrf.mxu0
        %v1331 = vadd.f32 %v1010, %v1330
        %v1332 = vpop.f32.mrf.mxu0
        %v1333 = vadd.f32 %v1014, %v1332
        %1334 = vmatprep.mubr.bf16.mxu0 0
        %1335 = vmatmul.mubr.bf16.gmra.mxu0 %v1099
        %v1336 = vpop.f32.mrf.mxu0
        %v1337 = vadd.f32 %v1010, %v1336
        %v1338 = vpop.f32.mrf.mxu0
        %v1339 = vadd.f32 %v1014, %v1338
        %v1340 = vpop.f32.mrf.mxu0
        %v1341 = vadd.f32 %v1010, %v1340
        %v1342 = vpop.f32.mrf.mxu0
        %v1343 = vadd.f32 %v1014, %v1342
        %1344 = vmatprep.mubr.bf16.mxu0 0
        %1345 = vmatmul.mubr.bf16.gmra.mxu0 %v1102
        %v1346 = vpop.f32.mrf.mxu0
        %v1347 = vadd.f32 %v1010, %v1346
        %v1348 = vpop.f32.mrf.mxu0
        %v1349 = vadd.f32 %v1014, %v1348
        %v1350 = vpop.f32.mrf.mxu0
        %v1351 = vadd.f32 %v1010, %v1350
        %v1352 = vpop.f32.mrf.mxu0
        %v1353 = vadd.f32 %v1014, %v1352
        %1354 = vmatprep.mubr.bf16.mxu0 0
        %1355 = vmatmul.mubr.bf16.gmra.mxu0 %v1105
        %v1356 = vpop.f32.mrf.mxu0
        %v1357 = vadd.f32 %v1010, %v1356
        %v1358 = vpop.f32.mrf.mxu0
        %v1359 = vadd.f32 %v1014, %v1358
        %v1360 = vpop.f32.mrf.mxu0
        %v1361 = vadd.f32 %v1010, %v1360
        %v1362 = vpop.f32.mrf.mxu0
        %v1363 = vadd.f32 %v1014, %v1362
        %1364 = vmatprep.mubr.bf16.mxu0 0
        %1365 = vmatmul.mubr.bf16.gmra.mxu0 %v1108
        %v1366 = vpop.f32.mrf.mxu0
        %v1367 = vadd.f32 %v1010, %v1366
        %v1368 = vpop.f32.mrf.mxu0
        %v1369 = vadd.f32 %v1014, %v1368
        %v1370 = vpop.f32.mrf.mxu0
        %v1371 = vadd.f32 %v1010, %v1370
        %v1372 = vpop.f32.mrf.mxu0
        %v1373 = vadd.f32 %v1014, %v1372
        %1374 = vmatprep.mubr.bf16.mxu0 0
        %1375 = vmatmul.mubr.bf16.gmra.mxu0 %v1111
        %v1376 = vpop.f32.mrf.mxu0
        %v1377 = vadd.f32 %v1010, %v1376
        %v1378 = vpop.f32.mrf.mxu0
        %v1379 = vadd.f32 %v1014, %v1378
        %v1380 = vpop.f32.mrf.mxu0
        %v1381 = vadd.f32 %v1010, %v1380
        %v1382 = vpop.f32.mrf.mxu0
        %v1383 = vadd.f32 %v1014, %v1382
        %1384 = vmatprep.mubr.bf16.mxu0 0
        %1385 = vmatmul.mubr.bf16.gmra.mxu0 %v1114
        %v1386 = vpop.f32.mrf.mxu0
        %v1387 = vadd.f32 %v1010, %v1386
        %v1388 = vpop.f32.mrf.mxu0
        %v1389 = vadd.f32 %v1014, %v1388
        %v1390 = vpop.f32.mrf.mxu0
        %v1391 = vadd.f32 %v1010, %v1390
        %v1392 = vpop.f32.mrf.mxu0
        %v1393 = vadd.f32 %v1014, %v1392
        %1394 = vmatprep.mubr.bf16.mxu0 0
        %1395 = vmatmul.mubr.bf16.gmra.mxu0 %v1117
        %v1396 = vpop.f32.mrf.mxu0
        %v1397 = vadd.f32 %v1010, %v1396
        %v1398 = vpop.f32.mrf.mxu0
        %v1399 = vadd.f32 %v1014, %v1398
        %v1400 = vpop.f32.mrf.mxu0
        %v1401 = vadd.f32 %v1010, %v1400
        %v1402 = vpop.f32.mrf.mxu0
        %v1403 = vadd.f32 %v1014, %v1402
        %1404 = vmatprep.mubr.bf16.mxu0 0
        %1405 = vmatmul.mubr.bf16.gmra.mxu0 %v1120
        %v1406 = vpop.f32.mrf.mxu0
        %v1407 = vadd.f32 %v1010, %v1406
        %v1408 = vpop.f32.mrf.mxu0
        %v1409 = vadd.f32 %v1014, %v1408
        %v1410 = vpop.f32.mrf.mxu0
        %v1411 = vadd.f32 %v1010, %v1410
        %v1412 = vpop.f32.mrf.mxu0
        %v1413 = vadd.f32 %v1014, %v1412
        %1414 = vmatprep.mubr.bf16.mxu0 0
        %1415 = vmatmul.mubr.bf16.gmra.mxu0 %v1123
        %v1416 = vpop.f32.mrf.mxu0
        %v1417 = vadd.f32 %v1010, %v1416
        %v1418 = vpop.f32.mrf.mxu0
        %v1419 = vadd.f32 %v1014, %v1418
        %v1420 = vpop.f32.mrf.mxu0
        %v1421 = vadd.f32 %v1010, %v1420
        %v1422 = vpop.f32.mrf.mxu0
        %v1423 = vadd.f32 %v1014, %v1422
        %1424 = vmatprep.mubr.bf16.mxu0 0
        %1425 = vmatmul.mubr.bf16.gmra.mxu0 %v1126
        %v1426 = vpop.f32.mrf.mxu0
        %v1427 = vadd.f32 %v1010, %v1426
        %v1428 = vpop.f32.mrf.mxu0
        %v1429 = vadd.f32 %v1014, %v1428
        %v1430 = vpop.f32.mrf.mxu0
        %v1431 = vadd.f32 %v1010, %v1430
        %v1432 = vpop.f32.mrf.mxu0
        %v1433 = vadd.f32 %v1014, %v1432
        %1434 = vmatprep.mubr.bf16.mxu0 0
        %1435 = vmatmul.mubr.bf16.gmra.mxu0 %v1129
        %v1436 = vpop.f32.mrf.mxu0
        %v1437 = vadd.f32 %v1010, %v1436
        %v1438 = vpop.f32.mrf.mxu0
        %v1439 = vadd.f32 %v1014, %v1438
        %v1440 = vpop.f32.mrf.mxu0
        %v1441 = vadd.f32 %v1010, %v1440
        %v1442 = vpop.f32.mrf.mxu0
        %v1443 = vadd.f32 %v1014, %v1442
        %1444 = vmatprep.mubr.bf16.mxu0 0
        %1445 = vmatmul.mubr.bf16.gmra.mxu0 %v1132
        %v1446 = vpop.f32.mrf.mxu0
        %v1447 = vadd.f32 %v1010, %v1446
        %v1448 = vpop.f32.mrf.mxu0
        %v1449 = vadd.f32 %v1014, %v1448
        %v1450 = vpop.f32.mrf.mxu0
        %v1451 = vadd.f32 %v1010, %v1450
        %v1452 = vpop.f32.mrf.mxu0
        %v1453 = vadd.f32 %v1014, %v1452
        %1454 = vmatprep.mubr.bf16.mxu0 0
        %1455 = vmatmul.mubr.bf16.gmra.mxu0 %v1135
        %v1456 = vpop.f32.mrf.mxu0
        %v1457 = vadd.f32 %v1010, %v1456
        %v1458 = vpop.f32.mrf.mxu0
        %v1459 = vadd.f32 %v1014, %v1458
        %v1460 = vpop.f32.mrf.mxu0
        %v1461 = vadd.f32 %v1010, %v1460
        %v1462 = vpop.f32.mrf.mxu0
        %v1463 = vadd.f32 %v1014, %v1462
        %1464 = vmatprep.mubr.bf16.mxu0 0
        %1465 = vmatmul.mubr.bf16.gmra.mxu0 %v1138
        %v1466 = vpop.f32.mrf.mxu0
        %v1467 = vadd.f32 %v1010, %v1466
        %v1468 = vpop.f32.mrf.mxu0
        %v1469 = vadd.f32 %v1014, %v1468
        %v1470 = vpop.f32.mrf.mxu0
        %v1471 = vadd.f32 %v1010, %v1470
        %v1472 = vpop.f32.mrf.mxu0
        %v1473 = vadd.f32 %v1014, %v1472
        %1474 = vmatprep.mubr.bf16.mxu0 0
        %1475 = vmatmul.mubr.bf16.gmra.mxu0 %v1141
        %v1476 = vpop.f32.mrf.mxu0
        %v1477 = vadd.f32 %v1010, %v1476
        %v1478 = vpop.f32.mrf.mxu0
        %v1479 = vadd.f32 %v1014, %v1478
        %v1480 = vpop.f32.mrf.mxu0
        %v1481 = vadd.f32 %v1010, %v1480
        %v1482 = vpop.f32.mrf.mxu0
        %v1483 = vadd.f32 %v1014, %v1482
        %1484 = vmatprep.mubr.bf16.mxu0 0
        %1485 = vmatmul.mubr.bf16.gmra.mxu0 %v1144
        %v1486 = vpop.f32.mrf.mxu0
        %v1487 = vadd.f32 %v1010, %v1486
        %v1488 = vpop.f32.mrf.mxu0
        %v1489 = vadd.f32 %v1014, %v1488
        %v1490 = vpop.f32.mrf.mxu0
        %v1491 = vadd.f32 %v1010, %v1490
        %v1492 = vpop.f32.mrf.mxu0
        %v1493 = vadd.f32 %v1014, %v1492
        %1494 = vmatprep.mubr.bf16.mxu0 0
        %1495 = vmatmul.mubr.bf16.gmra.mxu0 %v1147
        %v1496 = vpop.f32.mrf.mxu0
        %v1497 = vadd.f32 %v1010, %v1496
        %v1498 = vpop.f32.mrf.mxu0
        %v1499 = vadd.f32 %v1014, %v1498
        %v1500 = vpop.f32.mrf.mxu0
        %v1501 = vadd.f32 %v1010, %v1500
        %v1502 = vpop.f32.mrf.mxu0
        %v1503 = vadd.f32 %v1014, %v1502
        %1504 = vmatprep.mubr.bf16.mxu0 0
        %1505 = vmatmul.mubr.bf16.gmra.mxu0 %v1150
        %v1506 = vpop.f32.mrf.mxu0
        %v1507 = vadd.f32 %v1010, %v1506
        %v1508 = vpop.f32.mrf.mxu0
        %v1509 = vadd.f32 %v1014, %v1508
        %v1510 = vpop.f32.mrf.mxu0
        %v1511 = vadd.f32 %v1010, %v1510
        %v1512 = vpop.f32.mrf.mxu0
        %v1513 = vadd.f32 %v1014, %v1512
        %1514 = vdwg.mxu0
        %v1515 = vmax.f32 %v1197, 0.0
        %v1516 = vmax.f32 %v1199, 0.0
        %v1517 = vmax.f32 %v1201, 0.0
        %v1518 = vmax.f32 %v1203, 0.0
        %v1519 = vmax.f32 %v1207, 0.0
        %v1520 = vmax.f32 %v1209, 0.0
        %v1521 = vmax.f32 %v1211, 0.0
        %v1522 = vmax.f32 %v1213, 0.0
        %v1523 = vmax.f32 %v1217, 0.0
        %v1524 = vmax.f32 %v1219, 0.0
        %v1525 = vmax.f32 %v1221, 0.0
        %v1526 = vmax.f32 %v1223, 0.0
        %v1527 = vmax.f32 %v1227, 0.0
        %v1528 = vmax.f32 %v1229, 0.0
        %v1529 = vmax.f32 %v1231, 0.0
        %v1530 = vmax.f32 %v1233, 0.0
        %v1531 = vmax.f32 %v1237, 0.0
        %v1532 = vmax.f32 %v1239, 0.0
        %v1533 = vmax.f32 %v1241, 0.0
        %v1534 = vmax.f32 %v1243, 0.0
        %v1535 = vmax.f32 %v1247, 0.0
        %v1536 = vmax.f32 %v1249, 0.0
        %v1537 = vmax.f32 %v1251, 0.0
        %v1538 = vmax.f32 %v1253, 0.0
        %v1539 = vmax.f32 %v1257, 0.0
        %v1540 = vmax.f32 %v1259, 0.0
        %v1541 = vmax.f32 %v1261, 0.0
        %v1542 = vmax.f32 %v1263, 0.0
        %v1543 = vmax.f32 %v1267, 0.0
        %v1544 = vmax.f32 %v1269, 0.0
        %v1545 = vmax.f32 %v1271, 0.0
        %v1546 = vmax.f32 %v1273, 0.0
        %v1547 = vmax.f32 %v1277, 0.0
        %v1548 = vmax.f32 %v1279, 0.0
        %v1549 = vmax.f32 %v1281, 0.0
        %v1550 = vmax.f32 %v1283, 0.0
        %v1551 = vmax.f32 %v1287, 0.0
        %v1552 = vmax.f32 %v1289, 0.0
        %v1553 = vmax.f32 %v1291, 0.0
        %v1554 = vmax.f32 %v1293, 0.0
        %v1555 = vmax.f32 %v1297, 0.0
        %v1556 = vmax.f32 %v1299, 0.0
        %v1557 = vmax.f32 %v1301, 0.0
        %v1558 = vmax.f32 %v1303, 0.0
        %v1559 = vmax.f32 %v1307, 0.0
        %v1560 = vmax.f32 %v1309, 0.0
        %v1561 = vmax.f32 %v1311, 0.0
        %v1562 = vmax.f32 %v1313, 0.0
        %v1563 = vmax.f32 %v1317, 0.0
        %v1564 = vmax.f32 %v1319, 0.0
        %v1565 = vmax.f32 %v1321, 0.0
        %v1566 = vmax.f32 %v1323, 0.0
        %v1567 = vmax.f32 %v1327, 0.0
        %v1568 = vmax.f32 %v1329, 0.0
        %v1569 = vmax.f32 %v1331, 0.0
        %v1570 = vmax.f32 %v1333, 0.0
        %v1571 = vmax.f32 %v1337, 0.0
        %v1572 = vmax.f32 %v1339, 0.0
        %v1573 = vmax.f32 %v1341, 0.0
        %v1574 = vmax.f32 %v1343, 0.0
        %v1575 = vmax.f32 %v1347, 0.0
        %v1576 = vmax.f32 %v1349, 0.0
        %v1577 = vmax.f32 %v1351, 0.0
        %v1578 = vmax.f32 %v1353, 0.0
        %v1579 = vmax.f32 %v1357, 0.0
        %v1580 = vmax.f32 %v1359, 0.0
        %v1581 = vmax.f32 %v1361, 0.0
        %v1582 = vmax.f32 %v1363, 0.0
        %v1583 = vmax.f32 %v1367, 0.0
        %v1584 = vmax.f32 %v1369, 0.0
        %v1585 = vmax.f32 %v1371, 0.0
        %v1586 = vmax.f32 %v1373, 0.0
        %v1587 = vmax.f32 %v1377, 0.0
        %v1588 = vmax.f32 %v1379, 0.0
        %v1589 = vmax.f32 %v1381, 0.0
        %v1590 = vmax.f32 %v1383, 0.0
        %v1591 = vmax.f32 %v1387, 0.0
        %v1592 = vmax.f32 %v1389, 0.0
        %v1593 = vmax.f32 %v1391, 0.0
        %v1594 = vmax.f32 %v1393, 0.0
        %v1595 = vmax.f32 %v1397, 0.0
        %v1596 = vmax.f32 %v1399, 0.0
        %v1597 = vmax.f32 %v1401, 0.0
        %v1598 = vmax.f32 %v1403, 0.0
        %v1599 = vmax.f32 %v1407, 0.0
        %v1600 = vmax.f32 %v1409, 0.0
        %v1601 = vmax.f32 %v1411, 0.0
        %v1602 = vmax.f32 %v1413, 0.0
        %v1603 = vmax.f32 %v1417, 0.0
        %v1604 = vmax.f32 %v1419, 0.0
        %v1605 = vmax.f32 %v1421, 0.0
        %v1606 = vmax.f32 %v1423, 0.0
        %v1607 = vmax.f32 %v1427, 0.0
        %v1608 = vmax.f32 %v1429, 0.0
        %v1609 = vmax.f32 %v1431, 0.0
        %v1610 = vmax.f32 %v1433, 0.0
        %v1611 = vmax.f32 %v1437, 0.0
        %v1612 = vmax.f32 %v1439, 0.0
        %v1613 = vmax.f32 %v1441, 0.0
        %v1614 = vmax.f32 %v1443, 0.0
        %v1615 = vmax.f32 %v1447, 0.0
        %v1616 = vmax.f32 %v1449, 0.0
        %v1617 = vmax.f32 %v1451, 0.0
        %v1618 = vmax.f32 %v1453, 0.0
        %v1619 = vmax.f32 %v1457, 0.0
        %v1620 = vmax.f32 %v1459, 0.0
        %v1621 = vmax.f32 %v1461, 0.0
        %v1622 = vmax.f32 %v1463, 0.0
        %v1623 = vmax.f32 %v1467, 0.0
        %v1624 = vmax.f32 %v1469, 0.0
        %v1625 = vmax.f32 %v1471, 0.0
        %v1626 = vmax.f32 %v1473, 0.0
        %v1627 = vmax.f32 %v1477, 0.0
        %v1628 = vmax.f32 %v1479, 0.0
        %v1629 = vmax.f32 %v1481, 0.0
        %v1630 = vmax.f32 %v1483, 0.0
        %v1631 = vmax.f32 %v1487, 0.0
        %v1632 = vmax.f32 %v1489, 0.0
        %v1633 = vmax.f32 %v1491, 0.0
        %v1634 = vmax.f32 %v1493, 0.0
        %v1635 = vmax.f32 %v1497, 0.0
        %v1636 = vmax.f32 %v1499, 0.0
        %v1637 = vmax.f32 %v1501, 0.0
        %v1638 = vmax.f32 %v1503, 0.0
        %v1639 = vmax.f32 %v1507, 0.0
        %v1640 = vmax.f32 %v1509, 0.0
        %v1641 = vmax.f32 %v1511, 0.0
        %v1642 = vmax.f32 %v1513, 0.0
        %v1643 = vpack.c.bf16 %v1517, %v1515
        %v1644 = vpack.c.bf16 %v1518, %v1516
        %v1645 = vpack.c.bf16 %v1521, %v1519
        %v1646 = vpack.c.bf16 %v1522, %v1520
        %v1647 = vpack.c.bf16 %v1525, %v1523
        %v1648 = vpack.c.bf16 %v1526, %v1524
        %v1649 = vpack.c.bf16 %v1529, %v1527
        %v1650 = vpack.c.bf16 %v1530, %v1528
        %v1651 = vpack.c.bf16 %v1533, %v1531
        %v1652 = vpack.c.bf16 %v1534, %v1532
        %v1653 = vpack.c.bf16 %v1537, %v1535
        %v1654 = vpack.c.bf16 %v1538, %v1536
        %v1655 = vpack.c.bf16 %v1541, %v1539
        %v1656 = vpack.c.bf16 %v1542, %v1540
        %v1657 = vpack.c.bf16 %v1545, %v1543
        %v1658 = vpack.c.bf16 %v1546, %v1544
        %v1659 = vpack.c.bf16 %v1549, %v1547
        %v1660 = vpack.c.bf16 %v1550, %v1548
        %v1661 = vpack.c.bf16 %v1553, %v1551
        %v1662 = vpack.c.bf16 %v1554, %v1552
        %v1663 = vpack.c.bf16 %v1557, %v1555
        %v1664 = vpack.c.bf16 %v1558, %v1556
        %v1665 = vpack.c.bf16 %v1561, %v1559
        %v1666 = vpack.c.bf16 %v1562, %v1560
        %v1667 = vpack.c.bf16 %v1565, %v1563
        %v1668 = vpack.c.bf16 %v1566, %v1564
        %v1669 = vpack.c.bf16 %v1569, %v1567
        %v1670 = vpack.c.bf16 %v1570, %v1568
        %v1671 = vpack.c.bf16 %v1573, %v1571
        %v1672 = vpack.c.bf16 %v1574, %v1572
        %v1673 = vpack.c.bf16 %v1577, %v1575
        %v1674 = vpack.c.bf16 %v1578, %v1576
        %v1675 = vpack.c.bf16 %v1581, %v1579
        %v1676 = vpack.c.bf16 %v1582, %v1580
        %v1677 = vpack.c.bf16 %v1585, %v1583
        %v1678 = vpack.c.bf16 %v1586, %v1584
        %v1679 = vpack.c.bf16 %v1589, %v1587
        %v1680 = vpack.c.bf16 %v1590, %v1588
        %v1681 = vpack.c.bf16 %v1593, %v1591
        %v1682 = vpack.c.bf16 %v1594, %v1592
        %v1683 = vpack.c.bf16 %v1597, %v1595
        %v1684 = vpack.c.bf16 %v1598, %v1596
        %v1685 = vpack.c.bf16 %v1601, %v1599
        %v1686 = vpack.c.bf16 %v1602, %v1600
        %v1687 = vpack.c.bf16 %v1605, %v1603
        %v1688 = vpack.c.bf16 %v1606, %v1604
        %v1689 = vpack.c.bf16 %v1609, %v1607
        %v1690 = vpack.c.bf16 %v1610, %v1608
        %v1691 = vpack.c.bf16 %v1613, %v1611
        %v1692 = vpack.c.bf16 %v1614, %v1612
        %v1693 = vpack.c.bf16 %v1617, %v1615
        %v1694 = vpack.c.bf16 %v1618, %v1616
        %v1695 = vpack.c.bf16 %v1621, %v1619
        %v1696 = vpack.c.bf16 %v1622, %v1620
        %v1697 = vpack.c.bf16 %v1625, %v1623
        %v1698 = vpack.c.bf16 %v1626, %v1624
        %v1699 = vpack.c.bf16 %v1629, %v1627
        %v1700 = vpack.c.bf16 %v1630, %v1628
        %v1701 = vpack.c.bf16 %v1633, %v1631
        %v1702 = vpack.c.bf16 %v1634, %v1632
        %v1703 = vpack.c.bf16 %v1637, %v1635
        %v1704 = vpack.c.bf16 %v1638, %v1636
        %v1705 = vpack.c.bf16 %v1641, %v1639
        %v1706 = vpack.c.bf16 %v1642, %v1640
        %v1707 = vld [vmem:[%s3] sm:$0xff]
        %v1708 = vld [vmem:[%s3 + $0x8] sm:$0xff]
        %v1709 = vld [vmem:[%s3 + $0x10] sm:$0xff]
        %v1710 = vld [vmem:[%s3 + $0x18] sm:$0xff]
        %v1711 = vld [vmem:[%s3 + $0x20] sm:$0xff]
        %v1712 = vld [vmem:[%s3 + $0x28] sm:$0xff]
        %v1713 = vld [vmem:[%s3 + $0x30] sm:$0xff]
        %v1714 = vld [vmem:[%s3 + $0x38] sm:$0xff]
        %v1715 = vld [vmem:[%s3 + $0x40] sm:$0xff]
        %v1716 = vld [vmem:[%s3 + $0x48] sm:$0xff]
        %v1717 = vld [vmem:[%s3 + $0x50] sm:$0xff]
        %v1718 = vld [vmem:[%s3 + $0x58] sm:$0xff]
        %v1719 = vld [vmem:[%s3 + $0x60] sm:$0xff]
        %v1720 = vld [vmem:[%s3 + $0x68] sm:$0xff]
        %v1721 = vld [vmem:[%s3 + $0x70] sm:$0xff]
        %v1722 = vld [vmem:[%s3 + $0x78] sm:$0xff]
        %v1723 = vld [vmem:[%s3 + $0x80] sm:$0xff]
        %v1724 = vld [vmem:[%s3 + $0x88] sm:$0xff]
        %v1725 = vld [vmem:[%s3 + $0x90] sm:$0xff]
        %v1726 = vld [vmem:[%s3 + $0x98] sm:$0xff]
        %v1727 = vld [vmem:[%s3 + $0xa0] sm:$0xff]
        %v1728 = vld [vmem:[%s3 + $0xa8] sm:$0xff]
        %v1729 = vld [vmem:[%s3 + $0xb0] sm:$0xff]
        %v1730 = vld [vmem:[%s3 + $0xb8] sm:$0xff]
        %v1731 = vld [vmem:[%s3 + $0xc0] sm:$0xff]
        %v1732 = vld [vmem:[%s3 + $0xc8] sm:$0xff]
        %v1733 = vld [vmem:[%s3 + $0xd0] sm:$0xff]
        %v1734 = vld [vmem:[%s3 + $0xd8] sm:$0xff]
        %v1735 = vld [vmem:[%s3 + $0xe0] sm:$0xff]
        %v1736 = vld [vmem:[%s3 + $0xe8] sm:$0xff]
        %v1737 = vld [vmem:[%s3 + $0xf0] sm:$0xff]
        %v1738 = vld [vmem:[%s3 + $0xf8] sm:$0xff]
        %v1739 = vld [vmem:[#allocation2] sm:$0x3]
        %v1741 = vlaneseq
        %v1742 = vshrl.u32 %v1741, 7
        %v1743 = vsub.s32 0, %v1742
        %v1744 = vrot.slane %v1739, %v1743
        %v1745 = vlaneseq
        %v1746 = vshrl.u32 %v1745, 7
        %v1747 = vsub.s32 1, %v1746
        %v1748 = vrot.slane %v1739, %v1747
        %v1783 = vunpack.c.l.b16 %v1707
        %v1784 = vunpack.c.h.b16 %v1707
        %v1785 = vunpack.c.l.b16 %v1708
        %v1786 = vunpack.c.h.b16 %v1708
        %v1787 = vunpack.c.l.b16 %v1709
        %v1788 = vunpack.c.h.b16 %v1709
        %v1789 = vunpack.c.l.b16 %v1710
        %v1790 = vunpack.c.h.b16 %v1710
        %v1791 = vunpack.c.l.b16 %v1711
        %v1792 = vunpack.c.h.b16 %v1711
        %v1793 = vunpack.c.l.b16 %v1712
        %v1794 = vunpack.c.h.b16 %v1712
        %v1795 = vunpack.c.l.b16 %v1713
        %v1796 = vunpack.c.h.b16 %v1713
        %v1797 = vunpack.c.l.b16 %v1714
        %v1798 = vunpack.c.h.b16 %v1714
        %v1799 = vunpack.c.l.b16 %v1715
        %v1800 = vunpack.c.h.b16 %v1715
        %v1801 = vunpack.c.l.b16 %v1716
        %v1802 = vunpack.c.h.b16 %v1716
        %v1803 = vunpack.c.l.b16 %v1717
        %v1804 = vunpack.c.h.b16 %v1717
        %v1805 = vunpack.c.l.b16 %v1718
        %v1806 = vunpack.c.h.b16 %v1718
        %v1807 = vunpack.c.l.b16 %v1719
        %v1808 = vunpack.c.h.b16 %v1719
        %v1809 = vunpack.c.l.b16 %v1720
        %v1810 = vunpack.c.h.b16 %v1720
        %v1811 = vunpack.c.l.b16 %v1721
        %v1812 = vunpack.c.h.b16 %v1721
        %v1813 = vunpack.c.l.b16 %v1722
        %v1814 = vunpack.c.h.b16 %v1722
        %v1815 = vunpack.c.l.b16 %v1723
        %v1816 = vunpack.c.h.b16 %v1723
        %v1817 = vunpack.c.l.b16 %v1724
        %v1818 = vunpack.c.h.b16 %v1724
        %v1819 = vunpack.c.l.b16 %v1725
        %v1820 = vunpack.c.h.b16 %v1725
        %v1821 = vunpack.c.l.b16 %v1726
        %v1822 = vunpack.c.h.b16 %v1726
        %v1823 = vunpack.c.l.b16 %v1727
        %v1824 = vunpack.c.h.b16 %v1727
        %v1825 = vunpack.c.l.b16 %v1728
        %v1826 = vunpack.c.h.b16 %v1728
        %v1827 = vunpack.c.l.b16 %v1729
        %v1828 = vunpack.c.h.b16 %v1729
        %v1829 = vunpack.c.l.b16 %v1730
        %v1830 = vunpack.c.h.b16 %v1730
        %v1831 = vunpack.c.l.b16 %v1731
        %v1832 = vunpack.c.h.b16 %v1731
        %v1833 = vunpack.c.l.b16 %v1732
        %v1834 = vunpack.c.h.b16 %v1732
        %v1835 = vunpack.c.l.b16 %v1733
        %v1836 = vunpack.c.h.b16 %v1733
        %v1837 = vunpack.c.l.b16 %v1734
        %v1838 = vunpack.c.h.b16 %v1734
        %v1839 = vunpack.c.l.b16 %v1735
        %v1840 = vunpack.c.h.b16 %v1735
        %v1841 = vunpack.c.l.b16 %v1736
        %v1842 = vunpack.c.h.b16 %v1736
        %v1843 = vunpack.c.l.b16 %v1737
        %v1844 = vunpack.c.h.b16 %v1737
        %v1845 = vunpack.c.l.b16 %v1738
        %v1846 = vunpack.c.h.b16 %v1738
        %v1847 = vpack.c.b16 %v1785, %v1783
        %v1848 = vpack.c.b16 %v1786, %v1784
        %v1849 = vpack.c.b16 %v1789, %v1787
        %v1850 = vpack.c.b16 %v1790, %v1788
        %v1851 = vpack.c.b16 %v1793, %v1791
        %v1852 = vpack.c.b16 %v1794, %v1792
        %v1853 = vpack.c.b16 %v1797, %v1795
        %v1854 = vpack.c.b16 %v1798, %v1796
        %v1855 = vpack.c.b16 %v1801, %v1799
        %v1856 = vpack.c.b16 %v1802, %v1800
        %v1857 = vpack.c.b16 %v1805, %v1803
        %v1858 = vpack.c.b16 %v1806, %v1804
        %v1859 = vpack.c.b16 %v1809, %v1807
        %v1860 = vpack.c.b16 %v1810, %v1808
        %v1861 = vpack.c.b16 %v1813, %v1811
        %v1862 = vpack.c.b16 %v1814, %v1812
        %v1863 = vpack.c.b16 %v1817, %v1815
        %v1864 = vpack.c.b16 %v1818, %v1816
        %v1865 = vpack.c.b16 %v1821, %v1819
        %v1866 = vpack.c.b16 %v1822, %v1820
        %v1867 = vpack.c.b16 %v1825, %v1823
        %v1868 = vpack.c.b16 %v1826, %v1824
        %v1869 = vpack.c.b16 %v1829, %v1827
        %v1870 = vpack.c.b16 %v1830, %v1828
        %v1871 = vpack.c.b16 %v1833, %v1831
        %v1872 = vpack.c.b16 %v1834, %v1832
        %v1873 = vpack.c.b16 %v1837, %v1835
        %v1874 = vpack.c.b16 %v1838, %v1836
        %v1875 = vpack.c.b16 %v1841, %v1839
        %v1876 = vpack.c.b16 %v1842, %v1840
        %v1877 = vpack.c.b16 %v1845, %v1843
        %v1878 = vpack.c.b16 %v1846, %v1844
        %1911 = vmatprep.subr.bf16.mxu0 %v1862
        %1912 = vmatpush1.bf16.msra.mxu0 %v1861
        %1913 = vmatprep.subr.bf16.mxu0 %v1860
        %1914 = vmatpush1.bf16.msra.mxu0 %v1859
        %1915 = vmatprep.subr.bf16.mxu0 %v1858
        %1916 = vmatpush1.bf16.msra.mxu0 %v1857
        %1917 = vmatprep.subr.bf16.mxu0 %v1856
        %1918 = vmatpush1.bf16.msra.mxu0 %v1855
        %1919 = vmatprep.subr.bf16.mxu0 %v1854
        %1920 = vmatpush1.bf16.msra.mxu0 %v1853
        %1921 = vmatprep.subr.bf16.mxu0 %v1852
        %1922 = vmatpush1.bf16.msra.mxu0 %v1851
        %1923 = vmatprep.subr.bf16.mxu0 %v1850
        %1924 = vmatpush1.bf16.msra.mxu0 %v1849
        %1925 = vmatprep.subr.bf16.mxu0 %v1848
        %1926 = vmatpush1.bf16.msra.mxu0 %v1847
        %1927 = vmatprep.subr.bf16.mxu0 %v1878
        %1928 = vmatpush2.bf16.msra.mxu0 %v1877
        %1929 = vmatprep.subr.bf16.mxu0 %v1876
        %1930 = vmatpush2.bf16.msra.mxu0 %v1875
        %1931 = vmatprep.subr.bf16.mxu0 %v1874
        %1932 = vmatpush2.bf16.msra.mxu0 %v1873
        %1933 = vmatprep.subr.bf16.mxu0 %v1872
        %1934 = vmatpush2.bf16.msra.mxu0 %v1871
        %1935 = vmatprep.subr.bf16.mxu0 %v1870
        %1936 = vmatpush2.bf16.msra.mxu0 %v1869
        %1937 = vmatprep.subr.bf16.mxu0 %v1868
        %1938 = vmatpush2.bf16.msra.mxu0 %v1867
        %1939 = vmatprep.subr.bf16.mxu0 %v1866
        %1940 = vmatpush2.bf16.msra.mxu0 %v1865
        %1941 = vmatprep.subr.bf16.mxu0 %v1864
        %1942 = vmatpush2.bf16.msra.mxu0 %v1863
        %1943 = vmatprep.mubr.bf16.mxu0 %v1644
        %1944 = vmatmul.mubr.bf16.gmra.mxu0 %v1643
        %v1945 = vpop.f32.mrf.mxu0
        %v1946 = vadd.f32 %v1744, %v1945
        %v1947 = vpop.f32.mrf.mxu0
        %v1948 = vadd.f32 %v1748, %v1947
        %v1949 = vpop.f32.mrf.mxu0
        %v1950 = vadd.f32 %v1744, %v1949
        %v1951 = vpop.f32.mrf.mxu0
        %v1952 = vadd.f32 %v1748, %v1951
        %1953 = vmatprep.mubr.bf16.mxu0 %v1646
        %1954 = vmatmul.mubr.bf16.gmra.mxu0 %v1645
        %v1955 = vpop.f32.mrf.mxu0
        %v1956 = vadd.f32 %v1744, %v1955
        %v1957 = vpop.f32.mrf.mxu0
        %v1958 = vadd.f32 %v1748, %v1957
        %v1959 = vpop.f32.mrf.mxu0
        %v1960 = vadd.f32 %v1744, %v1959
        %v1961 = vpop.f32.mrf.mxu0
        %v1962 = vadd.f32 %v1748, %v1961
        %1963 = vmatprep.mubr.bf16.mxu0 %v1648
        %1964 = vmatmul.mubr.bf16.gmra.mxu0 %v1647
        %v1965 = vpop.f32.mrf.mxu0
        %v1966 = vadd.f32 %v1744, %v1965
        %v1967 = vpop.f32.mrf.mxu0
        %v1968 = vadd.f32 %v1748, %v1967
        %v1969 = vpop.f32.mrf.mxu0
        %v1970 = vadd.f32 %v1744, %v1969
        %v1971 = vpop.f32.mrf.mxu0
        %v1972 = vadd.f32 %v1748, %v1971
        %1973 = vmatprep.mubr.bf16.mxu0 %v1650
        %1974 = vmatmul.mubr.bf16.gmra.mxu0 %v1649
        %v1975 = vpop.f32.mrf.mxu0
        %v1976 = vadd.f32 %v1744, %v1975
        %v1977 = vpop.f32.mrf.mxu0
        %v1978 = vadd.f32 %v1748, %v1977
        %v1979 = vpop.f32.mrf.mxu0
        %v1980 = vadd.f32 %v1744, %v1979
        %v1981 = vpop.f32.mrf.mxu0
        %v1982 = vadd.f32 %v1748, %v1981
        %1983 = vmatprep.mubr.bf16.mxu0 %v1652
        %1984 = vmatmul.mubr.bf16.gmra.mxu0 %v1651
        %v1985 = vpop.f32.mrf.mxu0
        %v1986 = vadd.f32 %v1744, %v1985
        %v1987 = vpop.f32.mrf.mxu0
        %v1988 = vadd.f32 %v1748, %v1987
        %v1989 = vpop.f32.mrf.mxu0
        %v1990 = vadd.f32 %v1744, %v1989
        %v1991 = vpop.f32.mrf.mxu0
        %v1992 = vadd.f32 %v1748, %v1991
        %1993 = vmatprep.mubr.bf16.mxu0 %v1654
        %1994 = vmatmul.mubr.bf16.gmra.mxu0 %v1653
        %v1995 = vpop.f32.mrf.mxu0
        %v1996 = vadd.f32 %v1744, %v1995
        %v1997 = vpop.f32.mrf.mxu0
        %v1998 = vadd.f32 %v1748, %v1997
        %v1999 = vpop.f32.mrf.mxu0
        %v2000 = vadd.f32 %v1744, %v1999
        %v2001 = vpop.f32.mrf.mxu0
        %v2002 = vadd.f32 %v1748, %v2001
        %2003 = vmatprep.mubr.bf16.mxu0 %v1656
        %2004 = vmatmul.mubr.bf16.gmra.mxu0 %v1655
        %v2005 = vpop.f32.mrf.mxu0
        %v2006 = vadd.f32 %v1744, %v2005
        %v2007 = vpop.f32.mrf.mxu0
        %v2008 = vadd.f32 %v1748, %v2007
        %v2009 = vpop.f32.mrf.mxu0
        %v2010 = vadd.f32 %v1744, %v2009
        %v2011 = vpop.f32.mrf.mxu0
        %v2012 = vadd.f32 %v1748, %v2011
        %2013 = vmatprep.mubr.bf16.mxu0 %v1658
        %2014 = vmatmul.mubr.bf16.gmra.mxu0 %v1657
        %v2015 = vpop.f32.mrf.mxu0
        %v2016 = vadd.f32 %v1744, %v2015
        %v2017 = vpop.f32.mrf.mxu0
        %v2018 = vadd.f32 %v1748, %v2017
        %v2019 = vpop.f32.mrf.mxu0
        %v2020 = vadd.f32 %v1744, %v2019
        %v2021 = vpop.f32.mrf.mxu0
        %v2022 = vadd.f32 %v1748, %v2021
        %2023 = vmatprep.mubr.bf16.mxu0 %v1660
        %2024 = vmatmul.mubr.bf16.gmra.mxu0 %v1659
        %v2025 = vpop.f32.mrf.mxu0
        %v2026 = vadd.f32 %v1744, %v2025
        %v2027 = vpop.f32.mrf.mxu0
        %v2028 = vadd.f32 %v1748, %v2027
        %v2029 = vpop.f32.mrf.mxu0
        %v2030 = vadd.f32 %v1744, %v2029
        %v2031 = vpop.f32.mrf.mxu0
        %v2032 = vadd.f32 %v1748, %v2031
        %2033 = vmatprep.mubr.bf16.mxu0 %v1662
        %2034 = vmatmul.mubr.bf16.gmra.mxu0 %v1661
        %v2035 = vpop.f32.mrf.mxu0
        %v2036 = vadd.f32 %v1744, %v2035
        %v2037 = vpop.f32.mrf.mxu0
        %v2038 = vadd.f32 %v1748, %v2037
        %v2039 = vpop.f32.mrf.mxu0
        %v2040 = vadd.f32 %v1744, %v2039
        %v2041 = vpop.f32.mrf.mxu0
        %v2042 = vadd.f32 %v1748, %v2041
        %2043 = vmatprep.mubr.bf16.mxu0 %v1664
        %2044 = vmatmul.mubr.bf16.gmra.mxu0 %v1663
        %v2045 = vpop.f32.mrf.mxu0
        %v2046 = vadd.f32 %v1744, %v2045
        %v2047 = vpop.f32.mrf.mxu0
        %v2048 = vadd.f32 %v1748, %v2047
        %v2049 = vpop.f32.mrf.mxu0
        %v2050 = vadd.f32 %v1744, %v2049
        %v2051 = vpop.f32.mrf.mxu0
        %v2052 = vadd.f32 %v1748, %v2051
        %2053 = vmatprep.mubr.bf16.mxu0 %v1666
        %2054 = vmatmul.mubr.bf16.gmra.mxu0 %v1665
        %v2055 = vpop.f32.mrf.mxu0
        %v2056 = vadd.f32 %v1744, %v2055
        %v2057 = vpop.f32.mrf.mxu0
        %v2058 = vadd.f32 %v1748, %v2057
        %v2059 = vpop.f32.mrf.mxu0
        %v2060 = vadd.f32 %v1744, %v2059
        %v2061 = vpop.f32.mrf.mxu0
        %v2062 = vadd.f32 %v1748, %v2061
        %2063 = vmatprep.mubr.bf16.mxu0 %v1668
        %2064 = vmatmul.mubr.bf16.gmra.mxu0 %v1667
        %v2065 = vpop.f32.mrf.mxu0
        %v2066 = vadd.f32 %v1744, %v2065
        %v2067 = vpop.f32.mrf.mxu0
        %v2068 = vadd.f32 %v1748, %v2067
        %v2069 = vpop.f32.mrf.mxu0
        %v2070 = vadd.f32 %v1744, %v2069
        %v2071 = vpop.f32.mrf.mxu0
        %v2072 = vadd.f32 %v1748, %v2071
        %2073 = vmatprep.mubr.bf16.mxu0 %v1670
        %2074 = vmatmul.mubr.bf16.gmra.mxu0 %v1669
        %v2075 = vpop.f32.mrf.mxu0
        %v2076 = vadd.f32 %v1744, %v2075
        %v2077 = vpop.f32.mrf.mxu0
        %v2078 = vadd.f32 %v1748, %v2077
        %v2079 = vpop.f32.mrf.mxu0
        %v2080 = vadd.f32 %v1744, %v2079
        %v2081 = vpop.f32.mrf.mxu0
        %v2082 = vadd.f32 %v1748, %v2081
        %2083 = vmatprep.mubr.bf16.mxu0 %v1672
        %2084 = vmatmul.mubr.bf16.gmra.mxu0 %v1671
        %v2085 = vpop.f32.mrf.mxu0
        %v2086 = vadd.f32 %v1744, %v2085
        %v2087 = vpop.f32.mrf.mxu0
        %v2088 = vadd.f32 %v1748, %v2087
        %v2089 = vpop.f32.mrf.mxu0
        %v2090 = vadd.f32 %v1744, %v2089
        %v2091 = vpop.f32.mrf.mxu0
        %v2092 = vadd.f32 %v1748, %v2091
        %2093 = vmatprep.mubr.bf16.mxu0 %v1674
        %2094 = vmatmul.mubr.bf16.gmra.mxu0 %v1673
        %v2095 = vpop.f32.mrf.mxu0
        %v2096 = vadd.f32 %v1744, %v2095
        %v2097 = vpop.f32.mrf.mxu0
        %v2098 = vadd.f32 %v1748, %v2097
        %v2099 = vpop.f32.mrf.mxu0
        %v2100 = vadd.f32 %v1744, %v2099
        %v2101 = vpop.f32.mrf.mxu0
        %v2102 = vadd.f32 %v1748, %v2101
        %2103 = vmatprep.mubr.bf16.mxu0 %v1676
        %2104 = vmatmul.mubr.bf16.gmra.mxu0 %v1675
        %v2105 = vpop.f32.mrf.mxu0
        %v2106 = vadd.f32 %v1744, %v2105
        %v2107 = vpop.f32.mrf.mxu0
        %v2108 = vadd.f32 %v1748, %v2107
        %v2109 = vpop.f32.mrf.mxu0
        %v2110 = vadd.f32 %v1744, %v2109
        %v2111 = vpop.f32.mrf.mxu0
        %v2112 = vadd.f32 %v1748, %v2111
        %2113 = vmatprep.mubr.bf16.mxu0 %v1678
        %2114 = vmatmul.mubr.bf16.gmra.mxu0 %v1677
        %v2115 = vpop.f32.mrf.mxu0
        %v2116 = vadd.f32 %v1744, %v2115
        %v2117 = vpop.f32.mrf.mxu0
        %v2118 = vadd.f32 %v1748, %v2117
        %v2119 = vpop.f32.mrf.mxu0
        %v2120 = vadd.f32 %v1744, %v2119
        %v2121 = vpop.f32.mrf.mxu0
        %v2122 = vadd.f32 %v1748, %v2121
        %2123 = vmatprep.mubr.bf16.mxu0 %v1680
        %2124 = vmatmul.mubr.bf16.gmra.mxu0 %v1679
        %v2125 = vpop.f32.mrf.mxu0
        %v2126 = vadd.f32 %v1744, %v2125
        %v2127 = vpop.f32.mrf.mxu0
        %v2128 = vadd.f32 %v1748, %v2127
        %v2129 = vpop.f32.mrf.mxu0
        %v2130 = vadd.f32 %v1744, %v2129
        %v2131 = vpop.f32.mrf.mxu0
        %v2132 = vadd.f32 %v1748, %v2131
        %2133 = vmatprep.mubr.bf16.mxu0 %v1682
        %2134 = vmatmul.mubr.bf16.gmra.mxu0 %v1681
        %v2135 = vpop.f32.mrf.mxu0
        %v2136 = vadd.f32 %v1744, %v2135
        %v2137 = vpop.f32.mrf.mxu0
        %v2138 = vadd.f32 %v1748, %v2137
        %v2139 = vpop.f32.mrf.mxu0
        %v2140 = vadd.f32 %v1744, %v2139
        %v2141 = vpop.f32.mrf.mxu0
        %v2142 = vadd.f32 %v1748, %v2141
        %2143 = vmatprep.mubr.bf16.mxu0 %v1684
        %2144 = vmatmul.mubr.bf16.gmra.mxu0 %v1683
        %v2145 = vpop.f32.mrf.mxu0
        %v2146 = vadd.f32 %v1744, %v2145
        %v2147 = vpop.f32.mrf.mxu0
        %v2148 = vadd.f32 %v1748, %v2147
        %v2149 = vpop.f32.mrf.mxu0
        %v2150 = vadd.f32 %v1744, %v2149
        %v2151 = vpop.f32.mrf.mxu0
        %v2152 = vadd.f32 %v1748, %v2151
        %2153 = vmatprep.mubr.bf16.mxu0 %v1686
        %2154 = vmatmul.mubr.bf16.gmra.mxu0 %v1685
        %v2155 = vpop.f32.mrf.mxu0
        %v2156 = vadd.f32 %v1744, %v2155
        %v2157 = vpop.f32.mrf.mxu0
        %v2158 = vadd.f32 %v1748, %v2157
        %v2159 = vpop.f32.mrf.mxu0
        %v2160 = vadd.f32 %v1744, %v2159
        %v2161 = vpop.f32.mrf.mxu0
        %v2162 = vadd.f32 %v1748, %v2161
        %2163 = vmatprep.mubr.bf16.mxu0 %v1688
        %2164 = vmatmul.mubr.bf16.gmra.mxu0 %v1687
        %v2165 = vpop.f32.mrf.mxu0
        %v2166 = vadd.f32 %v1744, %v2165
        %v2167 = vpop.f32.mrf.mxu0
        %v2168 = vadd.f32 %v1748, %v2167
        %v2169 = vpop.f32.mrf.mxu0
        %v2170 = vadd.f32 %v1744, %v2169
        %v2171 = vpop.f32.mrf.mxu0
        %v2172 = vadd.f32 %v1748, %v2171
        %2173 = vmatprep.mubr.bf16.mxu0 %v1690
        %2174 = vmatmul.mubr.bf16.gmra.mxu0 %v1689
        %v2175 = vpop.f32.mrf.mxu0
        %v2176 = vadd.f32 %v1744, %v2175
        %v2177 = vpop.f32.mrf.mxu0
        %v2178 = vadd.f32 %v1748, %v2177
        %v2179 = vpop.f32.mrf.mxu0
        %v2180 = vadd.f32 %v1744, %v2179
        %v2181 = vpop.f32.mrf.mxu0
        %v2182 = vadd.f32 %v1748, %v2181
        %2183 = vmatprep.mubr.bf16.mxu0 %v1692
        %2184 = vmatmul.mubr.bf16.gmra.mxu0 %v1691
        %v2185 = vpop.f32.mrf.mxu0
        %v2186 = vadd.f32 %v1744, %v2185
        %v2187 = vpop.f32.mrf.mxu0
        %v2188 = vadd.f32 %v1748, %v2187
        %v2189 = vpop.f32.mrf.mxu0
        %v2190 = vadd.f32 %v1744, %v2189
        %v2191 = vpop.f32.mrf.mxu0
        %v2192 = vadd.f32 %v1748, %v2191
        %2193 = vmatprep.mubr.bf16.mxu0 %v1694
        %2194 = vmatmul.mubr.bf16.gmra.mxu0 %v1693
        %v2195 = vpop.f32.mrf.mxu0
        %v2196 = vadd.f32 %v1744, %v2195
        %v2197 = vpop.f32.mrf.mxu0
        %v2198 = vadd.f32 %v1748, %v2197
        %v2199 = vpop.f32.mrf.mxu0
        %v2200 = vadd.f32 %v1744, %v2199
        %v2201 = vpop.f32.mrf.mxu0
        %v2202 = vadd.f32 %v1748, %v2201
        %2203 = vmatprep.mubr.bf16.mxu0 %v1696
        %2204 = vmatmul.mubr.bf16.gmra.mxu0 %v1695
        %v2205 = vpop.f32.mrf.mxu0
        %v2206 = vadd.f32 %v1744, %v2205
        %v2207 = vpop.f32.mrf.mxu0
        %v2208 = vadd.f32 %v1748, %v2207
        %v2209 = vpop.f32.mrf.mxu0
        %v2210 = vadd.f32 %v1744, %v2209
        %v2211 = vpop.f32.mrf.mxu0
        %v2212 = vadd.f32 %v1748, %v2211
        %2213 = vmatprep.mubr.bf16.mxu0 %v1698
        %2214 = vmatmul.mubr.bf16.gmra.mxu0 %v1697
        %v2215 = vpop.f32.mrf.mxu0
        %v2216 = vadd.f32 %v1744, %v2215
        %v2217 = vpop.f32.mrf.mxu0
        %v2218 = vadd.f32 %v1748, %v2217
        %v2219 = vpop.f32.mrf.mxu0
        %v2220 = vadd.f32 %v1744, %v2219
        %v2221 = vpop.f32.mrf.mxu0
        %v2222 = vadd.f32 %v1748, %v2221
        %2223 = vmatprep.mubr.bf16.mxu0 %v1700
        %2224 = vmatmul.mubr.bf16.gmra.mxu0 %v1699
        %v2225 = vpop.f32.mrf.mxu0
        %v2226 = vadd.f32 %v1744, %v2225
        %v2227 = vpop.f32.mrf.mxu0
        %v2228 = vadd.f32 %v1748, %v2227
        %v2229 = vpop.f32.mrf.mxu0
        %v2230 = vadd.f32 %v1744, %v2229
        %v2231 = vpop.f32.mrf.mxu0
        %v2232 = vadd.f32 %v1748, %v2231
        %2233 = vmatprep.mubr.bf16.mxu0 %v1702
        %2234 = vmatmul.mubr.bf16.gmra.mxu0 %v1701
        %v2235 = vpop.f32.mrf.mxu0
        %v2236 = vadd.f32 %v1744, %v2235
        %v2237 = vpop.f32.mrf.mxu0
        %v2238 = vadd.f32 %v1748, %v2237
        %v2239 = vpop.f32.mrf.mxu0
        %v2240 = vadd.f32 %v1744, %v2239
        %v2241 = vpop.f32.mrf.mxu0
        %v2242 = vadd.f32 %v1748, %v2241
        %2243 = vmatprep.mubr.bf16.mxu0 %v1704
        %2244 = vmatmul.mubr.bf16.gmra.mxu0 %v1703
        %v2245 = vpop.f32.mrf.mxu0
        %v2246 = vadd.f32 %v1744, %v2245
        %v2247 = vpop.f32.mrf.mxu0
        %v2248 = vadd.f32 %v1748, %v2247
        %v2249 = vpop.f32.mrf.mxu0
        %v2250 = vadd.f32 %v1744, %v2249
        %v2251 = vpop.f32.mrf.mxu0
        %v2252 = vadd.f32 %v1748, %v2251
        %2253 = vmatprep.mubr.bf16.mxu0 %v1706
        %2254 = vmatmul.mubr.bf16.gmra.mxu0 %v1705
        %v2255 = vpop.f32.mrf.mxu0
        %v2256 = vadd.f32 %v1744, %v2255
        %v2257 = vpop.f32.mrf.mxu0
        %v2258 = vadd.f32 %v1748, %v2257
        %v2259 = vpop.f32.mrf.mxu0
        %v2260 = vadd.f32 %v1744, %v2259
        %v2261 = vpop.f32.mrf.mxu0
        %v2262 = vadd.f32 %v1748, %v2261
        %2263 = vdwg.mxu0
        %v2264 = vmax.f32 %v1946, 0.0
        %v2265 = vmax.f32 %v1948, 0.0
        %v2266 = vmax.f32 %v1950, 0.0
        %v2267 = vmax.f32 %v1952, 0.0
        %v2268 = vmax.f32 %v1956, 0.0
        %v2269 = vmax.f32 %v1958, 0.0
        %v2270 = vmax.f32 %v1960, 0.0
        %v2271 = vmax.f32 %v1962, 0.0
        %v2272 = vmax.f32 %v1966, 0.0
        %v2273 = vmax.f32 %v1968, 0.0
        %v2274 = vmax.f32 %v1970, 0.0
        %v2275 = vmax.f32 %v1972, 0.0
        %v2276 = vmax.f32 %v1976, 0.0
        %v2277 = vmax.f32 %v1978, 0.0
        %v2278 = vmax.f32 %v1980, 0.0
        %v2279 = vmax.f32 %v1982, 0.0
        %v2280 = vmax.f32 %v1986, 0.0
        %v2281 = vmax.f32 %v1988, 0.0
        %v2282 = vmax.f32 %v1990, 0.0
        %v2283 = vmax.f32 %v1992, 0.0
        %v2284 = vmax.f32 %v1996, 0.0
        %v2285 = vmax.f32 %v1998, 0.0
        %v2286 = vmax.f32 %v2000, 0.0
        %v2287 = vmax.f32 %v2002, 0.0
        %v2288 = vmax.f32 %v2006, 0.0
        %v2289 = vmax.f32 %v2008, 0.0
        %v2290 = vmax.f32 %v2010, 0.0
        %v2291 = vmax.f32 %v2012, 0.0
        %v2292 = vmax.f32 %v2016, 0.0
        %v2293 = vmax.f32 %v2018, 0.0
        %v2294 = vmax.f32 %v2020, 0.0
        %v2295 = vmax.f32 %v2022, 0.0
        %v2296 = vmax.f32 %v2026, 0.0
        %v2297 = vmax.f32 %v2028, 0.0
        %v2298 = vmax.f32 %v2030, 0.0
        %v2299 = vmax.f32 %v2032, 0.0
        %v2300 = vmax.f32 %v2036, 0.0
        %v2301 = vmax.f32 %v2038, 0.0
        %v2302 = vmax.f32 %v2040, 0.0
        %v2303 = vmax.f32 %v2042, 0.0
        %v2304 = vmax.f32 %v2046, 0.0
        %v2305 = vmax.f32 %v2048, 0.0
        %v2306 = vmax.f32 %v2050, 0.0
        %v2307 = vmax.f32 %v2052, 0.0
        %v2308 = vmax.f32 %v2056, 0.0
        %v2309 = vmax.f32 %v2058, 0.0
        %v2310 = vmax.f32 %v2060, 0.0
        %v2311 = vmax.f32 %v2062, 0.0
        %v2312 = vmax.f32 %v2066, 0.0
        %v2313 = vmax.f32 %v2068, 0.0
        %v2314 = vmax.f32 %v2070, 0.0
        %v2315 = vmax.f32 %v2072, 0.0
        %v2316 = vmax.f32 %v2076, 0.0
        %v2317 = vmax.f32 %v2078, 0.0
        %v2318 = vmax.f32 %v2080, 0.0
        %v2319 = vmax.f32 %v2082, 0.0
        %v2320 = vmax.f32 %v2086, 0.0
        %v2321 = vmax.f32 %v2088, 0.0
        %v2322 = vmax.f32 %v2090, 0.0
        %v2323 = vmax.f32 %v2092, 0.0
        %v2324 = vmax.f32 %v2096, 0.0
        %v2325 = vmax.f32 %v2098, 0.0
        %v2326 = vmax.f32 %v2100, 0.0
        %v2327 = vmax.f32 %v2102, 0.0
        %v2328 = vmax.f32 %v2106, 0.0
        %v2329 = vmax.f32 %v2108, 0.0
        %v2330 = vmax.f32 %v2110, 0.0
        %v2331 = vmax.f32 %v2112, 0.0
        %v2332 = vmax.f32 %v2116, 0.0
        %v2333 = vmax.f32 %v2118, 0.0
        %v2334 = vmax.f32 %v2120, 0.0
        %v2335 = vmax.f32 %v2122, 0.0
        %v2336 = vmax.f32 %v2126, 0.0
        %v2337 = vmax.f32 %v2128, 0.0
        %v2338 = vmax.f32 %v2130, 0.0
        %v2339 = vmax.f32 %v2132, 0.0
        %v2340 = vmax.f32 %v2136, 0.0
        %v2341 = vmax.f32 %v2138, 0.0
        %v2342 = vmax.f32 %v2140, 0.0
        %v2343 = vmax.f32 %v2142, 0.0
        %v2344 = vmax.f32 %v2146, 0.0
        %v2345 = vmax.f32 %v2148, 0.0
        %v2346 = vmax.f32 %v2150, 0.0
        %v2347 = vmax.f32 %v2152, 0.0
        %v2348 = vmax.f32 %v2156, 0.0
        %v2349 = vmax.f32 %v2158, 0.0
        %v2350 = vmax.f32 %v2160, 0.0
        %v2351 = vmax.f32 %v2162, 0.0
        %v2352 = vmax.f32 %v2166, 0.0
        %v2353 = vmax.f32 %v2168, 0.0
        %v2354 = vmax.f32 %v2170, 0.0
        %v2355 = vmax.f32 %v2172, 0.0
        %v2356 = vmax.f32 %v2176, 0.0
        %v2357 = vmax.f32 %v2178, 0.0
        %v2358 = vmax.f32 %v2180, 0.0
        %v2359 = vmax.f32 %v2182, 0.0
        %v2360 = vmax.f32 %v2186, 0.0
        %v2361 = vmax.f32 %v2188, 0.0
        %v2362 = vmax.f32 %v2190, 0.0
        %v2363 = vmax.f32 %v2192, 0.0
        %v2364 = vmax.f32 %v2196, 0.0
        %v2365 = vmax.f32 %v2198, 0.0
        %v2366 = vmax.f32 %v2200, 0.0
        %v2367 = vmax.f32 %v2202, 0.0
        %v2368 = vmax.f32 %v2206, 0.0
        %v2369 = vmax.f32 %v2208, 0.0
        %v2370 = vmax.f32 %v2210, 0.0
        %v2371 = vmax.f32 %v2212, 0.0
        %v2372 = vmax.f32 %v2216, 0.0
        %v2373 = vmax.f32 %v2218, 0.0
        %v2374 = vmax.f32 %v2220, 0.0
        %v2375 = vmax.f32 %v2222, 0.0
        %v2376 = vmax.f32 %v2226, 0.0
        %v2377 = vmax.f32 %v2228, 0.0
        %v2378 = vmax.f32 %v2230, 0.0
        %v2379 = vmax.f32 %v2232, 0.0
        %v2380 = vmax.f32 %v2236, 0.0
        %v2381 = vmax.f32 %v2238, 0.0
        %v2382 = vmax.f32 %v2240, 0.0
        %v2383 = vmax.f32 %v2242, 0.0
        %v2384 = vmax.f32 %v2246, 0.0
        %v2385 = vmax.f32 %v2248, 0.0
        %v2386 = vmax.f32 %v2250, 0.0
        %v2387 = vmax.f32 %v2252, 0.0
        %v2388 = vmax.f32 %v2256, 0.0
        %v2389 = vmax.f32 %v2258, 0.0
        %v2390 = vmax.f32 %v2260, 0.0
        %v2391 = vmax.f32 %v2262, 0.0
        %v2392 = vpack.c.bf16 %v2266, %v2264
        %v2393 = vpack.c.bf16 %v2267, %v2265
        %v2394 = vpack.c.bf16 %v2270, %v2268
        %v2395 = vpack.c.bf16 %v2271, %v2269
        %v2396 = vpack.c.bf16 %v2274, %v2272
        %v2397 = vpack.c.bf16 %v2275, %v2273
        %v2398 = vpack.c.bf16 %v2278, %v2276
        %v2399 = vpack.c.bf16 %v2279, %v2277
        %v2400 = vpack.c.bf16 %v2282, %v2280
        %v2401 = vpack.c.bf16 %v2283, %v2281
        %v2402 = vpack.c.bf16 %v2286, %v2284
        %v2403 = vpack.c.bf16 %v2287, %v2285
        %v2404 = vpack.c.bf16 %v2290, %v2288
        %v2405 = vpack.c.bf16 %v2291, %v2289
        %v2406 = vpack.c.bf16 %v2294, %v2292
        %v2407 = vpack.c.bf16 %v2295, %v2293
        %v2408 = vpack.c.bf16 %v2298, %v2296
        %v2409 = vpack.c.bf16 %v2299, %v2297
        %v2410 = vpack.c.bf16 %v2302, %v2300
        %v2411 = vpack.c.bf16 %v2303, %v2301
        %v2412 = vpack.c.bf16 %v2306, %v2304
        %v2413 = vpack.c.bf16 %v2307, %v2305
        %v2414 = vpack.c.bf16 %v2310, %v2308
        %v2415 = vpack.c.bf16 %v2311, %v2309
        %v2416 = vpack.c.bf16 %v2314, %v2312
        %v2417 = vpack.c.bf16 %v2315, %v2313
        %v2418 = vpack.c.bf16 %v2318, %v2316
        %v2419 = vpack.c.bf16 %v2319, %v2317
        %v2420 = vpack.c.bf16 %v2322, %v2320
        %v2421 = vpack.c.bf16 %v2323, %v2321
        %v2422 = vpack.c.bf16 %v2326, %v2324
        %v2423 = vpack.c.bf16 %v2327, %v2325
        %v2424 = vpack.c.bf16 %v2330, %v2328
        %v2425 = vpack.c.bf16 %v2331, %v2329
        %v2426 = vpack.c.bf16 %v2334, %v2332
        %v2427 = vpack.c.bf16 %v2335, %v2333
        %v2428 = vpack.c.bf16 %v2338, %v2336
        %v2429 = vpack.c.bf16 %v2339, %v2337
        %v2430 = vpack.c.bf16 %v2342, %v2340
        %v2431 = vpack.c.bf16 %v2343, %v2341
        %v2432 = vpack.c.bf16 %v2346, %v2344
        %v2433 = vpack.c.bf16 %v2347, %v2345
        %v2434 = vpack.c.bf16 %v2350, %v2348
        %v2435 = vpack.c.bf16 %v2351, %v2349
        %v2436 = vpack.c.bf16 %v2354, %v2352
        %v2437 = vpack.c.bf16 %v2355, %v2353
        %v2438 = vpack.c.bf16 %v2358, %v2356
        %v2439 = vpack.c.bf16 %v2359, %v2357
        %v2440 = vpack.c.bf16 %v2362, %v2360
        %v2441 = vpack.c.bf16 %v2363, %v2361
        %v2442 = vpack.c.bf16 %v2366, %v2364
        %v2443 = vpack.c.bf16 %v2367, %v2365
        %v2444 = vpack.c.bf16 %v2370, %v2368
        %v2445 = vpack.c.bf16 %v2371, %v2369
        %v2446 = vpack.c.bf16 %v2374, %v2372
        %v2447 = vpack.c.bf16 %v2375, %v2373
        %v2448 = vpack.c.bf16 %v2378, %v2376
        %v2449 = vpack.c.bf16 %v2379, %v2377
        %v2450 = vpack.c.bf16 %v2382, %v2380
        %v2451 = vpack.c.bf16 %v2383, %v2381
        %v2452 = vpack.c.bf16 %v2386, %v2384
        %v2453 = vpack.c.bf16 %v2387, %v2385
        %v2454 = vpack.c.bf16 %v2390, %v2388
        %v2455 = vpack.c.bf16 %v2391, %v2389
        %v2456 = vld [vmem:[%s5] sm:$0xff]
        %v2457 = vld [vmem:[%s5 + $0x8] sm:$0xff]
        %v2458 = vld [vmem:[%s5 + $0x10] sm:$0xff]
        %v2459 = vld [vmem:[%s5 + $0x18] sm:$0xff]
        %v2460 = vld [vmem:[%s5 + $0x20] sm:$0xff]
        %v2461 = vld [vmem:[%s5 + $0x28] sm:$0xff]
        %v2462 = vld [vmem:[%s5 + $0x30] sm:$0xff]
        %v2463 = vld [vmem:[%s5 + $0x38] sm:$0xff]
        %v2464 = vld [vmem:[%s5 + $0x40] sm:$0xff]
        %v2465 = vld [vmem:[%s5 + $0x48] sm:$0xff]
        %v2466 = vld [vmem:[%s5 + $0x50] sm:$0xff]
        %v2467 = vld [vmem:[%s5 + $0x58] sm:$0xff]
        %v2468 = vld [vmem:[%s5 + $0x60] sm:$0xff]
        %v2469 = vld [vmem:[%s5 + $0x68] sm:$0xff]
        %v2470 = vld [vmem:[%s5 + $0x70] sm:$0xff]
        %v2471 = vld [vmem:[%s5 + $0x78] sm:$0xff]
        %v2472 = vld [vmem:[%s5 + $0x80] sm:$0xff]
        %v2473 = vld [vmem:[%s5 + $0x88] sm:$0xff]
        %v2474 = vld [vmem:[%s5 + $0x90] sm:$0xff]
        %v2475 = vld [vmem:[%s5 + $0x98] sm:$0xff]
        %v2476 = vld [vmem:[%s5 + $0xa0] sm:$0xff]
        %v2477 = vld [vmem:[%s5 + $0xa8] sm:$0xff]
        %v2478 = vld [vmem:[%s5 + $0xb0] sm:$0xff]
        %v2479 = vld [vmem:[%s5 + $0xb8] sm:$0xff]
        %v2480 = vld [vmem:[%s5 + $0xc0] sm:$0xff]
        %v2481 = vld [vmem:[%s5 + $0xc8] sm:$0xff]
        %v2482 = vld [vmem:[%s5 + $0xd0] sm:$0xff]
        %v2483 = vld [vmem:[%s5 + $0xd8] sm:$0xff]
        %v2484 = vld [vmem:[%s5 + $0xe0] sm:$0xff]
        %v2485 = vld [vmem:[%s5 + $0xe8] sm:$0xff]
        %v2486 = vld [vmem:[%s5 + $0xf0] sm:$0xff]
        %v2487 = vld [vmem:[%s5 + $0xf8] sm:$0xff]
        %v2488 = vld [vmem:[#allocation4] sm:$0x3]
        %v2490 = vlaneseq
        %v2491 = vshrl.u32 %v2490, 7
        %v2492 = vsub.s32 0, %v2491
        %v2493 = vrot.slane %v2488, %v2492
        %v2494 = vlaneseq
        %v2495 = vshrl.u32 %v2494, 7
        %v2496 = vsub.s32 1, %v2495
        %v2497 = vrot.slane %v2488, %v2496
        %v2532 = vunpack.c.l.b16 %v2456
        %v2533 = vunpack.c.h.b16 %v2456
        %v2534 = vunpack.c.l.b16 %v2457
        %v2535 = vunpack.c.h.b16 %v2457
        %v2536 = vunpack.c.l.b16 %v2458
        %v2537 = vunpack.c.h.b16 %v2458
        %v2538 = vunpack.c.l.b16 %v2459
        %v2539 = vunpack.c.h.b16 %v2459
        %v2540 = vunpack.c.l.b16 %v2460
        %v2541 = vunpack.c.h.b16 %v2460
        %v2542 = vunpack.c.l.b16 %v2461
        %v2543 = vunpack.c.h.b16 %v2461
        %v2544 = vunpack.c.l.b16 %v2462
        %v2545 = vunpack.c.h.b16 %v2462
        %v2546 = vunpack.c.l.b16 %v2463
        %v2547 = vunpack.c.h.b16 %v2463
        %v2548 = vunpack.c.l.b16 %v2464
        %v2549 = vunpack.c.h.b16 %v2464
        %v2550 = vunpack.c.l.b16 %v2465
        %v2551 = vunpack.c.h.b16 %v2465
        %v2552 = vunpack.c.l.b16 %v2466
        %v2553 = vunpack.c.h.b16 %v2466
        %v2554 = vunpack.c.l.b16 %v2467
        %v2555 = vunpack.c.h.b16 %v2467
        %v2556 = vunpack.c.l.b16 %v2468
        %v2557 = vunpack.c.h.b16 %v2468
        %v2558 = vunpack.c.l.b16 %v2469
        %v2559 = vunpack.c.h.b16 %v2469
        %v2560 = vunpack.c.l.b16 %v2470
        %v2561 = vunpack.c.h.b16 %v2470
        %v2562 = vunpack.c.l.b16 %v2471
        %v2563 = vunpack.c.h.b16 %v2471
        %v2564 = vunpack.c.l.b16 %v2472
        %v2565 = vunpack.c.h.b16 %v2472
        %v2566 = vunpack.c.l.b16 %v2473
        %v2567 = vunpack.c.h.b16 %v2473
        %v2568 = vunpack.c.l.b16 %v2474
        %v2569 = vunpack.c.h.b16 %v2474
        %v2570 = vunpack.c.l.b16 %v2475
        %v2571 = vunpack.c.h.b16 %v2475
        %v2572 = vunpack.c.l.b16 %v2476
        %v2573 = vunpack.c.h.b16 %v2476
        %v2574 = vunpack.c.l.b16 %v2477
        %v2575 = vunpack.c.h.b16 %v2477
        %v2576 = vunpack.c.l.b16 %v2478
        %v2577 = vunpack.c.h.b16 %v2478
        %v2578 = vunpack.c.l.b16 %v2479
        %v2579 = vunpack.c.h.b16 %v2479
        %v2580 = vunpack.c.l.b16 %v2480
        %v2581 = vunpack.c.h.b16 %v2480
        %v2582 = vunpack.c.l.b16 %v2481
        %v2583 = vunpack.c.h.b16 %v2481
        %v2584 = vunpack.c.l.b16 %v2482
        %v2585 = vunpack.c.h.b16 %v2482
        %v2586 = vunpack.c.l.b16 %v2483
        %v2587 = vunpack.c.h.b16 %v2483
        %v2588 = vunpack.c.l.b16 %v2484
        %v2589 = vunpack.c.h.b16 %v2484
        %v2590 = vunpack.c.l.b16 %v2485
        %v2591 = vunpack.c.h.b16 %v2485
        %v2592 = vunpack.c.l.b16 %v2486
        %v2593 = vunpack.c.h.b16 %v2486
        %v2594 = vunpack.c.l.b16 %v2487
        %v2595 = vunpack.c.h.b16 %v2487
        %v2596 = vpack.c.b16 %v2534, %v2532
        %v2597 = vpack.c.b16 %v2535, %v2533
        %v2598 = vpack.c.b16 %v2538, %v2536
        %v2599 = vpack.c.b16 %v2539, %v2537
        %v2600 = vpack.c.b16 %v2542, %v2540
        %v2601 = vpack.c.b16 %v2543, %v2541
        %v2602 = vpack.c.b16 %v2546, %v2544
        %v2603 = vpack.c.b16 %v2547, %v2545
        %v2604 = vpack.c.b16 %v2550, %v2548
        %v2605 = vpack.c.b16 %v2551, %v2549
        %v2606 = vpack.c.b16 %v2554, %v2552
        %v2607 = vpack.c.b16 %v2555, %v2553
        %v2608 = vpack.c.b16 %v2558, %v2556
        %v2609 = vpack.c.b16 %v2559, %v2557
        %v2610 = vpack.c.b16 %v2562, %v2560
        %v2611 = vpack.c.b16 %v2563, %v2561
        %v2612 = vpack.c.b16 %v2566, %v2564
        %v2613 = vpack.c.b16 %v2567, %v2565
        %v2614 = vpack.c.b16 %v2570, %v2568
        %v2615 = vpack.c.b16 %v2571, %v2569
        %v2616 = vpack.c.b16 %v2574, %v2572
        %v2617 = vpack.c.b16 %v2575, %v2573
        %v2618 = vpack.c.b16 %v2578, %v2576
        %v2619 = vpack.c.b16 %v2579, %v2577
        %v2620 = vpack.c.b16 %v2582, %v2580
        %v2621 = vpack.c.b16 %v2583, %v2581
        %v2622 = vpack.c.b16 %v2586, %v2584
        %v2623 = vpack.c.b16 %v2587, %v2585
        %v2624 = vpack.c.b16 %v2590, %v2588
        %v2625 = vpack.c.b16 %v2591, %v2589
        %v2626 = vpack.c.b16 %v2594, %v2592
        %v2627 = vpack.c.b16 %v2595, %v2593
        %2660 = vmatprep.subr.bf16.mxu0 %v2611
        %2661 = vmatpush1.bf16.msra.mxu0 %v2610
        %2662 = vmatprep.subr.bf16.mxu0 %v2609
        %2663 = vmatpush1.bf16.msra.mxu0 %v2608
        %2664 = vmatprep.subr.bf16.mxu0 %v2607
        %2665 = vmatpush1.bf16.msra.mxu0 %v2606
        %2666 = vmatprep.subr.bf16.mxu0 %v2605
        %2667 = vmatpush1.bf16.msra.mxu0 %v2604
        %2668 = vmatprep.subr.bf16.mxu0 %v2603
        %2669 = vmatpush1.bf16.msra.mxu0 %v2602
        %2670 = vmatprep.subr.bf16.mxu0 %v2601
        %2671 = vmatpush1.bf16.msra.mxu0 %v2600
        %2672 = vmatprep.subr.bf16.mxu0 %v2599
        %2673 = vmatpush1.bf16.msra.mxu0 %v2598
        %2674 = vmatprep.subr.bf16.mxu0 %v2597
        %2675 = vmatpush1.bf16.msra.mxu0 %v2596
        %2676 = vmatprep.subr.bf16.mxu0 %v2627
        %2677 = vmatpush2.bf16.msra.mxu0 %v2626
        %2678 = vmatprep.subr.bf16.mxu0 %v2625
        %2679 = vmatpush2.bf16.msra.mxu0 %v2624
        %2680 = vmatprep.subr.bf16.mxu0 %v2623
        %2681 = vmatpush2.bf16.msra.mxu0 %v2622
        %2682 = vmatprep.subr.bf16.mxu0 %v2621
        %2683 = vmatpush2.bf16.msra.mxu0 %v2620
        %2684 = vmatprep.subr.bf16.mxu0 %v2619
        %2685 = vmatpush2.bf16.msra.mxu0 %v2618
        %2686 = vmatprep.subr.bf16.mxu0 %v2617
        %2687 = vmatpush2.bf16.msra.mxu0 %v2616
        %2688 = vmatprep.subr.bf16.mxu0 %v2615
        %2689 = vmatpush2.bf16.msra.mxu0 %v2614
        %2690 = vmatprep.subr.bf16.mxu0 %v2613
        %2691 = vmatpush2.bf16.msra.mxu0 %v2612
        %2692 = vmatprep.mubr.bf16.mxu0 %v2393
        %2693 = vmatmul.mubr.bf16.gmra.mxu0 %v2392
        %v2694 = vpop.f32.mrf.mxu0
        %v2695 = vadd.f32 %v2493, %v2694
        %v2696 = vpop.f32.mrf.mxu0
        %v2697 = vadd.f32 %v2497, %v2696
        %v2698 = vpop.f32.mrf.mxu0
        %v2699 = vadd.f32 %v2493, %v2698
        %v2700 = vpop.f32.mrf.mxu0
        %v2701 = vadd.f32 %v2497, %v2700
        %2702 = vmatprep.mubr.bf16.mxu0 %v2395
        %2703 = vmatmul.mubr.bf16.gmra.mxu0 %v2394
        %v2704 = vpop.f32.mrf.mxu0
        %v2705 = vadd.f32 %v2493, %v2704
        %v2706 = vpop.f32.mrf.mxu0
        %v2707 = vadd.f32 %v2497, %v2706
        %v2708 = vpop.f32.mrf.mxu0
        %v2709 = vadd.f32 %v2493, %v2708
        %v2710 = vpop.f32.mrf.mxu0
        %v2711 = vadd.f32 %v2497, %v2710
        %2712 = vmatprep.mubr.bf16.mxu0 %v2397
        %2713 = vmatmul.mubr.bf16.gmra.mxu0 %v2396
        %v2714 = vpop.f32.mrf.mxu0
        %v2715 = vadd.f32 %v2493, %v2714
        %v2716 = vpop.f32.mrf.mxu0
        %v2717 = vadd.f32 %v2497, %v2716
        %v2718 = vpop.f32.mrf.mxu0
        %v2719 = vadd.f32 %v2493, %v2718
        %v2720 = vpop.f32.mrf.mxu0
        %v2721 = vadd.f32 %v2497, %v2720
        %2722 = vmatprep.mubr.bf16.mxu0 %v2399
        %2723 = vmatmul.mubr.bf16.gmra.mxu0 %v2398
        %v2724 = vpop.f32.mrf.mxu0
        %v2725 = vadd.f32 %v2493, %v2724
        %v2726 = vpop.f32.mrf.mxu0
        %v2727 = vadd.f32 %v2497, %v2726
        %v2728 = vpop.f32.mrf.mxu0
        %v2729 = vadd.f32 %v2493, %v2728
        %v2730 = vpop.f32.mrf.mxu0
        %v2731 = vadd.f32 %v2497, %v2730
        %2732 = vmatprep.mubr.bf16.mxu0 %v2401
        %2733 = vmatmul.mubr.bf16.gmra.mxu0 %v2400
        %v2734 = vpop.f32.mrf.mxu0
        %v2735 = vadd.f32 %v2493, %v2734
        %v2736 = vpop.f32.mrf.mxu0
        %v2737 = vadd.f32 %v2497, %v2736
        %v2738 = vpop.f32.mrf.mxu0
        %v2739 = vadd.f32 %v2493, %v2738
        %v2740 = vpop.f32.mrf.mxu0
        %v2741 = vadd.f32 %v2497, %v2740
        %2742 = vmatprep.mubr.bf16.mxu0 %v2403
        %2743 = vmatmul.mubr.bf16.gmra.mxu0 %v2402
        %v2744 = vpop.f32.mrf.mxu0
        %v2745 = vadd.f32 %v2493, %v2744
        %v2746 = vpop.f32.mrf.mxu0
        %v2747 = vadd.f32 %v2497, %v2746
        %v2748 = vpop.f32.mrf.mxu0
        %v2749 = vadd.f32 %v2493, %v2748
        %v2750 = vpop.f32.mrf.mxu0
        %v2751 = vadd.f32 %v2497, %v2750
        %2752 = vmatprep.mubr.bf16.mxu0 %v2405
        %2753 = vmatmul.mubr.bf16.gmra.mxu0 %v2404
        %v2754 = vpop.f32.mrf.mxu0
        %v2755 = vadd.f32 %v2493, %v2754
        %v2756 = vpop.f32.mrf.mxu0
        %v2757 = vadd.f32 %v2497, %v2756
        %v2758 = vpop.f32.mrf.mxu0
        %v2759 = vadd.f32 %v2493, %v2758
        %v2760 = vpop.f32.mrf.mxu0
        %v2761 = vadd.f32 %v2497, %v2760
        %2762 = vmatprep.mubr.bf16.mxu0 %v2407
        %2763 = vmatmul.mubr.bf16.gmra.mxu0 %v2406
        %v2764 = vpop.f32.mrf.mxu0
        %v2765 = vadd.f32 %v2493, %v2764
        %v2766 = vpop.f32.mrf.mxu0
        %v2767 = vadd.f32 %v2497, %v2766
        %v2768 = vpop.f32.mrf.mxu0
        %v2769 = vadd.f32 %v2493, %v2768
        %v2770 = vpop.f32.mrf.mxu0
        %v2771 = vadd.f32 %v2497, %v2770
        %2772 = vmatprep.mubr.bf16.mxu0 %v2409
        %2773 = vmatmul.mubr.bf16.gmra.mxu0 %v2408
        %v2774 = vpop.f32.mrf.mxu0
        %v2775 = vadd.f32 %v2493, %v2774
        %v2776 = vpop.f32.mrf.mxu0
        %v2777 = vadd.f32 %v2497, %v2776
        %v2778 = vpop.f32.mrf.mxu0
        %v2779 = vadd.f32 %v2493, %v2778
        %v2780 = vpop.f32.mrf.mxu0
        %v2781 = vadd.f32 %v2497, %v2780
        %2782 = vmatprep.mubr.bf16.mxu0 %v2411
        %2783 = vmatmul.mubr.bf16.gmra.mxu0 %v2410
        %v2784 = vpop.f32.mrf.mxu0
        %v2785 = vadd.f32 %v2493, %v2784
        %v2786 = vpop.f32.mrf.mxu0
        %v2787 = vadd.f32 %v2497, %v2786
        %v2788 = vpop.f32.mrf.mxu0
        %v2789 = vadd.f32 %v2493, %v2788
        %v2790 = vpop.f32.mrf.mxu0
        %v2791 = vadd.f32 %v2497, %v2790
        %2792 = vmatprep.mubr.bf16.mxu0 %v2413
        %2793 = vmatmul.mubr.bf16.gmra.mxu0 %v2412
        %v2794 = vpop.f32.mrf.mxu0
        %v2795 = vadd.f32 %v2493, %v2794
        %v2796 = vpop.f32.mrf.mxu0
        %v2797 = vadd.f32 %v2497, %v2796
        %v2798 = vpop.f32.mrf.mxu0
        %v2799 = vadd.f32 %v2493, %v2798
        %v2800 = vpop.f32.mrf.mxu0
        %v2801 = vadd.f32 %v2497, %v2800
        %2802 = vmatprep.mubr.bf16.mxu0 %v2415
        %2803 = vmatmul.mubr.bf16.gmra.mxu0 %v2414
        %v2804 = vpop.f32.mrf.mxu0
        %v2805 = vadd.f32 %v2493, %v2804
        %v2806 = vpop.f32.mrf.mxu0
        %v2807 = vadd.f32 %v2497, %v2806
        %v2808 = vpop.f32.mrf.mxu0
        %v2809 = vadd.f32 %v2493, %v2808
        %v2810 = vpop.f32.mrf.mxu0
        %v2811 = vadd.f32 %v2497, %v2810
        %2812 = vmatprep.mubr.bf16.mxu0 %v2417
        %2813 = vmatmul.mubr.bf16.gmra.mxu0 %v2416
        %v2814 = vpop.f32.mrf.mxu0
        %v2815 = vadd.f32 %v2493, %v2814
        %v2816 = vpop.f32.mrf.mxu0
        %v2817 = vadd.f32 %v2497, %v2816
        %v2818 = vpop.f32.mrf.mxu0
        %v2819 = vadd.f32 %v2493, %v2818
        %v2820 = vpop.f32.mrf.mxu0
        %v2821 = vadd.f32 %v2497, %v2820
        %2822 = vmatprep.mubr.bf16.mxu0 %v2419
        %2823 = vmatmul.mubr.bf16.gmra.mxu0 %v2418
        %v2824 = vpop.f32.mrf.mxu0
        %v2825 = vadd.f32 %v2493, %v2824
        %v2826 = vpop.f32.mrf.mxu0
        %v2827 = vadd.f32 %v2497, %v2826
        %v2828 = vpop.f32.mrf.mxu0
        %v2829 = vadd.f32 %v2493, %v2828
        %v2830 = vpop.f32.mrf.mxu0
        %v2831 = vadd.f32 %v2497, %v2830
        %2832 = vmatprep.mubr.bf16.mxu0 %v2421
        %2833 = vmatmul.mubr.bf16.gmra.mxu0 %v2420
        %v2834 = vpop.f32.mrf.mxu0
        %v2835 = vadd.f32 %v2493, %v2834
        %v2836 = vpop.f32.mrf.mxu0
        %v2837 = vadd.f32 %v2497, %v2836
        %v2838 = vpop.f32.mrf.mxu0
        %v2839 = vadd.f32 %v2493, %v2838
        %v2840 = vpop.f32.mrf.mxu0
        %v2841 = vadd.f32 %v2497, %v2840
        %2842 = vmatprep.mubr.bf16.mxu0 %v2423
        %2843 = vmatmul.mubr.bf16.gmra.mxu0 %v2422
        %v2844 = vpop.f32.mrf.mxu0
        %v2845 = vadd.f32 %v2493, %v2844
        %v2846 = vpop.f32.mrf.mxu0
        %v2847 = vadd.f32 %v2497, %v2846
        %v2848 = vpop.f32.mrf.mxu0
        %v2849 = vadd.f32 %v2493, %v2848
        %v2850 = vpop.f32.mrf.mxu0
        %v2851 = vadd.f32 %v2497, %v2850
        %2852 = vmatprep.mubr.bf16.mxu0 %v2425
        %2853 = vmatmul.mubr.bf16.gmra.mxu0 %v2424
        %v2854 = vpop.f32.mrf.mxu0
        %v2855 = vadd.f32 %v2493, %v2854
        %v2856 = vpop.f32.mrf.mxu0
        %v2857 = vadd.f32 %v2497, %v2856
        %v2858 = vpop.f32.mrf.mxu0
        %v2859 = vadd.f32 %v2493, %v2858
        %v2860 = vpop.f32.mrf.mxu0
        %v2861 = vadd.f32 %v2497, %v2860
        %2862 = vmatprep.mubr.bf16.mxu0 %v2427
        %2863 = vmatmul.mubr.bf16.gmra.mxu0 %v2426
        %v2864 = vpop.f32.mrf.mxu0
        %v2865 = vadd.f32 %v2493, %v2864
        %v2866 = vpop.f32.mrf.mxu0
        %v2867 = vadd.f32 %v2497, %v2866
        %v2868 = vpop.f32.mrf.mxu0
        %v2869 = vadd.f32 %v2493, %v2868
        %v2870 = vpop.f32.mrf.mxu0
        %v2871 = vadd.f32 %v2497, %v2870
        %2872 = vmatprep.mubr.bf16.mxu0 %v2429
        %2873 = vmatmul.mubr.bf16.gmra.mxu0 %v2428
        %v2874 = vpop.f32.mrf.mxu0
        %v2875 = vadd.f32 %v2493, %v2874
        %v2876 = vpop.f32.mrf.mxu0
        %v2877 = vadd.f32 %v2497, %v2876
        %v2878 = vpop.f32.mrf.mxu0
        %v2879 = vadd.f32 %v2493, %v2878
        %v2880 = vpop.f32.mrf.mxu0
        %v2881 = vadd.f32 %v2497, %v2880
        %2882 = vmatprep.mubr.bf16.mxu0 %v2431
        %2883 = vmatmul.mubr.bf16.gmra.mxu0 %v2430
        %v2884 = vpop.f32.mrf.mxu0
        %v2885 = vadd.f32 %v2493, %v2884
        %v2886 = vpop.f32.mrf.mxu0
        %v2887 = vadd.f32 %v2497, %v2886
        %v2888 = vpop.f32.mrf.mxu0
        %v2889 = vadd.f32 %v2493, %v2888
        %v2890 = vpop.f32.mrf.mxu0
        %v2891 = vadd.f32 %v2497, %v2890
        %2892 = vmatprep.mubr.bf16.mxu0 %v2433
        %2893 = vmatmul.mubr.bf16.gmra.mxu0 %v2432
        %v2894 = vpop.f32.mrf.mxu0
        %v2895 = vadd.f32 %v2493, %v2894
        %v2896 = vpop.f32.mrf.mxu0
        %v2897 = vadd.f32 %v2497, %v2896
        %v2898 = vpop.f32.mrf.mxu0
        %v2899 = vadd.f32 %v2493, %v2898
        %v2900 = vpop.f32.mrf.mxu0
        %v2901 = vadd.f32 %v2497, %v2900
        %2902 = vmatprep.mubr.bf16.mxu0 %v2435
        %2903 = vmatmul.mubr.bf16.gmra.mxu0 %v2434
        %v2904 = vpop.f32.mrf.mxu0
        %v2905 = vadd.f32 %v2493, %v2904
        %v2906 = vpop.f32.mrf.mxu0
        %v2907 = vadd.f32 %v2497, %v2906
        %v2908 = vpop.f32.mrf.mxu0
        %v2909 = vadd.f32 %v2493, %v2908
        %v2910 = vpop.f32.mrf.mxu0
        %v2911 = vadd.f32 %v2497, %v2910
        %2912 = vmatprep.mubr.bf16.mxu0 %v2437
        %2913 = vmatmul.mubr.bf16.gmra.mxu0 %v2436
        %v2914 = vpop.f32.mrf.mxu0
        %v2915 = vadd.f32 %v2493, %v2914
        %v2916 = vpop.f32.mrf.mxu0
        %v2917 = vadd.f32 %v2497, %v2916
        %v2918 = vpop.f32.mrf.mxu0
        %v2919 = vadd.f32 %v2493, %v2918
        %v2920 = vpop.f32.mrf.mxu0
        %v2921 = vadd.f32 %v2497, %v2920
        %2922 = vmatprep.mubr.bf16.mxu0 %v2439
        %2923 = vmatmul.mubr.bf16.gmra.mxu0 %v2438
        %v2924 = vpop.f32.mrf.mxu0
        %v2925 = vadd.f32 %v2493, %v2924
        %v2926 = vpop.f32.mrf.mxu0
        %v2927 = vadd.f32 %v2497, %v2926
        %v2928 = vpop.f32.mrf.mxu0
        %v2929 = vadd.f32 %v2493, %v2928
        %v2930 = vpop.f32.mrf.mxu0
        %v2931 = vadd.f32 %v2497, %v2930
        %2932 = vmatprep.mubr.bf16.mxu0 %v2441
        %2933 = vmatmul.mubr.bf16.gmra.mxu0 %v2440
        %v2934 = vpop.f32.mrf.mxu0
        %v2935 = vadd.f32 %v2493, %v2934
        %v2936 = vpop.f32.mrf.mxu0
        %v2937 = vadd.f32 %v2497, %v2936
        %v2938 = vpop.f32.mrf.mxu0
        %v2939 = vadd.f32 %v2493, %v2938
        %v2940 = vpop.f32.mrf.mxu0
        %v2941 = vadd.f32 %v2497, %v2940
        %2942 = vmatprep.mubr.bf16.mxu0 %v2443
        %2943 = vmatmul.mubr.bf16.gmra.mxu0 %v2442
        %v2944 = vpop.f32.mrf.mxu0
        %v2945 = vadd.f32 %v2493, %v2944
        %v2946 = vpop.f32.mrf.mxu0
        %v2947 = vadd.f32 %v2497, %v2946
        %v2948 = vpop.f32.mrf.mxu0
        %v2949 = vadd.f32 %v2493, %v2948
        %v2950 = vpop.f32.mrf.mxu0
        %v2951 = vadd.f32 %v2497, %v2950
        %2952 = vmatprep.mubr.bf16.mxu0 %v2445
        %2953 = vmatmul.mubr.bf16.gmra.mxu0 %v2444
        %v2954 = vpop.f32.mrf.mxu0
        %v2955 = vadd.f32 %v2493, %v2954
        %v2956 = vpop.f32.mrf.mxu0
        %v2957 = vadd.f32 %v2497, %v2956
        %v2958 = vpop.f32.mrf.mxu0
        %v2959 = vadd.f32 %v2493, %v2958
        %v2960 = vpop.f32.mrf.mxu0
        %v2961 = vadd.f32 %v2497, %v2960
        %2962 = vmatprep.mubr.bf16.mxu0 %v2447
        %2963 = vmatmul.mubr.bf16.gmra.mxu0 %v2446
        %v2964 = vpop.f32.mrf.mxu0
        %v2965 = vadd.f32 %v2493, %v2964
        %v2966 = vpop.f32.mrf.mxu0
        %v2967 = vadd.f32 %v2497, %v2966
        %v2968 = vpop.f32.mrf.mxu0
        %v2969 = vadd.f32 %v2493, %v2968
        %v2970 = vpop.f32.mrf.mxu0
        %v2971 = vadd.f32 %v2497, %v2970
        %2972 = vmatprep.mubr.bf16.mxu0 %v2449
        %2973 = vmatmul.mubr.bf16.gmra.mxu0 %v2448
        %v2974 = vpop.f32.mrf.mxu0
        %v2975 = vadd.f32 %v2493, %v2974
        %v2976 = vpop.f32.mrf.mxu0
        %v2977 = vadd.f32 %v2497, %v2976
        %v2978 = vpop.f32.mrf.mxu0
        %v2979 = vadd.f32 %v2493, %v2978
        %v2980 = vpop.f32.mrf.mxu0
        %v2981 = vadd.f32 %v2497, %v2980
        %2982 = vmatprep.mubr.bf16.mxu0 %v2451
        %2983 = vmatmul.mubr.bf16.gmra.mxu0 %v2450
        %v2984 = vpop.f32.mrf.mxu0
        %v2985 = vadd.f32 %v2493, %v2984
        %v2986 = vpop.f32.mrf.mxu0
        %v2987 = vadd.f32 %v2497, %v2986
        %v2988 = vpop.f32.mrf.mxu0
        %v2989 = vadd.f32 %v2493, %v2988
        %v2990 = vpop.f32.mrf.mxu0
        %v2991 = vadd.f32 %v2497, %v2990
        %2992 = vmatprep.mubr.bf16.mxu0 %v2453
        %2993 = vmatmul.mubr.bf16.gmra.mxu0 %v2452
        %v2994 = vpop.f32.mrf.mxu0
        %v2995 = vadd.f32 %v2493, %v2994
        %v2996 = vpop.f32.mrf.mxu0
        %v2997 = vadd.f32 %v2497, %v2996
        %v2998 = vpop.f32.mrf.mxu0
        %v2999 = vadd.f32 %v2493, %v2998
        %v3000 = vpop.f32.mrf.mxu0
        %v3001 = vadd.f32 %v2497, %v3000
        %3002 = vmatprep.mubr.bf16.mxu0 %v2455
        %3003 = vmatmul.mubr.bf16.gmra.mxu0 %v2454
        %v3004 = vpop.f32.mrf.mxu0
        %v3005 = vadd.f32 %v2493, %v3004
        %v3006 = vpop.f32.mrf.mxu0
        %v3007 = vadd.f32 %v2497, %v3006
        %v3008 = vpop.f32.mrf.mxu0
        %v3009 = vadd.f32 %v2493, %v3008
        %v3010 = vpop.f32.mrf.mxu0
        %v3011 = vadd.f32 %v2497, %v3010
        %3012 = vdwg.mxu0
        %v3013 = vmax.f32 %v2695, 0.0
        %v3014 = vmax.f32 %v2697, 0.0
        %v3015 = vmax.f32 %v2699, 0.0
        %v3016 = vmax.f32 %v2701, 0.0
        %v3017 = vmax.f32 %v2705, 0.0
        %v3018 = vmax.f32 %v2707, 0.0
        %v3019 = vmax.f32 %v2709, 0.0
        %v3020 = vmax.f32 %v2711, 0.0
        %v3021 = vmax.f32 %v2715, 0.0
        %v3022 = vmax.f32 %v2717, 0.0
        %v3023 = vmax.f32 %v2719, 0.0
        %v3024 = vmax.f32 %v2721, 0.0
        %v3025 = vmax.f32 %v2725, 0.0
        %v3026 = vmax.f32 %v2727, 0.0
        %v3027 = vmax.f32 %v2729, 0.0
        %v3028 = vmax.f32 %v2731, 0.0
        %v3029 = vmax.f32 %v2735, 0.0
        %v3030 = vmax.f32 %v2737, 0.0
        %v3031 = vmax.f32 %v2739, 0.0
        %v3032 = vmax.f32 %v2741, 0.0
        %v3033 = vmax.f32 %v2745, 0.0
        %v3034 = vmax.f32 %v2747, 0.0
        %v3035 = vmax.f32 %v2749, 0.0
        %v3036 = vmax.f32 %v2751, 0.0
        %v3037 = vmax.f32 %v2755, 0.0
        %v3038 = vmax.f32 %v2757, 0.0
        %v3039 = vmax.f32 %v2759, 0.0
        %v3040 = vmax.f32 %v2761, 0.0
        %v3041 = vmax.f32 %v2765, 0.0
        %v3042 = vmax.f32 %v2767, 0.0
        %v3043 = vmax.f32 %v2769, 0.0
        %v3044 = vmax.f32 %v2771, 0.0
        %v3045 = vmax.f32 %v2775, 0.0
        %v3046 = vmax.f32 %v2777, 0.0
        %v3047 = vmax.f32 %v2779, 0.0
        %v3048 = vmax.f32 %v2781, 0.0
        %v3049 = vmax.f32 %v2785, 0.0
        %v3050 = vmax.f32 %v2787, 0.0
        %v3051 = vmax.f32 %v2789, 0.0
        %v3052 = vmax.f32 %v2791, 0.0
        %v3053 = vmax.f32 %v2795, 0.0
        %v3054 = vmax.f32 %v2797, 0.0
        %v3055 = vmax.f32 %v2799, 0.0
        %v3056 = vmax.f32 %v2801, 0.0
        %v3057 = vmax.f32 %v2805, 0.0
        %v3058 = vmax.f32 %v2807, 0.0
        %v3059 = vmax.f32 %v2809, 0.0
        %v3060 = vmax.f32 %v2811, 0.0
        %v3061 = vmax.f32 %v2815, 0.0
        %v3062 = vmax.f32 %v2817, 0.0
        %v3063 = vmax.f32 %v2819, 0.0
        %v3064 = vmax.f32 %v2821, 0.0
        %v3065 = vmax.f32 %v2825, 0.0
        %v3066 = vmax.f32 %v2827, 0.0
        %v3067 = vmax.f32 %v2829, 0.0
        %v3068 = vmax.f32 %v2831, 0.0
        %v3069 = vmax.f32 %v2835, 0.0
        %v3070 = vmax.f32 %v2837, 0.0
        %v3071 = vmax.f32 %v2839, 0.0
        %v3072 = vmax.f32 %v2841, 0.0
        %v3073 = vmax.f32 %v2845, 0.0
        %v3074 = vmax.f32 %v2847, 0.0
        %v3075 = vmax.f32 %v2849, 0.0
        %v3076 = vmax.f32 %v2851, 0.0
        %v3077 = vmax.f32 %v2855, 0.0
        %v3078 = vmax.f32 %v2857, 0.0
        %v3079 = vmax.f32 %v2859, 0.0
        %v3080 = vmax.f32 %v2861, 0.0
        %v3081 = vmax.f32 %v2865, 0.0
        %v3082 = vmax.f32 %v2867, 0.0
        %v3083 = vmax.f32 %v2869, 0.0
        %v3084 = vmax.f32 %v2871, 0.0
        %v3085 = vmax.f32 %v2875, 0.0
        %v3086 = vmax.f32 %v2877, 0.0
        %v3087 = vmax.f32 %v2879, 0.0
        %v3088 = vmax.f32 %v2881, 0.0
        %v3089 = vmax.f32 %v2885, 0.0
        %v3090 = vmax.f32 %v2887, 0.0
        %v3091 = vmax.f32 %v2889, 0.0
        %v3092 = vmax.f32 %v2891, 0.0
        %v3093 = vmax.f32 %v2895, 0.0
        %v3094 = vmax.f32 %v2897, 0.0
        %v3095 = vmax.f32 %v2899, 0.0
        %v3096 = vmax.f32 %v2901, 0.0
        %v3097 = vmax.f32 %v2905, 0.0
        %v3098 = vmax.f32 %v2907, 0.0
        %v3099 = vmax.f32 %v2909, 0.0
        %v3100 = vmax.f32 %v2911, 0.0
        %v3101 = vmax.f32 %v2915, 0.0
        %v3102 = vmax.f32 %v2917, 0.0
        %v3103 = vmax.f32 %v2919, 0.0
        %v3104 = vmax.f32 %v2921, 0.0
        %v3105 = vmax.f32 %v2925, 0.0
        %v3106 = vmax.f32 %v2927, 0.0
        %v3107 = vmax.f32 %v2929, 0.0
        %v3108 = vmax.f32 %v2931, 0.0
        %v3109 = vmax.f32 %v2935, 0.0
        %v3110 = vmax.f32 %v2937, 0.0
        %v3111 = vmax.f32 %v2939, 0.0
        %v3112 = vmax.f32 %v2941, 0.0
        %v3113 = vmax.f32 %v2945, 0.0
        %v3114 = vmax.f32 %v2947, 0.0
        %v3115 = vmax.f32 %v2949, 0.0
        %v3116 = vmax.f32 %v2951, 0.0
        %v3117 = vmax.f32 %v2955, 0.0
        %v3118 = vmax.f32 %v2957, 0.0
        %v3119 = vmax.f32 %v2959, 0.0
        %v3120 = vmax.f32 %v2961, 0.0
        %v3121 = vmax.f32 %v2965, 0.0
        %v3122 = vmax.f32 %v2967, 0.0
        %v3123 = vmax.f32 %v2969, 0.0
        %v3124 = vmax.f32 %v2971, 0.0
        %v3125 = vmax.f32 %v2975, 0.0
        %v3126 = vmax.f32 %v2977, 0.0
        %v3127 = vmax.f32 %v2979, 0.0
        %v3128 = vmax.f32 %v2981, 0.0
        %v3129 = vmax.f32 %v2985, 0.0
        %v3130 = vmax.f32 %v2987, 0.0
        %v3131 = vmax.f32 %v2989, 0.0
        %v3132 = vmax.f32 %v2991, 0.0
        %v3133 = vmax.f32 %v2995, 0.0
        %v3134 = vmax.f32 %v2997, 0.0
        %v3135 = vmax.f32 %v2999, 0.0
        %v3136 = vmax.f32 %v3001, 0.0
        %v3137 = vmax.f32 %v3005, 0.0
        %v3138 = vmax.f32 %v3007, 0.0
        %v3139 = vmax.f32 %v3009, 0.0
        %v3140 = vmax.f32 %v3011, 0.0
        %v3141 = vpack.c.bf16 %v3015, %v3013
        %v3142 = vpack.c.bf16 %v3016, %v3014
        %v3143 = vpack.c.bf16 %v3019, %v3017
        %v3144 = vpack.c.bf16 %v3020, %v3018
        %v3145 = vpack.c.bf16 %v3023, %v3021
        %v3146 = vpack.c.bf16 %v3024, %v3022
        %v3147 = vpack.c.bf16 %v3027, %v3025
        %v3148 = vpack.c.bf16 %v3028, %v3026
        %v3149 = vpack.c.bf16 %v3031, %v3029
        %v3150 = vpack.c.bf16 %v3032, %v3030
        %v3151 = vpack.c.bf16 %v3035, %v3033
        %v3152 = vpack.c.bf16 %v3036, %v3034
        %v3153 = vpack.c.bf16 %v3039, %v3037
        %v3154 = vpack.c.bf16 %v3040, %v3038
        %v3155 = vpack.c.bf16 %v3043, %v3041
        %v3156 = vpack.c.bf16 %v3044, %v3042
        %v3157 = vpack.c.bf16 %v3047, %v3045
        %v3158 = vpack.c.bf16 %v3048, %v3046
        %v3159 = vpack.c.bf16 %v3051, %v3049
        %v3160 = vpack.c.bf16 %v3052, %v3050
        %v3161 = vpack.c.bf16 %v3055, %v3053
        %v3162 = vpack.c.bf16 %v3056, %v3054
        %v3163 = vpack.c.bf16 %v3059, %v3057
        %v3164 = vpack.c.bf16 %v3060, %v3058
        %v3165 = vpack.c.bf16 %v3063, %v3061
        %v3166 = vpack.c.bf16 %v3064, %v3062
        %v3167 = vpack.c.bf16 %v3067, %v3065
        %v3168 = vpack.c.bf16 %v3068, %v3066
        %v3169 = vpack.c.bf16 %v3071, %v3069
        %v3170 = vpack.c.bf16 %v3072, %v3070
        %v3171 = vpack.c.bf16 %v3075, %v3073
        %v3172 = vpack.c.bf16 %v3076, %v3074
        %v3173 = vpack.c.bf16 %v3079, %v3077
        %v3174 = vpack.c.bf16 %v3080, %v3078
        %v3175 = vpack.c.bf16 %v3083, %v3081
        %v3176 = vpack.c.bf16 %v3084, %v3082
        %v3177 = vpack.c.bf16 %v3087, %v3085
        %v3178 = vpack.c.bf16 %v3088, %v3086
        %v3179 = vpack.c.bf16 %v3091, %v3089
        %v3180 = vpack.c.bf16 %v3092, %v3090
        %v3181 = vpack.c.bf16 %v3095, %v3093
        %v3182 = vpack.c.bf16 %v3096, %v3094
        %v3183 = vpack.c.bf16 %v3099, %v3097
        %v3184 = vpack.c.bf16 %v3100, %v3098
        %v3185 = vpack.c.bf16 %v3103, %v3101
        %v3186 = vpack.c.bf16 %v3104, %v3102
        %v3187 = vpack.c.bf16 %v3107, %v3105
        %v3188 = vpack.c.bf16 %v3108, %v3106
        %v3189 = vpack.c.bf16 %v3111, %v3109
        %v3190 = vpack.c.bf16 %v3112, %v3110
        %v3191 = vpack.c.bf16 %v3115, %v3113
        %v3192 = vpack.c.bf16 %v3116, %v3114
        %v3193 = vpack.c.bf16 %v3119, %v3117
        %v3194 = vpack.c.bf16 %v3120, %v3118
        %v3195 = vpack.c.bf16 %v3123, %v3121
        %v3196 = vpack.c.bf16 %v3124, %v3122
        %v3197 = vpack.c.bf16 %v3127, %v3125
        %v3198 = vpack.c.bf16 %v3128, %v3126
        %v3199 = vpack.c.bf16 %v3131, %v3129
        %v3200 = vpack.c.bf16 %v3132, %v3130
        %v3201 = vpack.c.bf16 %v3135, %v3133
        %v3202 = vpack.c.bf16 %v3136, %v3134
        %v3203 = vpack.c.bf16 %v3139, %v3137
        %v3204 = vpack.c.bf16 %v3140, %v3138
        %v3205 = vld [vmem:[%s7] sm:$0xff]
        %v3206 = vld [vmem:[%s7 + $0x8] sm:$0xff]
        %v3207 = vld [vmem:[%s7 + $0x10] sm:$0xff]
        %v3208 = vld [vmem:[%s7 + $0x18] sm:$0xff]
        %v3209 = vld [vmem:[%s7 + $0x20] sm:$0xff]
        %v3210 = vld [vmem:[%s7 + $0x28] sm:$0xff]
        %v3211 = vld [vmem:[%s7 + $0x30] sm:$0xff]
        %v3212 = vld [vmem:[%s7 + $0x38] sm:$0xff]
        %v3213 = vld [vmem:[%s7 + $0x40] sm:$0xff]
        %v3214 = vld [vmem:[%s7 + $0x48] sm:$0xff]
        %v3215 = vld [vmem:[%s7 + $0x50] sm:$0xff]
        %v3216 = vld [vmem:[%s7 + $0x58] sm:$0xff]
        %v3217 = vld [vmem:[%s7 + $0x60] sm:$0xff]
        %v3218 = vld [vmem:[%s7 + $0x68] sm:$0xff]
        %v3219 = vld [vmem:[%s7 + $0x70] sm:$0xff]
        %v3220 = vld [vmem:[%s7 + $0x78] sm:$0xff]
        %v3221 = vld [vmem:[%s7 + $0x80] sm:$0xff]
        %v3222 = vld [vmem:[%s7 + $0x88] sm:$0xff]
        %v3223 = vld [vmem:[%s7 + $0x90] sm:$0xff]
        %v3224 = vld [vmem:[%s7 + $0x98] sm:$0xff]
        %v3225 = vld [vmem:[%s7 + $0xa0] sm:$0xff]
        %v3226 = vld [vmem:[%s7 + $0xa8] sm:$0xff]
        %v3227 = vld [vmem:[%s7 + $0xb0] sm:$0xff]
        %v3228 = vld [vmem:[%s7 + $0xb8] sm:$0xff]
        %v3229 = vld [vmem:[%s7 + $0xc0] sm:$0xff]
        %v3230 = vld [vmem:[%s7 + $0xc8] sm:$0xff]
        %v3231 = vld [vmem:[%s7 + $0xd0] sm:$0xff]
        %v3232 = vld [vmem:[%s7 + $0xd8] sm:$0xff]
        %v3233 = vld [vmem:[%s7 + $0xe0] sm:$0xff]
        %v3234 = vld [vmem:[%s7 + $0xe8] sm:$0xff]
        %v3235 = vld [vmem:[%s7 + $0xf0] sm:$0xff]
        %v3236 = vld [vmem:[%s7 + $0xf8] sm:$0xff]
        %v3237 = vld [vmem:[#allocation6] sm:$0x3]
        %v3239 = vlaneseq
        %v3240 = vshrl.u32 %v3239, 7
        %v3241 = vsub.s32 0, %v3240
        %v3242 = vrot.slane %v3237, %v3241
        %v3243 = vlaneseq
        %v3244 = vshrl.u32 %v3243, 7
        %v3245 = vsub.s32 1, %v3244
        %v3246 = vrot.slane %v3237, %v3245
        %v3281 = vunpack.c.l.b16 %v3205
        %v3282 = vunpack.c.h.b16 %v3205
        %v3283 = vunpack.c.l.b16 %v3206
        %v3284 = vunpack.c.h.b16 %v3206
        %v3285 = vunpack.c.l.b16 %v3207
        %v3286 = vunpack.c.h.b16 %v3207
        %v3287 = vunpack.c.l.b16 %v3208
        %v3288 = vunpack.c.h.b16 %v3208
        %v3289 = vunpack.c.l.b16 %v3209
        %v3290 = vunpack.c.h.b16 %v3209
        %v3291 = vunpack.c.l.b16 %v3210
        %v3292 = vunpack.c.h.b16 %v3210
        %v3293 = vunpack.c.l.b16 %v3211
        %v3294 = vunpack.c.h.b16 %v3211
        %v3295 = vunpack.c.l.b16 %v3212
        %v3296 = vunpack.c.h.b16 %v3212
        %v3297 = vunpack.c.l.b16 %v3213
        %v3298 = vunpack.c.h.b16 %v3213
        %v3299 = vunpack.c.l.b16 %v3214
        %v3300 = vunpack.c.h.b16 %v3214
        %v3301 = vunpack.c.l.b16 %v3215
        %v3302 = vunpack.c.h.b16 %v3215
        %v3303 = vunpack.c.l.b16 %v3216
        %v3304 = vunpack.c.h.b16 %v3216
        %v3305 = vunpack.c.l.b16 %v3217
        %v3306 = vunpack.c.h.b16 %v3217
        %v3307 = vunpack.c.l.b16 %v3218
        %v3308 = vunpack.c.h.b16 %v3218
        %v3309 = vunpack.c.l.b16 %v3219
        %v3310 = vunpack.c.h.b16 %v3219
        %v3311 = vunpack.c.l.b16 %v3220
        %v3312 = vunpack.c.h.b16 %v3220
        %v3313 = vunpack.c.l.b16 %v3221
        %v3314 = vunpack.c.h.b16 %v3221
        %v3315 = vunpack.c.l.b16 %v3222
        %v3316 = vunpack.c.h.b16 %v3222
        %v3317 = vunpack.c.l.b16 %v3223
        %v3318 = vunpack.c.h.b16 %v3223
        %v3319 = vunpack.c.l.b16 %v3224
        %v3320 = vunpack.c.h.b16 %v3224
        %v3321 = vunpack.c.l.b16 %v3225
        %v3322 = vunpack.c.h.b16 %v3225
        %v3323 = vunpack.c.l.b16 %v3226
        %v3324 = vunpack.c.h.b16 %v3226
        %v3325 = vunpack.c.l.b16 %v3227
        %v3326 = vunpack.c.h.b16 %v3227
        %v3327 = vunpack.c.l.b16 %v3228
        %v3328 = vunpack.c.h.b16 %v3228
        %v3329 = vunpack.c.l.b16 %v3229
        %v3330 = vunpack.c.h.b16 %v3229
        %v3331 = vunpack.c.l.b16 %v3230
        %v3332 = vunpack.c.h.b16 %v3230
        %v3333 = vunpack.c.l.b16 %v3231
        %v3334 = vunpack.c.h.b16 %v3231
        %v3335 = vunpack.c.l.b16 %v3232
        %v3336 = vunpack.c.h.b16 %v3232
        %v3337 = vunpack.c.l.b16 %v3233
        %v3338 = vunpack.c.h.b16 %v3233
        %v3339 = vunpack.c.l.b16 %v3234
        %v3340 = vunpack.c.h.b16 %v3234
        %v3341 = vunpack.c.l.b16 %v3235
        %v3342 = vunpack.c.h.b16 %v3235
        %v3343 = vunpack.c.l.b16 %v3236
        %v3344 = vunpack.c.h.b16 %v3236
        %v3345 = vpack.c.b16 %v3283, %v3281
        %v3346 = vpack.c.b16 %v3284, %v3282
        %v3347 = vpack.c.b16 %v3287, %v3285
        %v3348 = vpack.c.b16 %v3288, %v3286
        %v3349 = vpack.c.b16 %v3291, %v3289
        %v3350 = vpack.c.b16 %v3292, %v3290
        %v3351 = vpack.c.b16 %v3295, %v3293
        %v3352 = vpack.c.b16 %v3296, %v3294
        %v3353 = vpack.c.b16 %v3299, %v3297
        %v3354 = vpack.c.b16 %v3300, %v3298
        %v3355 = vpack.c.b16 %v3303, %v3301
        %v3356 = vpack.c.b16 %v3304, %v3302
        %v3357 = vpack.c.b16 %v3307, %v3305
        %v3358 = vpack.c.b16 %v3308, %v3306
        %v3359 = vpack.c.b16 %v3311, %v3309
        %v3360 = vpack.c.b16 %v3312, %v3310
        %v3361 = vpack.c.b16 %v3315, %v3313
        %v3362 = vpack.c.b16 %v3316, %v3314
        %v3363 = vpack.c.b16 %v3319, %v3317
        %v3364 = vpack.c.b16 %v3320, %v3318
        %v3365 = vpack.c.b16 %v3323, %v3321
        %v3366 = vpack.c.b16 %v3324, %v3322
        %v3367 = vpack.c.b16 %v3327, %v3325
        %v3368 = vpack.c.b16 %v3328, %v3326
        %v3369 = vpack.c.b16 %v3331, %v3329
        %v3370 = vpack.c.b16 %v3332, %v3330
        %v3371 = vpack.c.b16 %v3335, %v3333
        %v3372 = vpack.c.b16 %v3336, %v3334
        %v3373 = vpack.c.b16 %v3339, %v3337
        %v3374 = vpack.c.b16 %v3340, %v3338
        %v3375 = vpack.c.b16 %v3343, %v3341
        %v3376 = vpack.c.b16 %v3344, %v3342
        %3409 = vmatprep.subr.bf16.mxu0 %v3360
        %3410 = vmatpush1.bf16.msra.mxu0 %v3359
        %3411 = vmatprep.subr.bf16.mxu0 %v3358
        %3412 = vmatpush1.bf16.msra.mxu0 %v3357
        %3413 = vmatprep.subr.bf16.mxu0 %v3356
        %3414 = vmatpush1.bf16.msra.mxu0 %v3355
        %3415 = vmatprep.subr.bf16.mxu0 %v3354
        %3416 = vmatpush1.bf16.msra.mxu0 %v3353
        %3417 = vmatprep.subr.bf16.mxu0 %v3352
        %3418 = vmatpush1.bf16.msra.mxu0 %v3351
        %3419 = vmatprep.subr.bf16.mxu0 %v3350
        %3420 = vmatpush1.bf16.msra.mxu0 %v3349
        %3421 = vmatprep.subr.bf16.mxu0 %v3348
        %3422 = vmatpush1.bf16.msra.mxu0 %v3347
        %3423 = vmatprep.subr.bf16.mxu0 %v3346
        %3424 = vmatpush1.bf16.msra.mxu0 %v3345
        %3425 = vmatprep.subr.bf16.mxu0 %v3376
        %3426 = vmatpush2.bf16.msra.mxu0 %v3375
        %3427 = vmatprep.subr.bf16.mxu0 %v3374
        %3428 = vmatpush2.bf16.msra.mxu0 %v3373
        %3429 = vmatprep.subr.bf16.mxu0 %v3372
        %3430 = vmatpush2.bf16.msra.mxu0 %v3371
        %3431 = vmatprep.subr.bf16.mxu0 %v3370
        %3432 = vmatpush2.bf16.msra.mxu0 %v3369
        %3433 = vmatprep.subr.bf16.mxu0 %v3368
        %3434 = vmatpush2.bf16.msra.mxu0 %v3367
        %3435 = vmatprep.subr.bf16.mxu0 %v3366
        %3436 = vmatpush2.bf16.msra.mxu0 %v3365
        %3437 = vmatprep.subr.bf16.mxu0 %v3364
        %3438 = vmatpush2.bf16.msra.mxu0 %v3363
        %3439 = vmatprep.subr.bf16.mxu0 %v3362
        %3440 = vmatpush2.bf16.msra.mxu0 %v3361
        %3441 = vmatprep.mubr.bf16.mxu0 %v3142
        %3442 = vmatmul.mubr.bf16.gmra.mxu0 %v3141
        %v3443 = vpop.f32.mrf.mxu0
        %v3444 = vadd.f32 %v3242, %v3443
        %v3445 = vpop.f32.mrf.mxu0
        %v3446 = vadd.f32 %v3246, %v3445
        %v3447 = vpop.f32.mrf.mxu0
        %v3448 = vadd.f32 %v3242, %v3447
        %v3449 = vpop.f32.mrf.mxu0
        %v3450 = vadd.f32 %v3246, %v3449
        %3451 = vmatprep.mubr.bf16.mxu0 %v3144
        %3452 = vmatmul.mubr.bf16.gmra.mxu0 %v3143
        %v3453 = vpop.f32.mrf.mxu0
        %v3454 = vadd.f32 %v3242, %v3453
        %v3455 = vpop.f32.mrf.mxu0
        %v3456 = vadd.f32 %v3246, %v3455
        %v3457 = vpop.f32.mrf.mxu0
        %v3458 = vadd.f32 %v3242, %v3457
        %v3459 = vpop.f32.mrf.mxu0
        %v3460 = vadd.f32 %v3246, %v3459
        %3461 = vmatprep.mubr.bf16.mxu0 %v3146
        %3462 = vmatmul.mubr.bf16.gmra.mxu0 %v3145
        %v3463 = vpop.f32.mrf.mxu0
        %v3464 = vadd.f32 %v3242, %v3463
        %v3465 = vpop.f32.mrf.mxu0
        %v3466 = vadd.f32 %v3246, %v3465
        %v3467 = vpop.f32.mrf.mxu0
        %v3468 = vadd.f32 %v3242, %v3467
        %v3469 = vpop.f32.mrf.mxu0
        %v3470 = vadd.f32 %v3246, %v3469
        %3471 = vmatprep.mubr.bf16.mxu0 %v3148
        %3472 = vmatmul.mubr.bf16.gmra.mxu0 %v3147
        %v3473 = vpop.f32.mrf.mxu0
        %v3474 = vadd.f32 %v3242, %v3473
        %v3475 = vpop.f32.mrf.mxu0
        %v3476 = vadd.f32 %v3246, %v3475
        %v3477 = vpop.f32.mrf.mxu0
        %v3478 = vadd.f32 %v3242, %v3477
        %v3479 = vpop.f32.mrf.mxu0
        %v3480 = vadd.f32 %v3246, %v3479
        %3481 = vmatprep.mubr.bf16.mxu0 %v3150
        %3482 = vmatmul.mubr.bf16.gmra.mxu0 %v3149
        %v3483 = vpop.f32.mrf.mxu0
        %v3484 = vadd.f32 %v3242, %v3483
        %v3485 = vpop.f32.mrf.mxu0
        %v3486 = vadd.f32 %v3246, %v3485
        %v3487 = vpop.f32.mrf.mxu0
        %v3488 = vadd.f32 %v3242, %v3487
        %v3489 = vpop.f32.mrf.mxu0
        %v3490 = vadd.f32 %v3246, %v3489
        %3491 = vmatprep.mubr.bf16.mxu0 %v3152
        %3492 = vmatmul.mubr.bf16.gmra.mxu0 %v3151
        %v3493 = vpop.f32.mrf.mxu0
        %v3494 = vadd.f32 %v3242, %v3493
        %v3495 = vpop.f32.mrf.mxu0
        %v3496 = vadd.f32 %v3246, %v3495
        %v3497 = vpop.f32.mrf.mxu0
        %v3498 = vadd.f32 %v3242, %v3497
        %v3499 = vpop.f32.mrf.mxu0
        %v3500 = vadd.f32 %v3246, %v3499
        %3501 = vmatprep.mubr.bf16.mxu0 %v3154
        %3502 = vmatmul.mubr.bf16.gmra.mxu0 %v3153
        %v3503 = vpop.f32.mrf.mxu0
        %v3504 = vadd.f32 %v3242, %v3503
        %v3505 = vpop.f32.mrf.mxu0
        %v3506 = vadd.f32 %v3246, %v3505
        %v3507 = vpop.f32.mrf.mxu0
        %v3508 = vadd.f32 %v3242, %v3507
        %v3509 = vpop.f32.mrf.mxu0
        %v3510 = vadd.f32 %v3246, %v3509
        %3511 = vmatprep.mubr.bf16.mxu0 %v3156
        %3512 = vmatmul.mubr.bf16.gmra.mxu0 %v3155
        %v3513 = vpop.f32.mrf.mxu0
        %v3514 = vadd.f32 %v3242, %v3513
        %v3515 = vpop.f32.mrf.mxu0
        %v3516 = vadd.f32 %v3246, %v3515
        %v3517 = vpop.f32.mrf.mxu0
        %v3518 = vadd.f32 %v3242, %v3517
        %v3519 = vpop.f32.mrf.mxu0
        %v3520 = vadd.f32 %v3246, %v3519
        %3521 = vmatprep.mubr.bf16.mxu0 %v3158
        %3522 = vmatmul.mubr.bf16.gmra.mxu0 %v3157
        %v3523 = vpop.f32.mrf.mxu0
        %v3524 = vadd.f32 %v3242, %v3523
        %v3525 = vpop.f32.mrf.mxu0
        %v3526 = vadd.f32 %v3246, %v3525
        %v3527 = vpop.f32.mrf.mxu0
        %v3528 = vadd.f32 %v3242, %v3527
        %v3529 = vpop.f32.mrf.mxu0
        %v3530 = vadd.f32 %v3246, %v3529
        %3531 = vmatprep.mubr.bf16.mxu0 %v3160
        %3532 = vmatmul.mubr.bf16.gmra.mxu0 %v3159
        %v3533 = vpop.f32.mrf.mxu0
        %v3534 = vadd.f32 %v3242, %v3533
        %v3535 = vpop.f32.mrf.mxu0
        %v3536 = vadd.f32 %v3246, %v3535
        %v3537 = vpop.f32.mrf.mxu0
        %v3538 = vadd.f32 %v3242, %v3537
        %v3539 = vpop.f32.mrf.mxu0
        %v3540 = vadd.f32 %v3246, %v3539
        %3541 = vmatprep.mubr.bf16.mxu0 %v3162
        %3542 = vmatmul.mubr.bf16.gmra.mxu0 %v3161
        %v3543 = vpop.f32.mrf.mxu0
        %v3544 = vadd.f32 %v3242, %v3543
        %v3545 = vpop.f32.mrf.mxu0
        %v3546 = vadd.f32 %v3246, %v3545
        %v3547 = vpop.f32.mrf.mxu0
        %v3548 = vadd.f32 %v3242, %v3547
        %v3549 = vpop.f32.mrf.mxu0
        %v3550 = vadd.f32 %v3246, %v3549
        %3551 = vmatprep.mubr.bf16.mxu0 %v3164
        %3552 = vmatmul.mubr.bf16.gmra.mxu0 %v3163
        %v3553 = vpop.f32.mrf.mxu0
        %v3554 = vadd.f32 %v3242, %v3553
        %v3555 = vpop.f32.mrf.mxu0
        %v3556 = vadd.f32 %v3246, %v3555
        %v3557 = vpop.f32.mrf.mxu0
        %v3558 = vadd.f32 %v3242, %v3557
        %v3559 = vpop.f32.mrf.mxu0
        %v3560 = vadd.f32 %v3246, %v3559
        %3561 = vmatprep.mubr.bf16.mxu0 %v3166
        %3562 = vmatmul.mubr.bf16.gmra.mxu0 %v3165
        %v3563 = vpop.f32.mrf.mxu0
        %v3564 = vadd.f32 %v3242, %v3563
        %v3565 = vpop.f32.mrf.mxu0
        %v3566 = vadd.f32 %v3246, %v3565
        %v3567 = vpop.f32.mrf.mxu0
        %v3568 = vadd.f32 %v3242, %v3567
        %v3569 = vpop.f32.mrf.mxu0
        %v3570 = vadd.f32 %v3246, %v3569
        %3571 = vmatprep.mubr.bf16.mxu0 %v3168
        %3572 = vmatmul.mubr.bf16.gmra.mxu0 %v3167
        %v3573 = vpop.f32.mrf.mxu0
        %v3574 = vadd.f32 %v3242, %v3573
        %v3575 = vpop.f32.mrf.mxu0
        %v3576 = vadd.f32 %v3246, %v3575
        %v3577 = vpop.f32.mrf.mxu0
        %v3578 = vadd.f32 %v3242, %v3577
        %v3579 = vpop.f32.mrf.mxu0
        %v3580 = vadd.f32 %v3246, %v3579
        %3581 = vmatprep.mubr.bf16.mxu0 %v3170
        %3582 = vmatmul.mubr.bf16.gmra.mxu0 %v3169
        %v3583 = vpop.f32.mrf.mxu0
        %v3584 = vadd.f32 %v3242, %v3583
        %v3585 = vpop.f32.mrf.mxu0
        %v3586 = vadd.f32 %v3246, %v3585
        %v3587 = vpop.f32.mrf.mxu0
        %v3588 = vadd.f32 %v3242, %v3587
        %v3589 = vpop.f32.mrf.mxu0
        %v3590 = vadd.f32 %v3246, %v3589
        %3591 = vmatprep.mubr.bf16.mxu0 %v3172
        %3592 = vmatmul.mubr.bf16.gmra.mxu0 %v3171
        %v3593 = vpop.f32.mrf.mxu0
        %v3594 = vadd.f32 %v3242, %v3593
        %v3595 = vpop.f32.mrf.mxu0
        %v3596 = vadd.f32 %v3246, %v3595
        %v3597 = vpop.f32.mrf.mxu0
        %v3598 = vadd.f32 %v3242, %v3597
        %v3599 = vpop.f32.mrf.mxu0
        %v3600 = vadd.f32 %v3246, %v3599
        %3601 = vmatprep.mubr.bf16.mxu0 %v3174
        %3602 = vmatmul.mubr.bf16.gmra.mxu0 %v3173
        %v3603 = vpop.f32.mrf.mxu0
        %v3604 = vadd.f32 %v3242, %v3603
        %v3605 = vpop.f32.mrf.mxu0
        %v3606 = vadd.f32 %v3246, %v3605
        %v3607 = vpop.f32.mrf.mxu0
        %v3608 = vadd.f32 %v3242, %v3607
        %v3609 = vpop.f32.mrf.mxu0
        %v3610 = vadd.f32 %v3246, %v3609
        %3611 = vmatprep.mubr.bf16.mxu0 %v3176
        %3612 = vmatmul.mubr.bf16.gmra.mxu0 %v3175
        %v3613 = vpop.f32.mrf.mxu0
        %v3614 = vadd.f32 %v3242, %v3613
        %v3615 = vpop.f32.mrf.mxu0
        %v3616 = vadd.f32 %v3246, %v3615
        %v3617 = vpop.f32.mrf.mxu0
        %v3618 = vadd.f32 %v3242, %v3617
        %v3619 = vpop.f32.mrf.mxu0
        %v3620 = vadd.f32 %v3246, %v3619
        %3621 = vmatprep.mubr.bf16.mxu0 %v3178
        %3622 = vmatmul.mubr.bf16.gmra.mxu0 %v3177
        %v3623 = vpop.f32.mrf.mxu0
        %v3624 = vadd.f32 %v3242, %v3623
        %v3625 = vpop.f32.mrf.mxu0
        %v3626 = vadd.f32 %v3246, %v3625
        %v3627 = vpop.f32.mrf.mxu0
        %v3628 = vadd.f32 %v3242, %v3627
        %v3629 = vpop.f32.mrf.mxu0
        %v3630 = vadd.f32 %v3246, %v3629
        %3631 = vmatprep.mubr.bf16.mxu0 %v3180
        %3632 = vmatmul.mubr.bf16.gmra.mxu0 %v3179
        %v3633 = vpop.f32.mrf.mxu0
        %v3634 = vadd.f32 %v3242, %v3633
        %v3635 = vpop.f32.mrf.mxu0
        %v3636 = vadd.f32 %v3246, %v3635
        %v3637 = vpop.f32.mrf.mxu0
        %v3638 = vadd.f32 %v3242, %v3637
        %v3639 = vpop.f32.mrf.mxu0
        %v3640 = vadd.f32 %v3246, %v3639
        %3641 = vmatprep.mubr.bf16.mxu0 %v3182
        %3642 = vmatmul.mubr.bf16.gmra.mxu0 %v3181
        %v3643 = vpop.f32.mrf.mxu0
        %v3644 = vadd.f32 %v3242, %v3643
        %v3645 = vpop.f32.mrf.mxu0
        %v3646 = vadd.f32 %v3246, %v3645
        %v3647 = vpop.f32.mrf.mxu0
        %v3648 = vadd.f32 %v3242, %v3647
        %v3649 = vpop.f32.mrf.mxu0
        %v3650 = vadd.f32 %v3246, %v3649
        %3651 = vmatprep.mubr.bf16.mxu0 %v3184
        %3652 = vmatmul.mubr.bf16.gmra.mxu0 %v3183
        %v3653 = vpop.f32.mrf.mxu0
        %v3654 = vadd.f32 %v3242, %v3653
        %v3655 = vpop.f32.mrf.mxu0
        %v3656 = vadd.f32 %v3246, %v3655
        %v3657 = vpop.f32.mrf.mxu0
        %v3658 = vadd.f32 %v3242, %v3657
        %v3659 = vpop.f32.mrf.mxu0
        %v3660 = vadd.f32 %v3246, %v3659
        %3661 = vmatprep.mubr.bf16.mxu0 %v3186
        %3662 = vmatmul.mubr.bf16.gmra.mxu0 %v3185
        %v3663 = vpop.f32.mrf.mxu0
        %v3664 = vadd.f32 %v3242, %v3663
        %v3665 = vpop.f32.mrf.mxu0
        %v3666 = vadd.f32 %v3246, %v3665
        %v3667 = vpop.f32.mrf.mxu0
        %v3668 = vadd.f32 %v3242, %v3667
        %v3669 = vpop.f32.mrf.mxu0
        %v3670 = vadd.f32 %v3246, %v3669
        %3671 = vmatprep.mubr.bf16.mxu0 %v3188
        %3672 = vmatmul.mubr.bf16.gmra.mxu0 %v3187
        %v3673 = vpop.f32.mrf.mxu0
        %v3674 = vadd.f32 %v3242, %v3673
        %v3675 = vpop.f32.mrf.mxu0
        %v3676 = vadd.f32 %v3246, %v3675
        %v3677 = vpop.f32.mrf.mxu0
        %v3678 = vadd.f32 %v3242, %v3677
        %v3679 = vpop.f32.mrf.mxu0
        %v3680 = vadd.f32 %v3246, %v3679
        %3681 = vmatprep.mubr.bf16.mxu0 %v3190
        %3682 = vmatmul.mubr.bf16.gmra.mxu0 %v3189
        %v3683 = vpop.f32.mrf.mxu0
        %v3684 = vadd.f32 %v3242, %v3683
        %v3685 = vpop.f32.mrf.mxu0
        %v3686 = vadd.f32 %v3246, %v3685
        %v3687 = vpop.f32.mrf.mxu0
        %v3688 = vadd.f32 %v3242, %v3687
        %v3689 = vpop.f32.mrf.mxu0
        %v3690 = vadd.f32 %v3246, %v3689
        %3691 = vmatprep.mubr.bf16.mxu0 %v3192
        %3692 = vmatmul.mubr.bf16.gmra.mxu0 %v3191
        %v3693 = vpop.f32.mrf.mxu0
        %v3694 = vadd.f32 %v3242, %v3693
        %v3695 = vpop.f32.mrf.mxu0
        %v3696 = vadd.f32 %v3246, %v3695
        %v3697 = vpop.f32.mrf.mxu0
        %v3698 = vadd.f32 %v3242, %v3697
        %v3699 = vpop.f32.mrf.mxu0
        %v3700 = vadd.f32 %v3246, %v3699
        %3701 = vmatprep.mubr.bf16.mxu0 %v3194
        %3702 = vmatmul.mubr.bf16.gmra.mxu0 %v3193
        %v3703 = vpop.f32.mrf.mxu0
        %v3704 = vadd.f32 %v3242, %v3703
        %v3705 = vpop.f32.mrf.mxu0
        %v3706 = vadd.f32 %v3246, %v3705
        %v3707 = vpop.f32.mrf.mxu0
        %v3708 = vadd.f32 %v3242, %v3707
        %v3709 = vpop.f32.mrf.mxu0
        %v3710 = vadd.f32 %v3246, %v3709
        %3711 = vmatprep.mubr.bf16.mxu0 %v3196
        %3712 = vmatmul.mubr.bf16.gmra.mxu0 %v3195
        %v3713 = vpop.f32.mrf.mxu0
        %v3714 = vadd.f32 %v3242, %v3713
        %v3715 = vpop.f32.mrf.mxu0
        %v3716 = vadd.f32 %v3246, %v3715
        %v3717 = vpop.f32.mrf.mxu0
        %v3718 = vadd.f32 %v3242, %v3717
        %v3719 = vpop.f32.mrf.mxu0
        %v3720 = vadd.f32 %v3246, %v3719
        %3721 = vmatprep.mubr.bf16.mxu0 %v3198
        %3722 = vmatmul.mubr.bf16.gmra.mxu0 %v3197
        %v3723 = vpop.f32.mrf.mxu0
        %v3724 = vadd.f32 %v3242, %v3723
        %v3725 = vpop.f32.mrf.mxu0
        %v3726 = vadd.f32 %v3246, %v3725
        %v3727 = vpop.f32.mrf.mxu0
        %v3728 = vadd.f32 %v3242, %v3727
        %v3729 = vpop.f32.mrf.mxu0
        %v3730 = vadd.f32 %v3246, %v3729
        %3731 = vmatprep.mubr.bf16.mxu0 %v3200
        %3732 = vmatmul.mubr.bf16.gmra.mxu0 %v3199
        %v3733 = vpop.f32.mrf.mxu0
        %v3734 = vadd.f32 %v3242, %v3733
        %v3735 = vpop.f32.mrf.mxu0
        %v3736 = vadd.f32 %v3246, %v3735
        %v3737 = vpop.f32.mrf.mxu0
        %v3738 = vadd.f32 %v3242, %v3737
        %v3739 = vpop.f32.mrf.mxu0
        %v3740 = vadd.f32 %v3246, %v3739
        %3741 = vmatprep.mubr.bf16.mxu0 %v3202
        %3742 = vmatmul.mubr.bf16.gmra.mxu0 %v3201
        %v3743 = vpop.f32.mrf.mxu0
        %v3744 = vadd.f32 %v3242, %v3743
        %v3745 = vpop.f32.mrf.mxu0
        %v3746 = vadd.f32 %v3246, %v3745
        %v3747 = vpop.f32.mrf.mxu0
        %v3748 = vadd.f32 %v3242, %v3747
        %v3749 = vpop.f32.mrf.mxu0
        %v3750 = vadd.f32 %v3246, %v3749
        %3751 = vmatprep.mubr.bf16.mxu0 %v3204
        %3752 = vmatmul.mubr.bf16.gmra.mxu0 %v3203
        %v3753 = vpop.f32.mrf.mxu0
        %v3754 = vadd.f32 %v3242, %v3753
        %v3755 = vpop.f32.mrf.mxu0
        %v3756 = vadd.f32 %v3246, %v3755
        %v3757 = vpop.f32.mrf.mxu0
        %v3758 = vadd.f32 %v3242, %v3757
        %v3759 = vpop.f32.mrf.mxu0
        %v3760 = vadd.f32 %v3246, %v3759
        %3761 = vdwg.mxu0
        %v3762 = vmax.f32 %v3444, 0.0
        %v3763 = vmax.f32 %v3446, 0.0
        %v3764 = vmax.f32 %v3448, 0.0
        %v3765 = vmax.f32 %v3450, 0.0
        %v3766 = vmax.f32 %v3454, 0.0
        %v3767 = vmax.f32 %v3456, 0.0
        %v3768 = vmax.f32 %v3458, 0.0
        %v3769 = vmax.f32 %v3460, 0.0
        %v3770 = vmax.f32 %v3464, 0.0
        %v3771 = vmax.f32 %v3466, 0.0
        %v3772 = vmax.f32 %v3468, 0.0
        %v3773 = vmax.f32 %v3470, 0.0
        %v3774 = vmax.f32 %v3474, 0.0
        %v3775 = vmax.f32 %v3476, 0.0
        %v3776 = vmax.f32 %v3478, 0.0
        %v3777 = vmax.f32 %v3480, 0.0
        %v3778 = vmax.f32 %v3484, 0.0
        %v3779 = vmax.f32 %v3486, 0.0
        %v3780 = vmax.f32 %v3488, 0.0
        %v3781 = vmax.f32 %v3490, 0.0
        %v3782 = vmax.f32 %v3494, 0.0
        %v3783 = vmax.f32 %v3496, 0.0
        %v3784 = vmax.f32 %v3498, 0.0
        %v3785 = vmax.f32 %v3500, 0.0
        %v3786 = vmax.f32 %v3504, 0.0
        %v3787 = vmax.f32 %v3506, 0.0
        %v3788 = vmax.f32 %v3508, 0.0
        %v3789 = vmax.f32 %v3510, 0.0
        %v3790 = vmax.f32 %v3514, 0.0
        %v3791 = vmax.f32 %v3516, 0.0
        %v3792 = vmax.f32 %v3518, 0.0
        %v3793 = vmax.f32 %v3520, 0.0
        %v3794 = vmax.f32 %v3524, 0.0
        %v3795 = vmax.f32 %v3526, 0.0
        %v3796 = vmax.f32 %v3528, 0.0
        %v3797 = vmax.f32 %v3530, 0.0
        %v3798 = vmax.f32 %v3534, 0.0
        %v3799 = vmax.f32 %v3536, 0.0
        %v3800 = vmax.f32 %v3538, 0.0
        %v3801 = vmax.f32 %v3540, 0.0
        %v3802 = vmax.f32 %v3544, 0.0
        %v3803 = vmax.f32 %v3546, 0.0
        %v3804 = vmax.f32 %v3548, 0.0
        %v3805 = vmax.f32 %v3550, 0.0
        %v3806 = vmax.f32 %v3554, 0.0
        %v3807 = vmax.f32 %v3556, 0.0
        %v3808 = vmax.f32 %v3558, 0.0
        %v3809 = vmax.f32 %v3560, 0.0
        %v3810 = vmax.f32 %v3564, 0.0
        %v3811 = vmax.f32 %v3566, 0.0
        %v3812 = vmax.f32 %v3568, 0.0
        %v3813 = vmax.f32 %v3570, 0.0
        %v3814 = vmax.f32 %v3574, 0.0
        %v3815 = vmax.f32 %v3576, 0.0
        %v3816 = vmax.f32 %v3578, 0.0
        %v3817 = vmax.f32 %v3580, 0.0
        %v3818 = vmax.f32 %v3584, 0.0
        %v3819 = vmax.f32 %v3586, 0.0
        %v3820 = vmax.f32 %v3588, 0.0
        %v3821 = vmax.f32 %v3590, 0.0
        %v3822 = vmax.f32 %v3594, 0.0
        %v3823 = vmax.f32 %v3596, 0.0
        %v3824 = vmax.f32 %v3598, 0.0
        %v3825 = vmax.f32 %v3600, 0.0
        %v3826 = vmax.f32 %v3604, 0.0
        %v3827 = vmax.f32 %v3606, 0.0
        %v3828 = vmax.f32 %v3608, 0.0
        %v3829 = vmax.f32 %v3610, 0.0
        %v3830 = vmax.f32 %v3614, 0.0
        %v3831 = vmax.f32 %v3616, 0.0
        %v3832 = vmax.f32 %v3618, 0.0
        %v3833 = vmax.f32 %v3620, 0.0
        %v3834 = vmax.f32 %v3624, 0.0
        %v3835 = vmax.f32 %v3626, 0.0
        %v3836 = vmax.f32 %v3628, 0.0
        %v3837 = vmax.f32 %v3630, 0.0
        %v3838 = vmax.f32 %v3634, 0.0
        %v3839 = vmax.f32 %v3636, 0.0
        %v3840 = vmax.f32 %v3638, 0.0
        %v3841 = vmax.f32 %v3640, 0.0
        %v3842 = vmax.f32 %v3644, 0.0
        %v3843 = vmax.f32 %v3646, 0.0
        %v3844 = vmax.f32 %v3648, 0.0
        %v3845 = vmax.f32 %v3650, 0.0
        %v3846 = vmax.f32 %v3654, 0.0
        %v3847 = vmax.f32 %v3656, 0.0
        %v3848 = vmax.f32 %v3658, 0.0
        %v3849 = vmax.f32 %v3660, 0.0
        %v3850 = vmax.f32 %v3664, 0.0
        %v3851 = vmax.f32 %v3666, 0.0
        %v3852 = vmax.f32 %v3668, 0.0
        %v3853 = vmax.f32 %v3670, 0.0
        %v3854 = vmax.f32 %v3674, 0.0
        %v3855 = vmax.f32 %v3676, 0.0
        %v3856 = vmax.f32 %v3678, 0.0
        %v3857 = vmax.f32 %v3680, 0.0
        %v3858 = vmax.f32 %v3684, 0.0
        %v3859 = vmax.f32 %v3686, 0.0
        %v3860 = vmax.f32 %v3688, 0.0
        %v3861 = vmax.f32 %v3690, 0.0
        %v3862 = vmax.f32 %v3694, 0.0
        %v3863 = vmax.f32 %v3696, 0.0
        %v3864 = vmax.f32 %v3698, 0.0
        %v3865 = vmax.f32 %v3700, 0.0
        %v3866 = vmax.f32 %v3704, 0.0
        %v3867 = vmax.f32 %v3706, 0.0
        %v3868 = vmax.f32 %v3708, 0.0
        %v3869 = vmax.f32 %v3710, 0.0
        %v3870 = vmax.f32 %v3714, 0.0
        %v3871 = vmax.f32 %v3716, 0.0
        %v3872 = vmax.f32 %v3718, 0.0
        %v3873 = vmax.f32 %v3720, 0.0
        %v3874 = vmax.f32 %v3724, 0.0
        %v3875 = vmax.f32 %v3726, 0.0
        %v3876 = vmax.f32 %v3728, 0.0
        %v3877 = vmax.f32 %v3730, 0.0
        %v3878 = vmax.f32 %v3734, 0.0
        %v3879 = vmax.f32 %v3736, 0.0
        %v3880 = vmax.f32 %v3738, 0.0
        %v3881 = vmax.f32 %v3740, 0.0
        %v3882 = vmax.f32 %v3744, 0.0
        %v3883 = vmax.f32 %v3746, 0.0
        %v3884 = vmax.f32 %v3748, 0.0
        %v3885 = vmax.f32 %v3750, 0.0
        %v3886 = vmax.f32 %v3754, 0.0
        %v3887 = vmax.f32 %v3756, 0.0
        %v3888 = vmax.f32 %v3758, 0.0
        %v3889 = vmax.f32 %v3760, 0.0
        %v3890 = vpack.c.bf16 %v3764, %v3762
        %v3891 = vpack.c.bf16 %v3765, %v3763
        %v3892 = vpack.c.bf16 %v3768, %v3766
        %v3893 = vpack.c.bf16 %v3769, %v3767
        %v3894 = vpack.c.bf16 %v3772, %v3770
        %v3895 = vpack.c.bf16 %v3773, %v3771
        %v3896 = vpack.c.bf16 %v3776, %v3774
        %v3897 = vpack.c.bf16 %v3777, %v3775
        %v3898 = vpack.c.bf16 %v3780, %v3778
        %v3899 = vpack.c.bf16 %v3781, %v3779
        %v3900 = vpack.c.bf16 %v3784, %v3782
        %v3901 = vpack.c.bf16 %v3785, %v3783
        %v3902 = vpack.c.bf16 %v3788, %v3786
        %v3903 = vpack.c.bf16 %v3789, %v3787
        %v3904 = vpack.c.bf16 %v3792, %v3790
        %v3905 = vpack.c.bf16 %v3793, %v3791
        %v3906 = vpack.c.bf16 %v3796, %v3794
        %v3907 = vpack.c.bf16 %v3797, %v3795
        %v3908 = vpack.c.bf16 %v3800, %v3798
        %v3909 = vpack.c.bf16 %v3801, %v3799
        %v3910 = vpack.c.bf16 %v3804, %v3802
        %v3911 = vpack.c.bf16 %v3805, %v3803
        %v3912 = vpack.c.bf16 %v3808, %v3806
        %v3913 = vpack.c.bf16 %v3809, %v3807
        %v3914 = vpack.c.bf16 %v3812, %v3810
        %v3915 = vpack.c.bf16 %v3813, %v3811
        %v3916 = vpack.c.bf16 %v3816, %v3814
        %v3917 = vpack.c.bf16 %v3817, %v3815
        %v3918 = vpack.c.bf16 %v3820, %v3818
        %v3919 = vpack.c.bf16 %v3821, %v3819
        %v3920 = vpack.c.bf16 %v3824, %v3822
        %v3921 = vpack.c.bf16 %v3825, %v3823
        %v3922 = vpack.c.bf16 %v3828, %v3826
        %v3923 = vpack.c.bf16 %v3829, %v3827
        %v3924 = vpack.c.bf16 %v3832, %v3830
        %v3925 = vpack.c.bf16 %v3833, %v3831
        %v3926 = vpack.c.bf16 %v3836, %v3834
        %v3927 = vpack.c.bf16 %v3837, %v3835
        %v3928 = vpack.c.bf16 %v3840, %v3838
        %v3929 = vpack.c.bf16 %v3841, %v3839
        %v3930 = vpack.c.bf16 %v3844, %v3842
        %v3931 = vpack.c.bf16 %v3845, %v3843
        %v3932 = vpack.c.bf16 %v3848, %v3846
        %v3933 = vpack.c.bf16 %v3849, %v3847
        %v3934 = vpack.c.bf16 %v3852, %v3850
        %v3935 = vpack.c.bf16 %v3853, %v3851
        %v3936 = vpack.c.bf16 %v3856, %v3854
        %v3937 = vpack.c.bf16 %v3857, %v3855
        %v3938 = vpack.c.bf16 %v3860, %v3858
        %v3939 = vpack.c.bf16 %v3861, %v3859
        %v3940 = vpack.c.bf16 %v3864, %v3862
        %v3941 = vpack.c.bf16 %v3865, %v3863
        %v3942 = vpack.c.bf16 %v3868, %v3866
        %v3943 = vpack.c.bf16 %v3869, %v3867
        %v3944 = vpack.c.bf16 %v3872, %v3870
        %v3945 = vpack.c.bf16 %v3873, %v3871
        %v3946 = vpack.c.bf16 %v3876, %v3874
        %v3947 = vpack.c.bf16 %v3877, %v3875
        %v3948 = vpack.c.bf16 %v3880, %v3878
        %v3949 = vpack.c.bf16 %v3881, %v3879
        %v3950 = vpack.c.bf16 %v3884, %v3882
        %v3951 = vpack.c.bf16 %v3885, %v3883
        %v3952 = vpack.c.bf16 %v3888, %v3886
        %v3953 = vpack.c.bf16 %v3889, %v3887
        %v3954 = vld [vmem:[#allocation7] sm:$0xff]
        %v3955 = vld [vmem:[#allocation7 + $0x8] sm:$0xff]
        %v3956 = vld [vmem:[#allocation7 + $0x10] sm:$0xff]
        %v3957 = vld [vmem:[#allocation7 + $0x18] sm:$0xff]
        %v3958 = vld [vmem:[#allocation7 + $0x20] sm:$0xff]
        %v3959 = vld [vmem:[#allocation7 + $0x28] sm:$0xff]
        %v3960 = vld [vmem:[#allocation7 + $0x30] sm:$0xff]
        %v3961 = vld [vmem:[#allocation7 + $0x38] sm:$0xff]
        %v3962 = vld [vmem:[%s10] sm:$0xff]
        %v3963 = vld [vmem:[%s10 + $0x8] sm:$0xff]
        %v3964 = vld [vmem:[%s10 + $0x10] sm:$0xff]
        %v3965 = vld [vmem:[%s10 + $0x18] sm:$0xff]
        %v3966 = vld [vmem:[%s10 + $0x20] sm:$0xff]
        %v3967 = vld [vmem:[%s10 + $0x28] sm:$0xff]
        %v3968 = vld [vmem:[%s10 + $0x30] sm:$0xff]
        %v3969 = vld [vmem:[%s10 + $0x38] sm:$0xff]
        %v3970 = vld [vmem:[%s10 + $0x40] sm:$0xff]
        %v3971 = vld [vmem:[%s10 + $0x48] sm:$0xff]
        %v3972 = vld [vmem:[%s10 + $0x50] sm:$0xff]
        %v3973 = vld [vmem:[%s10 + $0x58] sm:$0xff]
        %v3974 = vld [vmem:[%s10 + $0x60] sm:$0xff]
        %v3975 = vld [vmem:[%s10 + $0x68] sm:$0xff]
        %v3976 = vld [vmem:[%s10 + $0x70] sm:$0xff]
        %v3977 = vld [vmem:[%s10 + $0x78] sm:$0xff]
        %v3978 = vld [vmem:[%s10 + $0x80] sm:$0xff]
        %v3979 = vld [vmem:[%s10 + $0x88] sm:$0xff]
        %v3980 = vld [vmem:[%s10 + $0x90] sm:$0xff]
        %v3981 = vld [vmem:[%s10 + $0x98] sm:$0xff]
        %v3982 = vld [vmem:[%s10 + $0xa0] sm:$0xff]
        %v3983 = vld [vmem:[%s10 + $0xa8] sm:$0xff]
        %v3984 = vld [vmem:[%s10 + $0xb0] sm:$0xff]
        %v3985 = vld [vmem:[%s10 + $0xb8] sm:$0xff]
        %v3986 = vld [vmem:[%s10 + $0xc0] sm:$0xff]
        %v3987 = vld [vmem:[%s10 + $0xc8] sm:$0xff]
        %v3988 = vld [vmem:[%s10 + $0xd0] sm:$0xff]
        %v3989 = vld [vmem:[%s10 + $0xd8] sm:$0xff]
        %v3990 = vld [vmem:[%s10 + $0xe0] sm:$0xff]
        %v3991 = vld [vmem:[%s10 + $0xe8] sm:$0xff]
        %v3992 = vld [vmem:[%s10 + $0xf0] sm:$0xff]
        %v3993 = vld [vmem:[%s10 + $0xf8] sm:$0xff]
        %v4026 = vunpack.c.l.b16 %v3962
        %v4027 = vunpack.c.h.b16 %v3962
        %v4028 = vunpack.c.l.b16 %v3963
        %v4029 = vunpack.c.h.b16 %v3963
        %v4030 = vunpack.c.l.b16 %v3964
        %v4031 = vunpack.c.h.b16 %v3964
        %v4032 = vunpack.c.l.b16 %v3965
        %v4033 = vunpack.c.h.b16 %v3965
        %v4034 = vunpack.c.l.b16 %v3966
        %v4035 = vunpack.c.h.b16 %v3966
        %v4036 = vunpack.c.l.b16 %v3967
        %v4037 = vunpack.c.h.b16 %v3967
        %v4038 = vunpack.c.l.b16 %v3968
        %v4039 = vunpack.c.h.b16 %v3968
        %v4040 = vunpack.c.l.b16 %v3969
        %v4041 = vunpack.c.h.b16 %v3969
        %v4042 = vunpack.c.l.b16 %v3970
        %v4043 = vunpack.c.h.b16 %v3970
        %v4044 = vunpack.c.l.b16 %v3971
        %v4045 = vunpack.c.h.b16 %v3971
        %v4046 = vunpack.c.l.b16 %v3972
        %v4047 = vunpack.c.h.b16 %v3972
        %v4048 = vunpack.c.l.b16 %v3973
        %v4049 = vunpack.c.h.b16 %v3973
        %v4050 = vunpack.c.l.b16 %v3974
        %v4051 = vunpack.c.h.b16 %v3974
        %v4052 = vunpack.c.l.b16 %v3975
        %v4053 = vunpack.c.h.b16 %v3975
        %v4054 = vunpack.c.l.b16 %v3976
        %v4055 = vunpack.c.h.b16 %v3976
        %v4056 = vunpack.c.l.b16 %v3977
        %v4057 = vunpack.c.h.b16 %v3977
        %v4058 = vunpack.c.l.b16 %v3978
        %v4059 = vunpack.c.h.b16 %v3978
        %v4060 = vunpack.c.l.b16 %v3979
        %v4061 = vunpack.c.h.b16 %v3979
        %v4062 = vunpack.c.l.b16 %v3980
        %v4063 = vunpack.c.h.b16 %v3980
        %v4064 = vunpack.c.l.b16 %v3981
        %v4065 = vunpack.c.h.b16 %v3981
        %v4066 = vunpack.c.l.b16 %v3982
        %v4067 = vunpack.c.h.b16 %v3982
        %v4068 = vunpack.c.l.b16 %v3983
        %v4069 = vunpack.c.h.b16 %v3983
        %v4070 = vunpack.c.l.b16 %v3984
        %v4071 = vunpack.c.h.b16 %v3984
        %v4072 = vunpack.c.l.b16 %v3985
        %v4073 = vunpack.c.h.b16 %v3985
        %v4074 = vunpack.c.l.b16 %v3986
        %v4075 = vunpack.c.h.b16 %v3986
        %v4076 = vunpack.c.l.b16 %v3987
        %v4077 = vunpack.c.h.b16 %v3987
        %v4078 = vunpack.c.l.b16 %v3988
        %v4079 = vunpack.c.h.b16 %v3988
        %v4080 = vunpack.c.l.b16 %v3989
        %v4081 = vunpack.c.h.b16 %v3989
        %v4082 = vunpack.c.l.b16 %v3990
        %v4083 = vunpack.c.h.b16 %v3990
        %v4084 = vunpack.c.l.b16 %v3991
        %v4085 = vunpack.c.h.b16 %v3991
        %v4086 = vunpack.c.l.b16 %v3992
        %v4087 = vunpack.c.h.b16 %v3992
        %v4088 = vunpack.c.l.b16 %v3993
        %v4089 = vunpack.c.h.b16 %v3993
        %v4090 = vpack.c.b16 %v4028, %v4026
        %v4091 = vpack.c.b16 %v4029, %v4027
        %v4092 = vpack.c.b16 %v4032, %v4030
        %v4093 = vpack.c.b16 %v4033, %v4031
        %v4094 = vpack.c.b16 %v4036, %v4034
        %v4095 = vpack.c.b16 %v4037, %v4035
        %v4096 = vpack.c.b16 %v4040, %v4038
        %v4097 = vpack.c.b16 %v4041, %v4039
        %v4098 = vpack.c.b16 %v4044, %v4042
        %v4099 = vpack.c.b16 %v4045, %v4043
        %v4100 = vpack.c.b16 %v4048, %v4046
        %v4101 = vpack.c.b16 %v4049, %v4047
        %v4102 = vpack.c.b16 %v4052, %v4050
        %v4103 = vpack.c.b16 %v4053, %v4051
        %v4104 = vpack.c.b16 %v4056, %v4054
        %v4105 = vpack.c.b16 %v4057, %v4055
        %v4106 = vpack.c.b16 %v4060, %v4058
        %v4107 = vpack.c.b16 %v4061, %v4059
        %v4108 = vpack.c.b16 %v4064, %v4062
        %v4109 = vpack.c.b16 %v4065, %v4063
        %v4110 = vpack.c.b16 %v4068, %v4066
        %v4111 = vpack.c.b16 %v4069, %v4067
        %v4112 = vpack.c.b16 %v4072, %v4070
        %v4113 = vpack.c.b16 %v4073, %v4071
        %v4114 = vpack.c.b16 %v4076, %v4074
        %v4115 = vpack.c.b16 %v4077, %v4075
        %v4116 = vpack.c.b16 %v4080, %v4078
        %v4117 = vpack.c.b16 %v4081, %v4079
        %v4118 = vpack.c.b16 %v4084, %v4082
        %v4119 = vpack.c.b16 %v4085, %v4083
        %v4120 = vpack.c.b16 %v4088, %v4086
        %v4121 = vpack.c.b16 %v4089, %v4087
        %4154 = vmatprep.subr.bf16.mxu0 %v4105
        %4155 = vmatpush1.bf16.msra.mxu0 %v4104
        %4156 = vmatprep.subr.bf16.mxu0 %v4103
        %4157 = vmatpush1.bf16.msra.mxu0 %v4102
        %4158 = vmatprep.subr.bf16.mxu0 %v4101
        %4159 = vmatpush1.bf16.msra.mxu0 %v4100
        %4160 = vmatprep.subr.bf16.mxu0 %v4099
        %4161 = vmatpush1.bf16.msra.mxu0 %v4098
        %4162 = vmatprep.subr.bf16.mxu0 %v4097
        %4163 = vmatpush1.bf16.msra.mxu0 %v4096
        %4164 = vmatprep.subr.bf16.mxu0 %v4095
        %4165 = vmatpush1.bf16.msra.mxu0 %v4094
        %4166 = vmatprep.subr.bf16.mxu0 %v4093
        %4167 = vmatpush1.bf16.msra.mxu0 %v4092
        %4168 = vmatprep.subr.bf16.mxu0 %v4091
        %4169 = vmatpush1.bf16.msra.mxu0 %v4090
        %4170 = vmatprep.subr.bf16.mxu0 %v4121
        %4171 = vmatpush2.bf16.msra.mxu0 %v4120
        %4172 = vmatprep.subr.bf16.mxu0 %v4119
        %4173 = vmatpush2.bf16.msra.mxu0 %v4118
        %4174 = vmatprep.subr.bf16.mxu0 %v4117
        %4175 = vmatpush2.bf16.msra.mxu0 %v4116
        %4176 = vmatprep.subr.bf16.mxu0 %v4115
        %4177 = vmatpush2.bf16.msra.mxu0 %v4114
        %4178 = vmatprep.subr.bf16.mxu0 %v4113
        %4179 = vmatpush2.bf16.msra.mxu0 %v4112
        %4180 = vmatprep.subr.bf16.mxu0 %v4111
        %4181 = vmatpush2.bf16.msra.mxu0 %v4110
        %4182 = vmatprep.subr.bf16.mxu0 %v4109
        %4183 = vmatpush2.bf16.msra.mxu0 %v4108
        %4184 = vmatprep.subr.bf16.mxu0 %v4107
        %4185 = vmatpush2.bf16.msra.mxu0 %v4106
        %4186 = vmatprep.mubr.bf16.mxu0 %v3891
        %4187 = vmatmul.mubr.bf16.gmra.mxu0 %v3890
        %v4188 = vpop.f32.mrf.mxu0
        %v4189 = vadd.f32 0.0, %v4188
        %v4190 = vpop.f32.mrf.mxu0
        %v4191 = vadd.f32 0.0, %v4190
        %v4192 = vpop.f32.mrf.mxu0
        %v4193 = vadd.f32 0.0, %v4192
        %v4194 = vpop.f32.mrf.mxu0
        %v4195 = vadd.f32 0.0, %v4194
        %4196 = vmatprep.mubr.bf16.mxu0 %v3893
        %4197 = vmatmul.mubr.bf16.gmra.mxu0 %v3892
        %v4198 = vpop.f32.mrf.mxu0
        %v4199 = vadd.f32 0.0, %v4198
        %v4200 = vpop.f32.mrf.mxu0
        %v4201 = vadd.f32 0.0, %v4200
        %v4202 = vpop.f32.mrf.mxu0
        %v4203 = vadd.f32 0.0, %v4202
        %v4204 = vpop.f32.mrf.mxu0
        %v4205 = vadd.f32 0.0, %v4204
        %4206 = vmatprep.mubr.bf16.mxu0 %v3895
        %4207 = vmatmul.mubr.bf16.gmra.mxu0 %v3894
        %v4208 = vpop.f32.mrf.mxu0
        %v4209 = vadd.f32 0.0, %v4208
        %v4210 = vpop.f32.mrf.mxu0
        %v4211 = vadd.f32 0.0, %v4210
        %v4212 = vpop.f32.mrf.mxu0
        %v4213 = vadd.f32 0.0, %v4212
        %v4214 = vpop.f32.mrf.mxu0
        %v4215 = vadd.f32 0.0, %v4214
        %4216 = vmatprep.mubr.bf16.mxu0 %v3897
        %4217 = vmatmul.mubr.bf16.gmra.mxu0 %v3896
        %v4218 = vpop.f32.mrf.mxu0
        %v4219 = vadd.f32 0.0, %v4218
        %v4220 = vpop.f32.mrf.mxu0
        %v4221 = vadd.f32 0.0, %v4220
        %v4222 = vpop.f32.mrf.mxu0
        %v4223 = vadd.f32 0.0, %v4222
        %v4224 = vpop.f32.mrf.mxu0
        %v4225 = vadd.f32 0.0, %v4224
        %4226 = vmatprep.mubr.bf16.mxu0 %v3899
        %4227 = vmatmul.mubr.bf16.gmra.mxu0 %v3898
        %v4228 = vpop.f32.mrf.mxu0
        %v4229 = vadd.f32 0.0, %v4228
        %v4230 = vpop.f32.mrf.mxu0
        %v4231 = vadd.f32 0.0, %v4230
        %v4232 = vpop.f32.mrf.mxu0
        %v4233 = vadd.f32 0.0, %v4232
        %v4234 = vpop.f32.mrf.mxu0
        %v4235 = vadd.f32 0.0, %v4234
        %4236 = vmatprep.mubr.bf16.mxu0 %v3901
        %4237 = vmatmul.mubr.bf16.gmra.mxu0 %v3900
        %v4238 = vpop.f32.mrf.mxu0
        %v4239 = vadd.f32 0.0, %v4238
        %v4240 = vpop.f32.mrf.mxu0
        %v4241 = vadd.f32 0.0, %v4240
        %v4242 = vpop.f32.mrf.mxu0
        %v4243 = vadd.f32 0.0, %v4242
        %v4244 = vpop.f32.mrf.mxu0
        %v4245 = vadd.f32 0.0, %v4244
        %4246 = vmatprep.mubr.bf16.mxu0 %v3903
        %4247 = vmatmul.mubr.bf16.gmra.mxu0 %v3902
        %v4248 = vpop.f32.mrf.mxu0
        %v4249 = vadd.f32 0.0, %v4248
        %v4250 = vpop.f32.mrf.mxu0
        %v4251 = vadd.f32 0.0, %v4250
        %v4252 = vpop.f32.mrf.mxu0
        %v4253 = vadd.f32 0.0, %v4252
        %v4254 = vpop.f32.mrf.mxu0
        %v4255 = vadd.f32 0.0, %v4254
        %4256 = vmatprep.mubr.bf16.mxu0 %v3905
        %4257 = vmatmul.mubr.bf16.gmra.mxu0 %v3904
        %v4258 = vpop.f32.mrf.mxu0
        %v4259 = vadd.f32 0.0, %v4258
        %v4260 = vpop.f32.mrf.mxu0
        %v4261 = vadd.f32 0.0, %v4260
        %v4262 = vpop.f32.mrf.mxu0
        %v4263 = vadd.f32 0.0, %v4262
        %v4264 = vpop.f32.mrf.mxu0
        %v4265 = vadd.f32 0.0, %v4264
        %4266 = vmatprep.mubr.bf16.mxu0 %v3907
        %4267 = vmatmul.mubr.bf16.gmra.mxu0 %v3906
        %v4268 = vpop.f32.mrf.mxu0
        %v4269 = vadd.f32 0.0, %v4268
        %v4270 = vpop.f32.mrf.mxu0
        %v4271 = vadd.f32 0.0, %v4270
        %v4272 = vpop.f32.mrf.mxu0
        %v4273 = vadd.f32 0.0, %v4272
        %v4274 = vpop.f32.mrf.mxu0
        %v4275 = vadd.f32 0.0, %v4274
        %4276 = vmatprep.mubr.bf16.mxu0 %v3909
        %4277 = vmatmul.mubr.bf16.gmra.mxu0 %v3908
        %v4278 = vpop.f32.mrf.mxu0
        %v4279 = vadd.f32 0.0, %v4278
        %v4280 = vpop.f32.mrf.mxu0
        %v4281 = vadd.f32 0.0, %v4280
        %v4282 = vpop.f32.mrf.mxu0
        %v4283 = vadd.f32 0.0, %v4282
        %v4284 = vpop.f32.mrf.mxu0
        %v4285 = vadd.f32 0.0, %v4284
        %4286 = vmatprep.mubr.bf16.mxu0 %v3911
        %4287 = vmatmul.mubr.bf16.gmra.mxu0 %v3910
        %v4288 = vpop.f32.mrf.mxu0
        %v4289 = vadd.f32 0.0, %v4288
        %v4290 = vpop.f32.mrf.mxu0
        %v4291 = vadd.f32 0.0, %v4290
        %v4292 = vpop.f32.mrf.mxu0
        %v4293 = vadd.f32 0.0, %v4292
        %v4294 = vpop.f32.mrf.mxu0
        %v4295 = vadd.f32 0.0, %v4294
        %4296 = vmatprep.mubr.bf16.mxu0 %v3913
        %4297 = vmatmul.mubr.bf16.gmra.mxu0 %v3912
        %v4298 = vpop.f32.mrf.mxu0
        %v4299 = vadd.f32 0.0, %v4298
        %v4300 = vpop.f32.mrf.mxu0
        %v4301 = vadd.f32 0.0, %v4300
        %v4302 = vpop.f32.mrf.mxu0
        %v4303 = vadd.f32 0.0, %v4302
        %v4304 = vpop.f32.mrf.mxu0
        %v4305 = vadd.f32 0.0, %v4304
        %4306 = vmatprep.mubr.bf16.mxu0 %v3915
        %4307 = vmatmul.mubr.bf16.gmra.mxu0 %v3914
        %v4308 = vpop.f32.mrf.mxu0
        %v4309 = vadd.f32 0.0, %v4308
        %v4310 = vpop.f32.mrf.mxu0
        %v4311 = vadd.f32 0.0, %v4310
        %v4312 = vpop.f32.mrf.mxu0
        %v4313 = vadd.f32 0.0, %v4312
        %v4314 = vpop.f32.mrf.mxu0
        %v4315 = vadd.f32 0.0, %v4314
        %4316 = vmatprep.mubr.bf16.mxu0 %v3917
        %4317 = vmatmul.mubr.bf16.gmra.mxu0 %v3916
        %v4318 = vpop.f32.mrf.mxu0
        %v4319 = vadd.f32 0.0, %v4318
        %v4320 = vpop.f32.mrf.mxu0
        %v4321 = vadd.f32 0.0, %v4320
        %v4322 = vpop.f32.mrf.mxu0
        %v4323 = vadd.f32 0.0, %v4322
        %v4324 = vpop.f32.mrf.mxu0
        %v4325 = vadd.f32 0.0, %v4324
        %4326 = vmatprep.mubr.bf16.mxu0 %v3919
        %4327 = vmatmul.mubr.bf16.gmra.mxu0 %v3918
        %v4328 = vpop.f32.mrf.mxu0
        %v4329 = vadd.f32 0.0, %v4328
        %v4330 = vpop.f32.mrf.mxu0
        %v4331 = vadd.f32 0.0, %v4330
        %v4332 = vpop.f32.mrf.mxu0
        %v4333 = vadd.f32 0.0, %v4332
        %v4334 = vpop.f32.mrf.mxu0
        %v4335 = vadd.f32 0.0, %v4334
        %4336 = vmatprep.mubr.bf16.mxu0 %v3921
        %4337 = vmatmul.mubr.bf16.gmra.mxu0 %v3920
        %v4338 = vpop.f32.mrf.mxu0
        %v4339 = vadd.f32 0.0, %v4338
        %v4340 = vpop.f32.mrf.mxu0
        %v4341 = vadd.f32 0.0, %v4340
        %v4342 = vpop.f32.mrf.mxu0
        %v4343 = vadd.f32 0.0, %v4342
        %v4344 = vpop.f32.mrf.mxu0
        %v4345 = vadd.f32 0.0, %v4344
        %4346 = vmatprep.mubr.bf16.mxu0 %v3923
        %4347 = vmatmul.mubr.bf16.gmra.mxu0 %v3922
        %v4348 = vpop.f32.mrf.mxu0
        %v4349 = vadd.f32 0.0, %v4348
        %v4350 = vpop.f32.mrf.mxu0
        %v4351 = vadd.f32 0.0, %v4350
        %v4352 = vpop.f32.mrf.mxu0
        %v4353 = vadd.f32 0.0, %v4352
        %v4354 = vpop.f32.mrf.mxu0
        %v4355 = vadd.f32 0.0, %v4354
        %4356 = vmatprep.mubr.bf16.mxu0 %v3925
        %4357 = vmatmul.mubr.bf16.gmra.mxu0 %v3924
        %v4358 = vpop.f32.mrf.mxu0
        %v4359 = vadd.f32 0.0, %v4358
        %v4360 = vpop.f32.mrf.mxu0
        %v4361 = vadd.f32 0.0, %v4360
        %v4362 = vpop.f32.mrf.mxu0
        %v4363 = vadd.f32 0.0, %v4362
        %v4364 = vpop.f32.mrf.mxu0
        %v4365 = vadd.f32 0.0, %v4364
        %4366 = vmatprep.mubr.bf16.mxu0 %v3927
        %4367 = vmatmul.mubr.bf16.gmra.mxu0 %v3926
        %v4368 = vpop.f32.mrf.mxu0
        %v4369 = vadd.f32 0.0, %v4368
        %v4370 = vpop.f32.mrf.mxu0
        %v4371 = vadd.f32 0.0, %v4370
        %v4372 = vpop.f32.mrf.mxu0
        %v4373 = vadd.f32 0.0, %v4372
        %v4374 = vpop.f32.mrf.mxu0
        %v4375 = vadd.f32 0.0, %v4374
        %4376 = vmatprep.mubr.bf16.mxu0 %v3929
        %4377 = vmatmul.mubr.bf16.gmra.mxu0 %v3928
        %v4378 = vpop.f32.mrf.mxu0
        %v4379 = vadd.f32 0.0, %v4378
        %v4380 = vpop.f32.mrf.mxu0
        %v4381 = vadd.f32 0.0, %v4380
        %v4382 = vpop.f32.mrf.mxu0
        %v4383 = vadd.f32 0.0, %v4382
        %v4384 = vpop.f32.mrf.mxu0
        %v4385 = vadd.f32 0.0, %v4384
        %4386 = vmatprep.mubr.bf16.mxu0 %v3931
        %4387 = vmatmul.mubr.bf16.gmra.mxu0 %v3930
        %v4388 = vpop.f32.mrf.mxu0
        %v4389 = vadd.f32 0.0, %v4388
        %v4390 = vpop.f32.mrf.mxu0
        %v4391 = vadd.f32 0.0, %v4390
        %v4392 = vpop.f32.mrf.mxu0
        %v4393 = vadd.f32 0.0, %v4392
        %v4394 = vpop.f32.mrf.mxu0
        %v4395 = vadd.f32 0.0, %v4394
        %4396 = vmatprep.mubr.bf16.mxu0 %v3933
        %4397 = vmatmul.mubr.bf16.gmra.mxu0 %v3932
        %v4398 = vpop.f32.mrf.mxu0
        %v4399 = vadd.f32 0.0, %v4398
        %v4400 = vpop.f32.mrf.mxu0
        %v4401 = vadd.f32 0.0, %v4400
        %v4402 = vpop.f32.mrf.mxu0
        %v4403 = vadd.f32 0.0, %v4402
        %v4404 = vpop.f32.mrf.mxu0
        %v4405 = vadd.f32 0.0, %v4404
        %4406 = vmatprep.mubr.bf16.mxu0 %v3935
        %4407 = vmatmul.mubr.bf16.gmra.mxu0 %v3934
        %v4408 = vpop.f32.mrf.mxu0
        %v4409 = vadd.f32 0.0, %v4408
        %v4410 = vpop.f32.mrf.mxu0
        %v4411 = vadd.f32 0.0, %v4410
        %v4412 = vpop.f32.mrf.mxu0
        %v4413 = vadd.f32 0.0, %v4412
        %v4414 = vpop.f32.mrf.mxu0
        %v4415 = vadd.f32 0.0, %v4414
        %4416 = vmatprep.mubr.bf16.mxu0 %v3937
        %4417 = vmatmul.mubr.bf16.gmra.mxu0 %v3936
        %v4418 = vpop.f32.mrf.mxu0
        %v4419 = vadd.f32 0.0, %v4418
        %v4420 = vpop.f32.mrf.mxu0
        %v4421 = vadd.f32 0.0, %v4420
        %v4422 = vpop.f32.mrf.mxu0
        %v4423 = vadd.f32 0.0, %v4422
        %v4424 = vpop.f32.mrf.mxu0
        %v4425 = vadd.f32 0.0, %v4424
        %4426 = vmatprep.mubr.bf16.mxu0 %v3939
        %4427 = vmatmul.mubr.bf16.gmra.mxu0 %v3938
        %v4428 = vpop.f32.mrf.mxu0
        %v4429 = vadd.f32 0.0, %v4428
        %v4430 = vpop.f32.mrf.mxu0
        %v4431 = vadd.f32 0.0, %v4430
        %v4432 = vpop.f32.mrf.mxu0
        %v4433 = vadd.f32 0.0, %v4432
        %v4434 = vpop.f32.mrf.mxu0
        %v4435 = vadd.f32 0.0, %v4434
        %4436 = vmatprep.mubr.bf16.mxu0 %v3941
        %4437 = vmatmul.mubr.bf16.gmra.mxu0 %v3940
        %v4438 = vpop.f32.mrf.mxu0
        %v4439 = vadd.f32 0.0, %v4438
        %v4440 = vpop.f32.mrf.mxu0
        %v4441 = vadd.f32 0.0, %v4440
        %v4442 = vpop.f32.mrf.mxu0
        %v4443 = vadd.f32 0.0, %v4442
        %v4444 = vpop.f32.mrf.mxu0
        %v4445 = vadd.f32 0.0, %v4444
        %4446 = vmatprep.mubr.bf16.mxu0 %v3943
        %4447 = vmatmul.mubr.bf16.gmra.mxu0 %v3942
        %v4448 = vpop.f32.mrf.mxu0
        %v4449 = vadd.f32 0.0, %v4448
        %v4450 = vpop.f32.mrf.mxu0
        %v4451 = vadd.f32 0.0, %v4450
        %v4452 = vpop.f32.mrf.mxu0
        %v4453 = vadd.f32 0.0, %v4452
        %v4454 = vpop.f32.mrf.mxu0
        %v4455 = vadd.f32 0.0, %v4454
        %4456 = vmatprep.mubr.bf16.mxu0 %v3945
        %4457 = vmatmul.mubr.bf16.gmra.mxu0 %v3944
        %v4458 = vpop.f32.mrf.mxu0
        %v4459 = vadd.f32 0.0, %v4458
        %v4460 = vpop.f32.mrf.mxu0
        %v4461 = vadd.f32 0.0, %v4460
        %v4462 = vpop.f32.mrf.mxu0
        %v4463 = vadd.f32 0.0, %v4462
        %v4464 = vpop.f32.mrf.mxu0
        %v4465 = vadd.f32 0.0, %v4464
        %4466 = vmatprep.mubr.bf16.mxu0 %v3947
        %4467 = vmatmul.mubr.bf16.gmra.mxu0 %v3946
        %v4468 = vpop.f32.mrf.mxu0
        %v4469 = vadd.f32 0.0, %v4468
        %v4470 = vpop.f32.mrf.mxu0
        %v4471 = vadd.f32 0.0, %v4470
        %v4472 = vpop.f32.mrf.mxu0
        %v4473 = vadd.f32 0.0, %v4472
        %v4474 = vpop.f32.mrf.mxu0
        %v4475 = vadd.f32 0.0, %v4474
        %4476 = vmatprep.mubr.bf16.mxu0 %v3949
        %4477 = vmatmul.mubr.bf16.gmra.mxu0 %v3948
        %v4478 = vpop.f32.mrf.mxu0
        %v4479 = vadd.f32 0.0, %v4478
        %v4480 = vpop.f32.mrf.mxu0
        %v4481 = vadd.f32 0.0, %v4480
        %v4482 = vpop.f32.mrf.mxu0
        %v4483 = vadd.f32 0.0, %v4482
        %v4484 = vpop.f32.mrf.mxu0
        %v4485 = vadd.f32 0.0, %v4484
        %4486 = vmatprep.mubr.bf16.mxu0 %v3951
        %4487 = vmatmul.mubr.bf16.gmra.mxu0 %v3950
        %v4488 = vpop.f32.mrf.mxu0
        %v4489 = vadd.f32 0.0, %v4488
        %v4490 = vpop.f32.mrf.mxu0
        %v4491 = vadd.f32 0.0, %v4490
        %v4492 = vpop.f32.mrf.mxu0
        %v4493 = vadd.f32 0.0, %v4492
        %v4494 = vpop.f32.mrf.mxu0
        %v4495 = vadd.f32 0.0, %v4494
        %4496 = vmatprep.mubr.bf16.mxu0 %v3953
        %4497 = vmatmul.mubr.bf16.gmra.mxu0 %v3952
        %v4498 = vpop.f32.mrf.mxu0
        %v4499 = vadd.f32 0.0, %v4498
        %v4500 = vpop.f32.mrf.mxu0
        %v4501 = vadd.f32 0.0, %v4500
        %v4502 = vpop.f32.mrf.mxu0
        %v4503 = vadd.f32 0.0, %v4502
        %v4504 = vpop.f32.mrf.mxu0
        %v4505 = vadd.f32 0.0, %v4504
        %4506 = vdwg.mxu0
        %v4515 = vunpack.c.l.b16 %v3954
        %v4516 = vunpack.c.h.b16 %v3954
        %v4517 = vunpack.c.l.b16 %v3955
        %v4518 = vunpack.c.h.b16 %v3955
        %v4519 = vunpack.c.l.b16 %v3956
        %v4520 = vunpack.c.h.b16 %v3956
        %v4521 = vunpack.c.l.b16 %v3957
        %v4522 = vunpack.c.h.b16 %v3957
        %v4523 = vunpack.c.l.b16 %v3958
        %v4524 = vunpack.c.h.b16 %v3958
        %v4525 = vunpack.c.l.b16 %v3959
        %v4526 = vunpack.c.h.b16 %v3959
        %v4527 = vunpack.c.l.b16 %v3960
        %v4528 = vunpack.c.h.b16 %v3960
        %v4529 = vunpack.c.l.b16 %v3961
        %v4530 = vunpack.c.h.b16 %v3961
        %v4531 = vpack.c.b16 %v4517, %v4515
        %v4532 = vpack.c.b16 %v4518, %v4516
        %v4533 = vpack.c.b16 %v4521, %v4519
        %v4534 = vpack.c.b16 %v4522, %v4520
        %v4535 = vpack.c.b16 %v4525, %v4523
        %v4536 = vpack.c.b16 %v4526, %v4524
        %v4537 = vpack.c.b16 %v4529, %v4527
        %v4538 = vpack.c.b16 %v4530, %v4528
        %v4546 = vand.u32 %v4537, %v1155
        %v4549 = vand.u32 %v4538, %v1155
        %4551 = vmatprep.subr.bf16.mxu0 0
        %4552 = vmatpush1.bf16.msra.mxu0 0
        %4553 = vmatprep.subr.bf16.mxu0 0
        %4554 = vmatpush1.bf16.msra.mxu0 0
        %4555 = vmatprep.subr.bf16.mxu0 0
        %4556 = vmatpush1.bf16.msra.mxu0 0
        %4557 = vmatprep.subr.bf16.mxu0 0
        %4558 = vmatpush1.bf16.msra.mxu0 0
        %4559 = vmatprep.subr.bf16.mxu0 %v4549
        %4560 = vmatpush1.bf16.msra.mxu0 %v4546
        %4561 = vmatprep.subr.bf16.mxu0 %v4536
        %4562 = vmatpush1.bf16.msra.mxu0 %v4535
        %4563 = vmatprep.subr.bf16.mxu0 %v4534
        %4564 = vmatpush1.bf16.msra.mxu0 %v4533
        %4565 = vmatprep.subr.bf16.mxu0 %v4532
        %4566 = vmatpush1.bf16.msra.mxu0 %v4531
        %4567 = vmatprep.subr.bf16.mxu0 0
        %4568 = vmatpush2.bf16.msra.mxu0 0
        %4569 = vmatprep.subr.bf16.mxu0 0
        %4570 = vmatpush2.bf16.msra.mxu0 0
        %4571 = vmatprep.subr.bf16.mxu0 0
        %4572 = vmatpush2.bf16.msra.mxu0 0
        %4573 = vmatprep.subr.bf16.mxu0 0
        %4574 = vmatpush2.bf16.msra.mxu0 0
        %4575 = vmatprep.subr.bf16.mxu0 0
        %4576 = vmatpush2.bf16.msra.mxu0 0
        %4577 = vmatprep.subr.bf16.mxu0 0
        %4578 = vmatpush2.bf16.msra.mxu0 0
        %4579 = vmatprep.subr.bf16.mxu0 0
        %4580 = vmatpush2.bf16.msra.mxu0 0
        %4581 = vmatprep.subr.bf16.mxu0 0
        %4582 = vmatpush2.bf16.msra.mxu0 0
        %4583 = vmatprep.mubr.bf16.mxu0 0
        %4584 = vmatmul.mubr.bf16.gmra.mxu0 %v1057
        %v4585 = vpop.f32.mrf.mxu0
        %v4586 = vadd.f32 %v4189, %v4585
        %v4587 = vpop.f32.mrf.mxu0
        %v4588 = vadd.f32 %v4191, %v4587
        %v4589 = vpop.f32.mrf.mxu0
        %v4590 = vadd.f32 %v4193, %v4589
        %v4591 = vpop.f32.mrf.mxu0
        %v4592 = vadd.f32 %v4195, %v4591
        %4593 = vmatprep.mubr.bf16.mxu0 0
        %4594 = vmatmul.mubr.bf16.gmra.mxu0 %v1060
        %v4595 = vpop.f32.mrf.mxu0
        %v4596 = vadd.f32 %v4199, %v4595
        %v4597 = vpop.f32.mrf.mxu0
        %v4598 = vadd.f32 %v4201, %v4597
        %v4599 = vpop.f32.mrf.mxu0
        %v4600 = vadd.f32 %v4203, %v4599
        %v4601 = vpop.f32.mrf.mxu0
        %v4602 = vadd.f32 %v4205, %v4601
        %4603 = vmatprep.mubr.bf16.mxu0 0
        %4604 = vmatmul.mubr.bf16.gmra.mxu0 %v1063
        %v4605 = vpop.f32.mrf.mxu0
        %v4606 = vadd.f32 %v4209, %v4605
        %v4607 = vpop.f32.mrf.mxu0
        %v4608 = vadd.f32 %v4211, %v4607
        %v4609 = vpop.f32.mrf.mxu0
        %v4610 = vadd.f32 %v4213, %v4609
        %v4611 = vpop.f32.mrf.mxu0
        %v4612 = vadd.f32 %v4215, %v4611
        %4613 = vmatprep.mubr.bf16.mxu0 0
        %4614 = vmatmul.mubr.bf16.gmra.mxu0 %v1066
        %v4615 = vpop.f32.mrf.mxu0
        %v4616 = vadd.f32 %v4219, %v4615
        %v4617 = vpop.f32.mrf.mxu0
        %v4618 = vadd.f32 %v4221, %v4617
        %v4619 = vpop.f32.mrf.mxu0
        %v4620 = vadd.f32 %v4223, %v4619
        %v4621 = vpop.f32.mrf.mxu0
        %v4622 = vadd.f32 %v4225, %v4621
        %4623 = vmatprep.mubr.bf16.mxu0 0
        %4624 = vmatmul.mubr.bf16.gmra.mxu0 %v1069
        %v4625 = vpop.f32.mrf.mxu0
        %v4626 = vadd.f32 %v4229, %v4625
        %v4627 = vpop.f32.mrf.mxu0
        %v4628 = vadd.f32 %v4231, %v4627
        %v4629 = vpop.f32.mrf.mxu0
        %v4630 = vadd.f32 %v4233, %v4629
        %v4631 = vpop.f32.mrf.mxu0
        %v4632 = vadd.f32 %v4235, %v4631
        %4633 = vmatprep.mubr.bf16.mxu0 0
        %4634 = vmatmul.mubr.bf16.gmra.mxu0 %v1072
        %v4635 = vpop.f32.mrf.mxu0
        %v4636 = vadd.f32 %v4239, %v4635
        %v4637 = vpop.f32.mrf.mxu0
        %v4638 = vadd.f32 %v4241, %v4637
        %v4639 = vpop.f32.mrf.mxu0
        %v4640 = vadd.f32 %v4243, %v4639
        %v4641 = vpop.f32.mrf.mxu0
        %v4642 = vadd.f32 %v4245, %v4641
        %4643 = vmatprep.mubr.bf16.mxu0 0
        %4644 = vmatmul.mubr.bf16.gmra.mxu0 %v1075
        %v4645 = vpop.f32.mrf.mxu0
        %v4646 = vadd.f32 %v4249, %v4645
        %v4647 = vpop.f32.mrf.mxu0
        %v4648 = vadd.f32 %v4251, %v4647
        %v4649 = vpop.f32.mrf.mxu0
        %v4650 = vadd.f32 %v4253, %v4649
        %v4651 = vpop.f32.mrf.mxu0
        %v4652 = vadd.f32 %v4255, %v4651
        %4653 = vmatprep.mubr.bf16.mxu0 0
        %4654 = vmatmul.mubr.bf16.gmra.mxu0 %v1078
        %v4655 = vpop.f32.mrf.mxu0
        %v4656 = vadd.f32 %v4259, %v4655
        %v4657 = vpop.f32.mrf.mxu0
        %v4658 = vadd.f32 %v4261, %v4657
        %v4659 = vpop.f32.mrf.mxu0
        %v4660 = vadd.f32 %v4263, %v4659
        %v4661 = vpop.f32.mrf.mxu0
        %v4662 = vadd.f32 %v4265, %v4661
        %4663 = vmatprep.mubr.bf16.mxu0 0
        %4664 = vmatmul.mubr.bf16.gmra.mxu0 %v1081
        %v4665 = vpop.f32.mrf.mxu0
        %v4666 = vadd.f32 %v4269, %v4665
        %v4667 = vpop.f32.mrf.mxu0
        %v4668 = vadd.f32 %v4271, %v4667
        %v4669 = vpop.f32.mrf.mxu0
        %v4670 = vadd.f32 %v4273, %v4669
        %v4671 = vpop.f32.mrf.mxu0
        %v4672 = vadd.f32 %v4275, %v4671
        %4673 = vmatprep.mubr.bf16.mxu0 0
        %4674 = vmatmul.mubr.bf16.gmra.mxu0 %v1084
        %v4675 = vpop.f32.mrf.mxu0
        %v4676 = vadd.f32 %v4279, %v4675
        %v4677 = vpop.f32.mrf.mxu0
        %v4678 = vadd.f32 %v4281, %v4677
        %v4679 = vpop.f32.mrf.mxu0
        %v4680 = vadd.f32 %v4283, %v4679
        %v4681 = vpop.f32.mrf.mxu0
        %v4682 = vadd.f32 %v4285, %v4681
        %4683 = vmatprep.mubr.bf16.mxu0 0
        %4684 = vmatmul.mubr.bf16.gmra.mxu0 %v1087
        %v4685 = vpop.f32.mrf.mxu0
        %v4686 = vadd.f32 %v4289, %v4685
        %v4687 = vpop.f32.mrf.mxu0
        %v4688 = vadd.f32 %v4291, %v4687
        %v4689 = vpop.f32.mrf.mxu0
        %v4690 = vadd.f32 %v4293, %v4689
        %v4691 = vpop.f32.mrf.mxu0
        %v4692 = vadd.f32 %v4295, %v4691
        %4693 = vmatprep.mubr.bf16.mxu0 0
        %4694 = vmatmul.mubr.bf16.gmra.mxu0 %v1090
        %v4695 = vpop.f32.mrf.mxu0
        %v4696 = vadd.f32 %v4299, %v4695
        %v4697 = vpop.f32.mrf.mxu0
        %v4698 = vadd.f32 %v4301, %v4697
        %v4699 = vpop.f32.mrf.mxu0
        %v4700 = vadd.f32 %v4303, %v4699
        %v4701 = vpop.f32.mrf.mxu0
        %v4702 = vadd.f32 %v4305, %v4701
        %4703 = vmatprep.mubr.bf16.mxu0 0
        %4704 = vmatmul.mubr.bf16.gmra.mxu0 %v1093
        %v4705 = vpop.f32.mrf.mxu0
        %v4706 = vadd.f32 %v4309, %v4705
        %v4707 = vpop.f32.mrf.mxu0
        %v4708 = vadd.f32 %v4311, %v4707
        %v4709 = vpop.f32.mrf.mxu0
        %v4710 = vadd.f32 %v4313, %v4709
        %v4711 = vpop.f32.mrf.mxu0
        %v4712 = vadd.f32 %v4315, %v4711
        %4713 = vmatprep.mubr.bf16.mxu0 0
        %4714 = vmatmul.mubr.bf16.gmra.mxu0 %v1096
        %v4715 = vpop.f32.mrf.mxu0
        %v4716 = vadd.f32 %v4319, %v4715
        %v4717 = vpop.f32.mrf.mxu0
        %v4718 = vadd.f32 %v4321, %v4717
        %v4719 = vpop.f32.mrf.mxu0
        %v4720 = vadd.f32 %v4323, %v4719
        %v4721 = vpop.f32.mrf.mxu0
        %v4722 = vadd.f32 %v4325, %v4721
        %4723 = vmatprep.mubr.bf16.mxu0 0
        %4724 = vmatmul.mubr.bf16.gmra.mxu0 %v1099
        %v4725 = vpop.f32.mrf.mxu0
        %v4726 = vadd.f32 %v4329, %v4725
        %v4727 = vpop.f32.mrf.mxu0
        %v4728 = vadd.f32 %v4331, %v4727
        %v4729 = vpop.f32.mrf.mxu0
        %v4730 = vadd.f32 %v4333, %v4729
        %v4731 = vpop.f32.mrf.mxu0
        %v4732 = vadd.f32 %v4335, %v4731
        %4733 = vmatprep.mubr.bf16.mxu0 0
        %4734 = vmatmul.mubr.bf16.gmra.mxu0 %v1102
        %v4735 = vpop.f32.mrf.mxu0
        %v4736 = vadd.f32 %v4339, %v4735
        %v4737 = vpop.f32.mrf.mxu0
        %v4738 = vadd.f32 %v4341, %v4737
        %v4739 = vpop.f32.mrf.mxu0
        %v4740 = vadd.f32 %v4343, %v4739
        %v4741 = vpop.f32.mrf.mxu0
        %v4742 = vadd.f32 %v4345, %v4741
        %4743 = vmatprep.mubr.bf16.mxu0 0
        %4744 = vmatmul.mubr.bf16.gmra.mxu0 %v1105
        %v4745 = vpop.f32.mrf.mxu0
        %v4746 = vadd.f32 %v4349, %v4745
        %v4747 = vpop.f32.mrf.mxu0
        %v4748 = vadd.f32 %v4351, %v4747
        %v4749 = vpop.f32.mrf.mxu0
        %v4750 = vadd.f32 %v4353, %v4749
        %v4751 = vpop.f32.mrf.mxu0
        %v4752 = vadd.f32 %v4355, %v4751
        %4753 = vmatprep.mubr.bf16.mxu0 0
        %4754 = vmatmul.mubr.bf16.gmra.mxu0 %v1108
        %v4755 = vpop.f32.mrf.mxu0
        %v4756 = vadd.f32 %v4359, %v4755
        %v4757 = vpop.f32.mrf.mxu0
        %v4758 = vadd.f32 %v4361, %v4757
        %v4759 = vpop.f32.mrf.mxu0
        %v4760 = vadd.f32 %v4363, %v4759
        %v4761 = vpop.f32.mrf.mxu0
        %v4762 = vadd.f32 %v4365, %v4761
        %4763 = vmatprep.mubr.bf16.mxu0 0
        %4764 = vmatmul.mubr.bf16.gmra.mxu0 %v1111
        %v4765 = vpop.f32.mrf.mxu0
        %v4766 = vadd.f32 %v4369, %v4765
        %v4767 = vpop.f32.mrf.mxu0
        %v4768 = vadd.f32 %v4371, %v4767
        %v4769 = vpop.f32.mrf.mxu0
        %v4770 = vadd.f32 %v4373, %v4769
        %v4771 = vpop.f32.mrf.mxu0
        %v4772 = vadd.f32 %v4375, %v4771
        %4773 = vmatprep.mubr.bf16.mxu0 0
        %4774 = vmatmul.mubr.bf16.gmra.mxu0 %v1114
        %v4775 = vpop.f32.mrf.mxu0
        %v4776 = vadd.f32 %v4379, %v4775
        %v4777 = vpop.f32.mrf.mxu0
        %v4778 = vadd.f32 %v4381, %v4777
        %v4779 = vpop.f32.mrf.mxu0
        %v4780 = vadd.f32 %v4383, %v4779
        %v4781 = vpop.f32.mrf.mxu0
        %v4782 = vadd.f32 %v4385, %v4781
        %4783 = vmatprep.mubr.bf16.mxu0 0
        %4784 = vmatmul.mubr.bf16.gmra.mxu0 %v1117
        %v4785 = vpop.f32.mrf.mxu0
        %v4786 = vadd.f32 %v4389, %v4785
        %v4787 = vpop.f32.mrf.mxu0
        %v4788 = vadd.f32 %v4391, %v4787
        %v4789 = vpop.f32.mrf.mxu0
        %v4790 = vadd.f32 %v4393, %v4789
        %v4791 = vpop.f32.mrf.mxu0
        %v4792 = vadd.f32 %v4395, %v4791
        %4793 = vmatprep.mubr.bf16.mxu0 0
        %4794 = vmatmul.mubr.bf16.gmra.mxu0 %v1120
        %v4795 = vpop.f32.mrf.mxu0
        %v4796 = vadd.f32 %v4399, %v4795
        %v4797 = vpop.f32.mrf.mxu0
        %v4798 = vadd.f32 %v4401, %v4797
        %v4799 = vpop.f32.mrf.mxu0
        %v4800 = vadd.f32 %v4403, %v4799
        %v4801 = vpop.f32.mrf.mxu0
        %v4802 = vadd.f32 %v4405, %v4801
        %4803 = vmatprep.mubr.bf16.mxu0 0
        %4804 = vmatmul.mubr.bf16.gmra.mxu0 %v1123
        %v4805 = vpop.f32.mrf.mxu0
        %v4806 = vadd.f32 %v4409, %v4805
        %v4807 = vpop.f32.mrf.mxu0
        %v4808 = vadd.f32 %v4411, %v4807
        %v4809 = vpop.f32.mrf.mxu0
        %v4810 = vadd.f32 %v4413, %v4809
        %v4811 = vpop.f32.mrf.mxu0
        %v4812 = vadd.f32 %v4415, %v4811
        %4813 = vmatprep.mubr.bf16.mxu0 0
        %4814 = vmatmul.mubr.bf16.gmra.mxu0 %v1126
        %v4815 = vpop.f32.mrf.mxu0
        %v4816 = vadd.f32 %v4419, %v4815
        %v4817 = vpop.f32.mrf.mxu0
        %v4818 = vadd.f32 %v4421, %v4817
        %v4819 = vpop.f32.mrf.mxu0
        %v4820 = vadd.f32 %v4423, %v4819
        %v4821 = vpop.f32.mrf.mxu0
        %v4822 = vadd.f32 %v4425, %v4821
        %4823 = vmatprep.mubr.bf16.mxu0 0
        %4824 = vmatmul.mubr.bf16.gmra.mxu0 %v1129
        %v4825 = vpop.f32.mrf.mxu0
        %v4826 = vadd.f32 %v4429, %v4825
        %v4827 = vpop.f32.mrf.mxu0
        %v4828 = vadd.f32 %v4431, %v4827
        %v4829 = vpop.f32.mrf.mxu0
        %v4830 = vadd.f32 %v4433, %v4829
        %v4831 = vpop.f32.mrf.mxu0
        %v4832 = vadd.f32 %v4435, %v4831
        %4833 = vmatprep.mubr.bf16.mxu0 0
        %4834 = vmatmul.mubr.bf16.gmra.mxu0 %v1132
        %v4835 = vpop.f32.mrf.mxu0
        %v4836 = vadd.f32 %v4439, %v4835
        %v4837 = vpop.f32.mrf.mxu0
        %v4838 = vadd.f32 %v4441, %v4837
        %v4839 = vpop.f32.mrf.mxu0
        %v4840 = vadd.f32 %v4443, %v4839
        %v4841 = vpop.f32.mrf.mxu0
        %v4842 = vadd.f32 %v4445, %v4841
        %4843 = vmatprep.mubr.bf16.mxu0 0
        %4844 = vmatmul.mubr.bf16.gmra.mxu0 %v1135
        %v4845 = vpop.f32.mrf.mxu0
        %v4846 = vadd.f32 %v4449, %v4845
        %v4847 = vpop.f32.mrf.mxu0
        %v4848 = vadd.f32 %v4451, %v4847
        %v4849 = vpop.f32.mrf.mxu0
        %v4850 = vadd.f32 %v4453, %v4849
        %v4851 = vpop.f32.mrf.mxu0
        %v4852 = vadd.f32 %v4455, %v4851
        %4853 = vmatprep.mubr.bf16.mxu0 0
        %4854 = vmatmul.mubr.bf16.gmra.mxu0 %v1138
        %v4855 = vpop.f32.mrf.mxu0
        %v4856 = vadd.f32 %v4459, %v4855
        %v4857 = vpop.f32.mrf.mxu0
        %v4858 = vadd.f32 %v4461, %v4857
        %v4859 = vpop.f32.mrf.mxu0
        %v4860 = vadd.f32 %v4463, %v4859
        %v4861 = vpop.f32.mrf.mxu0
        %v4862 = vadd.f32 %v4465, %v4861
        %4863 = vmatprep.mubr.bf16.mxu0 0
        %4864 = vmatmul.mubr.bf16.gmra.mxu0 %v1141
        %v4865 = vpop.f32.mrf.mxu0
        %v4866 = vadd.f32 %v4469, %v4865
        %v4867 = vpop.f32.mrf.mxu0
        %v4868 = vadd.f32 %v4471, %v4867
        %v4869 = vpop.f32.mrf.mxu0
        %v4870 = vadd.f32 %v4473, %v4869
        %v4871 = vpop.f32.mrf.mxu0
        %v4872 = vadd.f32 %v4475, %v4871
        %4873 = vmatprep.mubr.bf16.mxu0 0
        %4874 = vmatmul.mubr.bf16.gmra.mxu0 %v1144
        %v4875 = vpop.f32.mrf.mxu0
        %v4876 = vadd.f32 %v4479, %v4875
        %v4877 = vpop.f32.mrf.mxu0
        %v4878 = vadd.f32 %v4481, %v4877
        %v4879 = vpop.f32.mrf.mxu0
        %v4880 = vadd.f32 %v4483, %v4879
        %v4881 = vpop.f32.mrf.mxu0
        %v4882 = vadd.f32 %v4485, %v4881
        %4883 = vmatprep.mubr.bf16.mxu0 0
        %4884 = vmatmul.mubr.bf16.gmra.mxu0 %v1147
        %v4885 = vpop.f32.mrf.mxu0
        %v4886 = vadd.f32 %v4489, %v4885
        %v4887 = vpop.f32.mrf.mxu0
        %v4888 = vadd.f32 %v4491, %v4887
        %v4889 = vpop.f32.mrf.mxu0
        %v4890 = vadd.f32 %v4493, %v4889
        %v4891 = vpop.f32.mrf.mxu0
        %v4892 = vadd.f32 %v4495, %v4891
        %4893 = vmatprep.mubr.bf16.mxu0 0
        %4894 = vmatmul.mubr.bf16.gmra.mxu0 %v1150
        %v4895 = vpop.f32.mrf.mxu0
        %v4896 = vadd.f32 %v4499, %v4895
        %v4897 = vpop.f32.mrf.mxu0
        %v4898 = vadd.f32 %v4501, %v4897
        %v4899 = vpop.f32.mrf.mxu0
        %v4900 = vadd.f32 %v4503, %v4899
        %v4901 = vpop.f32.mrf.mxu0
        %v4902 = vadd.f32 %v4505, %v4901
        %4903 = vdwg.mxu0
        %v4904 = vld [vmem:[#allocation9] sm:$0x3]
        %v4906 = vlaneseq
        %v4907 = vshrl.u32 %v4906, 7
        %v4908 = vsub.s32 0, %v4907
        %v4909 = vrot.slane %v4904, %v4908
        %v4910 = vlaneseq
        %v4911 = vshrl.u32 %v4910, 7
        %v4912 = vsub.s32 1, %v4911
        %v4913 = vrot.slane %v4904, %v4912
        %v4916 = vadd.f32 %v4586, %v4909
        %v4917 = vadd.f32 %v4588, %v4913
        %v4918 = vadd.f32 %v4590, %v4909
        %v4919 = vadd.f32 %v4592, %v4913
        %v4920 = vadd.f32 %v4596, %v4909
        %v4921 = vadd.f32 %v4598, %v4913
        %v4922 = vadd.f32 %v4600, %v4909
        %v4923 = vadd.f32 %v4602, %v4913
        %v4924 = vadd.f32 %v4606, %v4909
        %v4925 = vadd.f32 %v4608, %v4913
        %v4926 = vadd.f32 %v4610, %v4909
        %v4927 = vadd.f32 %v4612, %v4913
        %v4928 = vadd.f32 %v4616, %v4909
        %v4929 = vadd.f32 %v4618, %v4913
        %v4930 = vadd.f32 %v4620, %v4909
        %v4931 = vadd.f32 %v4622, %v4913
        %v4932 = vadd.f32 %v4626, %v4909
        %v4933 = vadd.f32 %v4628, %v4913
        %v4934 = vadd.f32 %v4630, %v4909
        %v4935 = vadd.f32 %v4632, %v4913
        %v4936 = vadd.f32 %v4636, %v4909
        %v4937 = vadd.f32 %v4638, %v4913
        %v4938 = vadd.f32 %v4640, %v4909
        %v4939 = vadd.f32 %v4642, %v4913
        %v4940 = vadd.f32 %v4646, %v4909
        %v4941 = vadd.f32 %v4648, %v4913
        %v4942 = vadd.f32 %v4650, %v4909
        %v4943 = vadd.f32 %v4652, %v4913
        %v4944 = vadd.f32 %v4656, %v4909
        %v4945 = vadd.f32 %v4658, %v4913
        %v4946 = vadd.f32 %v4660, %v4909
        %v4947 = vadd.f32 %v4662, %v4913
        %v4948 = vadd.f32 %v4666, %v4909
        %v4949 = vadd.f32 %v4668, %v4913
        %v4950 = vadd.f32 %v4670, %v4909
        %v4951 = vadd.f32 %v4672, %v4913
        %v4952 = vadd.f32 %v4676, %v4909
        %v4953 = vadd.f32 %v4678, %v4913
        %v4954 = vadd.f32 %v4680, %v4909
        %v4955 = vadd.f32 %v4682, %v4913
        %v4956 = vadd.f32 %v4686, %v4909
        %v4957 = vadd.f32 %v4688, %v4913
        %v4958 = vadd.f32 %v4690, %v4909
        %v4959 = vadd.f32 %v4692, %v4913
        %v4960 = vadd.f32 %v4696, %v4909
        %v4961 = vadd.f32 %v4698, %v4913
        %v4962 = vadd.f32 %v4700, %v4909
        %v4963 = vadd.f32 %v4702, %v4913
        %v4964 = vadd.f32 %v4706, %v4909
        %v4965 = vadd.f32 %v4708, %v4913
        %v4966 = vadd.f32 %v4710, %v4909
        %v4967 = vadd.f32 %v4712, %v4913
        %v4968 = vadd.f32 %v4716, %v4909
        %v4969 = vadd.f32 %v4718, %v4913
        %v4970 = vadd.f32 %v4720, %v4909
        %v4971 = vadd.f32 %v4722, %v4913
        %v4972 = vadd.f32 %v4726, %v4909
        %v4973 = vadd.f32 %v4728, %v4913
        %v4974 = vadd.f32 %v4730, %v4909
        %v4975 = vadd.f32 %v4732, %v4913
        %v4976 = vadd.f32 %v4736, %v4909
        %v4977 = vadd.f32 %v4738, %v4913
        %v4978 = vadd.f32 %v4740, %v4909
        %v4979 = vadd.f32 %v4742, %v4913
        %v4980 = vadd.f32 %v4746, %v4909
        %v4981 = vadd.f32 %v4748, %v4913
        %v4982 = vadd.f32 %v4750, %v4909
        %v4983 = vadd.f32 %v4752, %v4913
        %v4984 = vadd.f32 %v4756, %v4909
        %v4985 = vadd.f32 %v4758, %v4913
        %v4986 = vadd.f32 %v4760, %v4909
        %v4987 = vadd.f32 %v4762, %v4913
        %v4988 = vadd.f32 %v4766, %v4909
        %v4989 = vadd.f32 %v4768, %v4913
        %v4990 = vadd.f32 %v4770, %v4909
        %v4991 = vadd.f32 %v4772, %v4913
        %v4992 = vadd.f32 %v4776, %v4909
        %v4993 = vadd.f32 %v4778, %v4913
        %v4994 = vadd.f32 %v4780, %v4909
        %v4995 = vadd.f32 %v4782, %v4913
        %v4996 = vadd.f32 %v4786, %v4909
        %v4997 = vadd.f32 %v4788, %v4913
        %v4998 = vadd.f32 %v4790, %v4909
        %v4999 = vadd.f32 %v4792, %v4913
        %v5000 = vadd.f32 %v4796, %v4909
        %v5001 = vadd.f32 %v4798, %v4913
        %v5002 = vadd.f32 %v4800, %v4909
        %v5003 = vadd.f32 %v4802, %v4913
        %v5004 = vadd.f32 %v4806, %v4909
        %v5005 = vadd.f32 %v4808, %v4913
        %v5006 = vadd.f32 %v4810, %v4909
        %v5007 = vadd.f32 %v4812, %v4913
        %v5008 = vadd.f32 %v4816, %v4909
        %v5009 = vadd.f32 %v4818, %v4913
        %v5010 = vadd.f32 %v4820, %v4909
        %v5011 = vadd.f32 %v4822, %v4913
        %v5012 = vadd.f32 %v4826, %v4909
        %v5013 = vadd.f32 %v4828, %v4913
        %v5014 = vadd.f32 %v4830, %v4909
        %v5015 = vadd.f32 %v4832, %v4913
        %v5016 = vadd.f32 %v4836, %v4909
        %v5017 = vadd.f32 %v4838, %v4913
        %v5018 = vadd.f32 %v4840, %v4909
        %v5019 = vadd.f32 %v4842, %v4913
        %v5020 = vadd.f32 %v4846, %v4909
        %v5021 = vadd.f32 %v4848, %v4913
        %v5022 = vadd.f32 %v4850, %v4909
        %v5023 = vadd.f32 %v4852, %v4913
        %v5024 = vadd.f32 %v4856, %v4909
        %v5025 = vadd.f32 %v4858, %v4913
        %v5026 = vadd.f32 %v4860, %v4909
        %v5027 = vadd.f32 %v4862, %v4913
        %v5028 = vadd.f32 %v4866, %v4909
        %v5029 = vadd.f32 %v4868, %v4913
        %v5030 = vadd.f32 %v4870, %v4909
        %v5031 = vadd.f32 %v4872, %v4913
        %v5032 = vadd.f32 %v4876, %v4909
        %v5033 = vadd.f32 %v4878, %v4913
        %v5034 = vadd.f32 %v4880, %v4909
        %v5035 = vadd.f32 %v4882, %v4913
        %v5036 = vadd.f32 %v4886, %v4909
        %v5037 = vadd.f32 %v4888, %v4913
        %v5038 = vadd.f32 %v4890, %v4909
        %v5039 = vadd.f32 %v4892, %v4913
        %v5040 = vadd.f32 %v4896, %v4909
        %v5041 = vadd.f32 %v4898, %v4913
        %v5042 = vadd.f32 %v4900, %v4909
        %v5043 = vadd.f32 %v4902, %v4913
        %v5044 = vmax.f32 %v4916, 0.0
        %v5045 = vmax.f32 %v4917, 0.0
        %v5046 = vmax.f32 %v4918, 0.0
        %v5047 = vmax.f32 %v4919, 0.0
        %v5048 = vmax.f32 %v4920, 0.0
        %v5049 = vmax.f32 %v4921, 0.0
        %v5050 = vmax.f32 %v4922, 0.0
        %v5051 = vmax.f32 %v4923, 0.0
        %v5052 = vmax.f32 %v4924, 0.0
        %v5053 = vmax.f32 %v4925, 0.0
        %v5054 = vmax.f32 %v4926, 0.0
        %v5055 = vmax.f32 %v4927, 0.0
        %v5056 = vmax.f32 %v4928, 0.0
        %v5057 = vmax.f32 %v4929, 0.0
        %v5058 = vmax.f32 %v4930, 0.0
        %v5059 = vmax.f32 %v4931, 0.0
        %v5060 = vmax.f32 %v4932, 0.0
        %v5061 = vmax.f32 %v4933, 0.0
        %v5062 = vmax.f32 %v4934, 0.0
        %v5063 = vmax.f32 %v4935, 0.0
        %v5064 = vmax.f32 %v4936, 0.0
        %v5065 = vmax.f32 %v4937, 0.0
        %v5066 = vmax.f32 %v4938, 0.0
        %v5067 = vmax.f32 %v4939, 0.0
        %v5068 = vmax.f32 %v4940, 0.0
        %v5069 = vmax.f32 %v4941, 0.0
        %v5070 = vmax.f32 %v4942, 0.0
        %v5071 = vmax.f32 %v4943, 0.0
        %v5072 = vmax.f32 %v4944, 0.0
        %v5073 = vmax.f32 %v4945, 0.0
        %v5074 = vmax.f32 %v4946, 0.0
        %v5075 = vmax.f32 %v4947, 0.0
        %v5076 = vmax.f32 %v4948, 0.0
        %v5077 = vmax.f32 %v4949, 0.0
        %v5078 = vmax.f32 %v4950, 0.0
        %v5079 = vmax.f32 %v4951, 0.0
        %v5080 = vmax.f32 %v4952, 0.0
        %v5081 = vmax.f32 %v4953, 0.0
        %v5082 = vmax.f32 %v4954, 0.0
        %v5083 = vmax.f32 %v4955, 0.0
        %v5084 = vmax.f32 %v4956, 0.0
        %v5085 = vmax.f32 %v4957, 0.0
        %v5086 = vmax.f32 %v4958, 0.0
        %v5087 = vmax.f32 %v4959, 0.0
        %v5088 = vmax.f32 %v4960, 0.0
        %v5089 = vmax.f32 %v4961, 0.0
        %v5090 = vmax.f32 %v4962, 0.0
        %v5091 = vmax.f32 %v4963, 0.0
        %v5092 = vmax.f32 %v4964, 0.0
        %v5093 = vmax.f32 %v4965, 0.0
        %v5094 = vmax.f32 %v4966, 0.0
        %v5095 = vmax.f32 %v4967, 0.0
        %v5096 = vmax.f32 %v4968, 0.0
        %v5097 = vmax.f32 %v4969, 0.0
        %v5098 = vmax.f32 %v4970, 0.0
        %v5099 = vmax.f32 %v4971, 0.0
        %v5100 = vmax.f32 %v4972, 0.0
        %v5101 = vmax.f32 %v4973, 0.0
        %v5102 = vmax.f32 %v4974, 0.0
        %v5103 = vmax.f32 %v4975, 0.0
        %v5104 = vmax.f32 %v4976, 0.0
        %v5105 = vmax.f32 %v4977, 0.0
        %v5106 = vmax.f32 %v4978, 0.0
        %v5107 = vmax.f32 %v4979, 0.0
        %v5108 = vmax.f32 %v4980, 0.0
        %v5109 = vmax.f32 %v4981, 0.0
        %v5110 = vmax.f32 %v4982, 0.0
        %v5111 = vmax.f32 %v4983, 0.0
        %v5112 = vmax.f32 %v4984, 0.0
        %v5113 = vmax.f32 %v4985, 0.0
        %v5114 = vmax.f32 %v4986, 0.0
        %v5115 = vmax.f32 %v4987, 0.0
        %v5116 = vmax.f32 %v4988, 0.0
        %v5117 = vmax.f32 %v4989, 0.0
        %v5118 = vmax.f32 %v4990, 0.0
        %v5119 = vmax.f32 %v4991, 0.0
        %v5120 = vmax.f32 %v4992, 0.0
        %v5121 = vmax.f32 %v4993, 0.0
        %v5122 = vmax.f32 %v4994, 0.0
        %v5123 = vmax.f32 %v4995, 0.0
        %v5124 = vmax.f32 %v4996, 0.0
        %v5125 = vmax.f32 %v4997, 0.0
        %v5126 = vmax.f32 %v4998, 0.0
        %v5127 = vmax.f32 %v4999, 0.0
        %v5128 = vmax.f32 %v5000, 0.0
        %v5129 = vmax.f32 %v5001, 0.0
        %v5130 = vmax.f32 %v5002, 0.0
        %v5131 = vmax.f32 %v5003, 0.0
        %v5132 = vmax.f32 %v5004, 0.0
        %v5133 = vmax.f32 %v5005, 0.0
        %v5134 = vmax.f32 %v5006, 0.0
        %v5135 = vmax.f32 %v5007, 0.0
        %v5136 = vmax.f32 %v5008, 0.0
        %v5137 = vmax.f32 %v5009, 0.0
        %v5138 = vmax.f32 %v5010, 0.0
        %v5139 = vmax.f32 %v5011, 0.0
        %v5140 = vmax.f32 %v5012, 0.0
        %v5141 = vmax.f32 %v5013, 0.0
        %v5142 = vmax.f32 %v5014, 0.0
        %v5143 = vmax.f32 %v5015, 0.0
        %v5144 = vmax.f32 %v5016, 0.0
        %v5145 = vmax.f32 %v5017, 0.0
        %v5146 = vmax.f32 %v5018, 0.0
        %v5147 = vmax.f32 %v5019, 0.0
        %v5148 = vmax.f32 %v5020, 0.0
        %v5149 = vmax.f32 %v5021, 0.0
        %v5150 = vmax.f32 %v5022, 0.0
        %v5151 = vmax.f32 %v5023, 0.0
        %v5152 = vmax.f32 %v5024, 0.0
        %v5153 = vmax.f32 %v5025, 0.0
        %v5154 = vmax.f32 %v5026, 0.0
        %v5155 = vmax.f32 %v5027, 0.0
        %v5156 = vmax.f32 %v5028, 0.0
        %v5157 = vmax.f32 %v5029, 0.0
        %v5158 = vmax.f32 %v5030, 0.0
        %v5159 = vmax.f32 %v5031, 0.0
        %v5160 = vmax.f32 %v5032, 0.0
        %v5161 = vmax.f32 %v5033, 0.0
        %v5162 = vmax.f32 %v5034, 0.0
        %v5163 = vmax.f32 %v5035, 0.0
        %v5164 = vmax.f32 %v5036, 0.0
        %v5165 = vmax.f32 %v5037, 0.0
        %v5166 = vmax.f32 %v5038, 0.0
        %v5167 = vmax.f32 %v5039, 0.0
        %v5168 = vmax.f32 %v5040, 0.0
        %v5169 = vmax.f32 %v5041, 0.0
        %v5170 = vmax.f32 %v5042, 0.0
        %v5171 = vmax.f32 %v5043, 0.0
        %v5172 = vpack.c.bf16 %v5046, %v5044
        %v5173 = vpack.c.bf16 %v5047, %v5045
        %v5174 = vpack.c.bf16 %v5050, %v5048
        %v5175 = vpack.c.bf16 %v5051, %v5049
        %v5176 = vpack.c.bf16 %v5054, %v5052
        %v5177 = vpack.c.bf16 %v5055, %v5053
        %v5178 = vpack.c.bf16 %v5058, %v5056
        %v5179 = vpack.c.bf16 %v5059, %v5057
        %v5180 = vpack.c.bf16 %v5062, %v5060
        %v5181 = vpack.c.bf16 %v5063, %v5061
        %v5182 = vpack.c.bf16 %v5066, %v5064
        %v5183 = vpack.c.bf16 %v5067, %v5065
        %v5184 = vpack.c.bf16 %v5070, %v5068
        %v5185 = vpack.c.bf16 %v5071, %v5069
        %v5186 = vpack.c.bf16 %v5074, %v5072
        %v5187 = vpack.c.bf16 %v5075, %v5073
        %v5188 = vpack.c.bf16 %v5078, %v5076
        %v5189 = vpack.c.bf16 %v5079, %v5077
        %v5190 = vpack.c.bf16 %v5082, %v5080
        %v5191 = vpack.c.bf16 %v5083, %v5081
        %v5192 = vpack.c.bf16 %v5086, %v5084
        %v5193 = vpack.c.bf16 %v5087, %v5085
        %v5194 = vpack.c.bf16 %v5090, %v5088
        %v5195 = vpack.c.bf16 %v5091, %v5089
        %v5196 = vpack.c.bf16 %v5094, %v5092
        %v5197 = vpack.c.bf16 %v5095, %v5093
        %v5198 = vpack.c.bf16 %v5098, %v5096
        %v5199 = vpack.c.bf16 %v5099, %v5097
        %v5200 = vpack.c.bf16 %v5102, %v5100
        %v5201 = vpack.c.bf16 %v5103, %v5101
        %v5202 = vpack.c.bf16 %v5106, %v5104
        %v5203 = vpack.c.bf16 %v5107, %v5105
        %v5204 = vpack.c.bf16 %v5110, %v5108
        %v5205 = vpack.c.bf16 %v5111, %v5109
        %v5206 = vpack.c.bf16 %v5114, %v5112
        %v5207 = vpack.c.bf16 %v5115, %v5113
        %v5208 = vpack.c.bf16 %v5118, %v5116
        %v5209 = vpack.c.bf16 %v5119, %v5117
        %v5210 = vpack.c.bf16 %v5122, %v5120
        %v5211 = vpack.c.bf16 %v5123, %v5121
        %v5212 = vpack.c.bf16 %v5126, %v5124
        %v5213 = vpack.c.bf16 %v5127, %v5125
        %v5214 = vpack.c.bf16 %v5130, %v5128
        %v5215 = vpack.c.bf16 %v5131, %v5129
        %v5216 = vpack.c.bf16 %v5134, %v5132
        %v5217 = vpack.c.bf16 %v5135, %v5133
        %v5218 = vpack.c.bf16 %v5138, %v5136
        %v5219 = vpack.c.bf16 %v5139, %v5137
        %v5220 = vpack.c.bf16 %v5142, %v5140
        %v5221 = vpack.c.bf16 %v5143, %v5141
        %v5222 = vpack.c.bf16 %v5146, %v5144
        %v5223 = vpack.c.bf16 %v5147, %v5145
        %v5224 = vpack.c.bf16 %v5150, %v5148
        %v5225 = vpack.c.bf16 %v5151, %v5149
        %v5226 = vpack.c.bf16 %v5154, %v5152
        %v5227 = vpack.c.bf16 %v5155, %v5153
        %v5228 = vpack.c.bf16 %v5158, %v5156
        %v5229 = vpack.c.bf16 %v5159, %v5157
        %v5230 = vpack.c.bf16 %v5162, %v5160
        %v5231 = vpack.c.bf16 %v5163, %v5161
        %v5232 = vpack.c.bf16 %v5166, %v5164
        %v5233 = vpack.c.bf16 %v5167, %v5165
        %v5234 = vpack.c.bf16 %v5170, %v5168
        %v5235 = vpack.c.bf16 %v5171, %v5169
        %v5236 = vld [vmem:[%s12] sm:$0xff]
        %v5237 = vld [vmem:[%s12 + $0x8] sm:$0xff]
        %v5238 = vld [vmem:[%s12 + $0x10] sm:$0xff]
        %v5239 = vld [vmem:[%s12 + $0x18] sm:$0xff]
        %v5240 = vld [vmem:[%s12 + $0x20] sm:$0xff]
        %v5241 = vld [vmem:[%s12 + $0x28] sm:$0xff]
        %v5242 = vld [vmem:[%s12 + $0x30] sm:$0xff]
        %v5243 = vld [vmem:[%s12 + $0x38] sm:$0xff]
        %v5244 = vld [vmem:[%s12 + $0x40] sm:$0xff]
        %v5245 = vld [vmem:[%s12 + $0x48] sm:$0xff]
        %v5246 = vld [vmem:[%s12 + $0x50] sm:$0xff]
        %v5247 = vld [vmem:[%s12 + $0x58] sm:$0xff]
        %v5248 = vld [vmem:[%s12 + $0x60] sm:$0xff]
        %v5249 = vld [vmem:[%s12 + $0x68] sm:$0xff]
        %v5250 = vld [vmem:[%s12 + $0x70] sm:$0xff]
        %v5251 = vld [vmem:[%s12 + $0x78] sm:$0xff]
        %v5252 = vld [vmem:[%s12 + $0x80] sm:$0xff]
        %v5253 = vld [vmem:[%s12 + $0x88] sm:$0xff]
        %v5254 = vld [vmem:[%s12 + $0x90] sm:$0xff]
        %v5255 = vld [vmem:[%s12 + $0x98] sm:$0xff]
        %v5256 = vld [vmem:[%s12 + $0xa0] sm:$0xff]
        %v5257 = vld [vmem:[%s12 + $0xa8] sm:$0xff]
        %v5258 = vld [vmem:[%s12 + $0xb0] sm:$0xff]
        %v5259 = vld [vmem:[%s12 + $0xb8] sm:$0xff]
        %v5260 = vld [vmem:[%s12 + $0xc0] sm:$0xff]
        %v5261 = vld [vmem:[%s12 + $0xc8] sm:$0xff]
        %v5262 = vld [vmem:[%s12 + $0xd0] sm:$0xff]
        %v5263 = vld [vmem:[%s12 + $0xd8] sm:$0xff]
        %v5264 = vld [vmem:[%s12 + $0xe0] sm:$0xff]
        %v5265 = vld [vmem:[%s12 + $0xe8] sm:$0xff]
        %v5266 = vld [vmem:[%s12 + $0xf0] sm:$0xff]
        %v5267 = vld [vmem:[%s12 + $0xf8] sm:$0xff]
        %v5268 = vld [vmem:[#allocation10] sm:$0x3]
        %v5270 = vlaneseq
        %v5271 = vshrl.u32 %v5270, 7
        %v5272 = vsub.s32 0, %v5271
        %v5273 = vrot.slane %v5268, %v5272
        %v5274 = vlaneseq
        %v5275 = vshrl.u32 %v5274, 7
        %v5276 = vsub.s32 1, %v5275
        %v5277 = vrot.slane %v5268, %v5276
        %v5312 = vunpack.c.l.b16 %v5236
        %v5313 = vunpack.c.h.b16 %v5236
        %v5314 = vunpack.c.l.b16 %v5237
        %v5315 = vunpack.c.h.b16 %v5237
        %v5316 = vunpack.c.l.b16 %v5238
        %v5317 = vunpack.c.h.b16 %v5238
        %v5318 = vunpack.c.l.b16 %v5239
        %v5319 = vunpack.c.h.b16 %v5239
        %v5320 = vunpack.c.l.b16 %v5240
        %v5321 = vunpack.c.h.b16 %v5240
        %v5322 = vunpack.c.l.b16 %v5241
        %v5323 = vunpack.c.h.b16 %v5241
        %v5324 = vunpack.c.l.b16 %v5242
        %v5325 = vunpack.c.h.b16 %v5242
        %v5326 = vunpack.c.l.b16 %v5243
        %v5327 = vunpack.c.h.b16 %v5243
        %v5328 = vunpack.c.l.b16 %v5244
        %v5329 = vunpack.c.h.b16 %v5244
        %v5330 = vunpack.c.l.b16 %v5245
        %v5331 = vunpack.c.h.b16 %v5245
        %v5332 = vunpack.c.l.b16 %v5246
        %v5333 = vunpack.c.h.b16 %v5246
        %v5334 = vunpack.c.l.b16 %v5247
        %v5335 = vunpack.c.h.b16 %v5247
        %v5336 = vunpack.c.l.b16 %v5248
        %v5337 = vunpack.c.h.b16 %v5248
        %v5338 = vunpack.c.l.b16 %v5249
        %v5339 = vunpack.c.h.b16 %v5249
        %v5340 = vunpack.c.l.b16 %v5250
        %v5341 = vunpack.c.h.b16 %v5250
        %v5342 = vunpack.c.l.b16 %v5251
        %v5343 = vunpack.c.h.b16 %v5251
        %v5344 = vunpack.c.l.b16 %v5252
        %v5345 = vunpack.c.h.b16 %v5252
        %v5346 = vunpack.c.l.b16 %v5253
        %v5347 = vunpack.c.h.b16 %v5253
        %v5348 = vunpack.c.l.b16 %v5254
        %v5349 = vunpack.c.h.b16 %v5254
        %v5350 = vunpack.c.l.b16 %v5255
        %v5351 = vunpack.c.h.b16 %v5255
        %v5352 = vunpack.c.l.b16 %v5256
        %v5353 = vunpack.c.h.b16 %v5256
        %v5354 = vunpack.c.l.b16 %v5257
        %v5355 = vunpack.c.h.b16 %v5257
        %v5356 = vunpack.c.l.b16 %v5258
        %v5357 = vunpack.c.h.b16 %v5258
        %v5358 = vunpack.c.l.b16 %v5259
        %v5359 = vunpack.c.h.b16 %v5259
        %v5360 = vunpack.c.l.b16 %v5260
        %v5361 = vunpack.c.h.b16 %v5260
        %v5362 = vunpack.c.l.b16 %v5261
        %v5363 = vunpack.c.h.b16 %v5261
        %v5364 = vunpack.c.l.b16 %v5262
        %v5365 = vunpack.c.h.b16 %v5262
        %v5366 = vunpack.c.l.b16 %v5263
        %v5367 = vunpack.c.h.b16 %v5263
        %v5368 = vunpack.c.l.b16 %v5264
        %v5369 = vunpack.c.h.b16 %v5264
        %v5370 = vunpack.c.l.b16 %v5265
        %v5371 = vunpack.c.h.b16 %v5265
        %v5372 = vunpack.c.l.b16 %v5266
        %v5373 = vunpack.c.h.b16 %v5266
        %v5374 = vunpack.c.l.b16 %v5267
        %v5375 = vunpack.c.h.b16 %v5267
        %v5376 = vpack.c.b16 %v5314, %v5312
        %v5377 = vpack.c.b16 %v5315, %v5313
        %v5378 = vpack.c.b16 %v5318, %v5316
        %v5379 = vpack.c.b16 %v5319, %v5317
        %v5380 = vpack.c.b16 %v5322, %v5320
        %v5381 = vpack.c.b16 %v5323, %v5321
        %v5382 = vpack.c.b16 %v5326, %v5324
        %v5383 = vpack.c.b16 %v5327, %v5325
        %v5384 = vpack.c.b16 %v5330, %v5328
        %v5385 = vpack.c.b16 %v5331, %v5329
        %v5386 = vpack.c.b16 %v5334, %v5332
        %v5387 = vpack.c.b16 %v5335, %v5333
        %v5388 = vpack.c.b16 %v5338, %v5336
        %v5389 = vpack.c.b16 %v5339, %v5337
        %v5390 = vpack.c.b16 %v5342, %v5340
        %v5391 = vpack.c.b16 %v5343, %v5341
        %v5392 = vpack.c.b16 %v5346, %v5344
        %v5393 = vpack.c.b16 %v5347, %v5345
        %v5394 = vpack.c.b16 %v5350, %v5348
        %v5395 = vpack.c.b16 %v5351, %v5349
        %v5396 = vpack.c.b16 %v5354, %v5352
        %v5397 = vpack.c.b16 %v5355, %v5353
        %v5398 = vpack.c.b16 %v5358, %v5356
        %v5399 = vpack.c.b16 %v5359, %v5357
        %v5400 = vpack.c.b16 %v5362, %v5360
        %v5401 = vpack.c.b16 %v5363, %v5361
        %v5402 = vpack.c.b16 %v5366, %v5364
        %v5403 = vpack.c.b16 %v5367, %v5365
        %v5404 = vpack.c.b16 %v5370, %v5368
        %v5405 = vpack.c.b16 %v5371, %v5369
        %v5406 = vpack.c.b16 %v5374, %v5372
        %v5407 = vpack.c.b16 %v5375, %v5373
        %5440 = vmatprep.subr.bf16.mxu0 %v5391
        %5441 = vmatpush1.bf16.msra.mxu0 %v5390
        %5442 = vmatprep.subr.bf16.mxu0 %v5389
        %5443 = vmatpush1.bf16.msra.mxu0 %v5388
        %5444 = vmatprep.subr.bf16.mxu0 %v5387
        %5445 = vmatpush1.bf16.msra.mxu0 %v5386
        %5446 = vmatprep.subr.bf16.mxu0 %v5385
        %5447 = vmatpush1.bf16.msra.mxu0 %v5384
        %5448 = vmatprep.subr.bf16.mxu0 %v5383
        %5449 = vmatpush1.bf16.msra.mxu0 %v5382
        %5450 = vmatprep.subr.bf16.mxu0 %v5381
        %5451 = vmatpush1.bf16.msra.mxu0 %v5380
        %5452 = vmatprep.subr.bf16.mxu0 %v5379
        %5453 = vmatpush1.bf16.msra.mxu0 %v5378
        %5454 = vmatprep.subr.bf16.mxu0 %v5377
        %5455 = vmatpush1.bf16.msra.mxu0 %v5376
        %5456 = vmatprep.subr.bf16.mxu0 %v5407
        %5457 = vmatpush2.bf16.msra.mxu0 %v5406
        %5458 = vmatprep.subr.bf16.mxu0 %v5405
        %5459 = vmatpush2.bf16.msra.mxu0 %v5404
        %5460 = vmatprep.subr.bf16.mxu0 %v5403
        %5461 = vmatpush2.bf16.msra.mxu0 %v5402
        %5462 = vmatprep.subr.bf16.mxu0 %v5401
        %5463 = vmatpush2.bf16.msra.mxu0 %v5400
        %5464 = vmatprep.subr.bf16.mxu0 %v5399
        %5465 = vmatpush2.bf16.msra.mxu0 %v5398
        %5466 = vmatprep.subr.bf16.mxu0 %v5397
        %5467 = vmatpush2.bf16.msra.mxu0 %v5396
        %5468 = vmatprep.subr.bf16.mxu0 %v5395
        %5469 = vmatpush2.bf16.msra.mxu0 %v5394
        %5470 = vmatprep.subr.bf16.mxu0 %v5393
        %5471 = vmatpush2.bf16.msra.mxu0 %v5392
        %5472 = vmatprep.mubr.bf16.mxu0 %v5173
        %5473 = vmatmul.mubr.bf16.gmra.mxu0 %v5172
        %v5474 = vpop.f32.mrf.mxu0
        %v5475 = vadd.f32 %v5273, %v5474
        %v5476 = vpop.f32.mrf.mxu0
        %v5477 = vadd.f32 %v5277, %v5476
        %v5478 = vpop.f32.mrf.mxu0
        %v5479 = vadd.f32 %v5273, %v5478
        %v5480 = vpop.f32.mrf.mxu0
        %v5481 = vadd.f32 %v5277, %v5480
        %5482 = vmatprep.mubr.bf16.mxu0 %v5175
        %5483 = vmatmul.mubr.bf16.gmra.mxu0 %v5174
        %v5484 = vpop.f32.mrf.mxu0
        %v5485 = vadd.f32 %v5273, %v5484
        %v5486 = vpop.f32.mrf.mxu0
        %v5487 = vadd.f32 %v5277, %v5486
        %v5488 = vpop.f32.mrf.mxu0
        %v5489 = vadd.f32 %v5273, %v5488
        %v5490 = vpop.f32.mrf.mxu0
        %v5491 = vadd.f32 %v5277, %v5490
        %5492 = vmatprep.mubr.bf16.mxu0 %v5177
        %5493 = vmatmul.mubr.bf16.gmra.mxu0 %v5176
        %v5494 = vpop.f32.mrf.mxu0
        %v5495 = vadd.f32 %v5273, %v5494
        %v5496 = vpop.f32.mrf.mxu0
        %v5497 = vadd.f32 %v5277, %v5496
        %v5498 = vpop.f32.mrf.mxu0
        %v5499 = vadd.f32 %v5273, %v5498
        %v5500 = vpop.f32.mrf.mxu0
        %v5501 = vadd.f32 %v5277, %v5500
        %5502 = vmatprep.mubr.bf16.mxu0 %v5179
        %5503 = vmatmul.mubr.bf16.gmra.mxu0 %v5178
        %v5504 = vpop.f32.mrf.mxu0
        %v5505 = vadd.f32 %v5273, %v5504
        %v5506 = vpop.f32.mrf.mxu0
        %v5507 = vadd.f32 %v5277, %v5506
        %v5508 = vpop.f32.mrf.mxu0
        %v5509 = vadd.f32 %v5273, %v5508
        %v5510 = vpop.f32.mrf.mxu0
        %v5511 = vadd.f32 %v5277, %v5510
        %5512 = vmatprep.mubr.bf16.mxu0 %v5181
        %5513 = vmatmul.mubr.bf16.gmra.mxu0 %v5180
        %v5514 = vpop.f32.mrf.mxu0
        %v5515 = vadd.f32 %v5273, %v5514
        %v5516 = vpop.f32.mrf.mxu0
        %v5517 = vadd.f32 %v5277, %v5516
        %v5518 = vpop.f32.mrf.mxu0
        %v5519 = vadd.f32 %v5273, %v5518
        %v5520 = vpop.f32.mrf.mxu0
        %v5521 = vadd.f32 %v5277, %v5520
        %5522 = vmatprep.mubr.bf16.mxu0 %v5183
        %5523 = vmatmul.mubr.bf16.gmra.mxu0 %v5182
        %v5524 = vpop.f32.mrf.mxu0
        %v5525 = vadd.f32 %v5273, %v5524
        %v5526 = vpop.f32.mrf.mxu0
        %v5527 = vadd.f32 %v5277, %v5526
        %v5528 = vpop.f32.mrf.mxu0
        %v5529 = vadd.f32 %v5273, %v5528
        %v5530 = vpop.f32.mrf.mxu0
        %v5531 = vadd.f32 %v5277, %v5530
        %5532 = vmatprep.mubr.bf16.mxu0 %v5185
        %5533 = vmatmul.mubr.bf16.gmra.mxu0 %v5184
        %v5534 = vpop.f32.mrf.mxu0
        %v5535 = vadd.f32 %v5273, %v5534
        %v5536 = vpop.f32.mrf.mxu0
        %v5537 = vadd.f32 %v5277, %v5536
        %v5538 = vpop.f32.mrf.mxu0
        %v5539 = vadd.f32 %v5273, %v5538
        %v5540 = vpop.f32.mrf.mxu0
        %v5541 = vadd.f32 %v5277, %v5540
        %5542 = vmatprep.mubr.bf16.mxu0 %v5187
        %5543 = vmatmul.mubr.bf16.gmra.mxu0 %v5186
        %v5544 = vpop.f32.mrf.mxu0
        %v5545 = vadd.f32 %v5273, %v5544
        %v5546 = vpop.f32.mrf.mxu0
        %v5547 = vadd.f32 %v5277, %v5546
        %v5548 = vpop.f32.mrf.mxu0
        %v5549 = vadd.f32 %v5273, %v5548
        %v5550 = vpop.f32.mrf.mxu0
        %v5551 = vadd.f32 %v5277, %v5550
        %5552 = vmatprep.mubr.bf16.mxu0 %v5189
        %5553 = vmatmul.mubr.bf16.gmra.mxu0 %v5188
        %v5554 = vpop.f32.mrf.mxu0
        %v5555 = vadd.f32 %v5273, %v5554
        %v5556 = vpop.f32.mrf.mxu0
        %v5557 = vadd.f32 %v5277, %v5556
        %v5558 = vpop.f32.mrf.mxu0
        %v5559 = vadd.f32 %v5273, %v5558
        %v5560 = vpop.f32.mrf.mxu0
        %v5561 = vadd.f32 %v5277, %v5560
        %5562 = vmatprep.mubr.bf16.mxu0 %v5191
        %5563 = vmatmul.mubr.bf16.gmra.mxu0 %v5190
        %v5564 = vpop.f32.mrf.mxu0
        %v5565 = vadd.f32 %v5273, %v5564
        %v5566 = vpop.f32.mrf.mxu0
        %v5567 = vadd.f32 %v5277, %v5566
        %v5568 = vpop.f32.mrf.mxu0
        %v5569 = vadd.f32 %v5273, %v5568
        %v5570 = vpop.f32.mrf.mxu0
        %v5571 = vadd.f32 %v5277, %v5570
        %5572 = vmatprep.mubr.bf16.mxu0 %v5193
        %5573 = vmatmul.mubr.bf16.gmra.mxu0 %v5192
        %v5574 = vpop.f32.mrf.mxu0
        %v5575 = vadd.f32 %v5273, %v5574
        %v5576 = vpop.f32.mrf.mxu0
        %v5577 = vadd.f32 %v5277, %v5576
        %v5578 = vpop.f32.mrf.mxu0
        %v5579 = vadd.f32 %v5273, %v5578
        %v5580 = vpop.f32.mrf.mxu0
        %v5581 = vadd.f32 %v5277, %v5580
        %5582 = vmatprep.mubr.bf16.mxu0 %v5195
        %5583 = vmatmul.mubr.bf16.gmra.mxu0 %v5194
        %v5584 = vpop.f32.mrf.mxu0
        %v5585 = vadd.f32 %v5273, %v5584
        %v5586 = vpop.f32.mrf.mxu0
        %v5587 = vadd.f32 %v5277, %v5586
        %v5588 = vpop.f32.mrf.mxu0
        %v5589 = vadd.f32 %v5273, %v5588
        %v5590 = vpop.f32.mrf.mxu0
        %v5591 = vadd.f32 %v5277, %v5590
        %5592 = vmatprep.mubr.bf16.mxu0 %v5197
        %5593 = vmatmul.mubr.bf16.gmra.mxu0 %v5196
        %v5594 = vpop.f32.mrf.mxu0
        %v5595 = vadd.f32 %v5273, %v5594
        %v5596 = vpop.f32.mrf.mxu0
        %v5597 = vadd.f32 %v5277, %v5596
        %v5598 = vpop.f32.mrf.mxu0
        %v5599 = vadd.f32 %v5273, %v5598
        %v5600 = vpop.f32.mrf.mxu0
        %v5601 = vadd.f32 %v5277, %v5600
        %5602 = vmatprep.mubr.bf16.mxu0 %v5199
        %5603 = vmatmul.mubr.bf16.gmra.mxu0 %v5198
        %v5604 = vpop.f32.mrf.mxu0
        %v5605 = vadd.f32 %v5273, %v5604
        %v5606 = vpop.f32.mrf.mxu0
        %v5607 = vadd.f32 %v5277, %v5606
        %v5608 = vpop.f32.mrf.mxu0
        %v5609 = vadd.f32 %v5273, %v5608
        %v5610 = vpop.f32.mrf.mxu0
        %v5611 = vadd.f32 %v5277, %v5610
        %5612 = vmatprep.mubr.bf16.mxu0 %v5201
        %5613 = vmatmul.mubr.bf16.gmra.mxu0 %v5200
        %v5614 = vpop.f32.mrf.mxu0
        %v5615 = vadd.f32 %v5273, %v5614
        %v5616 = vpop.f32.mrf.mxu0
        %v5617 = vadd.f32 %v5277, %v5616
        %v5618 = vpop.f32.mrf.mxu0
        %v5619 = vadd.f32 %v5273, %v5618
        %v5620 = vpop.f32.mrf.mxu0
        %v5621 = vadd.f32 %v5277, %v5620
        %5622 = vmatprep.mubr.bf16.mxu0 %v5203
        %5623 = vmatmul.mubr.bf16.gmra.mxu0 %v5202
        %v5624 = vpop.f32.mrf.mxu0
        %v5625 = vadd.f32 %v5273, %v5624
        %v5626 = vpop.f32.mrf.mxu0
        %v5627 = vadd.f32 %v5277, %v5626
        %v5628 = vpop.f32.mrf.mxu0
        %v5629 = vadd.f32 %v5273, %v5628
        %v5630 = vpop.f32.mrf.mxu0
        %v5631 = vadd.f32 %v5277, %v5630
        %5632 = vmatprep.mubr.bf16.mxu0 %v5205
        %5633 = vmatmul.mubr.bf16.gmra.mxu0 %v5204
        %v5634 = vpop.f32.mrf.mxu0
        %v5635 = vadd.f32 %v5273, %v5634
        %v5636 = vpop.f32.mrf.mxu0
        %v5637 = vadd.f32 %v5277, %v5636
        %v5638 = vpop.f32.mrf.mxu0
        %v5639 = vadd.f32 %v5273, %v5638
        %v5640 = vpop.f32.mrf.mxu0
        %v5641 = vadd.f32 %v5277, %v5640
        %5642 = vmatprep.mubr.bf16.mxu0 %v5207
        %5643 = vmatmul.mubr.bf16.gmra.mxu0 %v5206
        %v5644 = vpop.f32.mrf.mxu0
        %v5645 = vadd.f32 %v5273, %v5644
        %v5646 = vpop.f32.mrf.mxu0
        %v5647 = vadd.f32 %v5277, %v5646
        %v5648 = vpop.f32.mrf.mxu0
        %v5649 = vadd.f32 %v5273, %v5648
        %v5650 = vpop.f32.mrf.mxu0
        %v5651 = vadd.f32 %v5277, %v5650
        %5652 = vmatprep.mubr.bf16.mxu0 %v5209
        %5653 = vmatmul.mubr.bf16.gmra.mxu0 %v5208
        %v5654 = vpop.f32.mrf.mxu0
        %v5655 = vadd.f32 %v5273, %v5654
        %v5656 = vpop.f32.mrf.mxu0
        %v5657 = vadd.f32 %v5277, %v5656
        %v5658 = vpop.f32.mrf.mxu0
        %v5659 = vadd.f32 %v5273, %v5658
        %v5660 = vpop.f32.mrf.mxu0
        %v5661 = vadd.f32 %v5277, %v5660
        %5662 = vmatprep.mubr.bf16.mxu0 %v5211
        %5663 = vmatmul.mubr.bf16.gmra.mxu0 %v5210
        %v5664 = vpop.f32.mrf.mxu0
        %v5665 = vadd.f32 %v5273, %v5664
        %v5666 = vpop.f32.mrf.mxu0
        %v5667 = vadd.f32 %v5277, %v5666
        %v5668 = vpop.f32.mrf.mxu0
        %v5669 = vadd.f32 %v5273, %v5668
        %v5670 = vpop.f32.mrf.mxu0
        %v5671 = vadd.f32 %v5277, %v5670
        %5672 = vmatprep.mubr.bf16.mxu0 %v5213
        %5673 = vmatmul.mubr.bf16.gmra.mxu0 %v5212
        %v5674 = vpop.f32.mrf.mxu0
        %v5675 = vadd.f32 %v5273, %v5674
        %v5676 = vpop.f32.mrf.mxu0
        %v5677 = vadd.f32 %v5277, %v5676
        %v5678 = vpop.f32.mrf.mxu0
        %v5679 = vadd.f32 %v5273, %v5678
        %v5680 = vpop.f32.mrf.mxu0
        %v5681 = vadd.f32 %v5277, %v5680
        %5682 = vmatprep.mubr.bf16.mxu0 %v5215
        %5683 = vmatmul.mubr.bf16.gmra.mxu0 %v5214
        %v5684 = vpop.f32.mrf.mxu0
        %v5685 = vadd.f32 %v5273, %v5684
        %v5686 = vpop.f32.mrf.mxu0
        %v5687 = vadd.f32 %v5277, %v5686
        %v5688 = vpop.f32.mrf.mxu0
        %v5689 = vadd.f32 %v5273, %v5688
        %v5690 = vpop.f32.mrf.mxu0
        %v5691 = vadd.f32 %v5277, %v5690
        %5692 = vmatprep.mubr.bf16.mxu0 %v5217
        %5693 = vmatmul.mubr.bf16.gmra.mxu0 %v5216
        %v5694 = vpop.f32.mrf.mxu0
        %v5695 = vadd.f32 %v5273, %v5694
        %v5696 = vpop.f32.mrf.mxu0
        %v5697 = vadd.f32 %v5277, %v5696
        %v5698 = vpop.f32.mrf.mxu0
        %v5699 = vadd.f32 %v5273, %v5698
        %v5700 = vpop.f32.mrf.mxu0
        %v5701 = vadd.f32 %v5277, %v5700
        %5702 = vmatprep.mubr.bf16.mxu0 %v5219
        %5703 = vmatmul.mubr.bf16.gmra.mxu0 %v5218
        %v5704 = vpop.f32.mrf.mxu0
        %v5705 = vadd.f32 %v5273, %v5704
        %v5706 = vpop.f32.mrf.mxu0
        %v5707 = vadd.f32 %v5277, %v5706
        %v5708 = vpop.f32.mrf.mxu0
        %v5709 = vadd.f32 %v5273, %v5708
        %v5710 = vpop.f32.mrf.mxu0
        %v5711 = vadd.f32 %v5277, %v5710
        %5712 = vmatprep.mubr.bf16.mxu0 %v5221
        %5713 = vmatmul.mubr.bf16.gmra.mxu0 %v5220
        %v5714 = vpop.f32.mrf.mxu0
        %v5715 = vadd.f32 %v5273, %v5714
        %v5716 = vpop.f32.mrf.mxu0
        %v5717 = vadd.f32 %v5277, %v5716
        %v5718 = vpop.f32.mrf.mxu0
        %v5719 = vadd.f32 %v5273, %v5718
        %v5720 = vpop.f32.mrf.mxu0
        %v5721 = vadd.f32 %v5277, %v5720
        %5722 = vmatprep.mubr.bf16.mxu0 %v5223
        %5723 = vmatmul.mubr.bf16.gmra.mxu0 %v5222
        %v5724 = vpop.f32.mrf.mxu0
        %v5725 = vadd.f32 %v5273, %v5724
        %v5726 = vpop.f32.mrf.mxu0
        %v5727 = vadd.f32 %v5277, %v5726
        %v5728 = vpop.f32.mrf.mxu0
        %v5729 = vadd.f32 %v5273, %v5728
        %v5730 = vpop.f32.mrf.mxu0
        %v5731 = vadd.f32 %v5277, %v5730
        %5732 = vmatprep.mubr.bf16.mxu0 %v5225
        %5733 = vmatmul.mubr.bf16.gmra.mxu0 %v5224
        %v5734 = vpop.f32.mrf.mxu0
        %v5735 = vadd.f32 %v5273, %v5734
        %v5736 = vpop.f32.mrf.mxu0
        %v5737 = vadd.f32 %v5277, %v5736
        %v5738 = vpop.f32.mrf.mxu0
        %v5739 = vadd.f32 %v5273, %v5738
        %v5740 = vpop.f32.mrf.mxu0
        %v5741 = vadd.f32 %v5277, %v5740
        %5742 = vmatprep.mubr.bf16.mxu0 %v5227
        %5743 = vmatmul.mubr.bf16.gmra.mxu0 %v5226
        %v5744 = vpop.f32.mrf.mxu0
        %v5745 = vadd.f32 %v5273, %v5744
        %v5746 = vpop.f32.mrf.mxu0
        %v5747 = vadd.f32 %v5277, %v5746
        %v5748 = vpop.f32.mrf.mxu0
        %v5749 = vadd.f32 %v5273, %v5748
        %v5750 = vpop.f32.mrf.mxu0
        %v5751 = vadd.f32 %v5277, %v5750
        %5752 = vmatprep.mubr.bf16.mxu0 %v5229
        %5753 = vmatmul.mubr.bf16.gmra.mxu0 %v5228
        %v5754 = vpop.f32.mrf.mxu0
        %v5755 = vadd.f32 %v5273, %v5754
        %v5756 = vpop.f32.mrf.mxu0
        %v5757 = vadd.f32 %v5277, %v5756
        %v5758 = vpop.f32.mrf.mxu0
        %v5759 = vadd.f32 %v5273, %v5758
        %v5760 = vpop.f32.mrf.mxu0
        %v5761 = vadd.f32 %v5277, %v5760
        %5762 = vmatprep.mubr.bf16.mxu0 %v5231
        %5763 = vmatmul.mubr.bf16.gmra.mxu0 %v5230
        %v5764 = vpop.f32.mrf.mxu0
        %v5765 = vadd.f32 %v5273, %v5764
        %v5766 = vpop.f32.mrf.mxu0
        %v5767 = vadd.f32 %v5277, %v5766
        %v5768 = vpop.f32.mrf.mxu0
        %v5769 = vadd.f32 %v5273, %v5768
        %v5770 = vpop.f32.mrf.mxu0
        %v5771 = vadd.f32 %v5277, %v5770
        %5772 = vmatprep.mubr.bf16.mxu0 %v5233
        %5773 = vmatmul.mubr.bf16.gmra.mxu0 %v5232
        %v5774 = vpop.f32.mrf.mxu0
        %v5775 = vadd.f32 %v5273, %v5774
        %v5776 = vpop.f32.mrf.mxu0
        %v5777 = vadd.f32 %v5277, %v5776
        %v5778 = vpop.f32.mrf.mxu0
        %v5779 = vadd.f32 %v5273, %v5778
        %v5780 = vpop.f32.mrf.mxu0
        %v5781 = vadd.f32 %v5277, %v5780
        %5782 = vmatprep.mubr.bf16.mxu0 %v5235
        %5783 = vmatmul.mubr.bf16.gmra.mxu0 %v5234
        %v5784 = vpop.f32.mrf.mxu0
        %v5785 = vadd.f32 %v5273, %v5784
        %v5786 = vpop.f32.mrf.mxu0
        %v5787 = vadd.f32 %v5277, %v5786
        %v5788 = vpop.f32.mrf.mxu0
        %v5789 = vadd.f32 %v5273, %v5788
        %v5790 = vpop.f32.mrf.mxu0
        %v5791 = vadd.f32 %v5277, %v5790
        %5792 = vdwg.mxu0
        %v5793 = vmax.f32 %v5475, 0.0
        %v5794 = vmax.f32 %v5477, 0.0
        %v5795 = vmax.f32 %v5479, 0.0
        %v5796 = vmax.f32 %v5481, 0.0
        %v5797 = vmax.f32 %v5485, 0.0
        %v5798 = vmax.f32 %v5487, 0.0
        %v5799 = vmax.f32 %v5489, 0.0
        %v5800 = vmax.f32 %v5491, 0.0
        %v5801 = vmax.f32 %v5495, 0.0
        %v5802 = vmax.f32 %v5497, 0.0
        %v5803 = vmax.f32 %v5499, 0.0
        %v5804 = vmax.f32 %v5501, 0.0
        %v5805 = vmax.f32 %v5505, 0.0
        %v5806 = vmax.f32 %v5507, 0.0
        %v5807 = vmax.f32 %v5509, 0.0
        %v5808 = vmax.f32 %v5511, 0.0
        %v5809 = vmax.f32 %v5515, 0.0
        %v5810 = vmax.f32 %v5517, 0.0
        %v5811 = vmax.f32 %v5519, 0.0
        %v5812 = vmax.f32 %v5521, 0.0
        %v5813 = vmax.f32 %v5525, 0.0
        %v5814 = vmax.f32 %v5527, 0.0
        %v5815 = vmax.f32 %v5529, 0.0
        %v5816 = vmax.f32 %v5531, 0.0
        %v5817 = vmax.f32 %v5535, 0.0
        %v5818 = vmax.f32 %v5537, 0.0
        %v5819 = vmax.f32 %v5539, 0.0
        %v5820 = vmax.f32 %v5541, 0.0
        %v5821 = vmax.f32 %v5545, 0.0
        %v5822 = vmax.f32 %v5547, 0.0
        %v5823 = vmax.f32 %v5549, 0.0
        %v5824 = vmax.f32 %v5551, 0.0
        %v5825 = vmax.f32 %v5555, 0.0
        %v5826 = vmax.f32 %v5557, 0.0
        %v5827 = vmax.f32 %v5559, 0.0
        %v5828 = vmax.f32 %v5561, 0.0
        %v5829 = vmax.f32 %v5565, 0.0
        %v5830 = vmax.f32 %v5567, 0.0
        %v5831 = vmax.f32 %v5569, 0.0
        %v5832 = vmax.f32 %v5571, 0.0
        %v5833 = vmax.f32 %v5575, 0.0
        %v5834 = vmax.f32 %v5577, 0.0
        %v5835 = vmax.f32 %v5579, 0.0
        %v5836 = vmax.f32 %v5581, 0.0
        %v5837 = vmax.f32 %v5585, 0.0
        %v5838 = vmax.f32 %v5587, 0.0
        %v5839 = vmax.f32 %v5589, 0.0
        %v5840 = vmax.f32 %v5591, 0.0
        %v5841 = vmax.f32 %v5595, 0.0
        %v5842 = vmax.f32 %v5597, 0.0
        %v5843 = vmax.f32 %v5599, 0.0
        %v5844 = vmax.f32 %v5601, 0.0
        %v5845 = vmax.f32 %v5605, 0.0
        %v5846 = vmax.f32 %v5607, 0.0
        %v5847 = vmax.f32 %v5609, 0.0
        %v5848 = vmax.f32 %v5611, 0.0
        %v5849 = vmax.f32 %v5615, 0.0
        %v5850 = vmax.f32 %v5617, 0.0
        %v5851 = vmax.f32 %v5619, 0.0
        %v5852 = vmax.f32 %v5621, 0.0
        %v5853 = vmax.f32 %v5625, 0.0
        %v5854 = vmax.f32 %v5627, 0.0
        %v5855 = vmax.f32 %v5629, 0.0
        %v5856 = vmax.f32 %v5631, 0.0
        %v5857 = vmax.f32 %v5635, 0.0
        %v5858 = vmax.f32 %v5637, 0.0
        %v5859 = vmax.f32 %v5639, 0.0
        %v5860 = vmax.f32 %v5641, 0.0
        %v5861 = vmax.f32 %v5645, 0.0
        %v5862 = vmax.f32 %v5647, 0.0
        %v5863 = vmax.f32 %v5649, 0.0
        %v5864 = vmax.f32 %v5651, 0.0
        %v5865 = vmax.f32 %v5655, 0.0
        %v5866 = vmax.f32 %v5657, 0.0
        %v5867 = vmax.f32 %v5659, 0.0
        %v5868 = vmax.f32 %v5661, 0.0
        %v5869 = vmax.f32 %v5665, 0.0
        %v5870 = vmax.f32 %v5667, 0.0
        %v5871 = vmax.f32 %v5669, 0.0
        %v5872 = vmax.f32 %v5671, 0.0
        %v5873 = vmax.f32 %v5675, 0.0
        %v5874 = vmax.f32 %v5677, 0.0
        %v5875 = vmax.f32 %v5679, 0.0
        %v5876 = vmax.f32 %v5681, 0.0
        %v5877 = vmax.f32 %v5685, 0.0
        %v5878 = vmax.f32 %v5687, 0.0
        %v5879 = vmax.f32 %v5689, 0.0
        %v5880 = vmax.f32 %v5691, 0.0
        %v5881 = vmax.f32 %v5695, 0.0
        %v5882 = vmax.f32 %v5697, 0.0
        %v5883 = vmax.f32 %v5699, 0.0
        %v5884 = vmax.f32 %v5701, 0.0
        %v5885 = vmax.f32 %v5705, 0.0
        %v5886 = vmax.f32 %v5707, 0.0
        %v5887 = vmax.f32 %v5709, 0.0
        %v5888 = vmax.f32 %v5711, 0.0
        %v5889 = vmax.f32 %v5715, 0.0
        %v5890 = vmax.f32 %v5717, 0.0
        %v5891 = vmax.f32 %v5719, 0.0
        %v5892 = vmax.f32 %v5721, 0.0
        %v5893 = vmax.f32 %v5725, 0.0
        %v5894 = vmax.f32 %v5727, 0.0
        %v5895 = vmax.f32 %v5729, 0.0
        %v5896 = vmax.f32 %v5731, 0.0
        %v5897 = vmax.f32 %v5735, 0.0
        %v5898 = vmax.f32 %v5737, 0.0
        %v5899 = vmax.f32 %v5739, 0.0
        %v5900 = vmax.f32 %v5741, 0.0
        %v5901 = vmax.f32 %v5745, 0.0
        %v5902 = vmax.f32 %v5747, 0.0
        %v5903 = vmax.f32 %v5749, 0.0
        %v5904 = vmax.f32 %v5751, 0.0
        %v5905 = vmax.f32 %v5755, 0.0
        %v5906 = vmax.f32 %v5757, 0.0
        %v5907 = vmax.f32 %v5759, 0.0
        %v5908 = vmax.f32 %v5761, 0.0
        %v5909 = vmax.f32 %v5765, 0.0
        %v5910 = vmax.f32 %v5767, 0.0
        %v5911 = vmax.f32 %v5769, 0.0
        %v5912 = vmax.f32 %v5771, 0.0
        %v5913 = vmax.f32 %v5775, 0.0
        %v5914 = vmax.f32 %v5777, 0.0
        %v5915 = vmax.f32 %v5779, 0.0
        %v5916 = vmax.f32 %v5781, 0.0
        %v5917 = vmax.f32 %v5785, 0.0
        %v5918 = vmax.f32 %v5787, 0.0
        %v5919 = vmax.f32 %v5789, 0.0
        %v5920 = vmax.f32 %v5791, 0.0
        %v5921 = vpack.c.bf16 %v5795, %v5793
        %v5922 = vpack.c.bf16 %v5796, %v5794
        %v5923 = vpack.c.bf16 %v5799, %v5797
        %v5924 = vpack.c.bf16 %v5800, %v5798
        %v5925 = vpack.c.bf16 %v5803, %v5801
        %v5926 = vpack.c.bf16 %v5804, %v5802
        %v5927 = vpack.c.bf16 %v5807, %v5805
        %v5928 = vpack.c.bf16 %v5808, %v5806
        %v5929 = vpack.c.bf16 %v5811, %v5809
        %v5930 = vpack.c.bf16 %v5812, %v5810
        %v5931 = vpack.c.bf16 %v5815, %v5813
        %v5932 = vpack.c.bf16 %v5816, %v5814
        %v5933 = vpack.c.bf16 %v5819, %v5817
        %v5934 = vpack.c.bf16 %v5820, %v5818
        %v5935 = vpack.c.bf16 %v5823, %v5821
        %v5936 = vpack.c.bf16 %v5824, %v5822
        %v5937 = vpack.c.bf16 %v5827, %v5825
        %v5938 = vpack.c.bf16 %v5828, %v5826
        %v5939 = vpack.c.bf16 %v5831, %v5829
        %v5940 = vpack.c.bf16 %v5832, %v5830
        %v5941 = vpack.c.bf16 %v5835, %v5833
        %v5942 = vpack.c.bf16 %v5836, %v5834
        %v5943 = vpack.c.bf16 %v5839, %v5837
        %v5944 = vpack.c.bf16 %v5840, %v5838
        %v5945 = vpack.c.bf16 %v5843, %v5841
        %v5946 = vpack.c.bf16 %v5844, %v5842
        %v5947 = vpack.c.bf16 %v5847, %v5845
        %v5948 = vpack.c.bf16 %v5848, %v5846
        %v5949 = vpack.c.bf16 %v5851, %v5849
        %v5950 = vpack.c.bf16 %v5852, %v5850
        %v5951 = vpack.c.bf16 %v5855, %v5853
        %v5952 = vpack.c.bf16 %v5856, %v5854
        %v5953 = vpack.c.bf16 %v5859, %v5857
        %v5954 = vpack.c.bf16 %v5860, %v5858
        %v5955 = vpack.c.bf16 %v5863, %v5861
        %v5956 = vpack.c.bf16 %v5864, %v5862
        %v5957 = vpack.c.bf16 %v5867, %v5865
        %v5958 = vpack.c.bf16 %v5868, %v5866
        %v5959 = vpack.c.bf16 %v5871, %v5869
        %v5960 = vpack.c.bf16 %v5872, %v5870
        %v5961 = vpack.c.bf16 %v5875, %v5873
        %v5962 = vpack.c.bf16 %v5876, %v5874
        %v5963 = vpack.c.bf16 %v5879, %v5877
        %v5964 = vpack.c.bf16 %v5880, %v5878
        %v5965 = vpack.c.bf16 %v5883, %v5881
        %v5966 = vpack.c.bf16 %v5884, %v5882
        %v5967 = vpack.c.bf16 %v5887, %v5885
        %v5968 = vpack.c.bf16 %v5888, %v5886
        %v5969 = vpack.c.bf16 %v5891, %v5889
        %v5970 = vpack.c.bf16 %v5892, %v5890
        %v5971 = vpack.c.bf16 %v5895, %v5893
        %v5972 = vpack.c.bf16 %v5896, %v5894
        %v5973 = vpack.c.bf16 %v5899, %v5897
        %v5974 = vpack.c.bf16 %v5900, %v5898
        %v5975 = vpack.c.bf16 %v5903, %v5901
        %v5976 = vpack.c.bf16 %v5904, %v5902
        %v5977 = vpack.c.bf16 %v5907, %v5905
        %v5978 = vpack.c.bf16 %v5908, %v5906
        %v5979 = vpack.c.bf16 %v5911, %v5909
        %v5980 = vpack.c.bf16 %v5912, %v5910
        %v5981 = vpack.c.bf16 %v5915, %v5913
        %v5982 = vpack.c.bf16 %v5916, %v5914
        %v5983 = vpack.c.bf16 %v5919, %v5917
        %v5984 = vpack.c.bf16 %v5920, %v5918
        %v5985 = vld [vmem:[#allocation12] sm:$0xff]
        %v5986 = vld [vmem:[#allocation12 + $0x8] sm:$0xff]
        %v5987 = vld [vmem:[#allocation12 + $0x10] sm:$0xff]
        %v5988 = vld [vmem:[#allocation12 + $0x18] sm:$0xff]
        %v5989 = vld [vmem:[#allocation12 + $0x20] sm:$0xff]
        %v5990 = vld [vmem:[#allocation12 + $0x28] sm:$0xff]
        %v5991 = vld [vmem:[#allocation12 + $0x30] sm:$0xff]
        %v5992 = vld [vmem:[#allocation12 + $0x38] sm:$0xff]
        %v5993 = vld [vmem:[#allocation12 + $0x40] sm:$0xff]
        %v5994 = vld [vmem:[#allocation12 + $0x48] sm:$0xff]
        %v5995 = vld [vmem:[#allocation12 + $0x50] sm:$0xff]
        %v5996 = vld [vmem:[#allocation12 + $0x58] sm:$0xff]
        %v5997 = vld [vmem:[#allocation12 + $0x60] sm:$0xff]
        %v5998 = vld [vmem:[#allocation12 + $0x68] sm:$0xff]
        %v5999 = vld [vmem:[#allocation12 + $0x70] sm:$0xff]
        %v6000 = vld [vmem:[#allocation12 + $0x78] sm:$0xff]
        %v6001 = vld [vmem:[#allocation12 + $0x80] sm:$0xff]
        %v6002 = vld [vmem:[#allocation12 + $0x88] sm:$0xff]
        %v6003 = vld [vmem:[#allocation12 + $0x90] sm:$0xff]
        %v6004 = vld [vmem:[#allocation12 + $0x98] sm:$0xff]
        %v6005 = vld [vmem:[#allocation12 + $0xa0] sm:$0xff]
        %v6006 = vld [vmem:[#allocation12 + $0xa8] sm:$0xff]
        %v6007 = vld [vmem:[#allocation12 + $0xb0] sm:$0xff]
        %v6008 = vld [vmem:[#allocation12 + $0xb8] sm:$0xff]
        %v6009 = vld [vmem:[#allocation12 + $0xc0] sm:$0xff]
        %v6010 = vld [vmem:[#allocation12 + $0xc8] sm:$0xff]
        %v6011 = vld [vmem:[#allocation12 + $0xd0] sm:$0xff]
        %v6012 = vld [vmem:[#allocation12 + $0xd8] sm:$0xff]
        %v6013 = vld [vmem:[#allocation12 + $0xe0] sm:$0xff]
        %v6014 = vld [vmem:[#allocation12 + $0xe8] sm:$0xff]
        %v6015 = vld [vmem:[#allocation12 + $0xf0] sm:$0xff]
        %v6016 = vld [vmem:[#allocation12 + $0xf8] sm:$0xff]
        %v6017 = vld [vmem:[#allocation13] sm:$0x3]
        %v6019 = vlaneseq
        %v6020 = vshrl.u32 %v6019, 7
        %v6021 = vsub.s32 0, %v6020
        %v6022 = vrot.slane %v6017, %v6021
        %v6023 = vlaneseq
        %v6024 = vshrl.u32 %v6023, 7
        %v6025 = vsub.s32 1, %v6024
        %v6026 = vrot.slane %v6017, %v6025
        %v6061 = vunpack.c.l.b16 %v5985
        %v6062 = vunpack.c.h.b16 %v5985
        %v6063 = vunpack.c.l.b16 %v5986
        %v6064 = vunpack.c.h.b16 %v5986
        %v6065 = vunpack.c.l.b16 %v5987
        %v6066 = vunpack.c.h.b16 %v5987
        %v6067 = vunpack.c.l.b16 %v5988
        %v6068 = vunpack.c.h.b16 %v5988
        %v6069 = vunpack.c.l.b16 %v5989
        %v6070 = vunpack.c.h.b16 %v5989
        %v6071 = vunpack.c.l.b16 %v5990
        %v6072 = vunpack.c.h.b16 %v5990
        %v6073 = vunpack.c.l.b16 %v5991
        %v6074 = vunpack.c.h.b16 %v5991
        %v6075 = vunpack.c.l.b16 %v5992
        %v6076 = vunpack.c.h.b16 %v5992
        %v6077 = vunpack.c.l.b16 %v5993
        %v6078 = vunpack.c.h.b16 %v5993
        %v6079 = vunpack.c.l.b16 %v5994
        %v6080 = vunpack.c.h.b16 %v5994
        %v6081 = vunpack.c.l.b16 %v5995
        %v6082 = vunpack.c.h.b16 %v5995
        %v6083 = vunpack.c.l.b16 %v5996
        %v6084 = vunpack.c.h.b16 %v5996
        %v6085 = vunpack.c.l.b16 %v5997
        %v6086 = vunpack.c.h.b16 %v5997
        %v6087 = vunpack.c.l.b16 %v5998
        %v6088 = vunpack.c.h.b16 %v5998
        %v6089 = vunpack.c.l.b16 %v5999
        %v6090 = vunpack.c.h.b16 %v5999
        %v6091 = vunpack.c.l.b16 %v6000
        %v6092 = vunpack.c.h.b16 %v6000
        %v6093 = vunpack.c.l.b16 %v6001
        %v6094 = vunpack.c.h.b16 %v6001
        %v6095 = vunpack.c.l.b16 %v6002
        %v6096 = vunpack.c.h.b16 %v6002
        %v6097 = vunpack.c.l.b16 %v6003
        %v6098 = vunpack.c.h.b16 %v6003
        %v6099 = vunpack.c.l.b16 %v6004
        %v6100 = vunpack.c.h.b16 %v6004
        %v6101 = vunpack.c.l.b16 %v6005
        %v6102 = vunpack.c.h.b16 %v6005
        %v6103 = vunpack.c.l.b16 %v6006
        %v6104 = vunpack.c.h.b16 %v6006
        %v6105 = vunpack.c.l.b16 %v6007
        %v6106 = vunpack.c.h.b16 %v6007
        %v6107 = vunpack.c.l.b16 %v6008
        %v6108 = vunpack.c.h.b16 %v6008
        %v6109 = vunpack.c.l.b16 %v6009
        %v6110 = vunpack.c.h.b16 %v6009
        %v6111 = vunpack.c.l.b16 %v6010
        %v6112 = vunpack.c.h.b16 %v6010
        %v6113 = vunpack.c.l.b16 %v6011
        %v6114 = vunpack.c.h.b16 %v6011
        %v6115 = vunpack.c.l.b16 %v6012
        %v6116 = vunpack.c.h.b16 %v6012
        %v6117 = vunpack.c.l.b16 %v6013
        %v6118 = vunpack.c.h.b16 %v6013
        %v6119 = vunpack.c.l.b16 %v6014
        %v6120 = vunpack.c.h.b16 %v6014
        %v6121 = vunpack.c.l.b16 %v6015
        %v6122 = vunpack.c.h.b16 %v6015
        %v6123 = vunpack.c.l.b16 %v6016
        %v6124 = vunpack.c.h.b16 %v6016
        %v6125 = vpack.c.b16 %v6063, %v6061
        %v6126 = vpack.c.b16 %v6064, %v6062
        %v6127 = vpack.c.b16 %v6067, %v6065
        %v6128 = vpack.c.b16 %v6068, %v6066
        %v6129 = vpack.c.b16 %v6071, %v6069
        %v6130 = vpack.c.b16 %v6072, %v6070
        %v6131 = vpack.c.b16 %v6075, %v6073
        %v6132 = vpack.c.b16 %v6076, %v6074
        %v6133 = vpack.c.b16 %v6079, %v6077
        %v6134 = vpack.c.b16 %v6080, %v6078
        %v6135 = vpack.c.b16 %v6083, %v6081
        %v6136 = vpack.c.b16 %v6084, %v6082
        %v6137 = vpack.c.b16 %v6087, %v6085
        %v6138 = vpack.c.b16 %v6088, %v6086
        %v6139 = vpack.c.b16 %v6091, %v6089
        %v6140 = vpack.c.b16 %v6092, %v6090
        %v6141 = vpack.c.b16 %v6095, %v6093
        %v6142 = vpack.c.b16 %v6096, %v6094
        %v6143 = vpack.c.b16 %v6099, %v6097
        %v6144 = vpack.c.b16 %v6100, %v6098
        %v6145 = vpack.c.b16 %v6103, %v6101
        %v6146 = vpack.c.b16 %v6104, %v6102
        %v6147 = vpack.c.b16 %v6107, %v6105
        %v6148 = vpack.c.b16 %v6108, %v6106
        %v6149 = vpack.c.b16 %v6111, %v6109
        %v6150 = vpack.c.b16 %v6112, %v6110
        %v6151 = vpack.c.b16 %v6115, %v6113
        %v6152 = vpack.c.b16 %v6116, %v6114
        %v6153 = vpack.c.b16 %v6119, %v6117
        %v6154 = vpack.c.b16 %v6120, %v6118
        %v6155 = vpack.c.b16 %v6123, %v6121
        %v6156 = vpack.c.b16 %v6124, %v6122
        %6189 = vmatprep.subr.bf16.mxu0 %v6140
        %6190 = vmatpush1.bf16.msra.mxu0 %v6139
        %6191 = vmatprep.subr.bf16.mxu0 %v6138
        %6192 = vmatpush1.bf16.msra.mxu0 %v6137
        %6193 = vmatprep.subr.bf16.mxu0 %v6136
        %6194 = vmatpush1.bf16.msra.mxu0 %v6135
        %6195 = vmatprep.subr.bf16.mxu0 %v6134
        %6196 = vmatpush1.bf16.msra.mxu0 %v6133
        %6197 = vmatprep.subr.bf16.mxu0 %v6132
        %6198 = vmatpush1.bf16.msra.mxu0 %v6131
        %6199 = vmatprep.subr.bf16.mxu0 %v6130
        %6200 = vmatpush1.bf16.msra.mxu0 %v6129
        %6201 = vmatprep.subr.bf16.mxu0 %v6128
        %6202 = vmatpush1.bf16.msra.mxu0 %v6127
        %6203 = vmatprep.subr.bf16.mxu0 %v6126
        %6204 = vmatpush1.bf16.msra.mxu0 %v6125
        %6205 = vmatprep.subr.bf16.mxu0 %v6156
        %6206 = vmatpush2.bf16.msra.mxu0 %v6155
        %6207 = vmatprep.subr.bf16.mxu0 %v6154
        %6208 = vmatpush2.bf16.msra.mxu0 %v6153
        %6209 = vmatprep.subr.bf16.mxu0 %v6152
        %6210 = vmatpush2.bf16.msra.mxu0 %v6151
        %6211 = vmatprep.subr.bf16.mxu0 %v6150
        %6212 = vmatpush2.bf16.msra.mxu0 %v6149
        %6213 = vmatprep.subr.bf16.mxu0 %v6148
        %6214 = vmatpush2.bf16.msra.mxu0 %v6147
        %6215 = vmatprep.subr.bf16.mxu0 %v6146
        %6216 = vmatpush2.bf16.msra.mxu0 %v6145
        %6217 = vmatprep.subr.bf16.mxu0 %v6144
        %6218 = vmatpush2.bf16.msra.mxu0 %v6143
        %6219 = vmatprep.subr.bf16.mxu0 %v6142
        %6220 = vmatpush2.bf16.msra.mxu0 %v6141
        %6221 = vmatprep.mubr.bf16.mxu0 %v5922
        %6222 = vmatmul.mubr.bf16.gmra.mxu0 %v5921
        %v6223 = vpop.f32.mrf.mxu0
        %v6224 = vadd.f32 %v6022, %v6223
        %v6225 = vpop.f32.mrf.mxu0
        %v6226 = vadd.f32 %v6026, %v6225
        %v6227 = vpop.f32.mrf.mxu0
        %v6228 = vadd.f32 %v6022, %v6227
        %v6229 = vpop.f32.mrf.mxu0
        %v6230 = vadd.f32 %v6026, %v6229
        %6231 = vmatprep.mubr.bf16.mxu0 %v5924
        %6232 = vmatmul.mubr.bf16.gmra.mxu0 %v5923
        %v6233 = vpop.f32.mrf.mxu0
        %v6234 = vadd.f32 %v6022, %v6233
        %v6235 = vpop.f32.mrf.mxu0
        %v6236 = vadd.f32 %v6026, %v6235
        %v6237 = vpop.f32.mrf.mxu0
        %v6238 = vadd.f32 %v6022, %v6237
        %v6239 = vpop.f32.mrf.mxu0
        %v6240 = vadd.f32 %v6026, %v6239
        %6241 = vmatprep.mubr.bf16.mxu0 %v5926
        %6242 = vmatmul.mubr.bf16.gmra.mxu0 %v5925
        %v6243 = vpop.f32.mrf.mxu0
        %v6244 = vadd.f32 %v6022, %v6243
        %v6245 = vpop.f32.mrf.mxu0
        %v6246 = vadd.f32 %v6026, %v6245
        %v6247 = vpop.f32.mrf.mxu0
        %v6248 = vadd.f32 %v6022, %v6247
        %v6249 = vpop.f32.mrf.mxu0
        %v6250 = vadd.f32 %v6026, %v6249
        %6251 = vmatprep.mubr.bf16.mxu0 %v5928
        %6252 = vmatmul.mubr.bf16.gmra.mxu0 %v5927
        %v6253 = vpop.f32.mrf.mxu0
        %v6254 = vadd.f32 %v6022, %v6253
        %v6255 = vpop.f32.mrf.mxu0
        %v6256 = vadd.f32 %v6026, %v6255
        %v6257 = vpop.f32.mrf.mxu0
        %v6258 = vadd.f32 %v6022, %v6257
        %v6259 = vpop.f32.mrf.mxu0
        %v6260 = vadd.f32 %v6026, %v6259
        %6261 = vmatprep.mubr.bf16.mxu0 %v5930
        %6262 = vmatmul.mubr.bf16.gmra.mxu0 %v5929
        %v6263 = vpop.f32.mrf.mxu0
        %v6264 = vadd.f32 %v6022, %v6263
        %v6265 = vpop.f32.mrf.mxu0
        %v6266 = vadd.f32 %v6026, %v6265
        %v6267 = vpop.f32.mrf.mxu0
        %v6268 = vadd.f32 %v6022, %v6267
        %v6269 = vpop.f32.mrf.mxu0
        %v6270 = vadd.f32 %v6026, %v6269
        %6271 = vmatprep.mubr.bf16.mxu0 %v5932
        %6272 = vmatmul.mubr.bf16.gmra.mxu0 %v5931
        %v6273 = vpop.f32.mrf.mxu0
        %v6274 = vadd.f32 %v6022, %v6273
        %v6275 = vpop.f32.mrf.mxu0
        %v6276 = vadd.f32 %v6026, %v6275
        %v6277 = vpop.f32.mrf.mxu0
        %v6278 = vadd.f32 %v6022, %v6277
        %v6279 = vpop.f32.mrf.mxu0
        %v6280 = vadd.f32 %v6026, %v6279
        %6281 = vmatprep.mubr.bf16.mxu0 %v5934
        %6282 = vmatmul.mubr.bf16.gmra.mxu0 %v5933
        %v6283 = vpop.f32.mrf.mxu0
        %v6284 = vadd.f32 %v6022, %v6283
        %v6285 = vpop.f32.mrf.mxu0
        %v6286 = vadd.f32 %v6026, %v6285
        %v6287 = vpop.f32.mrf.mxu0
        %v6288 = vadd.f32 %v6022, %v6287
        %v6289 = vpop.f32.mrf.mxu0
        %v6290 = vadd.f32 %v6026, %v6289
        %6291 = vmatprep.mubr.bf16.mxu0 %v5936
        %6292 = vmatmul.mubr.bf16.gmra.mxu0 %v5935
        %v6293 = vpop.f32.mrf.mxu0
        %v6294 = vadd.f32 %v6022, %v6293
        %v6295 = vpop.f32.mrf.mxu0
        %v6296 = vadd.f32 %v6026, %v6295
        %v6297 = vpop.f32.mrf.mxu0
        %v6298 = vadd.f32 %v6022, %v6297
        %v6299 = vpop.f32.mrf.mxu0
        %v6300 = vadd.f32 %v6026, %v6299
        %6301 = vmatprep.mubr.bf16.mxu0 %v5938
        %6302 = vmatmul.mubr.bf16.gmra.mxu0 %v5937
        %v6303 = vpop.f32.mrf.mxu0
        %v6304 = vadd.f32 %v6022, %v6303
        %v6305 = vpop.f32.mrf.mxu0
        %v6306 = vadd.f32 %v6026, %v6305
        %v6307 = vpop.f32.mrf.mxu0
        %v6308 = vadd.f32 %v6022, %v6307
        %v6309 = vpop.f32.mrf.mxu0
        %v6310 = vadd.f32 %v6026, %v6309
        %6311 = vmatprep.mubr.bf16.mxu0 %v5940
        %6312 = vmatmul.mubr.bf16.gmra.mxu0 %v5939
        %v6313 = vpop.f32.mrf.mxu0
        %v6314 = vadd.f32 %v6022, %v6313
        %v6315 = vpop.f32.mrf.mxu0
        %v6316 = vadd.f32 %v6026, %v6315
        %v6317 = vpop.f32.mrf.mxu0
        %v6318 = vadd.f32 %v6022, %v6317
        %v6319 = vpop.f32.mrf.mxu0
        %v6320 = vadd.f32 %v6026, %v6319
        %6321 = vmatprep.mubr.bf16.mxu0 %v5942
        %6322 = vmatmul.mubr.bf16.gmra.mxu0 %v5941
        %v6323 = vpop.f32.mrf.mxu0
        %v6324 = vadd.f32 %v6022, %v6323
        %v6325 = vpop.f32.mrf.mxu0
        %v6326 = vadd.f32 %v6026, %v6325
        %v6327 = vpop.f32.mrf.mxu0
        %v6328 = vadd.f32 %v6022, %v6327
        %v6329 = vpop.f32.mrf.mxu0
        %v6330 = vadd.f32 %v6026, %v6329
        %6331 = vmatprep.mubr.bf16.mxu0 %v5944
        %6332 = vmatmul.mubr.bf16.gmra.mxu0 %v5943
        %v6333 = vpop.f32.mrf.mxu0
        %v6334 = vadd.f32 %v6022, %v6333
        %v6335 = vpop.f32.mrf.mxu0
        %v6336 = vadd.f32 %v6026, %v6335
        %v6337 = vpop.f32.mrf.mxu0
        %v6338 = vadd.f32 %v6022, %v6337
        %v6339 = vpop.f32.mrf.mxu0
        %v6340 = vadd.f32 %v6026, %v6339
        %6341 = vmatprep.mubr.bf16.mxu0 %v5946
        %6342 = vmatmul.mubr.bf16.gmra.mxu0 %v5945
        %v6343 = vpop.f32.mrf.mxu0
        %v6344 = vadd.f32 %v6022, %v6343
        %v6345 = vpop.f32.mrf.mxu0
        %v6346 = vadd.f32 %v6026, %v6345
        %v6347 = vpop.f32.mrf.mxu0
        %v6348 = vadd.f32 %v6022, %v6347
        %v6349 = vpop.f32.mrf.mxu0
        %v6350 = vadd.f32 %v6026, %v6349
        %6351 = vmatprep.mubr.bf16.mxu0 %v5948
        %6352 = vmatmul.mubr.bf16.gmra.mxu0 %v5947
        %v6353 = vpop.f32.mrf.mxu0
        %v6354 = vadd.f32 %v6022, %v6353
        %v6355 = vpop.f32.mrf.mxu0
        %v6356 = vadd.f32 %v6026, %v6355
        %v6357 = vpop.f32.mrf.mxu0
        %v6358 = vadd.f32 %v6022, %v6357
        %v6359 = vpop.f32.mrf.mxu0
        %v6360 = vadd.f32 %v6026, %v6359
        %6361 = vmatprep.mubr.bf16.mxu0 %v5950
        %6362 = vmatmul.mubr.bf16.gmra.mxu0 %v5949
        %v6363 = vpop.f32.mrf.mxu0
        %v6364 = vadd.f32 %v6022, %v6363
        %v6365 = vpop.f32.mrf.mxu0
        %v6366 = vadd.f32 %v6026, %v6365
        %v6367 = vpop.f32.mrf.mxu0
        %v6368 = vadd.f32 %v6022, %v6367
        %v6369 = vpop.f32.mrf.mxu0
        %v6370 = vadd.f32 %v6026, %v6369
        %6371 = vmatprep.mubr.bf16.mxu0 %v5952
        %6372 = vmatmul.mubr.bf16.gmra.mxu0 %v5951
        %v6373 = vpop.f32.mrf.mxu0
        %v6374 = vadd.f32 %v6022, %v6373
        %v6375 = vpop.f32.mrf.mxu0
        %v6376 = vadd.f32 %v6026, %v6375
        %v6377 = vpop.f32.mrf.mxu0
        %v6378 = vadd.f32 %v6022, %v6377
        %v6379 = vpop.f32.mrf.mxu0
        %v6380 = vadd.f32 %v6026, %v6379
        %6381 = vmatprep.mubr.bf16.mxu0 %v5954
        %6382 = vmatmul.mubr.bf16.gmra.mxu0 %v5953
        %v6383 = vpop.f32.mrf.mxu0
        %v6384 = vadd.f32 %v6022, %v6383
        %v6385 = vpop.f32.mrf.mxu0
        %v6386 = vadd.f32 %v6026, %v6385
        %v6387 = vpop.f32.mrf.mxu0
        %v6388 = vadd.f32 %v6022, %v6387
        %v6389 = vpop.f32.mrf.mxu0
        %v6390 = vadd.f32 %v6026, %v6389
        %6391 = vmatprep.mubr.bf16.mxu0 %v5956
        %6392 = vmatmul.mubr.bf16.gmra.mxu0 %v5955
        %v6393 = vpop.f32.mrf.mxu0
        %v6394 = vadd.f32 %v6022, %v6393
        %v6395 = vpop.f32.mrf.mxu0
        %v6396 = vadd.f32 %v6026, %v6395
        %v6397 = vpop.f32.mrf.mxu0
        %v6398 = vadd.f32 %v6022, %v6397
        %v6399 = vpop.f32.mrf.mxu0
        %v6400 = vadd.f32 %v6026, %v6399
        %6401 = vmatprep.mubr.bf16.mxu0 %v5958
        %6402 = vmatmul.mubr.bf16.gmra.mxu0 %v5957
        %v6403 = vpop.f32.mrf.mxu0
        %v6404 = vadd.f32 %v6022, %v6403
        %v6405 = vpop.f32.mrf.mxu0
        %v6406 = vadd.f32 %v6026, %v6405
        %v6407 = vpop.f32.mrf.mxu0
        %v6408 = vadd.f32 %v6022, %v6407
        %v6409 = vpop.f32.mrf.mxu0
        %v6410 = vadd.f32 %v6026, %v6409
        %6411 = vmatprep.mubr.bf16.mxu0 %v5960
        %6412 = vmatmul.mubr.bf16.gmra.mxu0 %v5959
        %v6413 = vpop.f32.mrf.mxu0
        %v6414 = vadd.f32 %v6022, %v6413
        %v6415 = vpop.f32.mrf.mxu0
        %v6416 = vadd.f32 %v6026, %v6415
        %v6417 = vpop.f32.mrf.mxu0
        %v6418 = vadd.f32 %v6022, %v6417
        %v6419 = vpop.f32.mrf.mxu0
        %v6420 = vadd.f32 %v6026, %v6419
        %6421 = vmatprep.mubr.bf16.mxu0 %v5962
        %6422 = vmatmul.mubr.bf16.gmra.mxu0 %v5961
        %v6423 = vpop.f32.mrf.mxu0
        %v6424 = vadd.f32 %v6022, %v6423
        %v6425 = vpop.f32.mrf.mxu0
        %v6426 = vadd.f32 %v6026, %v6425
        %v6427 = vpop.f32.mrf.mxu0
        %v6428 = vadd.f32 %v6022, %v6427
        %v6429 = vpop.f32.mrf.mxu0
        %v6430 = vadd.f32 %v6026, %v6429
        %6431 = vmatprep.mubr.bf16.mxu0 %v5964
        %6432 = vmatmul.mubr.bf16.gmra.mxu0 %v5963
        %v6433 = vpop.f32.mrf.mxu0
        %v6434 = vadd.f32 %v6022, %v6433
        %v6435 = vpop.f32.mrf.mxu0
        %v6436 = vadd.f32 %v6026, %v6435
        %v6437 = vpop.f32.mrf.mxu0
        %v6438 = vadd.f32 %v6022, %v6437
        %v6439 = vpop.f32.mrf.mxu0
        %v6440 = vadd.f32 %v6026, %v6439
        %6441 = vmatprep.mubr.bf16.mxu0 %v5966
        %6442 = vmatmul.mubr.bf16.gmra.mxu0 %v5965
        %v6443 = vpop.f32.mrf.mxu0
        %v6444 = vadd.f32 %v6022, %v6443
        %v6445 = vpop.f32.mrf.mxu0
        %v6446 = vadd.f32 %v6026, %v6445
        %v6447 = vpop.f32.mrf.mxu0
        %v6448 = vadd.f32 %v6022, %v6447
        %v6449 = vpop.f32.mrf.mxu0
        %v6450 = vadd.f32 %v6026, %v6449
        %6451 = vmatprep.mubr.bf16.mxu0 %v5968
        %6452 = vmatmul.mubr.bf16.gmra.mxu0 %v5967
        %v6453 = vpop.f32.mrf.mxu0
        %v6454 = vadd.f32 %v6022, %v6453
        %v6455 = vpop.f32.mrf.mxu0
        %v6456 = vadd.f32 %v6026, %v6455
        %v6457 = vpop.f32.mrf.mxu0
        %v6458 = vadd.f32 %v6022, %v6457
        %v6459 = vpop.f32.mrf.mxu0
        %v6460 = vadd.f32 %v6026, %v6459
        %6461 = vmatprep.mubr.bf16.mxu0 %v5970
        %6462 = vmatmul.mubr.bf16.gmra.mxu0 %v5969
        %v6463 = vpop.f32.mrf.mxu0
        %v6464 = vadd.f32 %v6022, %v6463
        %v6465 = vpop.f32.mrf.mxu0
        %v6466 = vadd.f32 %v6026, %v6465
        %v6467 = vpop.f32.mrf.mxu0
        %v6468 = vadd.f32 %v6022, %v6467
        %v6469 = vpop.f32.mrf.mxu0
        %v6470 = vadd.f32 %v6026, %v6469
        %6471 = vmatprep.mubr.bf16.mxu0 %v5972
        %6472 = vmatmul.mubr.bf16.gmra.mxu0 %v5971
        %v6473 = vpop.f32.mrf.mxu0
        %v6474 = vadd.f32 %v6022, %v6473
        %v6475 = vpop.f32.mrf.mxu0
        %v6476 = vadd.f32 %v6026, %v6475
        %v6477 = vpop.f32.mrf.mxu0
        %v6478 = vadd.f32 %v6022, %v6477
        %v6479 = vpop.f32.mrf.mxu0
        %v6480 = vadd.f32 %v6026, %v6479
        %6481 = vmatprep.mubr.bf16.mxu0 %v5974
        %6482 = vmatmul.mubr.bf16.gmra.mxu0 %v5973
        %v6483 = vpop.f32.mrf.mxu0
        %v6484 = vadd.f32 %v6022, %v6483
        %v6485 = vpop.f32.mrf.mxu0
        %v6486 = vadd.f32 %v6026, %v6485
        %v6487 = vpop.f32.mrf.mxu0
        %v6488 = vadd.f32 %v6022, %v6487
        %v6489 = vpop.f32.mrf.mxu0
        %v6490 = vadd.f32 %v6026, %v6489
        %6491 = vmatprep.mubr.bf16.mxu0 %v5976
        %6492 = vmatmul.mubr.bf16.gmra.mxu0 %v5975
        %v6493 = vpop.f32.mrf.mxu0
        %v6494 = vadd.f32 %v6022, %v6493
        %v6495 = vpop.f32.mrf.mxu0
        %v6496 = vadd.f32 %v6026, %v6495
        %v6497 = vpop.f32.mrf.mxu0
        %v6498 = vadd.f32 %v6022, %v6497
        %v6499 = vpop.f32.mrf.mxu0
        %v6500 = vadd.f32 %v6026, %v6499
        %6501 = vmatprep.mubr.bf16.mxu0 %v5978
        %6502 = vmatmul.mubr.bf16.gmra.mxu0 %v5977
        %v6503 = vpop.f32.mrf.mxu0
        %v6504 = vadd.f32 %v6022, %v6503
        %v6505 = vpop.f32.mrf.mxu0
        %v6506 = vadd.f32 %v6026, %v6505
        %v6507 = vpop.f32.mrf.mxu0
        %v6508 = vadd.f32 %v6022, %v6507
        %v6509 = vpop.f32.mrf.mxu0
        %v6510 = vadd.f32 %v6026, %v6509
        %6511 = vmatprep.mubr.bf16.mxu0 %v5980
        %6512 = vmatmul.mubr.bf16.gmra.mxu0 %v5979
        %v6513 = vpop.f32.mrf.mxu0
        %v6514 = vadd.f32 %v6022, %v6513
        %v6515 = vpop.f32.mrf.mxu0
        %v6516 = vadd.f32 %v6026, %v6515
        %v6517 = vpop.f32.mrf.mxu0
        %v6518 = vadd.f32 %v6022, %v6517
        %v6519 = vpop.f32.mrf.mxu0
        %v6520 = vadd.f32 %v6026, %v6519
        %6521 = vmatprep.mubr.bf16.mxu0 %v5982
        %6522 = vmatmul.mubr.bf16.gmra.mxu0 %v5981
        %v6523 = vpop.f32.mrf.mxu0
        %v6524 = vadd.f32 %v6022, %v6523
        %v6525 = vpop.f32.mrf.mxu0
        %v6526 = vadd.f32 %v6026, %v6525
        %v6527 = vpop.f32.mrf.mxu0
        %v6528 = vadd.f32 %v6022, %v6527
        %v6529 = vpop.f32.mrf.mxu0
        %v6530 = vadd.f32 %v6026, %v6529
        %6531 = vmatprep.mubr.bf16.mxu0 %v5984
        %6532 = vmatmul.mubr.bf16.gmra.mxu0 %v5983
        %v6533 = vpop.f32.mrf.mxu0
        %v6534 = vadd.f32 %v6022, %v6533
        %v6535 = vpop.f32.mrf.mxu0
        %v6536 = vadd.f32 %v6026, %v6535
        %v6537 = vpop.f32.mrf.mxu0
        %v6538 = vadd.f32 %v6022, %v6537
        %v6539 = vpop.f32.mrf.mxu0
        %v6540 = vadd.f32 %v6026, %v6539
        %6541 = vdwg.mxu0
        %v6542 = vmax.f32 %v6224, 0.0
        %v6543 = vmax.f32 %v6226, 0.0
        %v6544 = vmax.f32 %v6228, 0.0
        %v6545 = vmax.f32 %v6230, 0.0
        %v6546 = vmax.f32 %v6234, 0.0
        %v6547 = vmax.f32 %v6236, 0.0
        %v6548 = vmax.f32 %v6238, 0.0
        %v6549 = vmax.f32 %v6240, 0.0
        %v6550 = vmax.f32 %v6244, 0.0
        %v6551 = vmax.f32 %v6246, 0.0
        %v6552 = vmax.f32 %v6248, 0.0
        %v6553 = vmax.f32 %v6250, 0.0
        %v6554 = vmax.f32 %v6254, 0.0
        %v6555 = vmax.f32 %v6256, 0.0
        %v6556 = vmax.f32 %v6258, 0.0
        %v6557 = vmax.f32 %v6260, 0.0
        %v6558 = vmax.f32 %v6264, 0.0
        %v6559 = vmax.f32 %v6266, 0.0
        %v6560 = vmax.f32 %v6268, 0.0
        %v6561 = vmax.f32 %v6270, 0.0
        %v6562 = vmax.f32 %v6274, 0.0
        %v6563 = vmax.f32 %v6276, 0.0
        %v6564 = vmax.f32 %v6278, 0.0
        %v6565 = vmax.f32 %v6280, 0.0
        %v6566 = vmax.f32 %v6284, 0.0
        %v6567 = vmax.f32 %v6286, 0.0
        %v6568 = vmax.f32 %v6288, 0.0
        %v6569 = vmax.f32 %v6290, 0.0
        %v6570 = vmax.f32 %v6294, 0.0
        %v6571 = vmax.f32 %v6296, 0.0
        %v6572 = vmax.f32 %v6298, 0.0
        %v6573 = vmax.f32 %v6300, 0.0
        %v6574 = vmax.f32 %v6304, 0.0
        %v6575 = vmax.f32 %v6306, 0.0
        %v6576 = vmax.f32 %v6308, 0.0
        %v6577 = vmax.f32 %v6310, 0.0
        %v6578 = vmax.f32 %v6314, 0.0
        %v6579 = vmax.f32 %v6316, 0.0
        %v6580 = vmax.f32 %v6318, 0.0
        %v6581 = vmax.f32 %v6320, 0.0
        %v6582 = vmax.f32 %v6324, 0.0
        %v6583 = vmax.f32 %v6326, 0.0
        %v6584 = vmax.f32 %v6328, 0.0
        %v6585 = vmax.f32 %v6330, 0.0
        %v6586 = vmax.f32 %v6334, 0.0
        %v6587 = vmax.f32 %v6336, 0.0
        %v6588 = vmax.f32 %v6338, 0.0
        %v6589 = vmax.f32 %v6340, 0.0
        %v6590 = vmax.f32 %v6344, 0.0
        %v6591 = vmax.f32 %v6346, 0.0
        %v6592 = vmax.f32 %v6348, 0.0
        %v6593 = vmax.f32 %v6350, 0.0
        %v6594 = vmax.f32 %v6354, 0.0
        %v6595 = vmax.f32 %v6356, 0.0
        %v6596 = vmax.f32 %v6358, 0.0
        %v6597 = vmax.f32 %v6360, 0.0
        %v6598 = vmax.f32 %v6364, 0.0
        %v6599 = vmax.f32 %v6366, 0.0
        %v6600 = vmax.f32 %v6368, 0.0
        %v6601 = vmax.f32 %v6370, 0.0
        %v6602 = vmax.f32 %v6374, 0.0
        %v6603 = vmax.f32 %v6376, 0.0
        %v6604 = vmax.f32 %v6378, 0.0
        %v6605 = vmax.f32 %v6380, 0.0
        %v6606 = vmax.f32 %v6384, 0.0
        %v6607 = vmax.f32 %v6386, 0.0
        %v6608 = vmax.f32 %v6388, 0.0
        %v6609 = vmax.f32 %v6390, 0.0
        %v6610 = vmax.f32 %v6394, 0.0
        %v6611 = vmax.f32 %v6396, 0.0
        %v6612 = vmax.f32 %v6398, 0.0
        %v6613 = vmax.f32 %v6400, 0.0
        %v6614 = vmax.f32 %v6404, 0.0
        %v6615 = vmax.f32 %v6406, 0.0
        %v6616 = vmax.f32 %v6408, 0.0
        %v6617 = vmax.f32 %v6410, 0.0
        %v6618 = vmax.f32 %v6414, 0.0
        %v6619 = vmax.f32 %v6416, 0.0
        %v6620 = vmax.f32 %v6418, 0.0
        %v6621 = vmax.f32 %v6420, 0.0
        %v6622 = vmax.f32 %v6424, 0.0
        %v6623 = vmax.f32 %v6426, 0.0
        %v6624 = vmax.f32 %v6428, 0.0
        %v6625 = vmax.f32 %v6430, 0.0
        %v6626 = vmax.f32 %v6434, 0.0
        %v6627 = vmax.f32 %v6436, 0.0
        %v6628 = vmax.f32 %v6438, 0.0
        %v6629 = vmax.f32 %v6440, 0.0
        %v6630 = vmax.f32 %v6444, 0.0
        %v6631 = vmax.f32 %v6446, 0.0
        %v6632 = vmax.f32 %v6448, 0.0
        %v6633 = vmax.f32 %v6450, 0.0
        %v6634 = vmax.f32 %v6454, 0.0
        %v6635 = vmax.f32 %v6456, 0.0
        %v6636 = vmax.f32 %v6458, 0.0
        %v6637 = vmax.f32 %v6460, 0.0
        %v6638 = vmax.f32 %v6464, 0.0
        %v6639 = vmax.f32 %v6466, 0.0
        %v6640 = vmax.f32 %v6468, 0.0
        %v6641 = vmax.f32 %v6470, 0.0
        %v6642 = vmax.f32 %v6474, 0.0
        %v6643 = vmax.f32 %v6476, 0.0
        %v6644 = vmax.f32 %v6478, 0.0
        %v6645 = vmax.f32 %v6480, 0.0
        %v6646 = vmax.f32 %v6484, 0.0
        %v6647 = vmax.f32 %v6486, 0.0
        %v6648 = vmax.f32 %v6488, 0.0
        %v6649 = vmax.f32 %v6490, 0.0
        %v6650 = vmax.f32 %v6494, 0.0
        %v6651 = vmax.f32 %v6496, 0.0
        %v6652 = vmax.f32 %v6498, 0.0
        %v6653 = vmax.f32 %v6500, 0.0
        %v6654 = vmax.f32 %v6504, 0.0
        %v6655 = vmax.f32 %v6506, 0.0
        %v6656 = vmax.f32 %v6508, 0.0
        %v6657 = vmax.f32 %v6510, 0.0
        %v6658 = vmax.f32 %v6514, 0.0
        %v6659 = vmax.f32 %v6516, 0.0
        %v6660 = vmax.f32 %v6518, 0.0
        %v6661 = vmax.f32 %v6520, 0.0
        %v6662 = vmax.f32 %v6524, 0.0
        %v6663 = vmax.f32 %v6526, 0.0
        %v6664 = vmax.f32 %v6528, 0.0
        %v6665 = vmax.f32 %v6530, 0.0
        %v6666 = vmax.f32 %v6534, 0.0
        %v6667 = vmax.f32 %v6536, 0.0
        %v6668 = vmax.f32 %v6538, 0.0
        %v6669 = vmax.f32 %v6540, 0.0
        %v6670 = vpack.c.bf16 %v6544, %v6542
        %v6671 = vpack.c.bf16 %v6545, %v6543
        %v6672 = vpack.c.bf16 %v6548, %v6546
        %v6673 = vpack.c.bf16 %v6549, %v6547
        %v6674 = vpack.c.bf16 %v6552, %v6550
        %v6675 = vpack.c.bf16 %v6553, %v6551
        %v6676 = vpack.c.bf16 %v6556, %v6554
        %v6677 = vpack.c.bf16 %v6557, %v6555
        %v6678 = vpack.c.bf16 %v6560, %v6558
        %v6679 = vpack.c.bf16 %v6561, %v6559
        %v6680 = vpack.c.bf16 %v6564, %v6562
        %v6681 = vpack.c.bf16 %v6565, %v6563
        %v6682 = vpack.c.bf16 %v6568, %v6566
        %v6683 = vpack.c.bf16 %v6569, %v6567
        %v6684 = vpack.c.bf16 %v6572, %v6570
        %v6685 = vpack.c.bf16 %v6573, %v6571
        %v6686 = vpack.c.bf16 %v6576, %v6574
        %v6687 = vpack.c.bf16 %v6577, %v6575
        %v6688 = vpack.c.bf16 %v6580, %v6578
        %v6689 = vpack.c.bf16 %v6581, %v6579
        %v6690 = vpack.c.bf16 %v6584, %v6582
        %v6691 = vpack.c.bf16 %v6585, %v6583
        %v6692 = vpack.c.bf16 %v6588, %v6586
        %v6693 = vpack.c.bf16 %v6589, %v6587
        %v6694 = vpack.c.bf16 %v6592, %v6590
        %v6695 = vpack.c.bf16 %v6593, %v6591
        %v6696 = vpack.c.bf16 %v6596, %v6594
        %v6697 = vpack.c.bf16 %v6597, %v6595
        %v6698 = vpack.c.bf16 %v6600, %v6598
        %v6699 = vpack.c.bf16 %v6601, %v6599
        %v6700 = vpack.c.bf16 %v6604, %v6602
        %v6701 = vpack.c.bf16 %v6605, %v6603
        %v6702 = vpack.c.bf16 %v6608, %v6606
        %v6703 = vpack.c.bf16 %v6609, %v6607
        %v6704 = vpack.c.bf16 %v6612, %v6610
        %v6705 = vpack.c.bf16 %v6613, %v6611
        %v6706 = vpack.c.bf16 %v6616, %v6614
        %v6707 = vpack.c.bf16 %v6617, %v6615
        %v6708 = vpack.c.bf16 %v6620, %v6618
        %v6709 = vpack.c.bf16 %v6621, %v6619
        %v6710 = vpack.c.bf16 %v6624, %v6622
        %v6711 = vpack.c.bf16 %v6625, %v6623
        %v6712 = vpack.c.bf16 %v6628, %v6626
        %v6713 = vpack.c.bf16 %v6629, %v6627
        %v6714 = vpack.c.bf16 %v6632, %v6630
        %v6715 = vpack.c.bf16 %v6633, %v6631
        %v6716 = vpack.c.bf16 %v6636, %v6634
        %v6717 = vpack.c.bf16 %v6637, %v6635
        %v6718 = vpack.c.bf16 %v6640, %v6638
        %v6719 = vpack.c.bf16 %v6641, %v6639
        %v6720 = vpack.c.bf16 %v6644, %v6642
        %v6721 = vpack.c.bf16 %v6645, %v6643
        %v6722 = vpack.c.bf16 %v6648, %v6646
        %v6723 = vpack.c.bf16 %v6649, %v6647
        %v6724 = vpack.c.bf16 %v6652, %v6650
        %v6725 = vpack.c.bf16 %v6653, %v6651
        %v6726 = vpack.c.bf16 %v6656, %v6654
        %v6727 = vpack.c.bf16 %v6657, %v6655
        %v6728 = vpack.c.bf16 %v6660, %v6658
        %v6729 = vpack.c.bf16 %v6661, %v6659
        %v6730 = vpack.c.bf16 %v6664, %v6662
        %v6731 = vpack.c.bf16 %v6665, %v6663
        %v6732 = vpack.c.bf16 %v6668, %v6666
        %v6733 = vpack.c.bf16 %v6669, %v6667
        %v6734 = vld [vmem:[#allocation15] sm:$0xff]
        %v6735 = vld [vmem:[#allocation15 + $0x8] sm:$0xff]
        %v6736 = vld [vmem:[#allocation15 + $0x10] sm:$0xff]
        %v6737 = vld [vmem:[#allocation15 + $0x18] sm:$0xff]
        %v6738 = vld [vmem:[#allocation15 + $0x20] sm:$0xff]
        %v6739 = vld [vmem:[#allocation15 + $0x28] sm:$0xff]
        %v6740 = vld [vmem:[#allocation15 + $0x30] sm:$0xff]
        %v6741 = vld [vmem:[#allocation15 + $0x38] sm:$0xff]
        %v6742 = vld [vmem:[#allocation15 + $0x40] sm:$0xff]
        %v6743 = vld [vmem:[#allocation15 + $0x48] sm:$0xff]
        %v6744 = vld [vmem:[#allocation15 + $0x50] sm:$0xff]
        %v6745 = vld [vmem:[#allocation15 + $0x58] sm:$0xff]
        %v6746 = vld [vmem:[#allocation15 + $0x60] sm:$0xff]
        %v6747 = vld [vmem:[#allocation15 + $0x68] sm:$0xff]
        %v6748 = vld [vmem:[#allocation15 + $0x70] sm:$0xff]
        %v6749 = vld [vmem:[#allocation15 + $0x78] sm:$0xff]
        %v6750 = vld [vmem:[#allocation15 + $0x80] sm:$0xff]
        %v6751 = vld [vmem:[#allocation15 + $0x88] sm:$0xff]
        %v6752 = vld [vmem:[#allocation15 + $0x90] sm:$0xff]
        %v6753 = vld [vmem:[#allocation15 + $0x98] sm:$0xff]
        %v6754 = vld [vmem:[#allocation15 + $0xa0] sm:$0xff]
        %v6755 = vld [vmem:[#allocation15 + $0xa8] sm:$0xff]
        %v6756 = vld [vmem:[#allocation15 + $0xb0] sm:$0xff]
        %v6757 = vld [vmem:[#allocation15 + $0xb8] sm:$0xff]
        %v6758 = vld [vmem:[#allocation15 + $0xc0] sm:$0xff]
        %v6759 = vld [vmem:[#allocation15 + $0xc8] sm:$0xff]
        %v6760 = vld [vmem:[#allocation15 + $0xd0] sm:$0xff]
        %v6761 = vld [vmem:[#allocation15 + $0xd8] sm:$0xff]
        %v6762 = vld [vmem:[#allocation15 + $0xe0] sm:$0xff]
        %v6763 = vld [vmem:[#allocation15 + $0xe8] sm:$0xff]
        %v6764 = vld [vmem:[#allocation15 + $0xf0] sm:$0xff]
        %v6765 = vld [vmem:[#allocation15 + $0xf8] sm:$0xff]
        %v6766 = vld [vmem:[#allocation16] sm:$0x3]
        %v6768 = vlaneseq
        %v6769 = vshrl.u32 %v6768, 7
        %v6770 = vsub.s32 0, %v6769
        %v6771 = vrot.slane %v6766, %v6770
        %v6772 = vlaneseq
        %v6773 = vshrl.u32 %v6772, 7
        %v6774 = vsub.s32 1, %v6773
        %v6775 = vrot.slane %v6766, %v6774
        %v6810 = vunpack.c.l.b16 %v6734
        %v6811 = vunpack.c.h.b16 %v6734
        %v6812 = vunpack.c.l.b16 %v6735
        %v6813 = vunpack.c.h.b16 %v6735
        %v6814 = vunpack.c.l.b16 %v6736
        %v6815 = vunpack.c.h.b16 %v6736
        %v6816 = vunpack.c.l.b16 %v6737
        %v6817 = vunpack.c.h.b16 %v6737
        %v6818 = vunpack.c.l.b16 %v6738
        %v6819 = vunpack.c.h.b16 %v6738
        %v6820 = vunpack.c.l.b16 %v6739
        %v6821 = vunpack.c.h.b16 %v6739
        %v6822 = vunpack.c.l.b16 %v6740
        %v6823 = vunpack.c.h.b16 %v6740
        %v6824 = vunpack.c.l.b16 %v6741
        %v6825 = vunpack.c.h.b16 %v6741
        %v6826 = vunpack.c.l.b16 %v6742
        %v6827 = vunpack.c.h.b16 %v6742
        %v6828 = vunpack.c.l.b16 %v6743
        %v6829 = vunpack.c.h.b16 %v6743
        %v6830 = vunpack.c.l.b16 %v6744
        %v6831 = vunpack.c.h.b16 %v6744
        %v6832 = vunpack.c.l.b16 %v6745
        %v6833 = vunpack.c.h.b16 %v6745
        %v6834 = vunpack.c.l.b16 %v6746
        %v6835 = vunpack.c.h.b16 %v6746
        %v6836 = vunpack.c.l.b16 %v6747
        %v6837 = vunpack.c.h.b16 %v6747
        %v6838 = vunpack.c.l.b16 %v6748
        %v6839 = vunpack.c.h.b16 %v6748
        %v6840 = vunpack.c.l.b16 %v6749
        %v6841 = vunpack.c.h.b16 %v6749
        %v6842 = vunpack.c.l.b16 %v6750
        %v6843 = vunpack.c.h.b16 %v6750
        %v6844 = vunpack.c.l.b16 %v6751
        %v6845 = vunpack.c.h.b16 %v6751
        %v6846 = vunpack.c.l.b16 %v6752
        %v6847 = vunpack.c.h.b16 %v6752
        %v6848 = vunpack.c.l.b16 %v6753
        %v6849 = vunpack.c.h.b16 %v6753
        %v6850 = vunpack.c.l.b16 %v6754
        %v6851 = vunpack.c.h.b16 %v6754
        %v6852 = vunpack.c.l.b16 %v6755
        %v6853 = vunpack.c.h.b16 %v6755
        %v6854 = vunpack.c.l.b16 %v6756
        %v6855 = vunpack.c.h.b16 %v6756
        %v6856 = vunpack.c.l.b16 %v6757
        %v6857 = vunpack.c.h.b16 %v6757
        %v6858 = vunpack.c.l.b16 %v6758
        %v6859 = vunpack.c.h.b16 %v6758
        %v6860 = vunpack.c.l.b16 %v6759
        %v6861 = vunpack.c.h.b16 %v6759
        %v6862 = vunpack.c.l.b16 %v6760
        %v6863 = vunpack.c.h.b16 %v6760
        %v6864 = vunpack.c.l.b16 %v6761
        %v6865 = vunpack.c.h.b16 %v6761
        %v6866 = vunpack.c.l.b16 %v6762
        %v6867 = vunpack.c.h.b16 %v6762
        %v6868 = vunpack.c.l.b16 %v6763
        %v6869 = vunpack.c.h.b16 %v6763
        %v6870 = vunpack.c.l.b16 %v6764
        %v6871 = vunpack.c.h.b16 %v6764
        %v6872 = vunpack.c.l.b16 %v6765
        %v6873 = vunpack.c.h.b16 %v6765
        %v6874 = vpack.c.b16 %v6812, %v6810
        %v6875 = vpack.c.b16 %v6813, %v6811
        %v6876 = vpack.c.b16 %v6816, %v6814
        %v6877 = vpack.c.b16 %v6817, %v6815
        %v6878 = vpack.c.b16 %v6820, %v6818
        %v6879 = vpack.c.b16 %v6821, %v6819
        %v6880 = vpack.c.b16 %v6824, %v6822
        %v6881 = vpack.c.b16 %v6825, %v6823
        %v6882 = vpack.c.b16 %v6828, %v6826
        %v6883 = vpack.c.b16 %v6829, %v6827
        %v6884 = vpack.c.b16 %v6832, %v6830
        %v6885 = vpack.c.b16 %v6833, %v6831
        %v6886 = vpack.c.b16 %v6836, %v6834
        %v6887 = vpack.c.b16 %v6837, %v6835
        %v6888 = vpack.c.b16 %v6840, %v6838
        %v6889 = vpack.c.b16 %v6841, %v6839
        %v6890 = vpack.c.b16 %v6844, %v6842
        %v6891 = vpack.c.b16 %v6845, %v6843
        %v6892 = vpack.c.b16 %v6848, %v6846
        %v6893 = vpack.c.b16 %v6849, %v6847
        %v6894 = vpack.c.b16 %v6852, %v6850
        %v6895 = vpack.c.b16 %v6853, %v6851
        %v6896 = vpack.c.b16 %v6856, %v6854
        %v6897 = vpack.c.b16 %v6857, %v6855
        %v6898 = vpack.c.b16 %v6860, %v6858
        %v6899 = vpack.c.b16 %v6861, %v6859
        %v6900 = vpack.c.b16 %v6864, %v6862
        %v6901 = vpack.c.b16 %v6865, %v6863
        %v6902 = vpack.c.b16 %v6868, %v6866
        %v6903 = vpack.c.b16 %v6869, %v6867
        %v6904 = vpack.c.b16 %v6872, %v6870
        %v6905 = vpack.c.b16 %v6873, %v6871
        %6938 = vmatprep.subr.bf16.mxu0 %v6889
        %6939 = vmatpush1.bf16.msra.mxu0 %v6888
        %6940 = vmatprep.subr.bf16.mxu0 %v6887
        %6941 = vmatpush1.bf16.msra.mxu0 %v6886
        %6942 = vmatprep.subr.bf16.mxu0 %v6885
        %6943 = vmatpush1.bf16.msra.mxu0 %v6884
        %6944 = vmatprep.subr.bf16.mxu0 %v6883
        %6945 = vmatpush1.bf16.msra.mxu0 %v6882
        %6946 = vmatprep.subr.bf16.mxu0 %v6881
        %6947 = vmatpush1.bf16.msra.mxu0 %v6880
        %6948 = vmatprep.subr.bf16.mxu0 %v6879
        %6949 = vmatpush1.bf16.msra.mxu0 %v6878
        %6950 = vmatprep.subr.bf16.mxu0 %v6877
        %6951 = vmatpush1.bf16.msra.mxu0 %v6876
        %6952 = vmatprep.subr.bf16.mxu0 %v6875
        %6953 = vmatpush1.bf16.msra.mxu0 %v6874
        %6954 = vmatprep.subr.bf16.mxu0 %v6905
        %6955 = vmatpush2.bf16.msra.mxu0 %v6904
        %6956 = vmatprep.subr.bf16.mxu0 %v6903
        %6957 = vmatpush2.bf16.msra.mxu0 %v6902
        %6958 = vmatprep.subr.bf16.mxu0 %v6901
        %6959 = vmatpush2.bf16.msra.mxu0 %v6900
        %6960 = vmatprep.subr.bf16.mxu0 %v6899
        %6961 = vmatpush2.bf16.msra.mxu0 %v6898
        %6962 = vmatprep.subr.bf16.mxu0 %v6897
        %6963 = vmatpush2.bf16.msra.mxu0 %v6896
        %6964 = vmatprep.subr.bf16.mxu0 %v6895
        %6965 = vmatpush2.bf16.msra.mxu0 %v6894
        %6966 = vmatprep.subr.bf16.mxu0 %v6893
        %6967 = vmatpush2.bf16.msra.mxu0 %v6892
        %6968 = vmatprep.subr.bf16.mxu0 %v6891
        %6969 = vmatpush2.bf16.msra.mxu0 %v6890
        %6970 = vmatprep.mubr.bf16.mxu0 %v6671
        %6971 = vmatmul.mubr.bf16.gmra.mxu0 %v6670
        %v6972 = vpop.f32.mrf.mxu0
        %v6973 = vadd.f32 %v6771, %v6972
        %v6974 = vpop.f32.mrf.mxu0
        %v6975 = vadd.f32 %v6775, %v6974
        %v6976 = vpop.f32.mrf.mxu0
        %v6977 = vadd.f32 %v6771, %v6976
        %v6978 = vpop.f32.mrf.mxu0
        %v6979 = vadd.f32 %v6775, %v6978
        %6980 = vmatprep.mubr.bf16.mxu0 %v6673
        %6981 = vmatmul.mubr.bf16.gmra.mxu0 %v6672
        %v6982 = vpop.f32.mrf.mxu0
        %v6983 = vadd.f32 %v6771, %v6982
        %v6984 = vpop.f32.mrf.mxu0
        %v6985 = vadd.f32 %v6775, %v6984
        %v6986 = vpop.f32.mrf.mxu0
        %v6987 = vadd.f32 %v6771, %v6986
        %v6988 = vpop.f32.mrf.mxu0
        %v6989 = vadd.f32 %v6775, %v6988
        %6990 = vmatprep.mubr.bf16.mxu0 %v6675
        %6991 = vmatmul.mubr.bf16.gmra.mxu0 %v6674
        %v6992 = vpop.f32.mrf.mxu0
        %v6993 = vadd.f32 %v6771, %v6992
        %v6994 = vpop.f32.mrf.mxu0
        %v6995 = vadd.f32 %v6775, %v6994
        %v6996 = vpop.f32.mrf.mxu0
        %v6997 = vadd.f32 %v6771, %v6996
        %v6998 = vpop.f32.mrf.mxu0
        %v6999 = vadd.f32 %v6775, %v6998
        %7000 = vmatprep.mubr.bf16.mxu0 %v6677
        %7001 = vmatmul.mubr.bf16.gmra.mxu0 %v6676
        %v7002 = vpop.f32.mrf.mxu0
        %v7003 = vadd.f32 %v6771, %v7002
        %v7004 = vpop.f32.mrf.mxu0
        %v7005 = vadd.f32 %v6775, %v7004
        %v7006 = vpop.f32.mrf.mxu0
        %v7007 = vadd.f32 %v6771, %v7006
        %v7008 = vpop.f32.mrf.mxu0
        %v7009 = vadd.f32 %v6775, %v7008
        %7010 = vmatprep.mubr.bf16.mxu0 %v6679
        %7011 = vmatmul.mubr.bf16.gmra.mxu0 %v6678
        %v7012 = vpop.f32.mrf.mxu0
        %v7013 = vadd.f32 %v6771, %v7012
        %v7014 = vpop.f32.mrf.mxu0
        %v7015 = vadd.f32 %v6775, %v7014
        %v7016 = vpop.f32.mrf.mxu0
        %v7017 = vadd.f32 %v6771, %v7016
        %v7018 = vpop.f32.mrf.mxu0
        %v7019 = vadd.f32 %v6775, %v7018
        %7020 = vmatprep.mubr.bf16.mxu0 %v6681
        %7021 = vmatmul.mubr.bf16.gmra.mxu0 %v6680
        %v7022 = vpop.f32.mrf.mxu0
        %v7023 = vadd.f32 %v6771, %v7022
        %v7024 = vpop.f32.mrf.mxu0
        %v7025 = vadd.f32 %v6775, %v7024
        %v7026 = vpop.f32.mrf.mxu0
        %v7027 = vadd.f32 %v6771, %v7026
        %v7028 = vpop.f32.mrf.mxu0
        %v7029 = vadd.f32 %v6775, %v7028
        %7030 = vmatprep.mubr.bf16.mxu0 %v6683
        %7031 = vmatmul.mubr.bf16.gmra.mxu0 %v6682
        %v7032 = vpop.f32.mrf.mxu0
        %v7033 = vadd.f32 %v6771, %v7032
        %v7034 = vpop.f32.mrf.mxu0
        %v7035 = vadd.f32 %v6775, %v7034
        %v7036 = vpop.f32.mrf.mxu0
        %v7037 = vadd.f32 %v6771, %v7036
        %v7038 = vpop.f32.mrf.mxu0
        %v7039 = vadd.f32 %v6775, %v7038
        %7040 = vmatprep.mubr.bf16.mxu0 %v6685
        %7041 = vmatmul.mubr.bf16.gmra.mxu0 %v6684
        %v7042 = vpop.f32.mrf.mxu0
        %v7043 = vadd.f32 %v6771, %v7042
        %v7044 = vpop.f32.mrf.mxu0
        %v7045 = vadd.f32 %v6775, %v7044
        %v7046 = vpop.f32.mrf.mxu0
        %v7047 = vadd.f32 %v6771, %v7046
        %v7048 = vpop.f32.mrf.mxu0
        %v7049 = vadd.f32 %v6775, %v7048
        %7050 = vmatprep.mubr.bf16.mxu0 %v6687
        %7051 = vmatmul.mubr.bf16.gmra.mxu0 %v6686
        %v7052 = vpop.f32.mrf.mxu0
        %v7053 = vadd.f32 %v6771, %v7052
        %v7054 = vpop.f32.mrf.mxu0
        %v7055 = vadd.f32 %v6775, %v7054
        %v7056 = vpop.f32.mrf.mxu0
        %v7057 = vadd.f32 %v6771, %v7056
        %v7058 = vpop.f32.mrf.mxu0
        %v7059 = vadd.f32 %v6775, %v7058
        %7060 = vmatprep.mubr.bf16.mxu0 %v6689
        %7061 = vmatmul.mubr.bf16.gmra.mxu0 %v6688
        %v7062 = vpop.f32.mrf.mxu0
        %v7063 = vadd.f32 %v6771, %v7062
        %v7064 = vpop.f32.mrf.mxu0
        %v7065 = vadd.f32 %v6775, %v7064
        %v7066 = vpop.f32.mrf.mxu0
        %v7067 = vadd.f32 %v6771, %v7066
        %v7068 = vpop.f32.mrf.mxu0
        %v7069 = vadd.f32 %v6775, %v7068
        %7070 = vmatprep.mubr.bf16.mxu0 %v6691
        %7071 = vmatmul.mubr.bf16.gmra.mxu0 %v6690
        %v7072 = vpop.f32.mrf.mxu0
        %v7073 = vadd.f32 %v6771, %v7072
        %v7074 = vpop.f32.mrf.mxu0
        %v7075 = vadd.f32 %v6775, %v7074
        %v7076 = vpop.f32.mrf.mxu0
        %v7077 = vadd.f32 %v6771, %v7076
        %v7078 = vpop.f32.mrf.mxu0
        %v7079 = vadd.f32 %v6775, %v7078
        %7080 = vmatprep.mubr.bf16.mxu0 %v6693
        %7081 = vmatmul.mubr.bf16.gmra.mxu0 %v6692
        %v7082 = vpop.f32.mrf.mxu0
        %v7083 = vadd.f32 %v6771, %v7082
        %v7084 = vpop.f32.mrf.mxu0
        %v7085 = vadd.f32 %v6775, %v7084
        %v7086 = vpop.f32.mrf.mxu0
        %v7087 = vadd.f32 %v6771, %v7086
        %v7088 = vpop.f32.mrf.mxu0
        %v7089 = vadd.f32 %v6775, %v7088
        %7090 = vmatprep.mubr.bf16.mxu0 %v6695
        %7091 = vmatmul.mubr.bf16.gmra.mxu0 %v6694
        %v7092 = vpop.f32.mrf.mxu0
        %v7093 = vadd.f32 %v6771, %v7092
        %v7094 = vpop.f32.mrf.mxu0
        %v7095 = vadd.f32 %v6775, %v7094
        %v7096 = vpop.f32.mrf.mxu0
        %v7097 = vadd.f32 %v6771, %v7096
        %v7098 = vpop.f32.mrf.mxu0
        %v7099 = vadd.f32 %v6775, %v7098
        %7100 = vmatprep.mubr.bf16.mxu0 %v6697
        %7101 = vmatmul.mubr.bf16.gmra.mxu0 %v6696
        %v7102 = vpop.f32.mrf.mxu0
        %v7103 = vadd.f32 %v6771, %v7102
        %v7104 = vpop.f32.mrf.mxu0
        %v7105 = vadd.f32 %v6775, %v7104
        %v7106 = vpop.f32.mrf.mxu0
        %v7107 = vadd.f32 %v6771, %v7106
        %v7108 = vpop.f32.mrf.mxu0
        %v7109 = vadd.f32 %v6775, %v7108
        %7110 = vmatprep.mubr.bf16.mxu0 %v6699
        %7111 = vmatmul.mubr.bf16.gmra.mxu0 %v6698
        %v7112 = vpop.f32.mrf.mxu0
        %v7113 = vadd.f32 %v6771, %v7112
        %v7114 = vpop.f32.mrf.mxu0
        %v7115 = vadd.f32 %v6775, %v7114
        %v7116 = vpop.f32.mrf.mxu0
        %v7117 = vadd.f32 %v6771, %v7116
        %v7118 = vpop.f32.mrf.mxu0
        %v7119 = vadd.f32 %v6775, %v7118
        %7120 = vmatprep.mubr.bf16.mxu0 %v6701
        %7121 = vmatmul.mubr.bf16.gmra.mxu0 %v6700
        %v7122 = vpop.f32.mrf.mxu0
        %v7123 = vadd.f32 %v6771, %v7122
        %v7124 = vpop.f32.mrf.mxu0
        %v7125 = vadd.f32 %v6775, %v7124
        %v7126 = vpop.f32.mrf.mxu0
        %v7127 = vadd.f32 %v6771, %v7126
        %v7128 = vpop.f32.mrf.mxu0
        %v7129 = vadd.f32 %v6775, %v7128
        %7130 = vmatprep.mubr.bf16.mxu0 %v6703
        %7131 = vmatmul.mubr.bf16.gmra.mxu0 %v6702
        %v7132 = vpop.f32.mrf.mxu0
        %v7133 = vadd.f32 %v6771, %v7132
        %v7134 = vpop.f32.mrf.mxu0
        %v7135 = vadd.f32 %v6775, %v7134
        %v7136 = vpop.f32.mrf.mxu0
        %v7137 = vadd.f32 %v6771, %v7136
        %v7138 = vpop.f32.mrf.mxu0
        %v7139 = vadd.f32 %v6775, %v7138
        %7140 = vmatprep.mubr.bf16.mxu0 %v6705
        %7141 = vmatmul.mubr.bf16.gmra.mxu0 %v6704
        %v7142 = vpop.f32.mrf.mxu0
        %v7143 = vadd.f32 %v6771, %v7142
        %v7144 = vpop.f32.mrf.mxu0
        %v7145 = vadd.f32 %v6775, %v7144
        %v7146 = vpop.f32.mrf.mxu0
        %v7147 = vadd.f32 %v6771, %v7146
        %v7148 = vpop.f32.mrf.mxu0
        %v7149 = vadd.f32 %v6775, %v7148
        %7150 = vmatprep.mubr.bf16.mxu0 %v6707
        %7151 = vmatmul.mubr.bf16.gmra.mxu0 %v6706
        %v7152 = vpop.f32.mrf.mxu0
        %v7153 = vadd.f32 %v6771, %v7152
        %v7154 = vpop.f32.mrf.mxu0
        %v7155 = vadd.f32 %v6775, %v7154
        %v7156 = vpop.f32.mrf.mxu0
        %v7157 = vadd.f32 %v6771, %v7156
        %v7158 = vpop.f32.mrf.mxu0
        %v7159 = vadd.f32 %v6775, %v7158
        %7160 = vmatprep.mubr.bf16.mxu0 %v6709
        %7161 = vmatmul.mubr.bf16.gmra.mxu0 %v6708
        %v7162 = vpop.f32.mrf.mxu0
        %v7163 = vadd.f32 %v6771, %v7162
        %v7164 = vpop.f32.mrf.mxu0
        %v7165 = vadd.f32 %v6775, %v7164
        %v7166 = vpop.f32.mrf.mxu0
        %v7167 = vadd.f32 %v6771, %v7166
        %v7168 = vpop.f32.mrf.mxu0
        %v7169 = vadd.f32 %v6775, %v7168
        %7170 = vmatprep.mubr.bf16.mxu0 %v6711
        %7171 = vmatmul.mubr.bf16.gmra.mxu0 %v6710
        %v7172 = vpop.f32.mrf.mxu0
        %v7173 = vadd.f32 %v6771, %v7172
        %v7174 = vpop.f32.mrf.mxu0
        %v7175 = vadd.f32 %v6775, %v7174
        %v7176 = vpop.f32.mrf.mxu0
        %v7177 = vadd.f32 %v6771, %v7176
        %v7178 = vpop.f32.mrf.mxu0
        %v7179 = vadd.f32 %v6775, %v7178
        %7180 = vmatprep.mubr.bf16.mxu0 %v6713
        %7181 = vmatmul.mubr.bf16.gmra.mxu0 %v6712
        %v7182 = vpop.f32.mrf.mxu0
        %v7183 = vadd.f32 %v6771, %v7182
        %v7184 = vpop.f32.mrf.mxu0
        %v7185 = vadd.f32 %v6775, %v7184
        %v7186 = vpop.f32.mrf.mxu0
        %v7187 = vadd.f32 %v6771, %v7186
        %v7188 = vpop.f32.mrf.mxu0
        %v7189 = vadd.f32 %v6775, %v7188
        %7190 = vmatprep.mubr.bf16.mxu0 %v6715
        %7191 = vmatmul.mubr.bf16.gmra.mxu0 %v6714
        %v7192 = vpop.f32.mrf.mxu0
        %v7193 = vadd.f32 %v6771, %v7192
        %v7194 = vpop.f32.mrf.mxu0
        %v7195 = vadd.f32 %v6775, %v7194
        %v7196 = vpop.f32.mrf.mxu0
        %v7197 = vadd.f32 %v6771, %v7196
        %v7198 = vpop.f32.mrf.mxu0
        %v7199 = vadd.f32 %v6775, %v7198
        %7200 = vmatprep.mubr.bf16.mxu0 %v6717
        %7201 = vmatmul.mubr.bf16.gmra.mxu0 %v6716
        %v7202 = vpop.f32.mrf.mxu0
        %v7203 = vadd.f32 %v6771, %v7202
        %v7204 = vpop.f32.mrf.mxu0
        %v7205 = vadd.f32 %v6775, %v7204
        %v7206 = vpop.f32.mrf.mxu0
        %v7207 = vadd.f32 %v6771, %v7206
        %v7208 = vpop.f32.mrf.mxu0
        %v7209 = vadd.f32 %v6775, %v7208
        %7210 = vmatprep.mubr.bf16.mxu0 %v6719
        %7211 = vmatmul.mubr.bf16.gmra.mxu0 %v6718
        %v7212 = vpop.f32.mrf.mxu0
        %v7213 = vadd.f32 %v6771, %v7212
        %v7214 = vpop.f32.mrf.mxu0
        %v7215 = vadd.f32 %v6775, %v7214
        %v7216 = vpop.f32.mrf.mxu0
        %v7217 = vadd.f32 %v6771, %v7216
        %v7218 = vpop.f32.mrf.mxu0
        %v7219 = vadd.f32 %v6775, %v7218
        %7220 = vmatprep.mubr.bf16.mxu0 %v6721
        %7221 = vmatmul.mubr.bf16.gmra.mxu0 %v6720
        %v7222 = vpop.f32.mrf.mxu0
        %v7223 = vadd.f32 %v6771, %v7222
        %v7224 = vpop.f32.mrf.mxu0
        %v7225 = vadd.f32 %v6775, %v7224
        %v7226 = vpop.f32.mrf.mxu0
        %v7227 = vadd.f32 %v6771, %v7226
        %v7228 = vpop.f32.mrf.mxu0
        %v7229 = vadd.f32 %v6775, %v7228
        %7230 = vmatprep.mubr.bf16.mxu0 %v6723
        %7231 = vmatmul.mubr.bf16.gmra.mxu0 %v6722
        %v7232 = vpop.f32.mrf.mxu0
        %v7233 = vadd.f32 %v6771, %v7232
        %v7234 = vpop.f32.mrf.mxu0
        %v7235 = vadd.f32 %v6775, %v7234
        %v7236 = vpop.f32.mrf.mxu0
        %v7237 = vadd.f32 %v6771, %v7236
        %v7238 = vpop.f32.mrf.mxu0
        %v7239 = vadd.f32 %v6775, %v7238
        %7240 = vmatprep.mubr.bf16.mxu0 %v6725
        %7241 = vmatmul.mubr.bf16.gmra.mxu0 %v6724
        %v7242 = vpop.f32.mrf.mxu0
        %v7243 = vadd.f32 %v6771, %v7242
        %v7244 = vpop.f32.mrf.mxu0
        %v7245 = vadd.f32 %v6775, %v7244
        %v7246 = vpop.f32.mrf.mxu0
        %v7247 = vadd.f32 %v6771, %v7246
        %v7248 = vpop.f32.mrf.mxu0
        %v7249 = vadd.f32 %v6775, %v7248
        %7250 = vmatprep.mubr.bf16.mxu0 %v6727
        %7251 = vmatmul.mubr.bf16.gmra.mxu0 %v6726
        %v7252 = vpop.f32.mrf.mxu0
        %v7253 = vadd.f32 %v6771, %v7252
        %v7254 = vpop.f32.mrf.mxu0
        %v7255 = vadd.f32 %v6775, %v7254
        %v7256 = vpop.f32.mrf.mxu0
        %v7257 = vadd.f32 %v6771, %v7256
        %v7258 = vpop.f32.mrf.mxu0
        %v7259 = vadd.f32 %v6775, %v7258
        %7260 = vmatprep.mubr.bf16.mxu0 %v6729
        %7261 = vmatmul.mubr.bf16.gmra.mxu0 %v6728
        %v7262 = vpop.f32.mrf.mxu0
        %v7263 = vadd.f32 %v6771, %v7262
        %v7264 = vpop.f32.mrf.mxu0
        %v7265 = vadd.f32 %v6775, %v7264
        %v7266 = vpop.f32.mrf.mxu0
        %v7267 = vadd.f32 %v6771, %v7266
        %v7268 = vpop.f32.mrf.mxu0
        %v7269 = vadd.f32 %v6775, %v7268
        %7270 = vmatprep.mubr.bf16.mxu0 %v6731
        %7271 = vmatmul.mubr.bf16.gmra.mxu0 %v6730
        %v7272 = vpop.f32.mrf.mxu0
        %v7273 = vadd.f32 %v6771, %v7272
        %v7274 = vpop.f32.mrf.mxu0
        %v7275 = vadd.f32 %v6775, %v7274
        %v7276 = vpop.f32.mrf.mxu0
        %v7277 = vadd.f32 %v6771, %v7276
        %v7278 = vpop.f32.mrf.mxu0
        %v7279 = vadd.f32 %v6775, %v7278
        %7280 = vmatprep.mubr.bf16.mxu0 %v6733
        %7281 = vmatmul.mubr.bf16.gmra.mxu0 %v6732
        %v7282 = vpop.f32.mrf.mxu0
        %v7283 = vadd.f32 %v6771, %v7282
        %v7284 = vpop.f32.mrf.mxu0
        %v7285 = vadd.f32 %v6775, %v7284
        %v7286 = vpop.f32.mrf.mxu0
        %v7287 = vadd.f32 %v6771, %v7286
        %v7288 = vpop.f32.mrf.mxu0
        %v7289 = vadd.f32 %v6775, %v7288
        %7290 = vdwg.mxu0
        %v7291 = vmax.f32 %v6973, 0.0
        %v7292 = vmax.f32 %v6975, 0.0
        %v7293 = vmax.f32 %v6977, 0.0
        %v7294 = vmax.f32 %v6979, 0.0
        %v7295 = vmax.f32 %v6983, 0.0
        %v7296 = vmax.f32 %v6985, 0.0
        %v7297 = vmax.f32 %v6987, 0.0
        %v7298 = vmax.f32 %v6989, 0.0
        %v7299 = vmax.f32 %v6993, 0.0
        %v7300 = vmax.f32 %v6995, 0.0
        %v7301 = vmax.f32 %v6997, 0.0
        %v7302 = vmax.f32 %v6999, 0.0
        %v7303 = vmax.f32 %v7003, 0.0
        %v7304 = vmax.f32 %v7005, 0.0
        %v7305 = vmax.f32 %v7007, 0.0
        %v7306 = vmax.f32 %v7009, 0.0
        %v7307 = vmax.f32 %v7013, 0.0
        %v7308 = vmax.f32 %v7015, 0.0
        %v7309 = vmax.f32 %v7017, 0.0
        %v7310 = vmax.f32 %v7019, 0.0
        %v7311 = vmax.f32 %v7023, 0.0
        %v7312 = vmax.f32 %v7025, 0.0
        %v7313 = vmax.f32 %v7027, 0.0
        %v7314 = vmax.f32 %v7029, 0.0
        %v7315 = vmax.f32 %v7033, 0.0
        %v7316 = vmax.f32 %v7035, 0.0
        %v7317 = vmax.f32 %v7037, 0.0
        %v7318 = vmax.f32 %v7039, 0.0
        %v7319 = vmax.f32 %v7043, 0.0
        %v7320 = vmax.f32 %v7045, 0.0
        %v7321 = vmax.f32 %v7047, 0.0
        %v7322 = vmax.f32 %v7049, 0.0
        %v7323 = vmax.f32 %v7053, 0.0
        %v7324 = vmax.f32 %v7055, 0.0
        %v7325 = vmax.f32 %v7057, 0.0
        %v7326 = vmax.f32 %v7059, 0.0
        %v7327 = vmax.f32 %v7063, 0.0
        %v7328 = vmax.f32 %v7065, 0.0
        %v7329 = vmax.f32 %v7067, 0.0
        %v7330 = vmax.f32 %v7069, 0.0
        %v7331 = vmax.f32 %v7073, 0.0
        %v7332 = vmax.f32 %v7075, 0.0
        %v7333 = vmax.f32 %v7077, 0.0
        %v7334 = vmax.f32 %v7079, 0.0
        %v7335 = vmax.f32 %v7083, 0.0
        %v7336 = vmax.f32 %v7085, 0.0
        %v7337 = vmax.f32 %v7087, 0.0
        %v7338 = vmax.f32 %v7089, 0.0
        %v7339 = vmax.f32 %v7093, 0.0
        %v7340 = vmax.f32 %v7095, 0.0
        %v7341 = vmax.f32 %v7097, 0.0
        %v7342 = vmax.f32 %v7099, 0.0
        %v7343 = vmax.f32 %v7103, 0.0
        %v7344 = vmax.f32 %v7105, 0.0
        %v7345 = vmax.f32 %v7107, 0.0
        %v7346 = vmax.f32 %v7109, 0.0
        %v7347 = vmax.f32 %v7113, 0.0
        %v7348 = vmax.f32 %v7115, 0.0
        %v7349 = vmax.f32 %v7117, 0.0
        %v7350 = vmax.f32 %v7119, 0.0
        %v7351 = vmax.f32 %v7123, 0.0
        %v7352 = vmax.f32 %v7125, 0.0
        %v7353 = vmax.f32 %v7127, 0.0
        %v7354 = vmax.f32 %v7129, 0.0
        %v7355 = vmax.f32 %v7133, 0.0
        %v7356 = vmax.f32 %v7135, 0.0
        %v7357 = vmax.f32 %v7137, 0.0
        %v7358 = vmax.f32 %v7139, 0.0
        %v7359 = vmax.f32 %v7143, 0.0
        %v7360 = vmax.f32 %v7145, 0.0
        %v7361 = vmax.f32 %v7147, 0.0
        %v7362 = vmax.f32 %v7149, 0.0
        %v7363 = vmax.f32 %v7153, 0.0
        %v7364 = vmax.f32 %v7155, 0.0
        %v7365 = vmax.f32 %v7157, 0.0
        %v7366 = vmax.f32 %v7159, 0.0
        %v7367 = vmax.f32 %v7163, 0.0
        %v7368 = vmax.f32 %v7165, 0.0
        %v7369 = vmax.f32 %v7167, 0.0
        %v7370 = vmax.f32 %v7169, 0.0
        %v7371 = vmax.f32 %v7173, 0.0
        %v7372 = vmax.f32 %v7175, 0.0
        %v7373 = vmax.f32 %v7177, 0.0
        %v7374 = vmax.f32 %v7179, 0.0
        %v7375 = vmax.f32 %v7183, 0.0
        %v7376 = vmax.f32 %v7185, 0.0
        %v7377 = vmax.f32 %v7187, 0.0
        %v7378 = vmax.f32 %v7189, 0.0
        %v7379 = vmax.f32 %v7193, 0.0
        %v7380 = vmax.f32 %v7195, 0.0
        %v7381 = vmax.f32 %v7197, 0.0
        %v7382 = vmax.f32 %v7199, 0.0
        %v7383 = vmax.f32 %v7203, 0.0
        %v7384 = vmax.f32 %v7205, 0.0
        %v7385 = vmax.f32 %v7207, 0.0
        %v7386 = vmax.f32 %v7209, 0.0
        %v7387 = vmax.f32 %v7213, 0.0
        %v7388 = vmax.f32 %v7215, 0.0
        %v7389 = vmax.f32 %v7217, 0.0
        %v7390 = vmax.f32 %v7219, 0.0
        %v7391 = vmax.f32 %v7223, 0.0
        %v7392 = vmax.f32 %v7225, 0.0
        %v7393 = vmax.f32 %v7227, 0.0
        %v7394 = vmax.f32 %v7229, 0.0
        %v7395 = vmax.f32 %v7233, 0.0
        %v7396 = vmax.f32 %v7235, 0.0
        %v7397 = vmax.f32 %v7237, 0.0
        %v7398 = vmax.f32 %v7239, 0.0
        %v7399 = vmax.f32 %v7243, 0.0
        %v7400 = vmax.f32 %v7245, 0.0
        %v7401 = vmax.f32 %v7247, 0.0
        %v7402 = vmax.f32 %v7249, 0.0
        %v7403 = vmax.f32 %v7253, 0.0
        %v7404 = vmax.f32 %v7255, 0.0
        %v7405 = vmax.f32 %v7257, 0.0
        %v7406 = vmax.f32 %v7259, 0.0
        %v7407 = vmax.f32 %v7263, 0.0
        %v7408 = vmax.f32 %v7265, 0.0
        %v7409 = vmax.f32 %v7267, 0.0
        %v7410 = vmax.f32 %v7269, 0.0
        %v7411 = vmax.f32 %v7273, 0.0
        %v7412 = vmax.f32 %v7275, 0.0
        %v7413 = vmax.f32 %v7277, 0.0
        %v7414 = vmax.f32 %v7279, 0.0
        %v7415 = vmax.f32 %v7283, 0.0
        %v7416 = vmax.f32 %v7285, 0.0
        %v7417 = vmax.f32 %v7287, 0.0
        %v7418 = vmax.f32 %v7289, 0.0
        %v7419 = vpack.c.bf16 %v7293, %v7291
        %v7420 = vpack.c.bf16 %v7294, %v7292
        %v7421 = vpack.c.bf16 %v7297, %v7295
        %v7422 = vpack.c.bf16 %v7298, %v7296
        %v7423 = vpack.c.bf16 %v7301, %v7299
        %v7424 = vpack.c.bf16 %v7302, %v7300
        %v7425 = vpack.c.bf16 %v7305, %v7303
        %v7426 = vpack.c.bf16 %v7306, %v7304
        %v7427 = vpack.c.bf16 %v7309, %v7307
        %v7428 = vpack.c.bf16 %v7310, %v7308
        %v7429 = vpack.c.bf16 %v7313, %v7311
        %v7430 = vpack.c.bf16 %v7314, %v7312
        %v7431 = vpack.c.bf16 %v7317, %v7315
        %v7432 = vpack.c.bf16 %v7318, %v7316
        %v7433 = vpack.c.bf16 %v7321, %v7319
        %v7434 = vpack.c.bf16 %v7322, %v7320
        %v7435 = vpack.c.bf16 %v7325, %v7323
        %v7436 = vpack.c.bf16 %v7326, %v7324
        %v7437 = vpack.c.bf16 %v7329, %v7327
        %v7438 = vpack.c.bf16 %v7330, %v7328
        %v7439 = vpack.c.bf16 %v7333, %v7331
        %v7440 = vpack.c.bf16 %v7334, %v7332
        %v7441 = vpack.c.bf16 %v7337, %v7335
        %v7442 = vpack.c.bf16 %v7338, %v7336
        %v7443 = vpack.c.bf16 %v7341, %v7339
        %v7444 = vpack.c.bf16 %v7342, %v7340
        %v7445 = vpack.c.bf16 %v7345, %v7343
        %v7446 = vpack.c.bf16 %v7346, %v7344
        %v7447 = vpack.c.bf16 %v7349, %v7347
        %v7448 = vpack.c.bf16 %v7350, %v7348
        %v7449 = vpack.c.bf16 %v7353, %v7351
        %v7450 = vpack.c.bf16 %v7354, %v7352
        %v7451 = vpack.c.bf16 %v7357, %v7355
        %v7452 = vpack.c.bf16 %v7358, %v7356
        %v7453 = vpack.c.bf16 %v7361, %v7359
        %v7454 = vpack.c.bf16 %v7362, %v7360
        %v7455 = vpack.c.bf16 %v7365, %v7363
        %v7456 = vpack.c.bf16 %v7366, %v7364
        %v7457 = vpack.c.bf16 %v7369, %v7367
        %v7458 = vpack.c.bf16 %v7370, %v7368
        %v7459 = vpack.c.bf16 %v7373, %v7371
        %v7460 = vpack.c.bf16 %v7374, %v7372
        %v7461 = vpack.c.bf16 %v7377, %v7375
        %v7462 = vpack.c.bf16 %v7378, %v7376
        %v7463 = vpack.c.bf16 %v7381, %v7379
        %v7464 = vpack.c.bf16 %v7382, %v7380
        %v7465 = vpack.c.bf16 %v7385, %v7383
        %v7466 = vpack.c.bf16 %v7386, %v7384
        %v7467 = vpack.c.bf16 %v7389, %v7387
        %v7468 = vpack.c.bf16 %v7390, %v7388
        %v7469 = vpack.c.bf16 %v7393, %v7391
        %v7470 = vpack.c.bf16 %v7394, %v7392
        %v7471 = vpack.c.bf16 %v7397, %v7395
        %v7472 = vpack.c.bf16 %v7398, %v7396
        %v7473 = vpack.c.bf16 %v7401, %v7399
        %v7474 = vpack.c.bf16 %v7402, %v7400
        %v7475 = vpack.c.bf16 %v7405, %v7403
        %v7476 = vpack.c.bf16 %v7406, %v7404
        %v7477 = vpack.c.bf16 %v7409, %v7407
        %v7478 = vpack.c.bf16 %v7410, %v7408
        %v7479 = vpack.c.bf16 %v7413, %v7411
        %v7480 = vpack.c.bf16 %v7414, %v7412
        %v7481 = vpack.c.bf16 %v7417, %v7415
        %v7482 = vpack.c.bf16 %v7418, %v7416
        %v7483 = vld [vmem:[%s18] sm:$0xff]
        %v7484 = vld [vmem:[%s18 + $0x8] sm:$0xf]
        %v7485 = vld [vmem:[%s18 + $0xc] sm:$0xff]
        %v7486 = vld [vmem:[%s18 + $0x14] sm:$0xf]
        %v7487 = vld [vmem:[%s18 + $0x18] sm:$0xff]
        %v7488 = vld [vmem:[%s18 + $0x20] sm:$0xf]
        %v7489 = vld [vmem:[%s18 + $0x24] sm:$0xff]
        %v7490 = vld [vmem:[%s18 + $0x2c] sm:$0xf]
        %v7491 = vld [vmem:[%s18 + $0x30] sm:$0xff]
        %v7492 = vld [vmem:[%s18 + $0x38] sm:$0xf]
        %v7493 = vld [vmem:[%s18 + $0x3c] sm:$0xff]
        %v7494 = vld [vmem:[%s18 + $0x44] sm:$0xf]
        %v7495 = vld [vmem:[%s18 + $0x48] sm:$0xff]
        %v7496 = vld [vmem:[%s18 + $0x50] sm:$0xf]
        %v7497 = vld [vmem:[%s18 + $0x54] sm:$0xff]
        %v7498 = vld [vmem:[%s18 + $0x5c] sm:$0xf]
        %v7499 = vld [vmem:[%s18 + $0x60] sm:$0xff]
        %v7500 = vld [vmem:[%s18 + $0x68] sm:$0xf]
        %v7501 = vld [vmem:[%s18 + $0x6c] sm:$0xff]
        %v7502 = vld [vmem:[%s18 + $0x74] sm:$0xf]
        %v7503 = vld [vmem:[%s18 + $0x78] sm:$0xff]
        %v7504 = vld [vmem:[%s18 + $0x80] sm:$0xf]
        %v7505 = vld [vmem:[%s18 + $0x84] sm:$0xff]
        %v7506 = vld [vmem:[%s18 + $0x8c] sm:$0xf]
        %v7507 = vld [vmem:[%s18 + $0x90] sm:$0xff]
        %v7508 = vld [vmem:[%s18 + $0x98] sm:$0xf]
        %v7509 = vld [vmem:[%s18 + $0x9c] sm:$0xff]
        %v7510 = vld [vmem:[%s18 + $0xa4] sm:$0xf]
        %v7511 = vld [vmem:[%s18 + $0xa8] sm:$0xff]
        %v7512 = vld [vmem:[%s18 + $0xb0] sm:$0xf]
        %v7513 = vld [vmem:[%s18 + $0xb4] sm:$0xff]
        %v7514 = vld [vmem:[%s18 + $0xbc] sm:$0xf]
        %v7515 = vld [vmem:[%s18 + $0xc0] sm:$0xff]
        %v7516 = vld [vmem:[%s18 + $0xc8] sm:$0xf]
        %v7517 = vld [vmem:[%s18 + $0xcc] sm:$0xff]
        %v7518 = vld [vmem:[%s18 + $0xd4] sm:$0xf]
        %v7519 = vld [vmem:[%s18 + $0xd8] sm:$0xff]
        %v7520 = vld [vmem:[%s18 + $0xe0] sm:$0xf]
        %v7521 = vld [vmem:[%s18 + $0xe4] sm:$0xff]
        %v7522 = vld [vmem:[%s18 + $0xec] sm:$0xf]
        %v7523 = vld [vmem:[%s18 + $0xf0] sm:$0xff]
        %v7524 = vld [vmem:[%s18 + $0xf8] sm:$0xf]
        %v7525 = vld [vmem:[%s18 + $0xfc] sm:$0xff]
        %v7526 = vld [vmem:[%s18 + $0x104] sm:$0xf]
        %v7527 = vld [vmem:[%s18 + $0x108] sm:$0xff]
        %v7528 = vld [vmem:[%s18 + $0x110] sm:$0xf]
        %v7529 = vld [vmem:[%s18 + $0x114] sm:$0xff]
        %v7530 = vld [vmem:[%s18 + $0x11c] sm:$0xf]
        %v7531 = vld [vmem:[%s18 + $0x120] sm:$0xff]
        %v7532 = vld [vmem:[%s18 + $0x128] sm:$0xf]
        %v7533 = vld [vmem:[%s18 + $0x12c] sm:$0xff]
        %v7534 = vld [vmem:[%s18 + $0x134] sm:$0xf]
        %v7535 = vld [vmem:[%s18 + $0x138] sm:$0xff]
        %v7536 = vld [vmem:[%s18 + $0x140] sm:$0xf]
        %v7537 = vld [vmem:[%s18 + $0x144] sm:$0xff]
        %v7538 = vld [vmem:[%s18 + $0x14c] sm:$0xf]
        %v7539 = vld [vmem:[%s18 + $0x150] sm:$0xff]
        %v7540 = vld [vmem:[%s18 + $0x158] sm:$0xf]
        %v7541 = vld [vmem:[%s18 + $0x15c] sm:$0xff]
        %v7542 = vld [vmem:[%s18 + $0x164] sm:$0xf]
        %v7543 = vld [vmem:[%s18 + $0x168] sm:$0xff]
        %v7544 = vld [vmem:[%s18 + $0x170] sm:$0xf]
        %v7545 = vld [vmem:[%s18 + $0x174] sm:$0xff]
        %v7546 = vld [vmem:[%s18 + $0x17c] sm:$0xf]
        %v7547 = vld [vmem:[%s19] sm:$0x7]
        %v7549 = vlaneseq
        %v7550 = vshrl.u32 %v7549, 7
        %v7551 = vsub.s32 0, %v7550
        %v7552 = vrot.slane %v7547, %v7551
        %v7553 = vlaneseq
        %v7554 = vshrl.u32 %v7553, 7
        %v7555 = vsub.s32 1, %v7554
        %v7556 = vrot.slane %v7547, %v7555
        %v7557 = vlaneseq
        %v7558 = vshrl.u32 %v7557, 7
        %v7559 = vsub.s32 2, %v7558
        %v7560 = vrot.slane %v7547, %v7559
        %v7628 = vunpack.c.l.b16 %v7483
        %v7629 = vunpack.c.h.b16 %v7483
        %v7630 = vunpack.c.l.b16 %v7484
        %v7631 = vunpack.c.l.b16 %v7485
        %v7632 = vunpack.c.h.b16 %v7485
        %v7633 = vunpack.c.l.b16 %v7486
        %v7634 = vunpack.c.l.b16 %v7487
        %v7635 = vunpack.c.h.b16 %v7487
        %v7636 = vunpack.c.l.b16 %v7488
        %v7637 = vunpack.c.l.b16 %v7489
        %v7638 = vunpack.c.h.b16 %v7489
        %v7639 = vunpack.c.l.b16 %v7490
        %v7640 = vunpack.c.l.b16 %v7491
        %v7641 = vunpack.c.h.b16 %v7491
        %v7642 = vunpack.c.l.b16 %v7492
        %v7643 = vunpack.c.l.b16 %v7493
        %v7644 = vunpack.c.h.b16 %v7493
        %v7645 = vunpack.c.l.b16 %v7494
        %v7646 = vunpack.c.l.b16 %v7495
        %v7647 = vunpack.c.h.b16 %v7495
        %v7648 = vunpack.c.l.b16 %v7496
        %v7649 = vunpack.c.l.b16 %v7497
        %v7650 = vunpack.c.h.b16 %v7497
        %v7651 = vunpack.c.l.b16 %v7498
        %v7652 = vunpack.c.l.b16 %v7499
        %v7653 = vunpack.c.h.b16 %v7499
        %v7654 = vunpack.c.l.b16 %v7500
        %v7655 = vunpack.c.l.b16 %v7501
        %v7656 = vunpack.c.h.b16 %v7501
        %v7657 = vunpack.c.l.b16 %v7502
        %v7658 = vunpack.c.l.b16 %v7503
        %v7659 = vunpack.c.h.b16 %v7503
        %v7660 = vunpack.c.l.b16 %v7504
        %v7661 = vunpack.c.l.b16 %v7505
        %v7662 = vunpack.c.h.b16 %v7505
        %v7663 = vunpack.c.l.b16 %v7506
        %v7664 = vunpack.c.l.b16 %v7507
        %v7665 = vunpack.c.h.b16 %v7507
        %v7666 = vunpack.c.l.b16 %v7508
        %v7667 = vunpack.c.l.b16 %v7509
        %v7668 = vunpack.c.h.b16 %v7509
        %v7669 = vunpack.c.l.b16 %v7510
        %v7670 = vunpack.c.l.b16 %v7511
        %v7671 = vunpack.c.h.b16 %v7511
        %v7672 = vunpack.c.l.b16 %v7512
        %v7673 = vunpack.c.l.b16 %v7513
        %v7674 = vunpack.c.h.b16 %v7513
        %v7675 = vunpack.c.l.b16 %v7514
        %v7676 = vunpack.c.l.b16 %v7515
        %v7677 = vunpack.c.h.b16 %v7515
        %v7678 = vunpack.c.l.b16 %v7516
        %v7679 = vunpack.c.l.b16 %v7517
        %v7680 = vunpack.c.h.b16 %v7517
        %v7681 = vunpack.c.l.b16 %v7518
        %v7682 = vunpack.c.l.b16 %v7519
        %v7683 = vunpack.c.h.b16 %v7519
        %v7684 = vunpack.c.l.b16 %v7520
        %v7685 = vunpack.c.l.b16 %v7521
        %v7686 = vunpack.c.h.b16 %v7521
        %v7687 = vunpack.c.l.b16 %v7522
        %v7688 = vunpack.c.l.b16 %v7523
        %v7689 = vunpack.c.h.b16 %v7523
        %v7690 = vunpack.c.l.b16 %v7524
        %v7691 = vunpack.c.l.b16 %v7525
        %v7692 = vunpack.c.h.b16 %v7525
        %v7693 = vunpack.c.l.b16 %v7526
        %v7694 = vunpack.c.l.b16 %v7527
        %v7695 = vunpack.c.h.b16 %v7527
        %v7696 = vunpack.c.l.b16 %v7528
        %v7697 = vunpack.c.l.b16 %v7529
        %v7698 = vunpack.c.h.b16 %v7529
        %v7699 = vunpack.c.l.b16 %v7530
        %v7700 = vunpack.c.l.b16 %v7531
        %v7701 = vunpack.c.h.b16 %v7531
        %v7702 = vunpack.c.l.b16 %v7532
        %v7703 = vunpack.c.l.b16 %v7533
        %v7704 = vunpack.c.h.b16 %v7533
        %v7705 = vunpack.c.l.b16 %v7534
        %v7706 = vunpack.c.l.b16 %v7535
        %v7707 = vunpack.c.h.b16 %v7535
        %v7708 = vunpack.c.l.b16 %v7536
        %v7709 = vunpack.c.l.b16 %v7537
        %v7710 = vunpack.c.h.b16 %v7537
        %v7711 = vunpack.c.l.b16 %v7538
        %v7712 = vunpack.c.l.b16 %v7539
        %v7713 = vunpack.c.h.b16 %v7539
        %v7714 = vunpack.c.l.b16 %v7540
        %v7715 = vunpack.c.l.b16 %v7541
        %v7716 = vunpack.c.h.b16 %v7541
        %v7717 = vunpack.c.l.b16 %v7542
        %v7718 = vunpack.c.l.b16 %v7543
        %v7719 = vunpack.c.h.b16 %v7543
        %v7720 = vunpack.c.l.b16 %v7544
        %v7721 = vunpack.c.l.b16 %v7545
        %v7722 = vunpack.c.h.b16 %v7545
        %v7723 = vunpack.c.l.b16 %v7546
        %v7724 = vpack.c.b16 %v7631, %v7628
        %v7725 = vpack.c.b16 %v7632, %v7629
        %v7726 = vpack.c.b16 %v7633, %v7630
        %v7727 = vpack.c.b16 %v7637, %v7634
        %v7728 = vpack.c.b16 %v7638, %v7635
        %v7729 = vpack.c.b16 %v7639, %v7636
        %v7730 = vpack.c.b16 %v7643, %v7640
        %v7731 = vpack.c.b16 %v7644, %v7641
        %v7732 = vpack.c.b16 %v7645, %v7642
        %v7733 = vpack.c.b16 %v7649, %v7646
        %v7734 = vpack.c.b16 %v7650, %v7647
        %v7735 = vpack.c.b16 %v7651, %v7648
        %v7736 = vpack.c.b16 %v7655, %v7652
        %v7737 = vpack.c.b16 %v7656, %v7653
        %v7738 = vpack.c.b16 %v7657, %v7654
        %v7739 = vpack.c.b16 %v7661, %v7658
        %v7740 = vpack.c.b16 %v7662, %v7659
        %v7741 = vpack.c.b16 %v7663, %v7660
        %v7742 = vpack.c.b16 %v7667, %v7664
        %v7743 = vpack.c.b16 %v7668, %v7665
        %v7744 = vpack.c.b16 %v7669, %v7666
        %v7745 = vpack.c.b16 %v7673, %v7670
        %v7746 = vpack.c.b16 %v7674, %v7671
        %v7747 = vpack.c.b16 %v7675, %v7672
        %v7748 = vpack.c.b16 %v7679, %v7676
        %v7749 = vpack.c.b16 %v7680, %v7677
        %v7750 = vpack.c.b16 %v7681, %v7678
        %v7751 = vpack.c.b16 %v7685, %v7682
        %v7752 = vpack.c.b16 %v7686, %v7683
        %v7753 = vpack.c.b16 %v7687, %v7684
        %v7754 = vpack.c.b16 %v7691, %v7688
        %v7755 = vpack.c.b16 %v7692, %v7689
        %v7756 = vpack.c.b16 %v7693, %v7690
        %v7757 = vpack.c.b16 %v7697, %v7694
        %v7758 = vpack.c.b16 %v7698, %v7695
        %v7759 = vpack.c.b16 %v7699, %v7696
        %v7760 = vpack.c.b16 %v7703, %v7700
        %v7761 = vpack.c.b16 %v7704, %v7701
        %v7762 = vpack.c.b16 %v7705, %v7702
        %v7763 = vpack.c.b16 %v7709, %v7706
        %v7764 = vpack.c.b16 %v7710, %v7707
        %v7765 = vpack.c.b16 %v7711, %v7708
        %v7766 = vpack.c.b16 %v7715, %v7712
        %v7767 = vpack.c.b16 %v7716, %v7713
        %v7768 = vpack.c.b16 %v7717, %v7714
        %v7769 = vpack.c.b16 %v7721, %v7718
        %v7770 = vpack.c.b16 %v7722, %v7719
        %v7771 = vpack.c.b16 %v7723, %v7720
        %7820 = vmatprep.subr.bf16.mxu0 %v7746
        %7821 = vmatpush1.bf16.msra.mxu0 %v7745
        %7822 = vmatprep.subr.bf16.mxu0 %v7743
        %7823 = vmatpush1.bf16.msra.mxu0 %v7742
        %7824 = vmatprep.subr.bf16.mxu0 %v7740
        %7825 = vmatpush1.bf16.msra.mxu0 %v7739
        %7826 = vmatprep.subr.bf16.mxu0 %v7737
        %7827 = vmatpush1.bf16.msra.mxu0 %v7736
        %7828 = vmatprep.subr.bf16.mxu0 %v7734
        %7829 = vmatpush1.bf16.msra.mxu0 %v7733
        %7830 = vmatprep.subr.bf16.mxu0 %v7731
        %7831 = vmatpush1.bf16.msra.mxu0 %v7730
        %7832 = vmatprep.subr.bf16.mxu0 %v7728
        %7833 = vmatpush1.bf16.msra.mxu0 %v7727
        %7834 = vmatprep.subr.bf16.mxu0 %v7725
        %7835 = vmatpush1.bf16.msra.mxu0 %v7724
        %7836 = vmatprep.subr.bf16.mxu0 %v7770
        %7837 = vmatpush2.bf16.msra.mxu0 %v7769
        %7838 = vmatprep.subr.bf16.mxu0 %v7767
        %7839 = vmatpush2.bf16.msra.mxu0 %v7766
        %7840 = vmatprep.subr.bf16.mxu0 %v7764
        %7841 = vmatpush2.bf16.msra.mxu0 %v7763
        %7842 = vmatprep.subr.bf16.mxu0 %v7761
        %7843 = vmatpush2.bf16.msra.mxu0 %v7760
        %7844 = vmatprep.subr.bf16.mxu0 %v7758
        %7845 = vmatpush2.bf16.msra.mxu0 %v7757
        %7846 = vmatprep.subr.bf16.mxu0 %v7755
        %7847 = vmatpush2.bf16.msra.mxu0 %v7754
        %7848 = vmatprep.subr.bf16.mxu0 %v7752
        %7849 = vmatpush2.bf16.msra.mxu0 %v7751
        %7850 = vmatprep.subr.bf16.mxu0 %v7749
        %7851 = vmatpush2.bf16.msra.mxu0 %v7748
        %7852 = vmatprep.mubr.bf16.mxu0 %v7420
        %7853 = vmatmul.mubr.bf16.gmra.mxu0 %v7419
        %v7854 = vpop.f32.mrf.mxu0
        %v7855 = vadd.f32 %v7552, %v7854
        %v7856 = vpop.f32.mrf.mxu0
        %v7857 = vadd.f32 %v7556, %v7856
        %v7858 = vpop.f32.mrf.mxu0
        %v7859 = vadd.f32 %v7552, %v7858
        %v7860 = vpop.f32.mrf.mxu0
        %v7861 = vadd.f32 %v7556, %v7860
        %7862 = vmatprep.mubr.bf16.mxu0 %v7422
        %7863 = vmatmul.mubr.bf16.gmra.mxu0 %v7421
        %v7864 = vpop.f32.mrf.mxu0
        %v7865 = vadd.f32 %v7552, %v7864
        %v7866 = vpop.f32.mrf.mxu0
        %v7867 = vadd.f32 %v7556, %v7866
        %v7868 = vpop.f32.mrf.mxu0
        %v7869 = vadd.f32 %v7552, %v7868
        %v7870 = vpop.f32.mrf.mxu0
        %v7871 = vadd.f32 %v7556, %v7870
        %7872 = vmatprep.mubr.bf16.mxu0 %v7424
        %7873 = vmatmul.mubr.bf16.gmra.mxu0 %v7423
        %v7874 = vpop.f32.mrf.mxu0
        %v7875 = vadd.f32 %v7552, %v7874
        %v7876 = vpop.f32.mrf.mxu0
        %v7877 = vadd.f32 %v7556, %v7876
        %v7878 = vpop.f32.mrf.mxu0
        %v7879 = vadd.f32 %v7552, %v7878
        %v7880 = vpop.f32.mrf.mxu0
        %v7881 = vadd.f32 %v7556, %v7880
        %7882 = vmatprep.mubr.bf16.mxu0 %v7426
        %7883 = vmatmul.mubr.bf16.gmra.mxu0 %v7425
        %v7884 = vpop.f32.mrf.mxu0
        %v7885 = vadd.f32 %v7552, %v7884
        %v7886 = vpop.f32.mrf.mxu0
        %v7887 = vadd.f32 %v7556, %v7886
        %v7888 = vpop.f32.mrf.mxu0
        %v7889 = vadd.f32 %v7552, %v7888
        %v7890 = vpop.f32.mrf.mxu0
        %v7891 = vadd.f32 %v7556, %v7890
        %7892 = vmatprep.mubr.bf16.mxu0 %v7428
        %7893 = vmatmul.mubr.bf16.gmra.mxu0 %v7427
        %v7894 = vpop.f32.mrf.mxu0
        %v7895 = vadd.f32 %v7552, %v7894
        %v7896 = vpop.f32.mrf.mxu0
        %v7897 = vadd.f32 %v7556, %v7896
        %v7898 = vpop.f32.mrf.mxu0
        %v7899 = vadd.f32 %v7552, %v7898
        %v7900 = vpop.f32.mrf.mxu0
        %v7901 = vadd.f32 %v7556, %v7900
        %7902 = vmatprep.mubr.bf16.mxu0 %v7430
        %7903 = vmatmul.mubr.bf16.gmra.mxu0 %v7429
        %v7904 = vpop.f32.mrf.mxu0
        %v7905 = vadd.f32 %v7552, %v7904
        %v7906 = vpop.f32.mrf.mxu0
        %v7907 = vadd.f32 %v7556, %v7906
        %v7908 = vpop.f32.mrf.mxu0
        %v7909 = vadd.f32 %v7552, %v7908
        %v7910 = vpop.f32.mrf.mxu0
        %v7911 = vadd.f32 %v7556, %v7910
        %7912 = vmatprep.mubr.bf16.mxu0 %v7432
        %7913 = vmatmul.mubr.bf16.gmra.mxu0 %v7431
        %v7914 = vpop.f32.mrf.mxu0
        %v7915 = vadd.f32 %v7552, %v7914
        %v7916 = vpop.f32.mrf.mxu0
        %v7917 = vadd.f32 %v7556, %v7916
        %v7918 = vpop.f32.mrf.mxu0
        %v7919 = vadd.f32 %v7552, %v7918
        %v7920 = vpop.f32.mrf.mxu0
        %v7921 = vadd.f32 %v7556, %v7920
        %7922 = vmatprep.mubr.bf16.mxu0 %v7434
        %7923 = vmatmul.mubr.bf16.gmra.mxu0 %v7433
        %v7924 = vpop.f32.mrf.mxu0
        %v7925 = vadd.f32 %v7552, %v7924
        %v7926 = vpop.f32.mrf.mxu0
        %v7927 = vadd.f32 %v7556, %v7926
        %v7928 = vpop.f32.mrf.mxu0
        %v7929 = vadd.f32 %v7552, %v7928
        %v7930 = vpop.f32.mrf.mxu0
        %v7931 = vadd.f32 %v7556, %v7930
        %7932 = vmatprep.mubr.bf16.mxu0 %v7436
        %7933 = vmatmul.mubr.bf16.gmra.mxu0 %v7435
        %v7934 = vpop.f32.mrf.mxu0
        %v7935 = vadd.f32 %v7552, %v7934
        %v7936 = vpop.f32.mrf.mxu0
        %v7937 = vadd.f32 %v7556, %v7936
        %v7938 = vpop.f32.mrf.mxu0
        %v7939 = vadd.f32 %v7552, %v7938
        %v7940 = vpop.f32.mrf.mxu0
        %v7941 = vadd.f32 %v7556, %v7940
        %7942 = vmatprep.mubr.bf16.mxu0 %v7438
        %7943 = vmatmul.mubr.bf16.gmra.mxu0 %v7437
        %v7944 = vpop.f32.mrf.mxu0
        %v7945 = vadd.f32 %v7552, %v7944
        %v7946 = vpop.f32.mrf.mxu0
        %v7947 = vadd.f32 %v7556, %v7946
        %v7948 = vpop.f32.mrf.mxu0
        %v7949 = vadd.f32 %v7552, %v7948
        %v7950 = vpop.f32.mrf.mxu0
        %v7951 = vadd.f32 %v7556, %v7950
        %7952 = vmatprep.mubr.bf16.mxu0 %v7440
        %7953 = vmatmul.mubr.bf16.gmra.mxu0 %v7439
        %v7954 = vpop.f32.mrf.mxu0
        %v7955 = vadd.f32 %v7552, %v7954
        %v7956 = vpop.f32.mrf.mxu0
        %v7957 = vadd.f32 %v7556, %v7956
        %v7958 = vpop.f32.mrf.mxu0
        %v7959 = vadd.f32 %v7552, %v7958
        %v7960 = vpop.f32.mrf.mxu0
        %v7961 = vadd.f32 %v7556, %v7960
        %7962 = vmatprep.mubr.bf16.mxu0 %v7442
        %7963 = vmatmul.mubr.bf16.gmra.mxu0 %v7441
        %v7964 = vpop.f32.mrf.mxu0
        %v7965 = vadd.f32 %v7552, %v7964
        %v7966 = vpop.f32.mrf.mxu0
        %v7967 = vadd.f32 %v7556, %v7966
        %v7968 = vpop.f32.mrf.mxu0
        %v7969 = vadd.f32 %v7552, %v7968
        %v7970 = vpop.f32.mrf.mxu0
        %v7971 = vadd.f32 %v7556, %v7970
        %7972 = vmatprep.mubr.bf16.mxu0 %v7444
        %7973 = vmatmul.mubr.bf16.gmra.mxu0 %v7443
        %v7974 = vpop.f32.mrf.mxu0
        %v7975 = vadd.f32 %v7552, %v7974
        %v7976 = vpop.f32.mrf.mxu0
        %v7977 = vadd.f32 %v7556, %v7976
        %v7978 = vpop.f32.mrf.mxu0
        %v7979 = vadd.f32 %v7552, %v7978
        %v7980 = vpop.f32.mrf.mxu0
        %v7981 = vadd.f32 %v7556, %v7980
        %7982 = vmatprep.mubr.bf16.mxu0 %v7446
        %7983 = vmatmul.mubr.bf16.gmra.mxu0 %v7445
        %v7984 = vpop.f32.mrf.mxu0
        %v7985 = vadd.f32 %v7552, %v7984
        %v7986 = vpop.f32.mrf.mxu0
        %v7987 = vadd.f32 %v7556, %v7986
        %v7988 = vpop.f32.mrf.mxu0
        %v7989 = vadd.f32 %v7552, %v7988
        %v7990 = vpop.f32.mrf.mxu0
        %v7991 = vadd.f32 %v7556, %v7990
        %7992 = vmatprep.mubr.bf16.mxu0 %v7448
        %7993 = vmatmul.mubr.bf16.gmra.mxu0 %v7447
        %v7994 = vpop.f32.mrf.mxu0
        %v7995 = vadd.f32 %v7552, %v7994
        %v7996 = vpop.f32.mrf.mxu0
        %v7997 = vadd.f32 %v7556, %v7996
        %v7998 = vpop.f32.mrf.mxu0
        %v7999 = vadd.f32 %v7552, %v7998
        %v8000 = vpop.f32.mrf.mxu0
        %v8001 = vadd.f32 %v7556, %v8000
        %8002 = vmatprep.mubr.bf16.mxu0 %v7450
        %8003 = vmatmul.mubr.bf16.gmra.mxu0 %v7449
        %v8004 = vpop.f32.mrf.mxu0
        %v8005 = vadd.f32 %v7552, %v8004
        %v8006 = vpop.f32.mrf.mxu0
        %v8007 = vadd.f32 %v7556, %v8006
        %v8008 = vpop.f32.mrf.mxu0
        %v8009 = vadd.f32 %v7552, %v8008
        %v8010 = vpop.f32.mrf.mxu0
        %v8011 = vadd.f32 %v7556, %v8010
        %8012 = vmatprep.mubr.bf16.mxu0 %v7452
        %8013 = vmatmul.mubr.bf16.gmra.mxu0 %v7451
        %v8014 = vpop.f32.mrf.mxu0
        %v8015 = vadd.f32 %v7552, %v8014
        %v8016 = vpop.f32.mrf.mxu0
        %v8017 = vadd.f32 %v7556, %v8016
        %v8018 = vpop.f32.mrf.mxu0
        %v8019 = vadd.f32 %v7552, %v8018
        %v8020 = vpop.f32.mrf.mxu0
        %v8021 = vadd.f32 %v7556, %v8020
        %8022 = vmatprep.mubr.bf16.mxu0 %v7454
        %8023 = vmatmul.mubr.bf16.gmra.mxu0 %v7453
        %v8024 = vpop.f32.mrf.mxu0
        %v8025 = vadd.f32 %v7552, %v8024
        %v8026 = vpop.f32.mrf.mxu0
        %v8027 = vadd.f32 %v7556, %v8026
        %v8028 = vpop.f32.mrf.mxu0
        %v8029 = vadd.f32 %v7552, %v8028
        %v8030 = vpop.f32.mrf.mxu0
        %v8031 = vadd.f32 %v7556, %v8030
        %8032 = vmatprep.mubr.bf16.mxu0 %v7456
        %8033 = vmatmul.mubr.bf16.gmra.mxu0 %v7455
        %v8034 = vpop.f32.mrf.mxu0
        %v8035 = vadd.f32 %v7552, %v8034
        %v8036 = vpop.f32.mrf.mxu0
        %v8037 = vadd.f32 %v7556, %v8036
        %v8038 = vpop.f32.mrf.mxu0
        %v8039 = vadd.f32 %v7552, %v8038
        %v8040 = vpop.f32.mrf.mxu0
        %v8041 = vadd.f32 %v7556, %v8040
        %8042 = vmatprep.mubr.bf16.mxu0 %v7458
        %8043 = vmatmul.mubr.bf16.gmra.mxu0 %v7457
        %v8044 = vpop.f32.mrf.mxu0
        %v8045 = vadd.f32 %v7552, %v8044
        %v8046 = vpop.f32.mrf.mxu0
        %v8047 = vadd.f32 %v7556, %v8046
        %v8048 = vpop.f32.mrf.mxu0
        %v8049 = vadd.f32 %v7552, %v8048
        %v8050 = vpop.f32.mrf.mxu0
        %v8051 = vadd.f32 %v7556, %v8050
        %8052 = vmatprep.mubr.bf16.mxu0 %v7460
        %8053 = vmatmul.mubr.bf16.gmra.mxu0 %v7459
        %v8054 = vpop.f32.mrf.mxu0
        %v8055 = vadd.f32 %v7552, %v8054
        %v8056 = vpop.f32.mrf.mxu0
        %v8057 = vadd.f32 %v7556, %v8056
        %v8058 = vpop.f32.mrf.mxu0
        %v8059 = vadd.f32 %v7552, %v8058
        %v8060 = vpop.f32.mrf.mxu0
        %v8061 = vadd.f32 %v7556, %v8060
        %8062 = vmatprep.mubr.bf16.mxu0 %v7462
        %8063 = vmatmul.mubr.bf16.gmra.mxu0 %v7461
        %v8064 = vpop.f32.mrf.mxu0
        %v8065 = vadd.f32 %v7552, %v8064
        %v8066 = vpop.f32.mrf.mxu0
        %v8067 = vadd.f32 %v7556, %v8066
        %v8068 = vpop.f32.mrf.mxu0
        %v8069 = vadd.f32 %v7552, %v8068
        %v8070 = vpop.f32.mrf.mxu0
        %v8071 = vadd.f32 %v7556, %v8070
        %8072 = vmatprep.mubr.bf16.mxu0 %v7464
        %8073 = vmatmul.mubr.bf16.gmra.mxu0 %v7463
        %v8074 = vpop.f32.mrf.mxu0
        %v8075 = vadd.f32 %v7552, %v8074
        %v8076 = vpop.f32.mrf.mxu0
        %v8077 = vadd.f32 %v7556, %v8076
        %v8078 = vpop.f32.mrf.mxu0
        %v8079 = vadd.f32 %v7552, %v8078
        %v8080 = vpop.f32.mrf.mxu0
        %v8081 = vadd.f32 %v7556, %v8080
        %8082 = vmatprep.mubr.bf16.mxu0 %v7466
        %8083 = vmatmul.mubr.bf16.gmra.mxu0 %v7465
        %v8084 = vpop.f32.mrf.mxu0
        %v8085 = vadd.f32 %v7552, %v8084
        %v8086 = vpop.f32.mrf.mxu0
        %v8087 = vadd.f32 %v7556, %v8086
        %v8088 = vpop.f32.mrf.mxu0
        %v8089 = vadd.f32 %v7552, %v8088
        %v8090 = vpop.f32.mrf.mxu0
        %v8091 = vadd.f32 %v7556, %v8090
        %8092 = vmatprep.mubr.bf16.mxu0 %v7468
        %8093 = vmatmul.mubr.bf16.gmra.mxu0 %v7467
        %v8094 = vpop.f32.mrf.mxu0
        %v8095 = vadd.f32 %v7552, %v8094
        %v8096 = vpop.f32.mrf.mxu0
        %v8097 = vadd.f32 %v7556, %v8096
        %v8098 = vpop.f32.mrf.mxu0
        %v8099 = vadd.f32 %v7552, %v8098
        %v8100 = vpop.f32.mrf.mxu0
        %v8101 = vadd.f32 %v7556, %v8100
        %8102 = vmatprep.mubr.bf16.mxu0 %v7470
        %8103 = vmatmul.mubr.bf16.gmra.mxu0 %v7469
        %v8104 = vpop.f32.mrf.mxu0
        %v8105 = vadd.f32 %v7552, %v8104
        %v8106 = vpop.f32.mrf.mxu0
        %v8107 = vadd.f32 %v7556, %v8106
        %v8108 = vpop.f32.mrf.mxu0
        %v8109 = vadd.f32 %v7552, %v8108
        %v8110 = vpop.f32.mrf.mxu0
        %v8111 = vadd.f32 %v7556, %v8110
        %8112 = vmatprep.mubr.bf16.mxu0 %v7472
        %8113 = vmatmul.mubr.bf16.gmra.mxu0 %v7471
        %v8114 = vpop.f32.mrf.mxu0
        %v8115 = vadd.f32 %v7552, %v8114
        %v8116 = vpop.f32.mrf.mxu0
        %v8117 = vadd.f32 %v7556, %v8116
        %v8118 = vpop.f32.mrf.mxu0
        %v8119 = vadd.f32 %v7552, %v8118
        %v8120 = vpop.f32.mrf.mxu0
        %v8121 = vadd.f32 %v7556, %v8120
        %8122 = vmatprep.mubr.bf16.mxu0 %v7474
        %8123 = vmatmul.mubr.bf16.gmra.mxu0 %v7473
        %v8124 = vpop.f32.mrf.mxu0
        %v8125 = vadd.f32 %v7552, %v8124
        %v8126 = vpop.f32.mrf.mxu0
        %v8127 = vadd.f32 %v7556, %v8126
        %v8128 = vpop.f32.mrf.mxu0
        %v8129 = vadd.f32 %v7552, %v8128
        %v8130 = vpop.f32.mrf.mxu0
        %v8131 = vadd.f32 %v7556, %v8130
        %8132 = vmatprep.mubr.bf16.mxu0 %v7476
        %8133 = vmatmul.mubr.bf16.gmra.mxu0 %v7475
        %v8134 = vpop.f32.mrf.mxu0
        %v8135 = vadd.f32 %v7552, %v8134
        %v8136 = vpop.f32.mrf.mxu0
        %v8137 = vadd.f32 %v7556, %v8136
        %v8138 = vpop.f32.mrf.mxu0
        %v8139 = vadd.f32 %v7552, %v8138
        %v8140 = vpop.f32.mrf.mxu0
        %v8141 = vadd.f32 %v7556, %v8140
        %8142 = vmatprep.mubr.bf16.mxu0 %v7478
        %8143 = vmatmul.mubr.bf16.gmra.mxu0 %v7477
        %v8144 = vpop.f32.mrf.mxu0
        %v8145 = vadd.f32 %v7552, %v8144
        %v8146 = vpop.f32.mrf.mxu0
        %v8147 = vadd.f32 %v7556, %v8146
        %v8148 = vpop.f32.mrf.mxu0
        %v8149 = vadd.f32 %v7552, %v8148
        %v8150 = vpop.f32.mrf.mxu0
        %v8151 = vadd.f32 %v7556, %v8150
        %8152 = vmatprep.mubr.bf16.mxu0 %v7480
        %8153 = vmatmul.mubr.bf16.gmra.mxu0 %v7479
        %v8154 = vpop.f32.mrf.mxu0
        %v8155 = vadd.f32 %v7552, %v8154
        %v8156 = vpop.f32.mrf.mxu0
        %v8157 = vadd.f32 %v7556, %v8156
        %v8158 = vpop.f32.mrf.mxu0
        %v8159 = vadd.f32 %v7552, %v8158
        %v8160 = vpop.f32.mrf.mxu0
        %v8161 = vadd.f32 %v7556, %v8160
        %8162 = vmatprep.mubr.bf16.mxu0 %v7482
        %8163 = vmatmul.mubr.bf16.gmra.mxu0 %v7481
        %v8164 = vpop.f32.mrf.mxu0
        %v8165 = vadd.f32 %v7552, %v8164
        %v8166 = vpop.f32.mrf.mxu0
        %v8167 = vadd.f32 %v7556, %v8166
        %v8168 = vpop.f32.mrf.mxu0
        %v8169 = vadd.f32 %v7552, %v8168
        %v8170 = vpop.f32.mrf.mxu0
        %v8171 = vadd.f32 %v7556, %v8170
        %8172 = vdwg.mxu0
        %8173 = vmatprep.subr.bf16.mxu0 0
        %8174 = vmatpush1.bf16.msra.mxu0 %v7747
        %8175 = vmatprep.subr.bf16.mxu0 0
        %8176 = vmatpush1.bf16.msra.mxu0 %v7744
        %8177 = vmatprep.subr.bf16.mxu0 0
        %8178 = vmatpush1.bf16.msra.mxu0 %v7741
        %8179 = vmatprep.subr.bf16.mxu0 0
        %8180 = vmatpush1.bf16.msra.mxu0 %v7738
        %8181 = vmatprep.subr.bf16.mxu0 0
        %8182 = vmatpush1.bf16.msra.mxu0 %v7735
        %8183 = vmatprep.subr.bf16.mxu0 0
        %8184 = vmatpush1.bf16.msra.mxu0 %v7732
        %8185 = vmatprep.subr.bf16.mxu0 0
        %8186 = vmatpush1.bf16.msra.mxu0 %v7729
        %8187 = vmatprep.subr.bf16.mxu0 0
        %8188 = vmatpush1.bf16.msra.mxu0 %v7726
        %8189 = vmatprep.subr.bf16.mxu0 0
        %8190 = vmatpush2.bf16.msra.mxu0 %v7771
        %8191 = vmatprep.subr.bf16.mxu0 0
        %8192 = vmatpush2.bf16.msra.mxu0 %v7768
        %8193 = vmatprep.subr.bf16.mxu0 0
        %8194 = vmatpush2.bf16.msra.mxu0 %v7765
        %8195 = vmatprep.subr.bf16.mxu0 0
        %8196 = vmatpush2.bf16.msra.mxu0 %v7762
        %8197 = vmatprep.subr.bf16.mxu0 0
        %8198 = vmatpush2.bf16.msra.mxu0 %v7759
        %8199 = vmatprep.subr.bf16.mxu0 0
        %8200 = vmatpush2.bf16.msra.mxu0 %v7756
        %8201 = vmatprep.subr.bf16.mxu0 0
        %8202 = vmatpush2.bf16.msra.mxu0 %v7753
        %8203 = vmatprep.subr.bf16.mxu0 0
        %8204 = vmatpush2.bf16.msra.mxu0 %v7750
        %8205 = vmatprep.mubr.bf16.mxu0 %v7420
        %8206 = vmatmul.mubr.bf16.gmra.mxu0 %v7419
        %v8207 = vpop.f32.mrf.mxu0
        %v8208 = vadd.f32 %v7560, %v8207
        %v8209 = vpop.f32.mrf.mxu0
        %v8210 = vpop.f32.mrf.mxu0
        %v8211 = vadd.f32 %v7560, %v8210
        %v8212 = vpop.f32.mrf.mxu0
        %8213 = vmatprep.mubr.bf16.mxu0 %v7422
        %8214 = vmatmul.mubr.bf16.gmra.mxu0 %v7421
        %v8215 = vpop.f32.mrf.mxu0
        %v8216 = vadd.f32 %v7560, %v8215
        %v8217 = vpop.f32.mrf.mxu0
        %v8218 = vpop.f32.mrf.mxu0
        %v8219 = vadd.f32 %v7560, %v8218
        %v8220 = vpop.f32.mrf.mxu0
        %8221 = vmatprep.mubr.bf16.mxu0 %v7424
        %8222 = vmatmul.mubr.bf16.gmra.mxu0 %v7423
        %v8223 = vpop.f32.mrf.mxu0
        %v8224 = vadd.f32 %v7560, %v8223
        %v8225 = vpop.f32.mrf.mxu0
        %v8226 = vpop.f32.mrf.mxu0
        %v8227 = vadd.f32 %v7560, %v8226
        %v8228 = vpop.f32.mrf.mxu0
        %8229 = vmatprep.mubr.bf16.mxu0 %v7426
        %8230 = vmatmul.mubr.bf16.gmra.mxu0 %v7425
        %v8231 = vpop.f32.mrf.mxu0
        %v8232 = vadd.f32 %v7560, %v8231
        %v8233 = vpop.f32.mrf.mxu0
        %v8234 = vpop.f32.mrf.mxu0
        %v8235 = vadd.f32 %v7560, %v8234
        %v8236 = vpop.f32.mrf.mxu0
        %8237 = vmatprep.mubr.bf16.mxu0 %v7428
        %8238 = vmatmul.mubr.bf16.gmra.mxu0 %v7427
        %v8239 = vpop.f32.mrf.mxu0
        %v8240 = vadd.f32 %v7560, %v8239
        %v8241 = vpop.f32.mrf.mxu0
        %v8242 = vpop.f32.mrf.mxu0
        %v8243 = vadd.f32 %v7560, %v8242
        %v8244 = vpop.f32.mrf.mxu0
        %8245 = vmatprep.mubr.bf16.mxu0 %v7430
        %8246 = vmatmul.mubr.bf16.gmra.mxu0 %v7429
        %v8247 = vpop.f32.mrf.mxu0
        %v8248 = vadd.f32 %v7560, %v8247
        %v8249 = vpop.f32.mrf.mxu0
        %v8250 = vpop.f32.mrf.mxu0
        %v8251 = vadd.f32 %v7560, %v8250
        %v8252 = vpop.f32.mrf.mxu0
        %8253 = vmatprep.mubr.bf16.mxu0 %v7432
        %8254 = vmatmul.mubr.bf16.gmra.mxu0 %v7431
        %v8255 = vpop.f32.mrf.mxu0
        %v8256 = vadd.f32 %v7560, %v8255
        %v8257 = vpop.f32.mrf.mxu0
        %v8258 = vpop.f32.mrf.mxu0
        %v8259 = vadd.f32 %v7560, %v8258
        %v8260 = vpop.f32.mrf.mxu0
        %8261 = vmatprep.mubr.bf16.mxu0 %v7434
        %8262 = vmatmul.mubr.bf16.gmra.mxu0 %v7433
        %v8263 = vpop.f32.mrf.mxu0
        %v8264 = vadd.f32 %v7560, %v8263
        %v8265 = vpop.f32.mrf.mxu0
        %v8266 = vpop.f32.mrf.mxu0
        %v8267 = vadd.f32 %v7560, %v8266
        %v8268 = vpop.f32.mrf.mxu0
        %8269 = vmatprep.mubr.bf16.mxu0 %v7436
        %8270 = vmatmul.mubr.bf16.gmra.mxu0 %v7435
        %v8271 = vpop.f32.mrf.mxu0
        %v8272 = vadd.f32 %v7560, %v8271
        %v8273 = vpop.f32.mrf.mxu0
        %v8274 = vpop.f32.mrf.mxu0
        %v8275 = vadd.f32 %v7560, %v8274
        %v8276 = vpop.f32.mrf.mxu0
        %8277 = vmatprep.mubr.bf16.mxu0 %v7438
        %8278 = vmatmul.mubr.bf16.gmra.mxu0 %v7437
        %v8279 = vpop.f32.mrf.mxu0
        %v8280 = vadd.f32 %v7560, %v8279
        %v8281 = vpop.f32.mrf.mxu0
        %v8282 = vpop.f32.mrf.mxu0
        %v8283 = vadd.f32 %v7560, %v8282
        %v8284 = vpop.f32.mrf.mxu0
        %8285 = vmatprep.mubr.bf16.mxu0 %v7440
        %8286 = vmatmul.mubr.bf16.gmra.mxu0 %v7439
        %v8287 = vpop.f32.mrf.mxu0
        %v8288 = vadd.f32 %v7560, %v8287
        %v8289 = vpop.f32.mrf.mxu0
        %v8290 = vpop.f32.mrf.mxu0
        %v8291 = vadd.f32 %v7560, %v8290
        %v8292 = vpop.f32.mrf.mxu0
        %8293 = vmatprep.mubr.bf16.mxu0 %v7442
        %8294 = vmatmul.mubr.bf16.gmra.mxu0 %v7441
        %v8295 = vpop.f32.mrf.mxu0
        %v8296 = vadd.f32 %v7560, %v8295
        %v8297 = vpop.f32.mrf.mxu0
        %v8298 = vpop.f32.mrf.mxu0
        %v8299 = vadd.f32 %v7560, %v8298
        %v8300 = vpop.f32.mrf.mxu0
        %8301 = vmatprep.mubr.bf16.mxu0 %v7444
        %8302 = vmatmul.mubr.bf16.gmra.mxu0 %v7443
        %v8303 = vpop.f32.mrf.mxu0
        %v8304 = vadd.f32 %v7560, %v8303
        %v8305 = vpop.f32.mrf.mxu0
        %v8306 = vpop.f32.mrf.mxu0
        %v8307 = vadd.f32 %v7560, %v8306
        %v8308 = vpop.f32.mrf.mxu0
        %8309 = vmatprep.mubr.bf16.mxu0 %v7446
        %8310 = vmatmul.mubr.bf16.gmra.mxu0 %v7445
        %v8311 = vpop.f32.mrf.mxu0
        %v8312 = vadd.f32 %v7560, %v8311
        %v8313 = vpop.f32.mrf.mxu0
        %v8314 = vpop.f32.mrf.mxu0
        %v8315 = vadd.f32 %v7560, %v8314
        %v8316 = vpop.f32.mrf.mxu0
        %8317 = vmatprep.mubr.bf16.mxu0 %v7448
        %8318 = vmatmul.mubr.bf16.gmra.mxu0 %v7447
        %v8319 = vpop.f32.mrf.mxu0
        %v8320 = vadd.f32 %v7560, %v8319
        %v8321 = vpop.f32.mrf.mxu0
        %v8322 = vpop.f32.mrf.mxu0
        %v8323 = vadd.f32 %v7560, %v8322
        %v8324 = vpop.f32.mrf.mxu0
        %8325 = vmatprep.mubr.bf16.mxu0 %v7450
        %8326 = vmatmul.mubr.bf16.gmra.mxu0 %v7449
        %v8327 = vpop.f32.mrf.mxu0
        %v8328 = vadd.f32 %v7560, %v8327
        %v8329 = vpop.f32.mrf.mxu0
        %v8330 = vpop.f32.mrf.mxu0
        %v8331 = vadd.f32 %v7560, %v8330
        %v8332 = vpop.f32.mrf.mxu0
        %8333 = vmatprep.mubr.bf16.mxu0 %v7452
        %8334 = vmatmul.mubr.bf16.gmra.mxu0 %v7451
        %v8335 = vpop.f32.mrf.mxu0
        %v8336 = vadd.f32 %v7560, %v8335
        %v8337 = vpop.f32.mrf.mxu0
        %v8338 = vpop.f32.mrf.mxu0
        %v8339 = vadd.f32 %v7560, %v8338
        %v8340 = vpop.f32.mrf.mxu0
        %8341 = vmatprep.mubr.bf16.mxu0 %v7454
        %8342 = vmatmul.mubr.bf16.gmra.mxu0 %v7453
        %v8343 = vpop.f32.mrf.mxu0
        %v8344 = vadd.f32 %v7560, %v8343
        %v8345 = vpop.f32.mrf.mxu0
        %v8346 = vpop.f32.mrf.mxu0
        %v8347 = vadd.f32 %v7560, %v8346
        %v8348 = vpop.f32.mrf.mxu0
        %8349 = vmatprep.mubr.bf16.mxu0 %v7456
        %8350 = vmatmul.mubr.bf16.gmra.mxu0 %v7455
        %v8351 = vpop.f32.mrf.mxu0
        %v8352 = vadd.f32 %v7560, %v8351
        %v8353 = vpop.f32.mrf.mxu0
        %v8354 = vpop.f32.mrf.mxu0
        %v8355 = vadd.f32 %v7560, %v8354
        %v8356 = vpop.f32.mrf.mxu0
        %8357 = vmatprep.mubr.bf16.mxu0 %v7458
        %8358 = vmatmul.mubr.bf16.gmra.mxu0 %v7457
        %v8359 = vpop.f32.mrf.mxu0
        %v8360 = vadd.f32 %v7560, %v8359
        %v8361 = vpop.f32.mrf.mxu0
        %v8362 = vpop.f32.mrf.mxu0
        %v8363 = vadd.f32 %v7560, %v8362
        %v8364 = vpop.f32.mrf.mxu0
        %8365 = vmatprep.mubr.bf16.mxu0 %v7460
        %8366 = vmatmul.mubr.bf16.gmra.mxu0 %v7459
        %v8367 = vpop.f32.mrf.mxu0
        %v8368 = vadd.f32 %v7560, %v8367
        %v8369 = vpop.f32.mrf.mxu0
        %v8370 = vpop.f32.mrf.mxu0
        %v8371 = vadd.f32 %v7560, %v8370
        %v8372 = vpop.f32.mrf.mxu0
        %8373 = vmatprep.mubr.bf16.mxu0 %v7462
        %8374 = vmatmul.mubr.bf16.gmra.mxu0 %v7461
        %v8375 = vpop.f32.mrf.mxu0
        %v8376 = vadd.f32 %v7560, %v8375
        %v8377 = vpop.f32.mrf.mxu0
        %v8378 = vpop.f32.mrf.mxu0
        %v8379 = vadd.f32 %v7560, %v8378
        %v8380 = vpop.f32.mrf.mxu0
        %8381 = vmatprep.mubr.bf16.mxu0 %v7464
        %8382 = vmatmul.mubr.bf16.gmra.mxu0 %v7463
        %v8383 = vpop.f32.mrf.mxu0
        %v8384 = vadd.f32 %v7560, %v8383
        %v8385 = vpop.f32.mrf.mxu0
        %v8386 = vpop.f32.mrf.mxu0
        %v8387 = vadd.f32 %v7560, %v8386
        %v8388 = vpop.f32.mrf.mxu0
        %8389 = vmatprep.mubr.bf16.mxu0 %v7466
        %8390 = vmatmul.mubr.bf16.gmra.mxu0 %v7465
        %v8391 = vpop.f32.mrf.mxu0
        %v8392 = vadd.f32 %v7560, %v8391
        %v8393 = vpop.f32.mrf.mxu0
        %v8394 = vpop.f32.mrf.mxu0
        %v8395 = vadd.f32 %v7560, %v8394
        %v8396 = vpop.f32.mrf.mxu0
        %8397 = vmatprep.mubr.bf16.mxu0 %v7468
        %8398 = vmatmul.mubr.bf16.gmra.mxu0 %v7467
        %v8399 = vpop.f32.mrf.mxu0
        %v8400 = vadd.f32 %v7560, %v8399
        %v8401 = vpop.f32.mrf.mxu0
        %v8402 = vpop.f32.mrf.mxu0
        %v8403 = vadd.f32 %v7560, %v8402
        %v8404 = vpop.f32.mrf.mxu0
        %8405 = vmatprep.mubr.bf16.mxu0 %v7470
        %8406 = vmatmul.mubr.bf16.gmra.mxu0 %v7469
        %v8407 = vpop.f32.mrf.mxu0
        %v8408 = vadd.f32 %v7560, %v8407
        %v8409 = vpop.f32.mrf.mxu0
        %v8410 = vpop.f32.mrf.mxu0
        %v8411 = vadd.f32 %v7560, %v8410
        %v8412 = vpop.f32.mrf.mxu0
        %8413 = vmatprep.mubr.bf16.mxu0 %v7472
        %8414 = vmatmul.mubr.bf16.gmra.mxu0 %v7471
        %v8415 = vpop.f32.mrf.mxu0
        %v8416 = vadd.f32 %v7560, %v8415
        %v8417 = vpop.f32.mrf.mxu0
        %v8418 = vpop.f32.mrf.mxu0
        %v8419 = vadd.f32 %v7560, %v8418
        %v8420 = vpop.f32.mrf.mxu0
        %8421 = vmatprep.mubr.bf16.mxu0 %v7474
        %8422 = vmatmul.mubr.bf16.gmra.mxu0 %v7473
        %v8423 = vpop.f32.mrf.mxu0
        %v8424 = vadd.f32 %v7560, %v8423
        %v8425 = vpop.f32.mrf.mxu0
        %v8426 = vpop.f32.mrf.mxu0
        %v8427 = vadd.f32 %v7560, %v8426
        %v8428 = vpop.f32.mrf.mxu0
        %8429 = vmatprep.mubr.bf16.mxu0 %v7476
        %8430 = vmatmul.mubr.bf16.gmra.mxu0 %v7475
        %v8431 = vpop.f32.mrf.mxu0
        %v8432 = vadd.f32 %v7560, %v8431
        %v8433 = vpop.f32.mrf.mxu0
        %v8434 = vpop.f32.mrf.mxu0
        %v8435 = vadd.f32 %v7560, %v8434
        %v8436 = vpop.f32.mrf.mxu0
        %8437 = vmatprep.mubr.bf16.mxu0 %v7478
        %8438 = vmatmul.mubr.bf16.gmra.mxu0 %v7477
        %v8439 = vpop.f32.mrf.mxu0
        %v8440 = vadd.f32 %v7560, %v8439
        %v8441 = vpop.f32.mrf.mxu0
        %v8442 = vpop.f32.mrf.mxu0
        %v8443 = vadd.f32 %v7560, %v8442
        %v8444 = vpop.f32.mrf.mxu0
        %8445 = vmatprep.mubr.bf16.mxu0 %v7480
        %8446 = vmatmul.mubr.bf16.gmra.mxu0 %v7479
        %v8447 = vpop.f32.mrf.mxu0
        %v8448 = vadd.f32 %v7560, %v8447
        %v8449 = vpop.f32.mrf.mxu0
        %v8450 = vpop.f32.mrf.mxu0
        %v8451 = vadd.f32 %v7560, %v8450
        %v8452 = vpop.f32.mrf.mxu0
        %8453 = vmatprep.mubr.bf16.mxu0 %v7482
        %8454 = vmatmul.mubr.bf16.gmra.mxu0 %v7481
        %v8455 = vpop.f32.mrf.mxu0
        %v8456 = vadd.f32 %v7560, %v8455
        %v8457 = vpop.f32.mrf.mxu0
        %v8458 = vpop.f32.mrf.mxu0
        %v8459 = vadd.f32 %v7560, %v8458
        %v8460 = vpop.f32.mrf.mxu0
        %8461 = vdwg.mxu0
        %v8462 = vpack.c.bf16 %v7859, %v7855
        %v8463 = vpack.c.bf16 %v7861, %v7857
        %v8464 = vpack.c.bf16 %v7869, %v7865
        %v8465 = vpack.c.bf16 %v7871, %v7867
        %v8466 = vpack.c.bf16 %v7879, %v7875
        %v8467 = vpack.c.bf16 %v7881, %v7877
        %v8468 = vpack.c.bf16 %v7889, %v7885
        %v8469 = vpack.c.bf16 %v7891, %v7887
        %v8470 = vpack.c.bf16 %v7899, %v7895
        %v8471 = vpack.c.bf16 %v7901, %v7897
        %v8472 = vpack.c.bf16 %v7909, %v7905
        %v8473 = vpack.c.bf16 %v7911, %v7907
        %v8474 = vpack.c.bf16 %v7919, %v7915
        %v8475 = vpack.c.bf16 %v7921, %v7917
        %v8476 = vpack.c.bf16 %v7929, %v7925
        %v8477 = vpack.c.bf16 %v7931, %v7927
        %v8478 = vpack.c.bf16 %v7939, %v7935
        %v8479 = vpack.c.bf16 %v7941, %v7937
        %v8480 = vpack.c.bf16 %v7949, %v7945
        %v8481 = vpack.c.bf16 %v7951, %v7947
        %v8482 = vpack.c.bf16 %v7959, %v7955
        %v8483 = vpack.c.bf16 %v7961, %v7957
        %v8484 = vpack.c.bf16 %v7969, %v7965
        %v8485 = vpack.c.bf16 %v7971, %v7967
        %v8486 = vpack.c.bf16 %v7979, %v7975
        %v8487 = vpack.c.bf16 %v7981, %v7977
        %v8488 = vpack.c.bf16 %v7989, %v7985
        %v8489 = vpack.c.bf16 %v7991, %v7987
        %v8490 = vpack.c.bf16 %v7999, %v7995
        %v8491 = vpack.c.bf16 %v8001, %v7997
        %v8492 = vpack.c.bf16 %v8009, %v8005
        %v8493 = vpack.c.bf16 %v8011, %v8007
        %v8494 = vpack.c.bf16 %v8019, %v8015
        %v8495 = vpack.c.bf16 %v8021, %v8017
        %v8496 = vpack.c.bf16 %v8029, %v8025
        %v8497 = vpack.c.bf16 %v8031, %v8027
        %v8498 = vpack.c.bf16 %v8039, %v8035
        %v8499 = vpack.c.bf16 %v8041, %v8037
        %v8500 = vpack.c.bf16 %v8049, %v8045
        %v8501 = vpack.c.bf16 %v8051, %v8047
        %v8502 = vpack.c.bf16 %v8059, %v8055
        %v8503 = vpack.c.bf16 %v8061, %v8057
        %v8504 = vpack.c.bf16 %v8069, %v8065
        %v8505 = vpack.c.bf16 %v8071, %v8067
        %v8506 = vpack.c.bf16 %v8079, %v8075
        %v8507 = vpack.c.bf16 %v8081, %v8077
        %v8508 = vpack.c.bf16 %v8089, %v8085
        %v8509 = vpack.c.bf16 %v8091, %v8087
        %v8510 = vpack.c.bf16 %v8099, %v8095
        %v8511 = vpack.c.bf16 %v8101, %v8097
        %v8512 = vpack.c.bf16 %v8109, %v8105
        %v8513 = vpack.c.bf16 %v8111, %v8107
        %v8514 = vpack.c.bf16 %v8119, %v8115
        %v8515 = vpack.c.bf16 %v8121, %v8117
        %v8516 = vpack.c.bf16 %v8129, %v8125
        %v8517 = vpack.c.bf16 %v8131, %v8127
        %v8518 = vpack.c.bf16 %v8139, %v8135
        %v8519 = vpack.c.bf16 %v8141, %v8137
        %v8520 = vpack.c.bf16 %v8149, %v8145
        %v8521 = vpack.c.bf16 %v8151, %v8147
        %v8522 = vpack.c.bf16 %v8159, %v8155
        %v8523 = vpack.c.bf16 %v8161, %v8157
        %v8524 = vpack.c.bf16 %v8169, %v8165
        %v8525 = vpack.c.bf16 %v8171, %v8167
        %v8526 = vld [vmem:[%s20] sm:$0xf]
        %v8527 = vld [vmem:[%s20 + $0x4] sm:$0xf]
        %v8528 = vld [vmem:[%s20 + $0x8] sm:$0xf]
        %v8529 = vld [vmem:[%s20 + $0xc] sm:$0xf]
        %v8530 = vld [vmem:[%s20 + $0x10] sm:$0xf]
        %v8531 = vld [vmem:[%s20 + $0x14] sm:$0xf]
        %v8532 = vld [vmem:[%s20 + $0x18] sm:$0xf]
        %v8533 = vld [vmem:[%s20 + $0x1c] sm:$0xf]
        %v8534 = vld [vmem:[%s20 + $0x20] sm:$0xf]
        %v8535 = vld [vmem:[%s20 + $0x24] sm:$0xf]
        %v8536 = vld [vmem:[%s20 + $0x28] sm:$0xf]
        %v8537 = vld [vmem:[%s20 + $0x2c] sm:$0xf]
        %v8538 = vld [vmem:[%s20 + $0x30] sm:$0xf]
        %v8539 = vld [vmem:[%s20 + $0x34] sm:$0xf]
        %v8540 = vld [vmem:[%s20 + $0x38] sm:$0xf]
        %v8541 = vld [vmem:[%s20 + $0x3c] sm:$0xf]
        %v8542 = vld [vmem:[%s20 + $0x40] sm:$0xf]
        %v8543 = vld [vmem:[%s20 + $0x44] sm:$0xf]
        %v8544 = vld [vmem:[%s20 + $0x48] sm:$0xf]
        %v8545 = vld [vmem:[%s20 + $0x4c] sm:$0xf]
        %v8546 = vld [vmem:[%s20 + $0x50] sm:$0xf]
        %v8547 = vld [vmem:[%s20 + $0x54] sm:$0xf]
        %v8548 = vld [vmem:[%s20 + $0x58] sm:$0xf]
        %v8549 = vld [vmem:[%s20 + $0x5c] sm:$0xf]
        %v8550 = vld [vmem:[%s20 + $0x60] sm:$0xf]
        %v8551 = vld [vmem:[%s20 + $0x64] sm:$0xf]
        %v8552 = vld [vmem:[%s20 + $0x68] sm:$0xf]
        %v8553 = vld [vmem:[%s20 + $0x6c] sm:$0xf]
        %v8554 = vld [vmem:[%s20 + $0x70] sm:$0xf]
        %v8555 = vld [vmem:[%s20 + $0x74] sm:$0xf]
        %v8556 = vld [vmem:[%s20 + $0x78] sm:$0xf]
        %v8557 = vld [vmem:[%s20 + $0x7c] sm:$0xf]
        %v8558 = vld [vmem:[%s21] sm:$0xf]
        %v8559 = vld [vmem:[%s21 + $0x4] sm:$0xf]
        %v8560 = vld [vmem:[%s21 + $0x8] sm:$0xf]
        %v8561 = vld [vmem:[%s21 + $0xc] sm:$0x3]
        %8594 = vrot.lane.b32.xlu0 %v965, 65
        %v8595 = vpop.permute.xlu0 %8594
        %8596 = vrot.lane.b32.xlu0 %v966, 65
        %v8597 = vpop.permute.xlu0 %8596
        %8598 = vrot.lane.b32.xlu0 %v967, 65
        %v8599 = vpop.permute.xlu0 %8598
        %8600 = vrot.lane.b32.xlu0 %v968, 65
        %v8601 = vpop.permute.xlu0 %8600
        %8602 = vrot.lane.b32.xlu0 %v969, 65
        %v8603 = vpop.permute.xlu0 %8602
        %8604 = vrot.lane.b32.xlu0 %v970, 65
        %v8605 = vpop.permute.xlu0 %8604
        %8606 = vrot.lane.b32.xlu0 %v971, 65
        %v8607 = vpop.permute.xlu0 %8606
        %8608 = vrot.lane.b32.xlu0 %v972, 65
        %v8609 = vpop.permute.xlu0 %8608
        %8610 = vrot.lane.b32.xlu0 %v973, 65
        %v8611 = vpop.permute.xlu0 %8610
        %8612 = vrot.lane.b32.xlu0 %v974, 65
        %v8613 = vpop.permute.xlu0 %8612
        %8614 = vrot.lane.b32.xlu0 %v975, 65
        %v8615 = vpop.permute.xlu0 %8614
        %8616 = vrot.lane.b32.xlu0 %v976, 65
        %v8617 = vpop.permute.xlu0 %8616
        %8618 = vrot.lane.b32.xlu0 %v977, 65
        %v8619 = vpop.permute.xlu0 %8618
        %8620 = vrot.lane.b32.xlu0 %v978, 65
        %v8621 = vpop.permute.xlu0 %8620
        %8622 = vrot.lane.b32.xlu0 %v979, 65
        %v8623 = vpop.permute.xlu0 %8622
        %8624 = vrot.lane.b32.xlu0 %v980, 65
        %v8625 = vpop.permute.xlu0 %8624
        %8626 = vrot.lane.b32.xlu0 %v981, 65
        %v8627 = vpop.permute.xlu0 %8626
        %8628 = vrot.lane.b32.xlu0 %v982, 65
        %v8629 = vpop.permute.xlu0 %8628
        %8630 = vrot.lane.b32.xlu0 %v983, 65
        %v8631 = vpop.permute.xlu0 %8630
        %8632 = vrot.lane.b32.xlu0 %v984, 65
        %v8633 = vpop.permute.xlu0 %8632
        %8634 = vrot.lane.b32.xlu0 %v985, 65
        %v8635 = vpop.permute.xlu0 %8634
        %8636 = vrot.lane.b32.xlu0 %v986, 65
        %v8637 = vpop.permute.xlu0 %8636
        %8638 = vrot.lane.b32.xlu0 %v987, 65
        %v8639 = vpop.permute.xlu0 %8638
        %8640 = vrot.lane.b32.xlu0 %v988, 65
        %v8641 = vpop.permute.xlu0 %8640
        %8642 = vrot.lane.b32.xlu0 %v989, 65
        %v8643 = vpop.permute.xlu0 %8642
        %8644 = vrot.lane.b32.xlu0 %v990, 65
        %v8645 = vpop.permute.xlu0 %8644
        %8646 = vrot.lane.b32.xlu0 %v991, 65
        %v8647 = vpop.permute.xlu0 %8646
        %8648 = vrot.lane.b32.xlu0 %v992, 65
        %v8649 = vpop.permute.xlu0 %8648
        %8650 = vrot.lane.b32.xlu0 %v993, 65
        %v8651 = vpop.permute.xlu0 %8650
        %8652 = vrot.lane.b32.xlu0 %v994, 65
        %v8653 = vpop.permute.xlu0 %8652
        %8654 = vrot.lane.b32.xlu0 %v995, 65
        %v8655 = vpop.permute.xlu0 %8654
        %8656 = vrot.lane.b32.xlu0 %v996, 65
        %v8657 = vpop.permute.xlu0 %8656
        %v8662 = vunpack.c.l.b16 %v8558
        %v8663 = vunpack.c.l.b16 %v8559
        %v8664 = vunpack.c.l.b16 %v8560
        %v8665 = vunpack.c.l.b16 %v8561
        %v8666 = vpack.c.b16 %v8663, %v8662
        %v8667 = vpack.c.b16 %v8665, %v8664
        %vm8669 = vcmask 220160
        %v8671 = vsel %vm8669, %v8595, 0
        %v8674 = vsel %vm8669, %v8597, 0
        %v8677 = vsel %vm8669, %v8599, 0
        %v8680 = vsel %vm8669, %v8601, 0
        %v8683 = vsel %vm8669, %v8603, 0
        %v8686 = vsel %vm8669, %v8605, 0
        %v8689 = vsel %vm8669, %v8607, 0
        %v8692 = vsel %vm8669, %v8609, 0
        %v8695 = vsel %vm8669, %v8611, 0
        %v8698 = vsel %vm8669, %v8613, 0
        %v8701 = vsel %vm8669, %v8615, 0
        %v8704 = vsel %vm8669, %v8617, 0
        %v8707 = vsel %vm8669, %v8619, 0
        %v8710 = vsel %vm8669, %v8621, 0
        %v8713 = vsel %vm8669, %v8623, 0
        %v8716 = vsel %vm8669, %v8625, 0
        %v8719 = vsel %vm8669, %v8627, 0
        %v8722 = vsel %vm8669, %v8629, 0
        %v8725 = vsel %vm8669, %v8631, 0
        %v8728 = vsel %vm8669, %v8633, 0
        %v8731 = vsel %vm8669, %v8635, 0
        %v8734 = vsel %vm8669, %v8637, 0
        %v8737 = vsel %vm8669, %v8639, 0
        %v8740 = vsel %vm8669, %v8641, 0
        %v8743 = vsel %vm8669, %v8643, 0
        %v8746 = vsel %vm8669, %v8645, 0
        %v8749 = vsel %vm8669, %v8647, 0
        %v8752 = vsel %vm8669, %v8649, 0
        %v8755 = vsel %vm8669, %v8651, 0
        %v8758 = vsel %vm8669, %v8653, 0
        %v8761 = vsel %vm8669, %v8655, 0
        %v8764 = vsel %vm8669, %v8657, 0
        %vm8766 = vcmask 1044480
        %vm8767 = vcmask 1045504
        %v8768 = vsel %vm8766, 4294967295, 65535
        %v8769 = vsel %vm8767, %v8768, 0
        %v8771 = vand.u32 %v8667, %v8769
        %8773 = vmatprep.subr.bf16.mxu0 0
        %8774 = vmatpush1.bf16.msra.mxu0 0
        %8775 = vmatprep.subr.bf16.mxu0 0
        %8776 = vmatpush1.bf16.msra.mxu0 0
        %8777 = vmatprep.subr.bf16.mxu0 0
        %8778 = vmatpush1.bf16.msra.mxu0 0
        %8779 = vmatprep.subr.bf16.mxu0 0
        %8780 = vmatpush1.bf16.msra.mxu0 0
        %8781 = vmatprep.subr.bf16.mxu0 0
        %8782 = vmatpush1.bf16.msra.mxu0 0
        %8783 = vmatprep.subr.bf16.mxu0 0
        %8784 = vmatpush1.bf16.msra.mxu0 0
        %8785 = vmatprep.subr.bf16.mxu0 0
        %8786 = vmatpush1.bf16.msra.mxu0 %v8771
        %8787 = vmatprep.subr.bf16.mxu0 0
        %8788 = vmatpush1.bf16.msra.mxu0 %v8666
        %8789 = vmatprep.subr.bf16.mxu0 0
        %8790 = vmatpush2.bf16.msra.mxu0 0
        %8791 = vmatprep.subr.bf16.mxu0 0
        %8792 = vmatpush2.bf16.msra.mxu0 0
        %8793 = vmatprep.subr.bf16.mxu0 0
        %8794 = vmatpush2.bf16.msra.mxu0 0
        %8795 = vmatprep.subr.bf16.mxu0 0
        %8796 = vmatpush2.bf16.msra.mxu0 0
        %8797 = vmatprep.subr.bf16.mxu0 0
        %8798 = vmatpush2.bf16.msra.mxu0 0
        %8799 = vmatprep.subr.bf16.mxu0 0
        %8800 = vmatpush2.bf16.msra.mxu0 0
        %8801 = vmatprep.subr.bf16.mxu0 0
        %8802 = vmatpush2.bf16.msra.mxu0 0
        %8803 = vmatprep.subr.bf16.mxu0 0
        %8804 = vmatpush2.bf16.msra.mxu0 0
        %8805 = vmatprep.mubr.bf16.mxu0 0
        %8806 = vmatmul.mubr.bf16.gmra.mxu0 %v8671
        %v8807 = vpop.f32.mrf.mxu0
        %v8808 = vadd.f32 0.0, %v8807
        %v8809 = vpop.f32.mrf.mxu0
        %v8810 = vpop.f32.mrf.mxu0
        %v8811 = vadd.f32 0.0, %v8810
        %v8812 = vpop.f32.mrf.mxu0
        %8813 = vmatprep.mubr.bf16.mxu0 0
        %8814 = vmatmul.mubr.bf16.gmra.mxu0 %v8674
        %v8815 = vpop.f32.mrf.mxu0
        %v8816 = vadd.f32 0.0, %v8815
        %v8817 = vpop.f32.mrf.mxu0
        %v8818 = vpop.f32.mrf.mxu0
        %v8819 = vadd.f32 0.0, %v8818
        %v8820 = vpop.f32.mrf.mxu0
        %8821 = vmatprep.mubr.bf16.mxu0 0
        %8822 = vmatmul.mubr.bf16.gmra.mxu0 %v8677
        %v8823 = vpop.f32.mrf.mxu0
        %v8824 = vadd.f32 0.0, %v8823
        %v8825 = vpop.f32.mrf.mxu0
        %v8826 = vpop.f32.mrf.mxu0
        %v8827 = vadd.f32 0.0, %v8826
        %v8828 = vpop.f32.mrf.mxu0
        %8829 = vmatprep.mubr.bf16.mxu0 0
        %8830 = vmatmul.mubr.bf16.gmra.mxu0 %v8680
        %v8831 = vpop.f32.mrf.mxu0
        %v8832 = vadd.f32 0.0, %v8831
        %v8833 = vpop.f32.mrf.mxu0
        %v8834 = vpop.f32.mrf.mxu0
        %v8835 = vadd.f32 0.0, %v8834
        %v8836 = vpop.f32.mrf.mxu0
        %8837 = vmatprep.mubr.bf16.mxu0 0
        %8838 = vmatmul.mubr.bf16.gmra.mxu0 %v8683
        %v8839 = vpop.f32.mrf.mxu0
        %v8840 = vadd.f32 0.0, %v8839
        %v8841 = vpop.f32.mrf.mxu0
        %v8842 = vpop.f32.mrf.mxu0
        %v8843 = vadd.f32 0.0, %v8842
        %v8844 = vpop.f32.mrf.mxu0
        %8845 = vmatprep.mubr.bf16.mxu0 0
        %8846 = vmatmul.mubr.bf16.gmra.mxu0 %v8686
        %v8847 = vpop.f32.mrf.mxu0
        %v8848 = vadd.f32 0.0, %v8847
        %v8849 = vpop.f32.mrf.mxu0
        %v8850 = vpop.f32.mrf.mxu0
        %v8851 = vadd.f32 0.0, %v8850
        %v8852 = vpop.f32.mrf.mxu0
        %8853 = vmatprep.mubr.bf16.mxu0 0
        %8854 = vmatmul.mubr.bf16.gmra.mxu0 %v8689
        %v8855 = vpop.f32.mrf.mxu0
        %v8856 = vadd.f32 0.0, %v8855
        %v8857 = vpop.f32.mrf.mxu0
        %v8858 = vpop.f32.mrf.mxu0
        %v8859 = vadd.f32 0.0, %v8858
        %v8860 = vpop.f32.mrf.mxu0
        %8861 = vmatprep.mubr.bf16.mxu0 0
        %8862 = vmatmul.mubr.bf16.gmra.mxu0 %v8692
        %v8863 = vpop.f32.mrf.mxu0
        %v8864 = vadd.f32 0.0, %v8863
        %v8865 = vpop.f32.mrf.mxu0
        %v8866 = vpop.f32.mrf.mxu0
        %v8867 = vadd.f32 0.0, %v8866
        %v8868 = vpop.f32.mrf.mxu0
        %8869 = vmatprep.mubr.bf16.mxu0 0
        %8870 = vmatmul.mubr.bf16.gmra.mxu0 %v8695
        %v8871 = vpop.f32.mrf.mxu0
        %v8872 = vadd.f32 0.0, %v8871
        %v8873 = vpop.f32.mrf.mxu0
        %v8874 = vpop.f32.mrf.mxu0
        %v8875 = vadd.f32 0.0, %v8874
        %v8876 = vpop.f32.mrf.mxu0
        %8877 = vmatprep.mubr.bf16.mxu0 0
        %8878 = vmatmul.mubr.bf16.gmra.mxu0 %v8698
        %v8879 = vpop.f32.mrf.mxu0
        %v8880 = vadd.f32 0.0, %v8879
        %v8881 = vpop.f32.mrf.mxu0
        %v8882 = vpop.f32.mrf.mxu0
        %v8883 = vadd.f32 0.0, %v8882
        %v8884 = vpop.f32.mrf.mxu0
        %8885 = vmatprep.mubr.bf16.mxu0 0
        %8886 = vmatmul.mubr.bf16.gmra.mxu0 %v8701
        %v8887 = vpop.f32.mrf.mxu0
        %v8888 = vadd.f32 0.0, %v8887
        %v8889 = vpop.f32.mrf.mxu0
        %v8890 = vpop.f32.mrf.mxu0
        %v8891 = vadd.f32 0.0, %v8890
        %v8892 = vpop.f32.mrf.mxu0
        %8893 = vmatprep.mubr.bf16.mxu0 0
        %8894 = vmatmul.mubr.bf16.gmra.mxu0 %v8704
        %v8895 = vpop.f32.mrf.mxu0
        %v8896 = vadd.f32 0.0, %v8895
        %v8897 = vpop.f32.mrf.mxu0
        %v8898 = vpop.f32.mrf.mxu0
        %v8899 = vadd.f32 0.0, %v8898
        %v8900 = vpop.f32.mrf.mxu0
        %8901 = vmatprep.mubr.bf16.mxu0 0
        %8902 = vmatmul.mubr.bf16.gmra.mxu0 %v8707
        %v8903 = vpop.f32.mrf.mxu0
        %v8904 = vadd.f32 0.0, %v8903
        %v8905 = vpop.f32.mrf.mxu0
        %v8906 = vpop.f32.mrf.mxu0
        %v8907 = vadd.f32 0.0, %v8906
        %v8908 = vpop.f32.mrf.mxu0
        %8909 = vmatprep.mubr.bf16.mxu0 0
        %8910 = vmatmul.mubr.bf16.gmra.mxu0 %v8710
        %v8911 = vpop.f32.mrf.mxu0
        %v8912 = vadd.f32 0.0, %v8911
        %v8913 = vpop.f32.mrf.mxu0
        %v8914 = vpop.f32.mrf.mxu0
        %v8915 = vadd.f32 0.0, %v8914
        %v8916 = vpop.f32.mrf.mxu0
        %8917 = vmatprep.mubr.bf16.mxu0 0
        %8918 = vmatmul.mubr.bf16.gmra.mxu0 %v8713
        %v8919 = vpop.f32.mrf.mxu0
        %v8920 = vadd.f32 0.0, %v8919
        %v8921 = vpop.f32.mrf.mxu0
        %v8922 = vpop.f32.mrf.mxu0
        %v8923 = vadd.f32 0.0, %v8922
        %v8924 = vpop.f32.mrf.mxu0
        %8925 = vmatprep.mubr.bf16.mxu0 0
        %8926 = vmatmul.mubr.bf16.gmra.mxu0 %v8716
        %v8927 = vpop.f32.mrf.mxu0
        %v8928 = vadd.f32 0.0, %v8927
        %v8929 = vpop.f32.mrf.mxu0
        %v8930 = vpop.f32.mrf.mxu0
        %v8931 = vadd.f32 0.0, %v8930
        %v8932 = vpop.f32.mrf.mxu0
        %8933 = vmatprep.mubr.bf16.mxu0 0
        %8934 = vmatmul.mubr.bf16.gmra.mxu0 %v8719
        %v8935 = vpop.f32.mrf.mxu0
        %v8936 = vadd.f32 0.0, %v8935
        %v8937 = vpop.f32.mrf.mxu0
        %v8938 = vpop.f32.mrf.mxu0
        %v8939 = vadd.f32 0.0, %v8938
        %v8940 = vpop.f32.mrf.mxu0
        %8941 = vmatprep.mubr.bf16.mxu0 0
        %8942 = vmatmul.mubr.bf16.gmra.mxu0 %v8722
        %v8943 = vpop.f32.mrf.mxu0
        %v8944 = vadd.f32 0.0, %v8943
        %v8945 = vpop.f32.mrf.mxu0
        %v8946 = vpop.f32.mrf.mxu0
        %v8947 = vadd.f32 0.0, %v8946
        %v8948 = vpop.f32.mrf.mxu0
        %8949 = vmatprep.mubr.bf16.mxu0 0
        %8950 = vmatmul.mubr.bf16.gmra.mxu0 %v8725
        %v8951 = vpop.f32.mrf.mxu0
        %v8952 = vadd.f32 0.0, %v8951
        %v8953 = vpop.f32.mrf.mxu0
        %v8954 = vpop.f32.mrf.mxu0
        %v8955 = vadd.f32 0.0, %v8954
        %v8956 = vpop.f32.mrf.mxu0
        %8957 = vmatprep.mubr.bf16.mxu0 0
        %8958 = vmatmul.mubr.bf16.gmra.mxu0 %v8728
        %v8959 = vpop.f32.mrf.mxu0
        %v8960 = vadd.f32 0.0, %v8959
        %v8961 = vpop.f32.mrf.mxu0
        %v8962 = vpop.f32.mrf.mxu0
        %v8963 = vadd.f32 0.0, %v8962
        %v8964 = vpop.f32.mrf.mxu0
        %8965 = vmatprep.mubr.bf16.mxu0 0
        %8966 = vmatmul.mubr.bf16.gmra.mxu0 %v8731
        %v8967 = vpop.f32.mrf.mxu0
        %v8968 = vadd.f32 0.0, %v8967
        %v8969 = vpop.f32.mrf.mxu0
        %v8970 = vpop.f32.mrf.mxu0
        %v8971 = vadd.f32 0.0, %v8970
        %v8972 = vpop.f32.mrf.mxu0
        %8973 = vmatprep.mubr.bf16.mxu0 0
        %8974 = vmatmul.mubr.bf16.gmra.mxu0 %v8734
        %v8975 = vpop.f32.mrf.mxu0
        %v8976 = vadd.f32 0.0, %v8975
        %v8977 = vpop.f32.mrf.mxu0
        %v8978 = vpop.f32.mrf.mxu0
        %v8979 = vadd.f32 0.0, %v8978
        %v8980 = vpop.f32.mrf.mxu0
        %8981 = vmatprep.mubr.bf16.mxu0 0
        %8982 = vmatmul.mubr.bf16.gmra.mxu0 %v8737
        %v8983 = vpop.f32.mrf.mxu0
        %v8984 = vadd.f32 0.0, %v8983
        %v8985 = vpop.f32.mrf.mxu0
        %v8986 = vpop.f32.mrf.mxu0
        %v8987 = vadd.f32 0.0, %v8986
        %v8988 = vpop.f32.mrf.mxu0
        %8989 = vmatprep.mubr.bf16.mxu0 0
        %8990 = vmatmul.mubr.bf16.gmra.mxu0 %v8740
        %v8991 = vpop.f32.mrf.mxu0
        %v8992 = vadd.f32 0.0, %v8991
        %v8993 = vpop.f32.mrf.mxu0
        %v8994 = vpop.f32.mrf.mxu0
        %v8995 = vadd.f32 0.0, %v8994
        %v8996 = vpop.f32.mrf.mxu0
        %8997 = vmatprep.mubr.bf16.mxu0 0
        %8998 = vmatmul.mubr.bf16.gmra.mxu0 %v8743
        %v8999 = vpop.f32.mrf.mxu0
        %v9000 = vadd.f32 0.0, %v8999
        %v9001 = vpop.f32.mrf.mxu0
        %v9002 = vpop.f32.mrf.mxu0
        %v9003 = vadd.f32 0.0, %v9002
        %v9004 = vpop.f32.mrf.mxu0
        %9005 = vmatprep.mubr.bf16.mxu0 0
        %9006 = vmatmul.mubr.bf16.gmra.mxu0 %v8746
        %v9007 = vpop.f32.mrf.mxu0
        %v9008 = vadd.f32 0.0, %v9007
        %v9009 = vpop.f32.mrf.mxu0
        %v9010 = vpop.f32.mrf.mxu0
        %v9011 = vadd.f32 0.0, %v9010
        %v9012 = vpop.f32.mrf.mxu0
        %9013 = vmatprep.mubr.bf16.mxu0 0
        %9014 = vmatmul.mubr.bf16.gmra.mxu0 %v8749
        %v9015 = vpop.f32.mrf.mxu0
        %v9016 = vadd.f32 0.0, %v9015
        %v9017 = vpop.f32.mrf.mxu0
        %v9018 = vpop.f32.mrf.mxu0
        %v9019 = vadd.f32 0.0, %v9018
        %v9020 = vpop.f32.mrf.mxu0
        %9021 = vmatprep.mubr.bf16.mxu0 0
        %9022 = vmatmul.mubr.bf16.gmra.mxu0 %v8752
        %v9023 = vpop.f32.mrf.mxu0
        %v9024 = vadd.f32 0.0, %v9023
        %v9025 = vpop.f32.mrf.mxu0
        %v9026 = vpop.f32.mrf.mxu0
        %v9027 = vadd.f32 0.0, %v9026
        %v9028 = vpop.f32.mrf.mxu0
        %9029 = vmatprep.mubr.bf16.mxu0 0
        %9030 = vmatmul.mubr.bf16.gmra.mxu0 %v8755
        %v9031 = vpop.f32.mrf.mxu0
        %v9032 = vadd.f32 0.0, %v9031
        %v9033 = vpop.f32.mrf.mxu0
        %v9034 = vpop.f32.mrf.mxu0
        %v9035 = vadd.f32 0.0, %v9034
        %v9036 = vpop.f32.mrf.mxu0
        %9037 = vmatprep.mubr.bf16.mxu0 0
        %9038 = vmatmul.mubr.bf16.gmra.mxu0 %v8758
        %v9039 = vpop.f32.mrf.mxu0
        %v9040 = vadd.f32 0.0, %v9039
        %v9041 = vpop.f32.mrf.mxu0
        %v9042 = vpop.f32.mrf.mxu0
        %v9043 = vadd.f32 0.0, %v9042
        %v9044 = vpop.f32.mrf.mxu0
        %9045 = vmatprep.mubr.bf16.mxu0 0
        %9046 = vmatmul.mubr.bf16.gmra.mxu0 %v8761
        %v9047 = vpop.f32.mrf.mxu0
        %v9048 = vadd.f32 0.0, %v9047
        %v9049 = vpop.f32.mrf.mxu0
        %v9050 = vpop.f32.mrf.mxu0
        %v9051 = vadd.f32 0.0, %v9050
        %v9052 = vpop.f32.mrf.mxu0
        %9053 = vmatprep.mubr.bf16.mxu0 0
        %9054 = vmatmul.mubr.bf16.gmra.mxu0 %v8764
        %v9055 = vpop.f32.mrf.mxu0
        %v9056 = vadd.f32 0.0, %v9055
        %v9057 = vpop.f32.mrf.mxu0
        %v9058 = vpop.f32.mrf.mxu0
        %v9059 = vadd.f32 0.0, %v9058
        %v9060 = vpop.f32.mrf.mxu0
        %9061 = vdwg.mxu0
        %v9094 = vunpack.c.l.b16 %v8526
        %v9095 = vunpack.c.l.b16 %v8527
        %v9096 = vunpack.c.l.b16 %v8528
        %v9097 = vunpack.c.l.b16 %v8529
        %v9098 = vunpack.c.l.b16 %v8530
        %v9099 = vunpack.c.l.b16 %v8531
        %v9100 = vunpack.c.l.b16 %v8532
        %v9101 = vunpack.c.l.b16 %v8533
        %v9102 = vunpack.c.l.b16 %v8534
        %v9103 = vunpack.c.l.b16 %v8535
        %v9104 = vunpack.c.l.b16 %v8536
        %v9105 = vunpack.c.l.b16 %v8537
        %v9106 = vunpack.c.l.b16 %v8538
        %v9107 = vunpack.c.l.b16 %v8539
        %v9108 = vunpack.c.l.b16 %v8540
        %v9109 = vunpack.c.l.b16 %v8541
        %v9110 = vunpack.c.l.b16 %v8542
        %v9111 = vunpack.c.l.b16 %v8543
        %v9112 = vunpack.c.l.b16 %v8544
        %v9113 = vunpack.c.l.b16 %v8545
        %v9114 = vunpack.c.l.b16 %v8546
        %v9115 = vunpack.c.l.b16 %v8547
        %v9116 = vunpack.c.l.b16 %v8548
        %v9117 = vunpack.c.l.b16 %v8549
        %v9118 = vunpack.c.l.b16 %v8550
        %v9119 = vunpack.c.l.b16 %v8551
        %v9120 = vunpack.c.l.b16 %v8552
        %v9121 = vunpack.c.l.b16 %v8553
        %v9122 = vunpack.c.l.b16 %v8554
        %v9123 = vunpack.c.l.b16 %v8555
        %v9124 = vunpack.c.l.b16 %v8556
        %v9125 = vunpack.c.l.b16 %v8557
        %v9126 = vpack.c.b16 %v9095, %v9094
        %v9127 = vpack.c.b16 %v9097, %v9096
        %v9128 = vpack.c.b16 %v9099, %v9098
        %v9129 = vpack.c.b16 %v9101, %v9100
        %v9130 = vpack.c.b16 %v9103, %v9102
        %v9131 = vpack.c.b16 %v9105, %v9104
        %v9132 = vpack.c.b16 %v9107, %v9106
        %v9133 = vpack.c.b16 %v9109, %v9108
        %v9134 = vpack.c.b16 %v9111, %v9110
        %v9135 = vpack.c.b16 %v9113, %v9112
        %v9136 = vpack.c.b16 %v9115, %v9114
        %v9137 = vpack.c.b16 %v9117, %v9116
        %v9138 = vpack.c.b16 %v9119, %v9118
        %v9139 = vpack.c.b16 %v9121, %v9120
        %v9140 = vpack.c.b16 %v9123, %v9122
        %v9141 = vpack.c.b16 %v9125, %v9124
        %9158 = vmatprep.subr.bf16.mxu0 0
        %9159 = vmatpush1.bf16.msra.mxu0 %v9133
        %9160 = vmatprep.subr.bf16.mxu0 0
        %9161 = vmatpush1.bf16.msra.mxu0 %v9132
        %9162 = vmatprep.subr.bf16.mxu0 0
        %9163 = vmatpush1.bf16.msra.mxu0 %v9131
        %9164 = vmatprep.subr.bf16.mxu0 0
        %9165 = vmatpush1.bf16.msra.mxu0 %v9130
        %9166 = vmatprep.subr.bf16.mxu0 0
        %9167 = vmatpush1.bf16.msra.mxu0 %v9129
        %9168 = vmatprep.subr.bf16.mxu0 0
        %9169 = vmatpush1.bf16.msra.mxu0 %v9128
        %9170 = vmatprep.subr.bf16.mxu0 0
        %9171 = vmatpush1.bf16.msra.mxu0 %v9127
        %9172 = vmatprep.subr.bf16.mxu0 0
        %9173 = vmatpush1.bf16.msra.mxu0 %v9126
        %9174 = vmatprep.subr.bf16.mxu0 0
        %9175 = vmatpush2.bf16.msra.mxu0 %v9141
        %9176 = vmatprep.subr.bf16.mxu0 0
        %9177 = vmatpush2.bf16.msra.mxu0 %v9140
        %9178 = vmatprep.subr.bf16.mxu0 0
        %9179 = vmatpush2.bf16.msra.mxu0 %v9139
        %9180 = vmatprep.subr.bf16.mxu0 0
        %9181 = vmatpush2.bf16.msra.mxu0 %v9138
        %9182 = vmatprep.subr.bf16.mxu0 0
        %9183 = vmatpush2.bf16.msra.mxu0 %v9137
        %9184 = vmatprep.subr.bf16.mxu0 0
        %9185 = vmatpush2.bf16.msra.mxu0 %v9136
        %9186 = vmatprep.subr.bf16.mxu0 0
        %9187 = vmatpush2.bf16.msra.mxu0 %v9135
        %9188 = vmatprep.subr.bf16.mxu0 0
        %9189 = vmatpush2.bf16.msra.mxu0 %v9134
        %9190 = vmatprep.mubr.bf16.mxu0 %v8463
        %9191 = vmatmul.mubr.bf16.gmra.mxu0 %v8462
        %v9192 = vpop.f32.mrf.mxu0
        %v9193 = vadd.f32 %v8808, %v9192
        %v9194 = vpop.f32.mrf.mxu0
        %v9195 = vpop.f32.mrf.mxu0
        %v9196 = vadd.f32 %v8811, %v9195
        %v9197 = vpop.f32.mrf.mxu0
        %9198 = vmatprep.mubr.bf16.mxu0 %v8465
        %9199 = vmatmul.mubr.bf16.gmra.mxu0 %v8464
        %v9200 = vpop.f32.mrf.mxu0
        %v9201 = vadd.f32 %v8816, %v9200
        %v9202 = vpop.f32.mrf.mxu0
        %v9203 = vpop.f32.mrf.mxu0
        %v9204 = vadd.f32 %v8819, %v9203
        %v9205 = vpop.f32.mrf.mxu0
        %9206 = vmatprep.mubr.bf16.mxu0 %v8467
        %9207 = vmatmul.mubr.bf16.gmra.mxu0 %v8466
        %v9208 = vpop.f32.mrf.mxu0
        %v9209 = vadd.f32 %v8824, %v9208
        %v9210 = vpop.f32.mrf.mxu0
        %v9211 = vpop.f32.mrf.mxu0
        %v9212 = vadd.f32 %v8827, %v9211
        %v9213 = vpop.f32.mrf.mxu0
        %9214 = vmatprep.mubr.bf16.mxu0 %v8469
        %9215 = vmatmul.mubr.bf16.gmra.mxu0 %v8468
        %v9216 = vpop.f32.mrf.mxu0
        %v9217 = vadd.f32 %v8832, %v9216
        %v9218 = vpop.f32.mrf.mxu0
        %v9219 = vpop.f32.mrf.mxu0
        %v9220 = vadd.f32 %v8835, %v9219
        %v9221 = vpop.f32.mrf.mxu0
        %9222 = vmatprep.mubr.bf16.mxu0 %v8471
        %9223 = vmatmul.mubr.bf16.gmra.mxu0 %v8470
        %v9224 = vpop.f32.mrf.mxu0
        %v9225 = vadd.f32 %v8840, %v9224
        %v9226 = vpop.f32.mrf.mxu0
        %v9227 = vpop.f32.mrf.mxu0
        %v9228 = vadd.f32 %v8843, %v9227
        %v9229 = vpop.f32.mrf.mxu0
        %9230 = vmatprep.mubr.bf16.mxu0 %v8473
        %9231 = vmatmul.mubr.bf16.gmra.mxu0 %v8472
        %v9232 = vpop.f32.mrf.mxu0
        %v9233 = vadd.f32 %v8848, %v9232
        %v9234 = vpop.f32.mrf.mxu0
        %v9235 = vpop.f32.mrf.mxu0
        %v9236 = vadd.f32 %v8851, %v9235
        %v9237 = vpop.f32.mrf.mxu0
        %9238 = vmatprep.mubr.bf16.mxu0 %v8475
        %9239 = vmatmul.mubr.bf16.gmra.mxu0 %v8474
        %v9240 = vpop.f32.mrf.mxu0
        %v9241 = vadd.f32 %v8856, %v9240
        %v9242 = vpop.f32.mrf.mxu0
        %v9243 = vpop.f32.mrf.mxu0
        %v9244 = vadd.f32 %v8859, %v9243
        %v9245 = vpop.f32.mrf.mxu0
        %9246 = vmatprep.mubr.bf16.mxu0 %v8477
        %9247 = vmatmul.mubr.bf16.gmra.mxu0 %v8476
        %v9248 = vpop.f32.mrf.mxu0
        %v9249 = vadd.f32 %v8864, %v9248
        %v9250 = vpop.f32.mrf.mxu0
        %v9251 = vpop.f32.mrf.mxu0
        %v9252 = vadd.f32 %v8867, %v9251
        %v9253 = vpop.f32.mrf.mxu0
        %9254 = vmatprep.mubr.bf16.mxu0 %v8479
        %9255 = vmatmul.mubr.bf16.gmra.mxu0 %v8478
        %v9256 = vpop.f32.mrf.mxu0
        %v9257 = vadd.f32 %v8872, %v9256
        %v9258 = vpop.f32.mrf.mxu0
        %v9259 = vpop.f32.mrf.mxu0
        %v9260 = vadd.f32 %v8875, %v9259
        %v9261 = vpop.f32.mrf.mxu0
        %9262 = vmatprep.mubr.bf16.mxu0 %v8481
        %9263 = vmatmul.mubr.bf16.gmra.mxu0 %v8480
        %v9264 = vpop.f32.mrf.mxu0
        %v9265 = vadd.f32 %v8880, %v9264
        %v9266 = vpop.f32.mrf.mxu0
        %v9267 = vpop.f32.mrf.mxu0
        %v9268 = vadd.f32 %v8883, %v9267
        %v9269 = vpop.f32.mrf.mxu0
        %9270 = vmatprep.mubr.bf16.mxu0 %v8483
        %9271 = vmatmul.mubr.bf16.gmra.mxu0 %v8482
        %v9272 = vpop.f32.mrf.mxu0
        %v9273 = vadd.f32 %v8888, %v9272
        %v9274 = vpop.f32.mrf.mxu0
        %v9275 = vpop.f32.mrf.mxu0
        %v9276 = vadd.f32 %v8891, %v9275
        %v9277 = vpop.f32.mrf.mxu0
        %9278 = vmatprep.mubr.bf16.mxu0 %v8485
        %9279 = vmatmul.mubr.bf16.gmra.mxu0 %v8484
        %v9280 = vpop.f32.mrf.mxu0
        %v9281 = vadd.f32 %v8896, %v9280
        %v9282 = vpop.f32.mrf.mxu0
        %v9283 = vpop.f32.mrf.mxu0
        %v9284 = vadd.f32 %v8899, %v9283
        %v9285 = vpop.f32.mrf.mxu0
        %9286 = vmatprep.mubr.bf16.mxu0 %v8487
        %9287 = vmatmul.mubr.bf16.gmra.mxu0 %v8486
        %v9288 = vpop.f32.mrf.mxu0
        %v9289 = vadd.f32 %v8904, %v9288
        %v9290 = vpop.f32.mrf.mxu0
        %v9291 = vpop.f32.mrf.mxu0
        %v9292 = vadd.f32 %v8907, %v9291
        %v9293 = vpop.f32.mrf.mxu0
        %9294 = vmatprep.mubr.bf16.mxu0 %v8489
        %9295 = vmatmul.mubr.bf16.gmra.mxu0 %v8488
        %v9296 = vpop.f32.mrf.mxu0
        %v9297 = vadd.f32 %v8912, %v9296
        %v9298 = vpop.f32.mrf.mxu0
        %v9299 = vpop.f32.mrf.mxu0
        %v9300 = vadd.f32 %v8915, %v9299
        %v9301 = vpop.f32.mrf.mxu0
        %9302 = vmatprep.mubr.bf16.mxu0 %v8491
        %9303 = vmatmul.mubr.bf16.gmra.mxu0 %v8490
        %v9304 = vpop.f32.mrf.mxu0
        %v9305 = vadd.f32 %v8920, %v9304
        %v9306 = vpop.f32.mrf.mxu0
        %v9307 = vpop.f32.mrf.mxu0
        %v9308 = vadd.f32 %v8923, %v9307
        %v9309 = vpop.f32.mrf.mxu0
        %9310 = vmatprep.mubr.bf16.mxu0 %v8493
        %9311 = vmatmul.mubr.bf16.gmra.mxu0 %v8492
        %v9312 = vpop.f32.mrf.mxu0
        %v9313 = vadd.f32 %v8928, %v9312
        %v9314 = vpop.f32.mrf.mxu0
        %v9315 = vpop.f32.mrf.mxu0
        %v9316 = vadd.f32 %v8931, %v9315
        %v9317 = vpop.f32.mrf.mxu0
        %9318 = vmatprep.mubr.bf16.mxu0 %v8495
        %9319 = vmatmul.mubr.bf16.gmra.mxu0 %v8494
        %v9320 = vpop.f32.mrf.mxu0
        %v9321 = vadd.f32 %v8936, %v9320
        %v9322 = vpop.f32.mrf.mxu0
        %v9323 = vpop.f32.mrf.mxu0
        %v9324 = vadd.f32 %v8939, %v9323
        %v9325 = vpop.f32.mrf.mxu0
        %9326 = vmatprep.mubr.bf16.mxu0 %v8497
        %9327 = vmatmul.mubr.bf16.gmra.mxu0 %v8496
        %v9328 = vpop.f32.mrf.mxu0
        %v9329 = vadd.f32 %v8944, %v9328
        %v9330 = vpop.f32.mrf.mxu0
        %v9331 = vpop.f32.mrf.mxu0
        %v9332 = vadd.f32 %v8947, %v9331
        %v9333 = vpop.f32.mrf.mxu0
        %9334 = vmatprep.mubr.bf16.mxu0 %v8499
        %9335 = vmatmul.mubr.bf16.gmra.mxu0 %v8498
        %v9336 = vpop.f32.mrf.mxu0
        %v9337 = vadd.f32 %v8952, %v9336
        %v9338 = vpop.f32.mrf.mxu0
        %v9339 = vpop.f32.mrf.mxu0
        %v9340 = vadd.f32 %v8955, %v9339
        %v9341 = vpop.f32.mrf.mxu0
        %9342 = vmatprep.mubr.bf16.mxu0 %v8501
        %9343 = vmatmul.mubr.bf16.gmra.mxu0 %v8500
        %v9344 = vpop.f32.mrf.mxu0
        %v9345 = vadd.f32 %v8960, %v9344
        %v9346 = vpop.f32.mrf.mxu0
        %v9347 = vpop.f32.mrf.mxu0
        %v9348 = vadd.f32 %v8963, %v9347
        %v9349 = vpop.f32.mrf.mxu0
        %9350 = vmatprep.mubr.bf16.mxu0 %v8503
        %9351 = vmatmul.mubr.bf16.gmra.mxu0 %v8502
        %v9352 = vpop.f32.mrf.mxu0
        %v9353 = vadd.f32 %v8968, %v9352
        %v9354 = vpop.f32.mrf.mxu0
        %v9355 = vpop.f32.mrf.mxu0
        %v9356 = vadd.f32 %v8971, %v9355
        %v9357 = vpop.f32.mrf.mxu0
        %9358 = vmatprep.mubr.bf16.mxu0 %v8505
        %9359 = vmatmul.mubr.bf16.gmra.mxu0 %v8504
        %v9360 = vpop.f32.mrf.mxu0
        %v9361 = vadd.f32 %v8976, %v9360
        %v9362 = vpop.f32.mrf.mxu0
        %v9363 = vpop.f32.mrf.mxu0
        %v9364 = vadd.f32 %v8979, %v9363
        %v9365 = vpop.f32.mrf.mxu0
        %9366 = vmatprep.mubr.bf16.mxu0 %v8507
        %9367 = vmatmul.mubr.bf16.gmra.mxu0 %v8506
        %v9368 = vpop.f32.mrf.mxu0
        %v9369 = vadd.f32 %v8984, %v9368
        %v9370 = vpop.f32.mrf.mxu0
        %v9371 = vpop.f32.mrf.mxu0
        %v9372 = vadd.f32 %v8987, %v9371
        %v9373 = vpop.f32.mrf.mxu0
        %9374 = vmatprep.mubr.bf16.mxu0 %v8509
        %9375 = vmatmul.mubr.bf16.gmra.mxu0 %v8508
        %v9376 = vpop.f32.mrf.mxu0
        %v9377 = vadd.f32 %v8992, %v9376
        %v9378 = vpop.f32.mrf.mxu0
        %v9379 = vpop.f32.mrf.mxu0
        %v9380 = vadd.f32 %v8995, %v9379
        %v9381 = vpop.f32.mrf.mxu0
        %9382 = vmatprep.mubr.bf16.mxu0 %v8511
        %9383 = vmatmul.mubr.bf16.gmra.mxu0 %v8510
        %v9384 = vpop.f32.mrf.mxu0
        %v9385 = vadd.f32 %v9000, %v9384
        %v9386 = vpop.f32.mrf.mxu0
        %v9387 = vpop.f32.mrf.mxu0
        %v9388 = vadd.f32 %v9003, %v9387
        %v9389 = vpop.f32.mrf.mxu0
        %9390 = vmatprep.mubr.bf16.mxu0 %v8513
        %9391 = vmatmul.mubr.bf16.gmra.mxu0 %v8512
        %v9392 = vpop.f32.mrf.mxu0
        %v9393 = vadd.f32 %v9008, %v9392
        %v9394 = vpop.f32.mrf.mxu0
        %v9395 = vpop.f32.mrf.mxu0
        %v9396 = vadd.f32 %v9011, %v9395
        %v9397 = vpop.f32.mrf.mxu0
        %9398 = vmatprep.mubr.bf16.mxu0 %v8515
        %9399 = vmatmul.mubr.bf16.gmra.mxu0 %v8514
        %v9400 = vpop.f32.mrf.mxu0
        %v9401 = vadd.f32 %v9016, %v9400
        %v9402 = vpop.f32.mrf.mxu0
        %v9403 = vpop.f32.mrf.mxu0
        %v9404 = vadd.f32 %v9019, %v9403
        %v9405 = vpop.f32.mrf.mxu0
        %9406 = vmatprep.mubr.bf16.mxu0 %v8517
        %9407 = vmatmul.mubr.bf16.gmra.mxu0 %v8516
        %v9408 = vpop.f32.mrf.mxu0
        %v9409 = vadd.f32 %v9024, %v9408
        %v9410 = vpop.f32.mrf.mxu0
        %v9411 = vpop.f32.mrf.mxu0
        %v9412 = vadd.f32 %v9027, %v9411
        %v9413 = vpop.f32.mrf.mxu0
        %9414 = vmatprep.mubr.bf16.mxu0 %v8519
        %9415 = vmatmul.mubr.bf16.gmra.mxu0 %v8518
        %v9416 = vpop.f32.mrf.mxu0
        %v9417 = vadd.f32 %v9032, %v9416
        %v9418 = vpop.f32.mrf.mxu0
        %v9419 = vpop.f32.mrf.mxu0
        %v9420 = vadd.f32 %v9035, %v9419
        %v9421 = vpop.f32.mrf.mxu0
        %9422 = vmatprep.mubr.bf16.mxu0 %v8521
        %9423 = vmatmul.mubr.bf16.gmra.mxu0 %v8520
        %v9424 = vpop.f32.mrf.mxu0
        %v9425 = vadd.f32 %v9040, %v9424
        %v9426 = vpop.f32.mrf.mxu0
        %v9427 = vpop.f32.mrf.mxu0
        %v9428 = vadd.f32 %v9043, %v9427
        %v9429 = vpop.f32.mrf.mxu0
        %9430 = vmatprep.mubr.bf16.mxu0 %v8523
        %9431 = vmatmul.mubr.bf16.gmra.mxu0 %v8522
        %v9432 = vpop.f32.mrf.mxu0
        %v9433 = vadd.f32 %v9048, %v9432
        %v9434 = vpop.f32.mrf.mxu0
        %v9435 = vpop.f32.mrf.mxu0
        %v9436 = vadd.f32 %v9051, %v9435
        %v9437 = vpop.f32.mrf.mxu0
        %9438 = vmatprep.mubr.bf16.mxu0 %v8525
        %9439 = vmatmul.mubr.bf16.gmra.mxu0 %v8524
        %v9440 = vpop.f32.mrf.mxu0
        %v9441 = vadd.f32 %v9056, %v9440
        %v9442 = vpop.f32.mrf.mxu0
        %v9443 = vpop.f32.mrf.mxu0
        %v9444 = vadd.f32 %v9059, %v9443
        %v9445 = vpop.f32.mrf.mxu0
        %9446 = vdwg.mxu0
        %v9447 = vld [vmem:[%s22] sm:$0x1]
        %v9449 = vlaneseq
        %v9450 = vshrl.u32 %v9449, 7
        %v9451 = vsub.s32 0, %v9450
        %v9452 = vrot.slane %v9447, %v9451
        %v9454 = vadd.f32 %v9193, %v9452
        %v9455 = vadd.f32 %v9196, %v9452
        %v9456 = vadd.f32 %v9201, %v9452
        %v9457 = vadd.f32 %v9204, %v9452
        %v9458 = vadd.f32 %v9209, %v9452
        %v9459 = vadd.f32 %v9212, %v9452
        %v9460 = vadd.f32 %v9217, %v9452
        %v9461 = vadd.f32 %v9220, %v9452
        %v9462 = vadd.f32 %v9225, %v9452
        %v9463 = vadd.f32 %v9228, %v9452
        %v9464 = vadd.f32 %v9233, %v9452
        %v9465 = vadd.f32 %v9236, %v9452
        %v9466 = vadd.f32 %v9241, %v9452
        %v9467 = vadd.f32 %v9244, %v9452
        %v9468 = vadd.f32 %v9249, %v9452
        %v9469 = vadd.f32 %v9252, %v9452
        %v9470 = vadd.f32 %v9257, %v9452
        %v9471 = vadd.f32 %v9260, %v9452
        %v9472 = vadd.f32 %v9265, %v9452
        %v9473 = vadd.f32 %v9268, %v9452
        %v9474 = vadd.f32 %v9273, %v9452
        %v9475 = vadd.f32 %v9276, %v9452
        %v9476 = vadd.f32 %v9281, %v9452
        %v9477 = vadd.f32 %v9284, %v9452
        %v9478 = vadd.f32 %v9289, %v9452
        %v9479 = vadd.f32 %v9292, %v9452
        %v9480 = vadd.f32 %v9297, %v9452
        %v9481 = vadd.f32 %v9300, %v9452
        %v9482 = vadd.f32 %v9305, %v9452
        %v9483 = vadd.f32 %v9308, %v9452
        %v9484 = vadd.f32 %v9313, %v9452
        %v9485 = vadd.f32 %v9316, %v9452
        %v9486 = vadd.f32 %v9321, %v9452
        %v9487 = vadd.f32 %v9324, %v9452
        %v9488 = vadd.f32 %v9329, %v9452
        %v9489 = vadd.f32 %v9332, %v9452
        %v9490 = vadd.f32 %v9337, %v9452
        %v9491 = vadd.f32 %v9340, %v9452
        %v9492 = vadd.f32 %v9345, %v9452
        %v9493 = vadd.f32 %v9348, %v9452
        %v9494 = vadd.f32 %v9353, %v9452
        %v9495 = vadd.f32 %v9356, %v9452
        %v9496 = vadd.f32 %v9361, %v9452
        %v9497 = vadd.f32 %v9364, %v9452
        %v9498 = vadd.f32 %v9369, %v9452
        %v9499 = vadd.f32 %v9372, %v9452
        %v9500 = vadd.f32 %v9377, %v9452
        %v9501 = vadd.f32 %v9380, %v9452
        %v9502 = vadd.f32 %v9385, %v9452
        %v9503 = vadd.f32 %v9388, %v9452
        %v9504 = vadd.f32 %v9393, %v9452
        %v9505 = vadd.f32 %v9396, %v9452
        %v9506 = vadd.f32 %v9401, %v9452
        %v9507 = vadd.f32 %v9404, %v9452
        %v9508 = vadd.f32 %v9409, %v9452
        %v9509 = vadd.f32 %v9412, %v9452
        %v9510 = vadd.f32 %v9417, %v9452
        %v9511 = vadd.f32 %v9420, %v9452
        %v9512 = vadd.f32 %v9425, %v9452
        %v9513 = vadd.f32 %v9428, %v9452
        %v9514 = vadd.f32 %v9433, %v9452
        %v9515 = vadd.f32 %v9436, %v9452
        %v9516 = vadd.f32 %v9441, %v9452
        %v9517 = vadd.f32 %v9444, %v9452
        %v9518 = vmax.f32 %v9454, 0.0
        %v9519 = vmax.f32 %v9455, 0.0
        %v9520 = vmax.f32 %v9456, 0.0
        %v9521 = vmax.f32 %v9457, 0.0
        %v9522 = vmax.f32 %v9458, 0.0
        %v9523 = vmax.f32 %v9459, 0.0
        %v9524 = vmax.f32 %v9460, 0.0
        %v9525 = vmax.f32 %v9461, 0.0
        %v9526 = vmax.f32 %v9462, 0.0
        %v9527 = vmax.f32 %v9463, 0.0
        %v9528 = vmax.f32 %v9464, 0.0
        %v9529 = vmax.f32 %v9465, 0.0
        %v9530 = vmax.f32 %v9466, 0.0
        %v9531 = vmax.f32 %v9467, 0.0
        %v9532 = vmax.f32 %v9468, 0.0
        %v9533 = vmax.f32 %v9469, 0.0
        %v9534 = vmax.f32 %v9470, 0.0
        %v9535 = vmax.f32 %v9471, 0.0
        %v9536 = vmax.f32 %v9472, 0.0
        %v9537 = vmax.f32 %v9473, 0.0
        %v9538 = vmax.f32 %v9474, 0.0
        %v9539 = vmax.f32 %v9475, 0.0
        %v9540 = vmax.f32 %v9476, 0.0
        %v9541 = vmax.f32 %v9477, 0.0
        %v9542 = vmax.f32 %v9478, 0.0
        %v9543 = vmax.f32 %v9479, 0.0
        %v9544 = vmax.f32 %v9480, 0.0
        %v9545 = vmax.f32 %v9481, 0.0
        %v9546 = vmax.f32 %v9482, 0.0
        %v9547 = vmax.f32 %v9483, 0.0
        %v9548 = vmax.f32 %v9484, 0.0
        %v9549 = vmax.f32 %v9485, 0.0
        %v9550 = vmax.f32 %v9486, 0.0
        %v9551 = vmax.f32 %v9487, 0.0
        %v9552 = vmax.f32 %v9488, 0.0
        %v9553 = vmax.f32 %v9489, 0.0
        %v9554 = vmax.f32 %v9490, 0.0
        %v9555 = vmax.f32 %v9491, 0.0
        %v9556 = vmax.f32 %v9492, 0.0
        %v9557 = vmax.f32 %v9493, 0.0
        %v9558 = vmax.f32 %v9494, 0.0
        %v9559 = vmax.f32 %v9495, 0.0
        %v9560 = vmax.f32 %v9496, 0.0
        %v9561 = vmax.f32 %v9497, 0.0
        %v9562 = vmax.f32 %v9498, 0.0
        %v9563 = vmax.f32 %v9499, 0.0
        %v9564 = vmax.f32 %v9500, 0.0
        %v9565 = vmax.f32 %v9501, 0.0
        %v9566 = vmax.f32 %v9502, 0.0
        %v9567 = vmax.f32 %v9503, 0.0
        %v9568 = vmax.f32 %v9504, 0.0
        %v9569 = vmax.f32 %v9505, 0.0
        %v9570 = vmax.f32 %v9506, 0.0
        %v9571 = vmax.f32 %v9507, 0.0
        %v9572 = vmax.f32 %v9508, 0.0
        %v9573 = vmax.f32 %v9509, 0.0
        %v9574 = vmax.f32 %v9510, 0.0
        %v9575 = vmax.f32 %v9511, 0.0
        %v9576 = vmax.f32 %v9512, 0.0
        %v9577 = vmax.f32 %v9513, 0.0
        %v9578 = vmax.f32 %v9514, 0.0
        %v9579 = vmax.f32 %v9515, 0.0
        %v9580 = vmax.f32 %v9516, 0.0
        %v9581 = vmax.f32 %v9517, 0.0
        %v9582 = vpack.c.bf16 %v9519, %v9518
        %v9583 = vpack.c.bf16 %v9521, %v9520
        %v9584 = vpack.c.bf16 %v9523, %v9522
        %v9585 = vpack.c.bf16 %v9525, %v9524
        %v9586 = vpack.c.bf16 %v9527, %v9526
        %v9587 = vpack.c.bf16 %v9529, %v9528
        %v9588 = vpack.c.bf16 %v9531, %v9530
        %v9589 = vpack.c.bf16 %v9533, %v9532
        %v9590 = vpack.c.bf16 %v9535, %v9534
        %v9591 = vpack.c.bf16 %v9537, %v9536
        %v9592 = vpack.c.bf16 %v9539, %v9538
        %v9593 = vpack.c.bf16 %v9541, %v9540
        %v9594 = vpack.c.bf16 %v9543, %v9542
        %v9595 = vpack.c.bf16 %v9545, %v9544
        %v9596 = vpack.c.bf16 %v9547, %v9546
        %v9597 = vpack.c.bf16 %v9549, %v9548
        %v9598 = vpack.c.bf16 %v9551, %v9550
        %v9599 = vpack.c.bf16 %v9553, %v9552
        %v9600 = vpack.c.bf16 %v9555, %v9554
        %v9601 = vpack.c.bf16 %v9557, %v9556
        %v9602 = vpack.c.bf16 %v9559, %v9558
        %v9603 = vpack.c.bf16 %v9561, %v9560
        %v9604 = vpack.c.bf16 %v9563, %v9562
        %v9605 = vpack.c.bf16 %v9565, %v9564
        %v9606 = vpack.c.bf16 %v9567, %v9566
        %v9607 = vpack.c.bf16 %v9569, %v9568
        %v9608 = vpack.c.bf16 %v9571, %v9570
        %v9609 = vpack.c.bf16 %v9573, %v9572
        %v9610 = vpack.c.bf16 %v9575, %v9574
        %v9611 = vpack.c.bf16 %v9577, %v9576
        %v9612 = vpack.c.bf16 %v9579, %v9578
        %v9613 = vpack.c.bf16 %v9581, %v9580
        %v9614 = vld [vmem:[%s23] sm:$0xf]
        %v9615 = vld [vmem:[%s23 + $0x4] sm:$0xf]
        %v9616 = vld [vmem:[%s23 + $0x8] sm:$0xf]
        %v9617 = vld [vmem:[%s23 + $0xc] sm:$0xf]
        %v9618 = vld [vmem:[%s23 + $0x10] sm:$0xf]
        %v9619 = vld [vmem:[%s23 + $0x14] sm:$0xf]
        %v9620 = vld [vmem:[%s23 + $0x18] sm:$0xf]
        %v9621 = vld [vmem:[%s23 + $0x1c] sm:$0xf]
        %v9622 = vld [vmem:[%s23 + $0x20] sm:$0xf]
        %v9623 = vld [vmem:[%s23 + $0x24] sm:$0xf]
        %v9624 = vld [vmem:[%s23 + $0x28] sm:$0xf]
        %v9625 = vld [vmem:[%s23 + $0x2c] sm:$0xf]
        %v9626 = vld [vmem:[%s23 + $0x30] sm:$0xf]
        %v9627 = vld [vmem:[%s23 + $0x34] sm:$0xf]
        %v9628 = vld [vmem:[%s23 + $0x38] sm:$0xf]
        %v9629 = vld [vmem:[%s23 + $0x3c] sm:$0xf]
        %v9630 = vld [vmem:[%s24] sm:$0x1]
        %v9632 = vlaneseq
        %v9633 = vshrl.u32 %v9632, 7
        %v9634 = vsub.s32 0, %v9633
        %v9635 = vrot.slane %v9630, %v9634
        %v9653 = vunpack.c.l.b16 %v9614
        %v9654 = vunpack.c.l.b16 %v9615
        %v9655 = vunpack.c.l.b16 %v9616
        %v9656 = vunpack.c.l.b16 %v9617
        %v9657 = vunpack.c.l.b16 %v9618
        %v9658 = vunpack.c.l.b16 %v9619
        %v9659 = vunpack.c.l.b16 %v9620
        %v9660 = vunpack.c.l.b16 %v9621
        %v9661 = vunpack.c.l.b16 %v9622
        %v9662 = vunpack.c.l.b16 %v9623
        %v9663 = vunpack.c.l.b16 %v9624
        %v9664 = vunpack.c.l.b16 %v9625
        %v9665 = vunpack.c.l.b16 %v9626
        %v9666 = vunpack.c.l.b16 %v9627
        %v9667 = vunpack.c.l.b16 %v9628
        %v9668 = vunpack.c.l.b16 %v9629
        %v9669 = vpack.c.b16 %v9654, %v9653
        %v9670 = vpack.c.b16 %v9656, %v9655
        %v9671 = vpack.c.b16 %v9658, %v9657
        %v9672 = vpack.c.b16 %v9660, %v9659
        %v9673 = vpack.c.b16 %v9662, %v9661
        %v9674 = vpack.c.b16 %v9664, %v9663
        %v9675 = vpack.c.b16 %v9666, %v9665
        %v9676 = vpack.c.b16 %v9668, %v9667
        %9685 = vmatprep.subr.bf16.mxu0 0
        %9686 = vmatpush1.bf16.msra.mxu0 %v9676
        %9687 = vmatprep.subr.bf16.mxu0 0
        %9688 = vmatpush1.bf16.msra.mxu0 %v9675
        %9689 = vmatprep.subr.bf16.mxu0 0
        %9690 = vmatpush1.bf16.msra.mxu0 %v9674
        %9691 = vmatprep.subr.bf16.mxu0 0
        %9692 = vmatpush1.bf16.msra.mxu0 %v9673
        %9693 = vmatprep.subr.bf16.mxu0 0
        %9694 = vmatpush1.bf16.msra.mxu0 %v9672
        %9695 = vmatprep.subr.bf16.mxu0 0
        %9696 = vmatpush1.bf16.msra.mxu0 %v9671
        %9697 = vmatprep.subr.bf16.mxu0 0
        %9698 = vmatpush1.bf16.msra.mxu0 %v9670
        %9699 = vmatprep.subr.bf16.mxu0 0
        %9700 = vmatpush1.bf16.msra.mxu0 %v9669
        %9701 = vmatprep.subr.bf16.mxu0 0
        %9702 = vmatpush2.bf16.msra.mxu0 0
        %9703 = vmatprep.subr.bf16.mxu0 0
        %9704 = vmatpush2.bf16.msra.mxu0 0
        %9705 = vmatprep.subr.bf16.mxu0 0
        %9706 = vmatpush2.bf16.msra.mxu0 0
        %9707 = vmatprep.subr.bf16.mxu0 0
        %9708 = vmatpush2.bf16.msra.mxu0 0
        %9709 = vmatprep.subr.bf16.mxu0 0
        %9710 = vmatpush2.bf16.msra.mxu0 0
        %9711 = vmatprep.subr.bf16.mxu0 0
        %9712 = vmatpush2.bf16.msra.mxu0 0
        %9713 = vmatprep.subr.bf16.mxu0 0
        %9714 = vmatpush2.bf16.msra.mxu0 0
        %9715 = vmatprep.subr.bf16.mxu0 0
        %9716 = vmatpush2.bf16.msra.mxu0 0
        %9717 = vmatprep.mubr.bf16.mxu0 0
        %9718 = vmatmul.mubr.bf16.gmra.mxu0 %v9582
        %v9719 = vpop.f32.mrf.mxu0
        %v9720 = vadd.f32 %v9635, %v9719
        %v9721 = vpop.f32.mrf.mxu0
        %v9722 = vpop.f32.mrf.mxu0
        %v9723 = vadd.f32 %v9635, %v9722
        %v9724 = vpop.f32.mrf.mxu0
        %9725 = vmatprep.mubr.bf16.mxu0 0
        %9726 = vmatmul.mubr.bf16.gmra.mxu0 %v9583
        %v9727 = vpop.f32.mrf.mxu0
        %v9728 = vadd.f32 %v9635, %v9727
        %v9729 = vpop.f32.mrf.mxu0
        %v9730 = vpop.f32.mrf.mxu0
        %v9731 = vadd.f32 %v9635, %v9730
        %v9732 = vpop.f32.mrf.mxu0
        %9733 = vmatprep.mubr.bf16.mxu0 0
        %9734 = vmatmul.mubr.bf16.gmra.mxu0 %v9584
        %v9735 = vpop.f32.mrf.mxu0
        %v9736 = vadd.f32 %v9635, %v9735
        %v9737 = vpop.f32.mrf.mxu0
        %v9738 = vpop.f32.mrf.mxu0
        %v9739 = vadd.f32 %v9635, %v9738
        %v9740 = vpop.f32.mrf.mxu0
        %9741 = vmatprep.mubr.bf16.mxu0 0
        %9742 = vmatmul.mubr.bf16.gmra.mxu0 %v9585
        %v9743 = vpop.f32.mrf.mxu0
        %v9744 = vadd.f32 %v9635, %v9743
        %v9745 = vpop.f32.mrf.mxu0
        %v9746 = vpop.f32.mrf.mxu0
        %v9747 = vadd.f32 %v9635, %v9746
        %v9748 = vpop.f32.mrf.mxu0
        %9749 = vmatprep.mubr.bf16.mxu0 0
        %9750 = vmatmul.mubr.bf16.gmra.mxu0 %v9586
        %v9751 = vpop.f32.mrf.mxu0
        %v9752 = vadd.f32 %v9635, %v9751
        %v9753 = vpop.f32.mrf.mxu0
        %v9754 = vpop.f32.mrf.mxu0
        %v9755 = vadd.f32 %v9635, %v9754
        %v9756 = vpop.f32.mrf.mxu0
        %9757 = vmatprep.mubr.bf16.mxu0 0
        %9758 = vmatmul.mubr.bf16.gmra.mxu0 %v9587
        %v9759 = vpop.f32.mrf.mxu0
        %v9760 = vadd.f32 %v9635, %v9759
        %v9761 = vpop.f32.mrf.mxu0
        %v9762 = vpop.f32.mrf.mxu0
        %v9763 = vadd.f32 %v9635, %v9762
        %v9764 = vpop.f32.mrf.mxu0
        %9765 = vmatprep.mubr.bf16.mxu0 0
        %9766 = vmatmul.mubr.bf16.gmra.mxu0 %v9588
        %v9767 = vpop.f32.mrf.mxu0
        %v9768 = vadd.f32 %v9635, %v9767
        %v9769 = vpop.f32.mrf.mxu0
        %v9770 = vpop.f32.mrf.mxu0
        %v9771 = vadd.f32 %v9635, %v9770
        %v9772 = vpop.f32.mrf.mxu0
        %9773 = vmatprep.mubr.bf16.mxu0 0
        %9774 = vmatmul.mubr.bf16.gmra.mxu0 %v9589
        %v9775 = vpop.f32.mrf.mxu0
        %v9776 = vadd.f32 %v9635, %v9775
        %v9777 = vpop.f32.mrf.mxu0
        %v9778 = vpop.f32.mrf.mxu0
        %v9779 = vadd.f32 %v9635, %v9778
        %v9780 = vpop.f32.mrf.mxu0
        %9781 = vmatprep.mubr.bf16.mxu0 0
        %9782 = vmatmul.mubr.bf16.gmra.mxu0 %v9590
        %v9783 = vpop.f32.mrf.mxu0
        %v9784 = vadd.f32 %v9635, %v9783
        %v9785 = vpop.f32.mrf.mxu0
        %v9786 = vpop.f32.mrf.mxu0
        %v9787 = vadd.f32 %v9635, %v9786
        %v9788 = vpop.f32.mrf.mxu0
        %9789 = vmatprep.mubr.bf16.mxu0 0
        %9790 = vmatmul.mubr.bf16.gmra.mxu0 %v9591
        %v9791 = vpop.f32.mrf.mxu0
        %v9792 = vadd.f32 %v9635, %v9791
        %v9793 = vpop.f32.mrf.mxu0
        %v9794 = vpop.f32.mrf.mxu0
        %v9795 = vadd.f32 %v9635, %v9794
        %v9796 = vpop.f32.mrf.mxu0
        %9797 = vmatprep.mubr.bf16.mxu0 0
        %9798 = vmatmul.mubr.bf16.gmra.mxu0 %v9592
        %v9799 = vpop.f32.mrf.mxu0
        %v9800 = vadd.f32 %v9635, %v9799
        %v9801 = vpop.f32.mrf.mxu0
        %v9802 = vpop.f32.mrf.mxu0
        %v9803 = vadd.f32 %v9635, %v9802
        %v9804 = vpop.f32.mrf.mxu0
        %9805 = vmatprep.mubr.bf16.mxu0 0
        %9806 = vmatmul.mubr.bf16.gmra.mxu0 %v9593
        %v9807 = vpop.f32.mrf.mxu0
        %v9808 = vadd.f32 %v9635, %v9807
        %v9809 = vpop.f32.mrf.mxu0
        %v9810 = vpop.f32.mrf.mxu0
        %v9811 = vadd.f32 %v9635, %v9810
        %v9812 = vpop.f32.mrf.mxu0
        %9813 = vmatprep.mubr.bf16.mxu0 0
        %9814 = vmatmul.mubr.bf16.gmra.mxu0 %v9594
        %v9815 = vpop.f32.mrf.mxu0
        %v9816 = vadd.f32 %v9635, %v9815
        %v9817 = vpop.f32.mrf.mxu0
        %v9818 = vpop.f32.mrf.mxu0
        %v9819 = vadd.f32 %v9635, %v9818
        %v9820 = vpop.f32.mrf.mxu0
        %9821 = vmatprep.mubr.bf16.mxu0 0
        %9822 = vmatmul.mubr.bf16.gmra.mxu0 %v9595
        %v9823 = vpop.f32.mrf.mxu0
        %v9824 = vadd.f32 %v9635, %v9823
        %v9825 = vpop.f32.mrf.mxu0
        %v9826 = vpop.f32.mrf.mxu0
        %v9827 = vadd.f32 %v9635, %v9826
        %v9828 = vpop.f32.mrf.mxu0
        %9829 = vmatprep.mubr.bf16.mxu0 0
        %9830 = vmatmul.mubr.bf16.gmra.mxu0 %v9596
        %v9831 = vpop.f32.mrf.mxu0
        %v9832 = vadd.f32 %v9635, %v9831
        %v9833 = vpop.f32.mrf.mxu0
        %v9834 = vpop.f32.mrf.mxu0
        %v9835 = vadd.f32 %v9635, %v9834
        %v9836 = vpop.f32.mrf.mxu0
        %9837 = vmatprep.mubr.bf16.mxu0 0
        %9838 = vmatmul.mubr.bf16.gmra.mxu0 %v9597
        %v9839 = vpop.f32.mrf.mxu0
        %v9840 = vadd.f32 %v9635, %v9839
        %v9841 = vpop.f32.mrf.mxu0
        %v9842 = vpop.f32.mrf.mxu0
        %v9843 = vadd.f32 %v9635, %v9842
        %v9844 = vpop.f32.mrf.mxu0
        %9845 = vmatprep.mubr.bf16.mxu0 0
        %9846 = vmatmul.mubr.bf16.gmra.mxu0 %v9598
        %v9847 = vpop.f32.mrf.mxu0
        %v9848 = vadd.f32 %v9635, %v9847
        %v9849 = vpop.f32.mrf.mxu0
        %v9850 = vpop.f32.mrf.mxu0
        %v9851 = vadd.f32 %v9635, %v9850
        %v9852 = vpop.f32.mrf.mxu0
        %9853 = vmatprep.mubr.bf16.mxu0 0
        %9854 = vmatmul.mubr.bf16.gmra.mxu0 %v9599
        %v9855 = vpop.f32.mrf.mxu0
        %v9856 = vadd.f32 %v9635, %v9855
        %v9857 = vpop.f32.mrf.mxu0
        %v9858 = vpop.f32.mrf.mxu0
        %v9859 = vadd.f32 %v9635, %v9858
        %v9860 = vpop.f32.mrf.mxu0
        %9861 = vmatprep.mubr.bf16.mxu0 0
        %9862 = vmatmul.mubr.bf16.gmra.mxu0 %v9600
        %v9863 = vpop.f32.mrf.mxu0
        %v9864 = vadd.f32 %v9635, %v9863
        %v9865 = vpop.f32.mrf.mxu0
        %v9866 = vpop.f32.mrf.mxu0
        %v9867 = vadd.f32 %v9635, %v9866
        %v9868 = vpop.f32.mrf.mxu0
        %9869 = vmatprep.mubr.bf16.mxu0 0
        %9870 = vmatmul.mubr.bf16.gmra.mxu0 %v9601
        %v9871 = vpop.f32.mrf.mxu0
        %v9872 = vadd.f32 %v9635, %v9871
        %v9873 = vpop.f32.mrf.mxu0
        %v9874 = vpop.f32.mrf.mxu0
        %v9875 = vadd.f32 %v9635, %v9874
        %v9876 = vpop.f32.mrf.mxu0
        %9877 = vmatprep.mubr.bf16.mxu0 0
        %9878 = vmatmul.mubr.bf16.gmra.mxu0 %v9602
        %v9879 = vpop.f32.mrf.mxu0
        %v9880 = vadd.f32 %v9635, %v9879
        %v9881 = vpop.f32.mrf.mxu0
        %v9882 = vpop.f32.mrf.mxu0
        %v9883 = vadd.f32 %v9635, %v9882
        %v9884 = vpop.f32.mrf.mxu0
        %9885 = vmatprep.mubr.bf16.mxu0 0
        %9886 = vmatmul.mubr.bf16.gmra.mxu0 %v9603
        %v9887 = vpop.f32.mrf.mxu0
        %v9888 = vadd.f32 %v9635, %v9887
        %v9889 = vpop.f32.mrf.mxu0
        %v9890 = vpop.f32.mrf.mxu0
        %v9891 = vadd.f32 %v9635, %v9890
        %v9892 = vpop.f32.mrf.mxu0
        %9893 = vmatprep.mubr.bf16.mxu0 0
        %9894 = vmatmul.mubr.bf16.gmra.mxu0 %v9604
        %v9895 = vpop.f32.mrf.mxu0
        %v9896 = vadd.f32 %v9635, %v9895
        %v9897 = vpop.f32.mrf.mxu0
        %v9898 = vpop.f32.mrf.mxu0
        %v9899 = vadd.f32 %v9635, %v9898
        %v9900 = vpop.f32.mrf.mxu0
        %9901 = vmatprep.mubr.bf16.mxu0 0
        %9902 = vmatmul.mubr.bf16.gmra.mxu0 %v9605
        %v9903 = vpop.f32.mrf.mxu0
        %v9904 = vadd.f32 %v9635, %v9903
        %v9905 = vpop.f32.mrf.mxu0
        %v9906 = vpop.f32.mrf.mxu0
        %v9907 = vadd.f32 %v9635, %v9906
        %v9908 = vpop.f32.mrf.mxu0
        %9909 = vmatprep.mubr.bf16.mxu0 0
        %9910 = vmatmul.mubr.bf16.gmra.mxu0 %v9606
        %v9911 = vpop.f32.mrf.mxu0
        %v9912 = vadd.f32 %v9635, %v9911
        %v9913 = vpop.f32.mrf.mxu0
        %v9914 = vpop.f32.mrf.mxu0
        %v9915 = vadd.f32 %v9635, %v9914
        %v9916 = vpop.f32.mrf.mxu0
        %9917 = vmatprep.mubr.bf16.mxu0 0
        %9918 = vmatmul.mubr.bf16.gmra.mxu0 %v9607
        %v9919 = vpop.f32.mrf.mxu0
        %v9920 = vadd.f32 %v9635, %v9919
        %v9921 = vpop.f32.mrf.mxu0
        %v9922 = vpop.f32.mrf.mxu0
        %v9923 = vadd.f32 %v9635, %v9922
        %v9924 = vpop.f32.mrf.mxu0
        %9925 = vmatprep.mubr.bf16.mxu0 0
        %9926 = vmatmul.mubr.bf16.gmra.mxu0 %v9608
        %v9927 = vpop.f32.mrf.mxu0
        %v9928 = vadd.f32 %v9635, %v9927
        %v9929 = vpop.f32.mrf.mxu0
        %v9930 = vpop.f32.mrf.mxu0
        %v9931 = vadd.f32 %v9635, %v9930
        %v9932 = vpop.f32.mrf.mxu0
        %9933 = vmatprep.mubr.bf16.mxu0 0
        %9934 = vmatmul.mubr.bf16.gmra.mxu0 %v9609
        %v9935 = vpop.f32.mrf.mxu0
        %v9936 = vadd.f32 %v9635, %v9935
        %v9937 = vpop.f32.mrf.mxu0
        %v9938 = vpop.f32.mrf.mxu0
        %v9939 = vadd.f32 %v9635, %v9938
        %v9940 = vpop.f32.mrf.mxu0
        %9941 = vmatprep.mubr.bf16.mxu0 0
        %9942 = vmatmul.mubr.bf16.gmra.mxu0 %v9610
        %v9943 = vpop.f32.mrf.mxu0
        %v9944 = vadd.f32 %v9635, %v9943
        %v9945 = vpop.f32.mrf.mxu0
        %v9946 = vpop.f32.mrf.mxu0
        %v9947 = vadd.f32 %v9635, %v9946
        %v9948 = vpop.f32.mrf.mxu0
        %9949 = vmatprep.mubr.bf16.mxu0 0
        %9950 = vmatmul.mubr.bf16.gmra.mxu0 %v9611
        %v9951 = vpop.f32.mrf.mxu0
        %v9952 = vadd.f32 %v9635, %v9951
        %v9953 = vpop.f32.mrf.mxu0
        %v9954 = vpop.f32.mrf.mxu0
        %v9955 = vadd.f32 %v9635, %v9954
        %v9956 = vpop.f32.mrf.mxu0
        %9957 = vmatprep.mubr.bf16.mxu0 0
        %9958 = vmatmul.mubr.bf16.gmra.mxu0 %v9612
        %v9959 = vpop.f32.mrf.mxu0
        %v9960 = vadd.f32 %v9635, %v9959
        %v9961 = vpop.f32.mrf.mxu0
        %v9962 = vpop.f32.mrf.mxu0
        %v9963 = vadd.f32 %v9635, %v9962
        %v9964 = vpop.f32.mrf.mxu0
        %9965 = vmatprep.mubr.bf16.mxu0 0
        %9966 = vmatmul.mubr.bf16.gmra.mxu0 %v9613
        %v9967 = vpop.f32.mrf.mxu0
        %v9968 = vadd.f32 %v9635, %v9967
        %v9969 = vpop.f32.mrf.mxu0
        %v9970 = vpop.f32.mrf.mxu0
        %v9971 = vadd.f32 %v9635, %v9970
        %v9972 = vpop.f32.mrf.mxu0
        %9973 = vdwg.mxu0
        %v9974 = vxor.u32 %v9720, 2147483648
        %v9975 = vxor.u32 %v9723, 2147483648
        %v9976 = vxor.u32 %v9728, 2147483648
        %v9977 = vxor.u32 %v9731, 2147483648
        %v9978 = vxor.u32 %v9736, 2147483648
        %v9979 = vxor.u32 %v9739, 2147483648
        %v9980 = vxor.u32 %v9744, 2147483648
        %v9981 = vxor.u32 %v9747, 2147483648
        %v9982 = vxor.u32 %v9752, 2147483648
        %v9983 = vxor.u32 %v9755, 2147483648
        %v9984 = vxor.u32 %v9760, 2147483648
        %v9985 = vxor.u32 %v9763, 2147483648
        %v9986 = vxor.u32 %v9768, 2147483648
        %v9987 = vxor.u32 %v9771, 2147483648
        %v9988 = vxor.u32 %v9776, 2147483648
        %v9989 = vxor.u32 %v9779, 2147483648
        %v9990 = vxor.u32 %v9784, 2147483648
        %v9991 = vxor.u32 %v9787, 2147483648
        %v9992 = vxor.u32 %v9792, 2147483648
        %v9993 = vxor.u32 %v9795, 2147483648
        %v9994 = vxor.u32 %v9800, 2147483648
        %v9995 = vxor.u32 %v9803, 2147483648
        %v9996 = vxor.u32 %v9808, 2147483648
        %v9997 = vxor.u32 %v9811, 2147483648
        %v9998 = vxor.u32 %v9816, 2147483648
        %v9999 = vxor.u32 %v9819, 2147483648
        %v10000 = vxor.u32 %v9824, 2147483648
        %v10001 = vxor.u32 %v9827, 2147483648
        %v10002 = vxor.u32 %v9832, 2147483648
        %v10003 = vxor.u32 %v9835, 2147483648
        %v10004 = vxor.u32 %v9840, 2147483648
        %v10005 = vxor.u32 %v9843, 2147483648
        %v10006 = vxor.u32 %v9848, 2147483648
        %v10007 = vxor.u32 %v9851, 2147483648
        %v10008 = vxor.u32 %v9856, 2147483648
        %v10009 = vxor.u32 %v9859, 2147483648
        %v10010 = vxor.u32 %v9864, 2147483648
        %v10011 = vxor.u32 %v9867, 2147483648
        %v10012 = vxor.u32 %v9872, 2147483648
        %v10013 = vxor.u32 %v9875, 2147483648
        %v10014 = vxor.u32 %v9880, 2147483648
        %v10015 = vxor.u32 %v9883, 2147483648
        %v10016 = vxor.u32 %v9888, 2147483648
        %v10017 = vxor.u32 %v9891, 2147483648
        %v10018 = vxor.u32 %v9896, 2147483648
        %v10019 = vxor.u32 %v9899, 2147483648
        %v10020 = vxor.u32 %v9904, 2147483648
        %v10021 = vxor.u32 %v9907, 2147483648
        %v10022 = vxor.u32 %v9912, 2147483648
        %v10023 = vxor.u32 %v9915, 2147483648
        %v10024 = vxor.u32 %v9920, 2147483648
        %v10025 = vxor.u32 %v9923, 2147483648
        %v10026 = vxor.u32 %v9928, 2147483648
        %v10027 = vxor.u32 %v9931, 2147483648
        %v10028 = vxor.u32 %v9936, 2147483648
        %v10029 = vxor.u32 %v9939, 2147483648
        %v10030 = vxor.u32 %v9944, 2147483648
        %v10031 = vxor.u32 %v9947, 2147483648
        %v10032 = vxor.u32 %v9952, 2147483648
        %v10033 = vxor.u32 %v9955, 2147483648
        %v10034 = vxor.u32 %v9960, 2147483648
        %v10035 = vxor.u32 %v9963, 2147483648
        %v10036 = vxor.u32 %v9968, 2147483648
        %v10037 = vxor.u32 %v9971, 2147483648
        %v10038 = vmul.f32 %v9974, 1.442695
        %v10039 = vpow.pop %v10038
        %v10040 = vmul.f32 %v9975, 1.442695
        %v10041 = vpow.pop %v10040
        %v10042 = vmul.f32 %v9976, 1.442695
        %v10043 = vpow.pop %v10042
        %v10044 = vmul.f32 %v9977, 1.442695
        %v10045 = vpow.pop %v10044
        %v10046 = vmul.f32 %v9978, 1.442695
        %v10047 = vpow.pop %v10046
        %v10048 = vmul.f32 %v9979, 1.442695
        %v10049 = vpow.pop %v10048
        %v10050 = vmul.f32 %v9980, 1.442695
        %v10051 = vpow.pop %v10050
        %v10052 = vmul.f32 %v9981, 1.442695
        %v10053 = vpow.pop %v10052
        %v10054 = vmul.f32 %v9982, 1.442695
        %v10055 = vpow.pop %v10054
        %v10056 = vmul.f32 %v9983, 1.442695
        %v10057 = vpow.pop %v10056
        %v10058 = vmul.f32 %v9984, 1.442695
        %v10059 = vpow.pop %v10058
        %v10060 = vmul.f32 %v9985, 1.442695
        %v10061 = vpow.pop %v10060
        %v10062 = vmul.f32 %v9986, 1.442695
        %v10063 = vpow.pop %v10062
        %v10064 = vmul.f32 %v9987, 1.442695
        %v10065 = vpow.pop %v10064
        %v10066 = vmul.f32 %v9988, 1.442695
        %v10067 = vpow.pop %v10066
        %v10068 = vmul.f32 %v9989, 1.442695
        %v10069 = vpow.pop %v10068
        %v10070 = vmul.f32 %v9990, 1.442695
        %v10071 = vpow.pop %v10070
        %v10072 = vmul.f32 %v9991, 1.442695
        %v10073 = vpow.pop %v10072
        %v10074 = vmul.f32 %v9992, 1.442695
        %v10075 = vpow.pop %v10074
        %v10076 = vmul.f32 %v9993, 1.442695
        %v10077 = vpow.pop %v10076
        %v10078 = vmul.f32 %v9994, 1.442695
        %v10079 = vpow.pop %v10078
        %v10080 = vmul.f32 %v9995, 1.442695
        %v10081 = vpow.pop %v10080
        %v10082 = vmul.f32 %v9996, 1.442695
        %v10083 = vpow.pop %v10082
        %v10084 = vmul.f32 %v9997, 1.442695
        %v10085 = vpow.pop %v10084
        %v10086 = vmul.f32 %v9998, 1.442695
        %v10087 = vpow.pop %v10086
        %v10088 = vmul.f32 %v9999, 1.442695
        %v10089 = vpow.pop %v10088
        %v10090 = vmul.f32 %v10000, 1.442695
        %v10091 = vpow.pop %v10090
        %v10092 = vmul.f32 %v10001, 1.442695
        %v10093 = vpow.pop %v10092
        %v10094 = vmul.f32 %v10002, 1.442695
        %v10095 = vpow.pop %v10094
        %v10096 = vmul.f32 %v10003, 1.442695
        %v10097 = vpow.pop %v10096
        %v10098 = vmul.f32 %v10004, 1.442695
        %v10099 = vpow.pop %v10098
        %v10100 = vmul.f32 %v10005, 1.442695
        %v10101 = vpow.pop %v10100
        %v10102 = vmul.f32 %v10006, 1.442695
        %v10103 = vpow.pop %v10102
        %v10104 = vmul.f32 %v10007, 1.442695
        %v10105 = vpow.pop %v10104
        %v10106 = vmul.f32 %v10008, 1.442695
        %v10107 = vpow.pop %v10106
        %v10108 = vmul.f32 %v10009, 1.442695
        %v10109 = vpow.pop %v10108
        %v10110 = vmul.f32 %v10010, 1.442695
        %v10111 = vpow.pop %v10110
        %v10112 = vmul.f32 %v10011, 1.442695
        %v10113 = vpow.pop %v10112
        %v10114 = vmul.f32 %v10012, 1.442695
        %v10115 = vpow.pop %v10114
        %v10116 = vmul.f32 %v10013, 1.442695
        %v10117 = vpow.pop %v10116
        %v10118 = vmul.f32 %v10014, 1.442695
        %v10119 = vpow.pop %v10118
        %v10120 = vmul.f32 %v10015, 1.442695
        %v10121 = vpow.pop %v10120
        %v10122 = vmul.f32 %v10016, 1.442695
        %v10123 = vpow.pop %v10122
        %v10124 = vmul.f32 %v10017, 1.442695
        %v10125 = vpow.pop %v10124
        %v10126 = vmul.f32 %v10018, 1.442695
        %v10127 = vpow.pop %v10126
        %v10128 = vmul.f32 %v10019, 1.442695
        %v10129 = vpow.pop %v10128
        %v10130 = vmul.f32 %v10020, 1.442695
        %v10131 = vpow.pop %v10130
        %v10132 = vmul.f32 %v10021, 1.442695
        %v10133 = vpow.pop %v10132
        %v10134 = vmul.f32 %v10022, 1.442695
        %v10135 = vpow.pop %v10134
        %v10136 = vmul.f32 %v10023, 1.442695
        %v10137 = vpow.pop %v10136
        %v10138 = vmul.f32 %v10024, 1.442695
        %v10139 = vpow.pop %v10138
        %v10140 = vmul.f32 %v10025, 1.442695
        %v10141 = vpow.pop %v10140
        %v10142 = vmul.f32 %v10026, 1.442695
        %v10143 = vpow.pop %v10142
        %v10144 = vmul.f32 %v10027, 1.442695
        %v10145 = vpow.pop %v10144
        %v10146 = vmul.f32 %v10028, 1.442695
        %v10147 = vpow.pop %v10146
        %v10148 = vmul.f32 %v10029, 1.442695
        %v10149 = vpow.pop %v10148
        %v10150 = vmul.f32 %v10030, 1.442695
        %v10151 = vpow.pop %v10150
        %v10152 = vmul.f32 %v10031, 1.442695
        %v10153 = vpow.pop %v10152
        %v10154 = vmul.f32 %v10032, 1.442695
        %v10155 = vpow.pop %v10154
        %v10156 = vmul.f32 %v10033, 1.442695
        %v10157 = vpow.pop %v10156
        %v10158 = vmul.f32 %v10034, 1.442695
        %v10159 = vpow.pop %v10158
        %v10160 = vmul.f32 %v10035, 1.442695
        %v10161 = vpow.pop %v10160
        %v10162 = vmul.f32 %v10036, 1.442695
        %v10163 = vpow.pop %v10162
        %v10164 = vmul.f32 %v10037, 1.442695
        %v10165 = vpow.pop %v10164
        %v10166 = vadd.f32 %v10039, 1.0
        %v10167 = vadd.f32 %v10041, 1.0
        %v10168 = vadd.f32 %v10043, 1.0
        %v10169 = vadd.f32 %v10045, 1.0
        %v10170 = vadd.f32 %v10047, 1.0
        %v10171 = vadd.f32 %v10049, 1.0
        %v10172 = vadd.f32 %v10051, 1.0
        %v10173 = vadd.f32 %v10053, 1.0
        %v10174 = vadd.f32 %v10055, 1.0
        %v10175 = vadd.f32 %v10057, 1.0
        %v10176 = vadd.f32 %v10059, 1.0
        %v10177 = vadd.f32 %v10061, 1.0
        %v10178 = vadd.f32 %v10063, 1.0
        %v10179 = vadd.f32 %v10065, 1.0
        %v10180 = vadd.f32 %v10067, 1.0
        %v10181 = vadd.f32 %v10069, 1.0
        %v10182 = vadd.f32 %v10071, 1.0
        %v10183 = vadd.f32 %v10073, 1.0
        %v10184 = vadd.f32 %v10075, 1.0
        %v10185 = vadd.f32 %v10077, 1.0
        %v10186 = vadd.f32 %v10079, 1.0
        %v10187 = vadd.f32 %v10081, 1.0
        %v10188 = vadd.f32 %v10083, 1.0
        %v10189 = vadd.f32 %v10085, 1.0
        %v10190 = vadd.f32 %v10087, 1.0
        %v10191 = vadd.f32 %v10089, 1.0
        %v10192 = vadd.f32 %v10091, 1.0
        %v10193 = vadd.f32 %v10093, 1.0
        %v10194 = vadd.f32 %v10095, 1.0
        %v10195 = vadd.f32 %v10097, 1.0
        %v10196 = vadd.f32 %v10099, 1.0
        %v10197 = vadd.f32 %v10101, 1.0
        %v10198 = vadd.f32 %v10103, 1.0
        %v10199 = vadd.f32 %v10105, 1.0
        %v10200 = vadd.f32 %v10107, 1.0
        %v10201 = vadd.f32 %v10109, 1.0
        %v10202 = vadd.f32 %v10111, 1.0
        %v10203 = vadd.f32 %v10113, 1.0
        %v10204 = vadd.f32 %v10115, 1.0
        %v10205 = vadd.f32 %v10117, 1.0
        %v10206 = vadd.f32 %v10119, 1.0
        %v10207 = vadd.f32 %v10121, 1.0
        %v10208 = vadd.f32 %v10123, 1.0
        %v10209 = vadd.f32 %v10125, 1.0
        %v10210 = vadd.f32 %v10127, 1.0
        %v10211 = vadd.f32 %v10129, 1.0
        %v10212 = vadd.f32 %v10131, 1.0
        %v10213 = vadd.f32 %v10133, 1.0
        %v10214 = vadd.f32 %v10135, 1.0
        %v10215 = vadd.f32 %v10137, 1.0
        %v10216 = vadd.f32 %v10139, 1.0
        %v10217 = vadd.f32 %v10141, 1.0
        %v10218 = vadd.f32 %v10143, 1.0
        %v10219 = vadd.f32 %v10145, 1.0
        %v10220 = vadd.f32 %v10147, 1.0
        %v10221 = vadd.f32 %v10149, 1.0
        %v10222 = vadd.f32 %v10151, 1.0
        %v10223 = vadd.f32 %v10153, 1.0
        %v10224 = vadd.f32 %v10155, 1.0
        %v10225 = vadd.f32 %v10157, 1.0
        %v10226 = vadd.f32 %v10159, 1.0
        %v10227 = vadd.f32 %v10161, 1.0
        %v10228 = vadd.f32 %v10163, 1.0
        %v10229 = vadd.f32 %v10165, 1.0
        %v10230 = vrcp.pop %v10166
        %v10231 = vmul.f32 1.0, %v10230
        %v10232 = vrcp.pop %v10167
        %v10233 = vmul.f32 1.0, %v10232
        %v10234 = vrcp.pop %v10168
        %v10235 = vmul.f32 1.0, %v10234
        %v10236 = vrcp.pop %v10169
        %v10237 = vmul.f32 1.0, %v10236
        %v10238 = vrcp.pop %v10170
        %v10239 = vmul.f32 1.0, %v10238
        %v10240 = vrcp.pop %v10171
        %v10241 = vmul.f32 1.0, %v10240
        %v10242 = vrcp.pop %v10172
        %v10243 = vmul.f32 1.0, %v10242
        %v10244 = vrcp.pop %v10173
        %v10245 = vmul.f32 1.0, %v10244
        %v10246 = vrcp.pop %v10174
        %v10247 = vmul.f32 1.0, %v10246
        %v10248 = vrcp.pop %v10175
        %v10249 = vmul.f32 1.0, %v10248
        %v10250 = vrcp.pop %v10176
        %v10251 = vmul.f32 1.0, %v10250
        %v10252 = vrcp.pop %v10177
        %v10253 = vmul.f32 1.0, %v10252
        %v10254 = vrcp.pop %v10178
        %v10255 = vmul.f32 1.0, %v10254
        %v10256 = vrcp.pop %v10179
        %v10257 = vmul.f32 1.0, %v10256
        %v10258 = vrcp.pop %v10180
        %v10259 = vmul.f32 1.0, %v10258
        %v10260 = vrcp.pop %v10181
        %v10261 = vmul.f32 1.0, %v10260
        %v10262 = vrcp.pop %v10182
        %v10263 = vmul.f32 1.0, %v10262
        %v10264 = vrcp.pop %v10183
        %v10265 = vmul.f32 1.0, %v10264
        %v10266 = vrcp.pop %v10184
        %v10267 = vmul.f32 1.0, %v10266
        %v10268 = vrcp.pop %v10185
        %v10269 = vmul.f32 1.0, %v10268
        %v10270 = vrcp.pop %v10186
        %v10271 = vmul.f32 1.0, %v10270
        %v10272 = vrcp.pop %v10187
        %v10273 = vmul.f32 1.0, %v10272
        %v10274 = vrcp.pop %v10188
        %v10275 = vmul.f32 1.0, %v10274
        %v10276 = vrcp.pop %v10189
        %v10277 = vmul.f32 1.0, %v10276
        %v10278 = vrcp.pop %v10190
        %v10279 = vmul.f32 1.0, %v10278
        %v10280 = vrcp.pop %v10191
        %v10281 = vmul.f32 1.0, %v10280
        %v10282 = vrcp.pop %v10192
        %v10283 = vmul.f32 1.0, %v10282
        %v10284 = vrcp.pop %v10193
        %v10285 = vmul.f32 1.0, %v10284
        %v10286 = vrcp.pop %v10194
        %v10287 = vmul.f32 1.0, %v10286
        %v10288 = vrcp.pop %v10195
        %v10289 = vmul.f32 1.0, %v10288
        %v10290 = vrcp.pop %v10196
        %v10291 = vmul.f32 1.0, %v10290
        %v10292 = vrcp.pop %v10197
        %v10293 = vmul.f32 1.0, %v10292
        %v10294 = vrcp.pop %v10198
        %v10295 = vmul.f32 1.0, %v10294
        %v10296 = vrcp.pop %v10199
        %v10297 = vmul.f32 1.0, %v10296
        %v10298 = vrcp.pop %v10200
        %v10299 = vmul.f32 1.0, %v10298
        %v10300 = vrcp.pop %v10201
        %v10301 = vmul.f32 1.0, %v10300
        %v10302 = vrcp.pop %v10202
        %v10303 = vmul.f32 1.0, %v10302
        %v10304 = vrcp.pop %v10203
        %v10305 = vmul.f32 1.0, %v10304
        %v10306 = vrcp.pop %v10204
        %v10307 = vmul.f32 1.0, %v10306
        %v10308 = vrcp.pop %v10205
        %v10309 = vmul.f32 1.0, %v10308
        %v10310 = vrcp.pop %v10206
        %v10311 = vmul.f32 1.0, %v10310
        %v10312 = vrcp.pop %v10207
        %v10313 = vmul.f32 1.0, %v10312
        %v10314 = vrcp.pop %v10208
        %v10315 = vmul.f32 1.0, %v10314
        %v10316 = vrcp.pop %v10209
        %v10317 = vmul.f32 1.0, %v10316
        %v10318 = vrcp.pop %v10210
        %v10319 = vmul.f32 1.0, %v10318
        %v10320 = vrcp.pop %v10211
        %v10321 = vmul.f32 1.0, %v10320
        %v10322 = vrcp.pop %v10212
        %v10323 = vmul.f32 1.0, %v10322
        %v10324 = vrcp.pop %v10213
        %v10325 = vmul.f32 1.0, %v10324
        %v10326 = vrcp.pop %v10214
        %v10327 = vmul.f32 1.0, %v10326
        %v10328 = vrcp.pop %v10215
        %v10329 = vmul.f32 1.0, %v10328
        %v10330 = vrcp.pop %v10216
        %v10331 = vmul.f32 1.0, %v10330
        %v10332 = vrcp.pop %v10217
        %v10333 = vmul.f32 1.0, %v10332
        %v10334 = vrcp.pop %v10218
        %v10335 = vmul.f32 1.0, %v10334
        %v10336 = vrcp.pop %v10219
        %v10337 = vmul.f32 1.0, %v10336
        %v10338 = vrcp.pop %v10220
        %v10339 = vmul.f32 1.0, %v10338
        %v10340 = vrcp.pop %v10221
        %v10341 = vmul.f32 1.0, %v10340
        %v10342 = vrcp.pop %v10222
        %v10343 = vmul.f32 1.0, %v10342
        %v10344 = vrcp.pop %v10223
        %v10345 = vmul.f32 1.0, %v10344
        %v10346 = vrcp.pop %v10224
        %v10347 = vmul.f32 1.0, %v10346
        %v10348 = vrcp.pop %v10225
        %v10349 = vmul.f32 1.0, %v10348
        %v10350 = vrcp.pop %v10226
        %v10351 = vmul.f32 1.0, %v10350
        %v10352 = vrcp.pop %v10227
        %v10353 = vmul.f32 1.0, %v10352
        %v10354 = vrcp.pop %v10228
        %v10355 = vmul.f32 1.0, %v10354
        %v10356 = vrcp.pop %v10229
        %v10357 = vmul.f32 1.0, %v10356
        %10422 = vrot.lane.b32.xlu0 %v8208, 3
        %v10423 = vpop.permute.xlu0 %10422
        %10424 = vrot.lane.b32.xlu0 %v8211, 3
        %v10425 = vpop.permute.xlu0 %10424
        %10426 = vrot.lane.b32.xlu0 %v8216, 3
        %v10427 = vpop.permute.xlu0 %10426
        %10428 = vrot.lane.b32.xlu0 %v8219, 3
        %v10429 = vpop.permute.xlu0 %10428
        %10430 = vrot.lane.b32.xlu0 %v8224, 3
        %v10431 = vpop.permute.xlu0 %10430
        %10432 = vrot.lane.b32.xlu0 %v8227, 3
        %v10433 = vpop.permute.xlu0 %10432
        %10434 = vrot.lane.b32.xlu0 %v8232, 3
        %v10435 = vpop.permute.xlu0 %10434
        %10436 = vrot.lane.b32.xlu0 %v8235, 3
        %v10437 = vpop.permute.xlu0 %10436
        %10438 = vrot.lane.b32.xlu0 %v8240, 3
        %v10439 = vpop.permute.xlu0 %10438
        %10440 = vrot.lane.b32.xlu0 %v8243, 3
        %v10441 = vpop.permute.xlu0 %10440
        %10442 = vrot.lane.b32.xlu0 %v8248, 3
        %v10443 = vpop.permute.xlu0 %10442
        %10444 = vrot.lane.b32.xlu0 %v8251, 3
        %v10445 = vpop.permute.xlu0 %10444
        %10446 = vrot.lane.b32.xlu0 %v8256, 3
        %v10447 = vpop.permute.xlu0 %10446
        %10448 = vrot.lane.b32.xlu0 %v8259, 3
        %v10449 = vpop.permute.xlu0 %10448
        %10450 = vrot.lane.b32.xlu0 %v8264, 3
        %v10451 = vpop.permute.xlu0 %10450
        %10452 = vrot.lane.b32.xlu0 %v8267, 3
        %v10453 = vpop.permute.xlu0 %10452
        %10454 = vrot.lane.b32.xlu0 %v8272, 3
        %v10455 = vpop.permute.xlu0 %10454
        %10456 = vrot.lane.b32.xlu0 %v8275, 3
        %v10457 = vpop.permute.xlu0 %10456
        %10458 = vrot.lane.b32.xlu0 %v8280, 3
        %v10459 = vpop.permute.xlu0 %10458
        %10460 = vrot.lane.b32.xlu0 %v8283, 3
        %v10461 = vpop.permute.xlu0 %10460
        %10462 = vrot.lane.b32.xlu0 %v8288, 3
        %v10463 = vpop.permute.xlu0 %10462
        %10464 = vrot.lane.b32.xlu0 %v8291, 3
        %v10465 = vpop.permute.xlu0 %10464
        %10466 = vrot.lane.b32.xlu0 %v8296, 3
        %v10467 = vpop.permute.xlu0 %10466
        %10468 = vrot.lane.b32.xlu0 %v8299, 3
        %v10469 = vpop.permute.xlu0 %10468
        %10470 = vrot.lane.b32.xlu0 %v8304, 3
        %v10471 = vpop.permute.xlu0 %10470
        %10472 = vrot.lane.b32.xlu0 %v8307, 3
        %v10473 = vpop.permute.xlu0 %10472
        %10474 = vrot.lane.b32.xlu0 %v8312, 3
        %v10475 = vpop.permute.xlu0 %10474
        %10476 = vrot.lane.b32.xlu0 %v8315, 3
        %v10477 = vpop.permute.xlu0 %10476
        %10478 = vrot.lane.b32.xlu0 %v8320, 3
        %v10479 = vpop.permute.xlu0 %10478
        %10480 = vrot.lane.b32.xlu0 %v8323, 3
        %v10481 = vpop.permute.xlu0 %10480
        %10482 = vrot.lane.b32.xlu0 %v8328, 3
        %v10483 = vpop.permute.xlu0 %10482
        %10484 = vrot.lane.b32.xlu0 %v8331, 3
        %v10485 = vpop.permute.xlu0 %10484
        %10486 = vrot.lane.b32.xlu0 %v8336, 3
        %v10487 = vpop.permute.xlu0 %10486
        %10488 = vrot.lane.b32.xlu0 %v8339, 3
        %v10489 = vpop.permute.xlu0 %10488
        %10490 = vrot.lane.b32.xlu0 %v8344, 3
        %v10491 = vpop.permute.xlu0 %10490
        %10492 = vrot.lane.b32.xlu0 %v8347, 3
        %v10493 = vpop.permute.xlu0 %10492
        %10494 = vrot.lane.b32.xlu0 %v8352, 3
        %v10495 = vpop.permute.xlu0 %10494
        %10496 = vrot.lane.b32.xlu0 %v8355, 3
        %v10497 = vpop.permute.xlu0 %10496
        %10498 = vrot.lane.b32.xlu0 %v8360, 3
        %v10499 = vpop.permute.xlu0 %10498
        %10500 = vrot.lane.b32.xlu0 %v8363, 3
        %v10501 = vpop.permute.xlu0 %10500
        %10502 = vrot.lane.b32.xlu0 %v8368, 3
        %v10503 = vpop.permute.xlu0 %10502
        %10504 = vrot.lane.b32.xlu0 %v8371, 3
        %v10505 = vpop.permute.xlu0 %10504
        %10506 = vrot.lane.b32.xlu0 %v8376, 3
        %v10507 = vpop.permute.xlu0 %10506
        %10508 = vrot.lane.b32.xlu0 %v8379, 3
        %v10509 = vpop.permute.xlu0 %10508
        %10510 = vrot.lane.b32.xlu0 %v8384, 3
        %v10511 = vpop.permute.xlu0 %10510
        %10512 = vrot.lane.b32.xlu0 %v8387, 3
        %v10513 = vpop.permute.xlu0 %10512
        %10514 = vrot.lane.b32.xlu0 %v8392, 3
        %v10515 = vpop.permute.xlu0 %10514
        %10516 = vrot.lane.b32.xlu0 %v8395, 3
        %v10517 = vpop.permute.xlu0 %10516
        %10518 = vrot.lane.b32.xlu0 %v8400, 3
        %v10519 = vpop.permute.xlu0 %10518
        %10520 = vrot.lane.b32.xlu0 %v8403, 3
        %v10521 = vpop.permute.xlu0 %10520
        %10522 = vrot.lane.b32.xlu0 %v8408, 3
        %v10523 = vpop.permute.xlu0 %10522
        %10524 = vrot.lane.b32.xlu0 %v8411, 3
        %v10525 = vpop.permute.xlu0 %10524
        %10526 = vrot.lane.b32.xlu0 %v8416, 3
        %v10527 = vpop.permute.xlu0 %10526
        %10528 = vrot.lane.b32.xlu0 %v8419, 3
        %v10529 = vpop.permute.xlu0 %10528
        %10530 = vrot.lane.b32.xlu0 %v8424, 3
        %v10531 = vpop.permute.xlu0 %10530
        %10532 = vrot.lane.b32.xlu0 %v8427, 3
        %v10533 = vpop.permute.xlu0 %10532
        %10534 = vrot.lane.b32.xlu0 %v8432, 3
        %v10535 = vpop.permute.xlu0 %10534
        %10536 = vrot.lane.b32.xlu0 %v8435, 3
        %v10537 = vpop.permute.xlu0 %10536
        %10538 = vrot.lane.b32.xlu0 %v8440, 3
        %v10539 = vpop.permute.xlu0 %10538
        %10540 = vrot.lane.b32.xlu0 %v8443, 3
        %v10541 = vpop.permute.xlu0 %10540
        %10542 = vrot.lane.b32.xlu0 %v8448, 3
        %v10543 = vpop.permute.xlu0 %10542
        %10544 = vrot.lane.b32.xlu0 %v8451, 3
        %v10545 = vpop.permute.xlu0 %10544
        %10546 = vrot.lane.b32.xlu0 %v8456, 3
        %v10547 = vpop.permute.xlu0 %10546
        %10548 = vrot.lane.b32.xlu0 %v8459, 3
        %v10549 = vpop.permute.xlu0 %10548
        %vm10614 = vcmask 23552
        %v10615 = vsel %vm10614, %v10231, %v10423
        %v10616 = vsel %vm10614, %v10233, %v10425
        %v10617 = vsel %vm10614, %v10235, %v10427
        %v10618 = vsel %vm10614, %v10237, %v10429
        %v10619 = vsel %vm10614, %v10239, %v10431
        %v10620 = vsel %vm10614, %v10241, %v10433
        %v10621 = vsel %vm10614, %v10243, %v10435
        %v10622 = vsel %vm10614, %v10245, %v10437
        %v10623 = vsel %vm10614, %v10247, %v10439
        %v10624 = vsel %vm10614, %v10249, %v10441
        %v10625 = vsel %vm10614, %v10251, %v10443
        %v10626 = vsel %vm10614, %v10253, %v10445
        %v10627 = vsel %vm10614, %v10255, %v10447
        %v10628 = vsel %vm10614, %v10257, %v10449
        %v10629 = vsel %vm10614, %v10259, %v10451
        %v10630 = vsel %vm10614, %v10261, %v10453
        %v10631 = vsel %vm10614, %v10263, %v10455
        %v10632 = vsel %vm10614, %v10265, %v10457
        %v10633 = vsel %vm10614, %v10267, %v10459
        %v10634 = vsel %vm10614, %v10269, %v10461
        %v10635 = vsel %vm10614, %v10271, %v10463
        %v10636 = vsel %vm10614, %v10273, %v10465
        %v10637 = vsel %vm10614, %v10275, %v10467
        %v10638 = vsel %vm10614, %v10277, %v10469
        %v10639 = vsel %vm10614, %v10279, %v10471
        %v10640 = vsel %vm10614, %v10281, %v10473
        %v10641 = vsel %vm10614, %v10283, %v10475
        %v10642 = vsel %vm10614, %v10285, %v10477
        %v10643 = vsel %vm10614, %v10287, %v10479
        %v10644 = vsel %vm10614, %v10289, %v10481
        %v10645 = vsel %vm10614, %v10291, %v10483
        %v10646 = vsel %vm10614, %v10293, %v10485
        %v10647 = vsel %vm10614, %v10295, %v10487
        %v10648 = vsel %vm10614, %v10297, %v10489
        %v10649 = vsel %vm10614, %v10299, %v10491
        %v10650 = vsel %vm10614, %v10301, %v10493
        %v10651 = vsel %vm10614, %v10303, %v10495
        %v10652 = vsel %vm10614, %v10305, %v10497
        %v10653 = vsel %vm10614, %v10307, %v10499
        %v10654 = vsel %vm10614, %v10309, %v10501
        %v10655 = vsel %vm10614, %v10311, %v10503
        %v10656 = vsel %vm10614, %v10313, %v10505
        %v10657 = vsel %vm10614, %v10315, %v10507
        %v10658 = vsel %vm10614, %v10317, %v10509
        %v10659 = vsel %vm10614, %v10319, %v10511
        %v10660 = vsel %vm10614, %v10321, %v10513
        %v10661 = vsel %vm10614, %v10323, %v10515
        %v10662 = vsel %vm10614, %v10325, %v10517
        %v10663 = vsel %vm10614, %v10327, %v10519
        %v10664 = vsel %vm10614, %v10329, %v10521
        %v10665 = vsel %vm10614, %v10331, %v10523
        %v10666 = vsel %vm10614, %v10333, %v10525
        %v10667 = vsel %vm10614, %v10335, %v10527
        %v10668 = vsel %vm10614, %v10337, %v10529
        %v10669 = vsel %vm10614, %v10339, %v10531
        %v10670 = vsel %vm10614, %v10341, %v10533
        %v10671 = vsel %vm10614, %v10343, %v10535
        %v10672 = vsel %vm10614, %v10345, %v10537
        %v10673 = vsel %vm10614, %v10347, %v10539
        %v10674 = vsel %vm10614, %v10349, %v10541
        %v10675 = vsel %vm10614, %v10351, %v10543
        %v10676 = vsel %vm10614, %v10353, %v10545
        %v10677 = vsel %vm10614, %v10355, %v10547
        %v10678 = vsel %vm10614, %v10357, %v10549
        %vm10679 = vcmask 31744
        %10680 = vst.msk [vmem:[%s898] sm:$0xff] %vm10679, %v10615
        %10681 = vst.msk [vmem:[%s898 + $0x8] sm:$0xff] %vm10679, %v10616
        %10682 = vst.msk [vmem:[%s898 + $0x10] sm:$0xff] %vm10679, %v10617
        %10683 = vst.msk [vmem:[%s898 + $0x18] sm:$0xff] %vm10679, %v10618
        %10684 = vst.msk [vmem:[%s898 + $0x20] sm:$0xff] %vm10679, %v10619
        %10685 = vst.msk [vmem:[%s898 + $0x28] sm:$0xff] %vm10679, %v10620
        %10686 = vst.msk [vmem:[%s898 + $0x30] sm:$0xff] %vm10679, %v10621
        %10687 = vst.msk [vmem:[%s898 + $0x38] sm:$0xff] %vm10679, %v10622
        %10688 = vst.msk [vmem:[%s898 + $0x40] sm:$0xff] %vm10679, %v10623
        %10689 = vst.msk [vmem:[%s898 + $0x48] sm:$0xff] %vm10679, %v10624
        %10690 = vst.msk [vmem:[%s898 + $0x50] sm:$0xff] %vm10679, %v10625
        %10691 = vst.msk [vmem:[%s898 + $0x58] sm:$0xff] %vm10679, %v10626
        %10692 = vst.msk [vmem:[%s898 + $0x60] sm:$0xff] %vm10679, %v10627
        %10693 = vst.msk [vmem:[%s898 + $0x68] sm:$0xff] %vm10679, %v10628
        %10694 = vst.msk [vmem:[%s898 + $0x70] sm:$0xff] %vm10679, %v10629
        %10695 = vst.msk [vmem:[%s898 + $0x78] sm:$0xff] %vm10679, %v10630
        %10696 = vst.msk [vmem:[%s898 + $0x80] sm:$0xff] %vm10679, %v10631
        %10697 = vst.msk [vmem:[%s898 + $0x88] sm:$0xff] %vm10679, %v10632
        %10698 = vst.msk [vmem:[%s898 + $0x90] sm:$0xff] %vm10679, %v10633
        %10699 = vst.msk [vmem:[%s898 + $0x98] sm:$0xff] %vm10679, %v10634
        %10700 = vst.msk [vmem:[%s898 + $0xa0] sm:$0xff] %vm10679, %v10635
        %10701 = vst.msk [vmem:[%s898 + $0xa8] sm:$0xff] %vm10679, %v10636
        %10702 = vst.msk [vmem:[%s898 + $0xb0] sm:$0xff] %vm10679, %v10637
        %10703 = vst.msk [vmem:[%s898 + $0xb8] sm:$0xff] %vm10679, %v10638
        %10704 = vst.msk [vmem:[%s898 + $0xc0] sm:$0xff] %vm10679, %v10639
        %10705 = vst.msk [vmem:[%s898 + $0xc8] sm:$0xff] %vm10679, %v10640
        %10706 = vst.msk [vmem:[%s898 + $0xd0] sm:$0xff] %vm10679, %v10641
        %10707 = vst.msk [vmem:[%s898 + $0xd8] sm:$0xff] %vm10679, %v10642
        %10708 = vst.msk [vmem:[%s898 + $0xe0] sm:$0xff] %vm10679, %v10643
        %10709 = vst.msk [vmem:[%s898 + $0xe8] sm:$0xff] %vm10679, %v10644
        %10710 = vst.msk [vmem:[%s898 + $0xf0] sm:$0xff] %vm10679, %v10645
        %10711 = vst.msk [vmem:[%s898 + $0xf8] sm:$0xff] %vm10679, %v10646
        %10712 = vst.msk [vmem:[%s898 + $0x100] sm:$0xff] %vm10679, %v10647
        %10713 = vst.msk [vmem:[%s898 + $0x108] sm:$0xff] %vm10679, %v10648
        %10714 = vst.msk [vmem:[%s898 + $0x110] sm:$0xff] %vm10679, %v10649
        %10715 = vst.msk [vmem:[%s898 + $0x118] sm:$0xff] %vm10679, %v10650
        %10716 = vst.msk [vmem:[%s898 + $0x120] sm:$0xff] %vm10679, %v10651
        %10717 = vst.msk [vmem:[%s898 + $0x128] sm:$0xff] %vm10679, %v10652
        %10718 = vst.msk [vmem:[%s898 + $0x130] sm:$0xff] %vm10679, %v10653
        %10719 = vst.msk [vmem:[%s898 + $0x138] sm:$0xff] %vm10679, %v10654
        %10720 = vst.msk [vmem:[%s898 + $0x140] sm:$0xff] %vm10679, %v10655
        %10721 = vst.msk [vmem:[%s898 + $0x148] sm:$0xff] %vm10679, %v10656
        %10722 = vst.msk [vmem:[%s898 + $0x150] sm:$0xff] %vm10679, %v10657
        %10723 = vst.msk [vmem:[%s898 + $0x158] sm:$0xff] %vm10679, %v10658
        %10724 = vst.msk [vmem:[%s898 + $0x160] sm:$0xff] %vm10679, %v10659
        %10725 = vst.msk [vmem:[%s898 + $0x168] sm:$0xff] %vm10679, %v10660
        %10726 = vst.msk [vmem:[%s898 + $0x170] sm:$0xff] %vm10679, %v10661
        %10727 = vst.msk [vmem:[%s898 + $0x178] sm:$0xff] %vm10679, %v10662
        %10728 = vst.msk [vmem:[%s898 + $0x180] sm:$0xff] %vm10679, %v10663
        %10729 = vst.msk [vmem:[%s898 + $0x188] sm:$0xff] %vm10679, %v10664
        %10730 = vst.msk [vmem:[%s898 + $0x190] sm:$0xff] %vm10679, %v10665
        %10731 = vst.msk [vmem:[%s898 + $0x198] sm:$0xff] %vm10679, %v10666
        %10732 = vst.msk [vmem:[%s898 + $0x1a0] sm:$0xff] %vm10679, %v10667
        %10733 = vst.msk [vmem:[%s898 + $0x1a8] sm:$0xff] %vm10679, %v10668
        %10734 = vst.msk [vmem:[%s898 + $0x1b0] sm:$0xff] %vm10679, %v10669
        %10735 = vst.msk [vmem:[%s898 + $0x1b8] sm:$0xff] %vm10679, %v10670
        %10736 = vst.msk [vmem:[%s898 + $0x1c0] sm:$0xff] %vm10679, %v10671
        %10737 = vst.msk [vmem:[%s898 + $0x1c8] sm:$0xff] %vm10679, %v10672
        %10738 = vst.msk [vmem:[%s898 + $0x1d0] sm:$0xff] %vm10679, %v10673
        %10739 = vst.msk [vmem:[%s898 + $0x1d8] sm:$0xff] %vm10679, %v10674
        %10740 = vst.msk [vmem:[%s898 + $0x1e0] sm:$0xff] %vm10679, %v10675
        %10741 = vst.msk [vmem:[%s898 + $0x1e8] sm:$0xff] %vm10679, %v10676
        %10742 = vst.msk [vmem:[%s898 + $0x1f0] sm:$0xff] %vm10679, %v10677
        %10743 = vst.msk [vmem:[%s898 + $0x1f8] sm:$0xff] %vm10679, %v10678
        %s10744 = smul.u32 64, %s42
        %p10745 = scmp.lt.s32.totalorder %s10744, 127
        %s10746 = scalar_select %p10745, %s10744, 127
        %s10747 = smul.addr %s10746, 8
        %s10748 = scalar_lea.vmem %s25, %s10747
        // Predicated region
        $region161: #{tpu_custom_call.1} parent=119 // pred_check
          %p10749 = pneg %p590
        $region162: #{tpu_custom_call.1} parent=119 // pred_check_branch
          %10751 = sbr.rel (%p10749) target = $region164
        $region163: #{tpu_custom_call.1} parent=119 // pred_region
          %s10752 = smul.u32 64, %s42
        $region164: #{tpu_custom_call.1} parent=119 // pred_fallthru
          _
      $region120: #{tpu_custom_call.1} parent=5 // pred_fallthru
        _
      %p10753 = scmp.le.s32.totalorder 2, %s37
      // Predicated region
      $region165: #{tpu_custom_call.1} parent=5 // pred_check
        %p10754 = pneg %p10753
      $region166: #{tpu_custom_call.1} parent=5 // pred_check_branch
        %10756 = sbr.rel (%p10754) target = $region168
      $region167: #{tpu_custom_call.1} parent=5 // pred_region
        %s10757 = ssub.s32 %s37, 2
        // Predicated region
        $region169: #{tpu_custom_call.1} parent=167 // pred_check
          %p10758 = pneg %p596
        $region170: #{tpu_custom_call.1} parent=167 // pred_check_branch
          %10760 = sbr.rel (%p10758) target = $region172
        $region171: #{tpu_custom_call.1} parent=167 // pred_region
          %s10761 = smul.u32 64, %s43
          %p10762 = scmp.lt.s32.totalorder %s10761, 127
          %s10763 = scalar_select %p10762, %s10761, 127
          %s10764 = smul.addr %s10763, 8
          %s10765 = scalar_lea.vmem %s25, %s10764
        $region172: #{tpu_custom_call.1} parent=167 // pred_fallthru
          _
      $region168: #{tpu_custom_call.1} parent=5 // pred_fallthru
        _
    $region6: #{tpu_custom_call.1} parent=1 // loop_footer
      %s41 = sadd.s32 1, %s37
    $region7: #{tpu_custom_call.1} parent=1 // loop_footer_branch
      %36 = sbr.rel target = $region3
    $region8: #{tpu_custom_call.1} parent=1 // loop_exit
      _
    %10766 = vsyncpa [#allocation3], 1
    %s10767 = scalar_lea.sflag [#allocation3], 1
    %10768 = vsyncpa %s10767, 1
    %10769 = vsyncpa [#allocation5], 1
    %10770 = vsyncpa [#allocation8], 1
    %10771 = vsyncpa [#allocation11], 1
    %10772 = vsyncpa [#allocation14], 1
    %10773 = vsyncpa [#allocation17], 1

</llo_original>
